<compile_context>
chip_gen: v7x
topology: tpu7x:2x2x1
jax: 0.10.0
libtpu: 0.0.40
codegen_flags: <defaults>
</compile_context>

<pallas_src>
import functools

import jax
import jax.numpy as jnp
from jax import lax
from jax.experimental import pallas as pl
from jax.experimental.pallas import tpu as pltpu

_HI = lax.Precision.HIGHEST  # for the XLA-side reference / wrapper matmuls


# ----------------------------------------------------------------------------
# Fused kernel: encoder (2 layers) -> decoder (2 layers) -> attention -> Wc, W
# ----------------------------------------------------------------------------
def _fused_kernel(gx_e0_ref, gx_d0_ref,
                  w_hh_e0_ref, w_ih_e1_ref, w_hh_e1_ref, b_e1_ref,
                  w_hh_d0_ref, w_ih_d1_ref, w_hh_d1_ref, b_d1_ref,
                  wc1_ref, wc2_ref, bc_ref, w_ref, bw_ref,
                  out_ref,
                  seq_e0_ref, seq_d0_ref, ox_ref, oy_ref,
                  *, B, Tx, Ty, H):
    f32 = jnp.float32

    def lstm_layer(get_gx, w_hh, h0, c0, T, emit):
        """Serial LSTM recurrence. Input projection already hoisted into get_gx;
        only the (B, H) @ (H, 4H) recurrent matmul runs per step."""
        h, c = h0, c0
        for t in range(T):          # fully unrolled; T is static & small
            gates = get_gx(t) + jnp.dot(h, w_hh, preferred_element_type=f32)
            i = jax.nn.sigmoid(gates[:, 0 * H:1 * H])
            f = jax.nn.sigmoid(gates[:, 1 * H:2 * H])
            g = jnp.tanh(gates[:, 2 * H:3 * H])
            o = jax.nn.sigmoid(gates[:, 3 * H:4 * H])
            c = f * c + i * g
            h = o * jnp.tanh(c)
            emit(t, h)
        return h, c

    def emit_flat(seq_ref):
        # store h_t as rows [t*B, (t+1)*B) of a (T*B, H) VMEM scratch
        def emit(t, h):
            seq_ref[t * B:(t + 1) * B, :] = h
        return emit

    def emit_batched(bth_ref):
        # store h_t into a (B, T, H) VMEM scratch (per-batch layout for attn)
        def emit(t, h):
            for b in range(B):
                bth_ref[b, t:t + 1, :] = h[b:b + 1, :]
        return emit

    zeros = jnp.zeros((B, H), f32)

    # ---------------- encoder (lstm1), zero initial state --------------------
    # layer 0: x @ W_ih + b precomputed in the wrapper (gx_e0_ref).
    hn_e0, cn_e0 = lstm_layer(lambda t: gx_e0_ref[t], w_hh_e0_ref[...],
                              zeros, zeros, Tx, emit_flat(seq_e0_ref))
    # layer 1: hoist its input projection over all Tx steps (single matmul).
    gx_e1 = (jnp.dot(seq_e0_ref[...], w_ih_e1_ref[...],
                     preferred_element_type=f32) + b_e1_ref[...])   # (Tx*B, 4H)
    hn_e1, cn_e1 = lstm_layer(lambda t: gx_e1[t * B:(t + 1) * B, :],
                              w_hh_e1_ref[...], zeros, zeros, Tx,
                              emit_batched(ox_ref))

    # ---------------- decoder (lstm2), init = encoder per-layer final state --
    lstm_layer(lambda t: gx_d0_ref[t], w_hh_d0_ref[...],
               hn_e0, cn_e0, Ty, emit_flat(seq_d0_ref))
    gx_d1 = (jnp.dot(seq_d0_ref[...], w_ih_d1_ref[...],
                     preferred_element_type=f32) + b_d1_ref[...])   # (Ty*B, 4H)
    lstm_layer(lambda t: gx_d1[t * B:(t + 1) * B, :],
               w_hh_d1_ref[...], hn_e1, cn_e1, Ty, emit_batched(oy_ref))

    # ---------------- attention + Wc + W (per batch element, B=2) ------------
    wc1 = wc1_ref[...]
    wc2 = wc2_ref[...]
    bc = bc_ref[...]
    w_out = w_ref[...]
    b_out = bw_ref[...]
    contract_last = (((1,), (1,)), ((), ()))   # A @ B^T without materializing T
    for b in range(B):
        oxb = ox_ref[b]                                     # (Tx, H)
        oyb = oy_ref[b]                                     # (Ty, H)
        sim = lax.dot_general(oyb, oxb, contract_last,
                              preferred_element_type=f32)   # (Ty, Tx)
        m = jnp.max(sim, axis=-1, keepdims=True)
        e = jnp.exp(sim - m)
        alpha = e * pl.reciprocal(jnp.sum(e, axis=-1, keepdims=True),
                                  approx=False)
        ct = jnp.dot(alpha, oxb, preferred_element_type=f32)        # (Ty, H)
        oy2 = (jnp.dot(oyb, wc1, preferred_element_type=f32)
               + jnp.dot(ct, wc2, preferred_element_type=f32) + bc)  # (Ty, H)
        # lane-dense (Ty, V=128) store
        out_ref[b] = jnp.dot(oy2, w_out, preferred_element_type=f32) + b_out


# ----------------------------------------------------------------------------
# Wrapper: embedding gathers + hoisted layer-0 projections (XLA glue), then
# one pallas_call for everything else.
# ----------------------------------------------------------------------------
@jax.jit
def lstm_with_att_forward(params, token, answer_token):
    w_ih_e0, w_hh_e0, _b_unused = params["lstm1"][0]
    H = w_hh_e0.shape[0]
    B, Tx = token.shape
    Ty = answer_token.shape[1]
    V = params["W_w"].shape[1]

    # Time-major embedding gathers (transposing the tiny int token array is
    # free; no activation transpose needed).
    x_tm = jnp.take(params["input_emb"], token.T, axis=0)            # (Tx, B, H)
    y_tm = jnp.take(params["answer_emb"], answer_token.T, axis=0)    # (Ty, B, H)

    w_ih_e0, w_hh_e0, b_e0 = params["lstm1"][0]
    w_ih_e1, w_hh_e1, b_e1 = params["lstm1"][1]
    w_ih_d0, w_hh_d0, b_d0 = params["lstm2"][0]
    w_ih_d1, w_hh_d1, b_d1 = params["lstm2"][1]

    # Hoisted layer-0 input projections: one big matmul each, fused by XLA
    # with the gather; removes x @ W_ih from the serial recurrence.
    gx_e0 = jnp.einsum("tbh,hg->tbg", x_tm, w_ih_e0, precision=_HI) + b_e0
    gx_d0 = jnp.einsum("tbh,hg->tbg", y_tm, w_ih_d0, precision=_HI) + b_d0

    wc1 = params["Wc_w"][:H]   # acts on oy
    wc2 = params["Wc_w"][H:]   # acts on ct

    kern = functools.partial(_fused_kernel, B=B, Tx=Tx, Ty=Ty, H=H)
    vmem = pl.BlockSpec(memory_space=pltpu.MemorySpace.VMEM)
    return pl.pallas_call(
        kern,
        out_shape=jax.ShapeDtypeStruct((B, Ty, V), jnp.float32),
        in_specs=[vmem] * 15,
        out_specs=vmem,
        scratch_shapes=[
            pltpu.VMEM((Tx * B, H), jnp.float32),   # encoder layer-0 outputs
            pltpu.VMEM((Ty * B, H), jnp.float32),   # decoder layer-0 outputs
            pltpu.VMEM((B, Tx, H), jnp.float32),    # ox (encoder layer-1 out)
            pltpu.VMEM((B, Ty, H), jnp.float32),    # oy (decoder layer-1 out)
        ],
    )(gx_e0, gx_d0,
      w_hh_e0, w_ih_e1, w_hh_e1, b_e1,
      w_hh_d0, w_ih_d1, w_hh_d1, b_d1,
      wc1, wc2, params["Wc_b"], params["W_w"], params["W_b"])


# ----------------------------------------------------------------------------
# Pure-JAX reference (HIGHEST-precision matmuls) for validation
# ----------------------------------------------------------------------------
def _lstm_layer_ref(x_tm, w_ih, w_hh, b, h0, c0):
    H = w_hh.shape[0]

    def step(carry, x_t):
        h, c = carry
        gates = (jnp.dot(x_t, w_ih, precision=_HI)
                 + jnp.dot(h, w_hh, precision=_HI) + b)
        i = jax.nn.sigmoid(gates[:, :H])
        f = jax.nn.sigmoid(gates[:, H:2 * H])
        g = jnp.tanh(gates[:, 2 * H:3 * H])
        o = jax.nn.sigmoid(gates[:, 3 * H:])
        c = f * c + i * g
        h = o * jnp.tanh(c)
        return (h, c), h

    (hn, cn), out = lax.scan(step, (h0, c0), x_tm)
    return out, hn, cn


def forward_ref(params, token, answer_token):
    x = jnp.take(params["input_emb"], token, axis=0)
    y = jnp.take(params["answer_emb"], answer_token, axis=0)
    B, Tx, H = x.shape
    h0 = jnp.zeros((B, H), jnp.float32)
    c0 = jnp.zeros((B, H), jnp.float32)

    out0, hn0, cn0 = _lstm_layer_ref(jnp.transpose(x, (1, 0, 2)),
                                     *params["lstm1"][0], h0, c0)
    out1, hn1, cn1 = _lstm_layer_ref(out0, *params["lstm1"][1], h0, c0)
    ox = jnp.transpose(out1, (1, 0, 2))

    oy0, _, _ = _lstm_layer_ref(jnp.transpose(y, (1, 0, 2)),
                                *params["lstm2"][0], hn0, cn0)
    oy1, _, _ = _lstm_layer_ref(oy0, *params["lstm2"][1], hn1, cn1)
    oy = jnp.transpose(oy1, (1, 0, 2))

    sim = jnp.einsum("byh,bxh->byx", oy, ox, precision=_HI)
    alpha = jax.nn.softmax(sim, axis=-1)
    ct = jnp.einsum("byx,bxh->byh", alpha, ox, precision=_HI)
    oy1c = jnp.concatenate([oy, ct], axis=2)
    oy2 = jnp.dot(oy1c, params["Wc_w"], precision=_HI) + params["Wc_b"]
    return jnp.dot(oy2, params["W_w"], precision=_HI) + params["W_b"]


# ----------------------------------------------------------------------------
# Deterministic parameter init (synthetic; mirrors nn.Module shapes)
# ----------------------------------------------------------------------------
def init_params(key, vocab, hidden):
    k = hidden ** -0.5
    keys = list(jax.random.split(key, 32))
    it = iter(keys)

    def u(shape):
        return jax.random.uniform(next(it), shape, jnp.float32, -k, k)

    input_emb = jax.random.normal(next(it), (vocab, hidden), jnp.float32) * 0.1
    input_emb = input_emb.at[0].set(0.0)       # padding_idx = 0
    answer_emb = jax.random.normal(next(it), (vocab, hidden), jnp.float32) * 0.1
    answer_emb = answer_emb.at[0].set(0.0)

    def lstm_layer_params():
        w_ih = u((hidden, 4 * hidden))         # pre-transposed (H_in, 4H)
        w_hh = u((hidden, 4 * hidden))         # pre-transposed (H, 4H)
        b = u((1, 4 * hidden)) + u((1, 4 * hidden))  # b_ih + b_hh
        return (w_ih, w_hh, b)

    params = {
        "input_emb": input_emb,
        "answer_emb": answer_emb,
        "lstm1": [lstm_layer_params(), lstm_layer_params()],
        "lstm2": [lstm_layer_params(), lstm_layer_params()],
        "Wc_w": u((2 * hidden, hidden)),       # pre-transposed Linear weight
        "Wc_b": u((1, hidden)),
        "W_w": u((hidden, vocab)),             # pre-transposed Linear weight
        "W_b": u((1, vocab)),
    }
    return params


if __name__ == "__main__":
    VOCAB = 128
    HIDDEN = 32
    BATCH = 2
    TX = 16   # input sequence length
    TY = 8    # answer sequence length

    root = jax.random.PRNGKey(0)
    k_p, k_tok, k_ans = jax.random.split(root, 3)

    params = init_params(k_p, VOCAB, HIDDEN)
    token = jax.random.randint(k_tok, (BATCH, TX), 0, VOCAB, dtype=jnp.int32)
    answer_token = jax.random.randint(k_ans, (BATCH, TY), 0, VOCAB,
                                      dtype=jnp.int32)

    out = lstm_with_att_forward(params, token, answer_token)
    out = jax.block_until_ready(out)

    ref = jax.block_until_ready(forward_ref(params, token, answer_token))

    assert out.shape == (BATCH, TY, VOCAB), out.shape
    assert bool(jnp.all(jnp.isfinite(out)))
    assert bool(jnp.allclose(out, ref, rtol=1e-4, atol=1e-4)), (
        float(jnp.max(jnp.abs(out - ref))))

    print("KERNEL_OK")
</pallas_src>

<mosaic_0001>
module attributes {stable_mosaic.version = 11 : i64} {
  func.func @_fused_kernel(%arg0: memref<16x2x128xf32, #tpu.memory_space<vmem>>, %arg1: memref<8x2x128xf32, #tpu.memory_space<vmem>>, %arg2: memref<32x128xf32, #tpu.memory_space<vmem>>, %arg3: memref<32x128xf32, #tpu.memory_space<vmem>>, %arg4: memref<32x128xf32, #tpu.memory_space<vmem>>, %arg5: memref<1x128xf32, #tpu.memory_space<vmem>>, %arg6: memref<32x128xf32, #tpu.memory_space<vmem>>, %arg7: memref<32x128xf32, #tpu.memory_space<vmem>>, %arg8: memref<32x128xf32, #tpu.memory_space<vmem>>, %arg9: memref<1x128xf32, #tpu.memory_space<vmem>>, %arg10: memref<32x32xf32, #tpu.memory_space<vmem>>, %arg11: memref<32x32xf32, #tpu.memory_space<vmem>>, %arg12: memref<1x32xf32, #tpu.memory_space<vmem>>, %arg13: memref<32x128xf32, #tpu.memory_space<vmem>>, %arg14: memref<1x128xf32, #tpu.memory_space<vmem>>, %arg15: memref<2x8x128xf32, #tpu.memory_space<vmem>>, %arg16: memref<32x32xf32, #tpu.memory_space<vmem>>, %arg17: memref<16x32xf32, #tpu.memory_space<vmem>>, %arg18: memref<2x16x32xf32, #tpu.memory_space<vmem>>, %arg19: memref<2x8x32xf32, #tpu.memory_space<vmem>>) attributes {dimension_semantics = [], scalar_prefetch = 0 : i64, scratch_operands = 4 : i64, tpu.core_type = #tpu.core_type<tc>} {
    %cst = arith.constant 0.000000e+00 : f32
    %0 = vector.broadcast %cst : f32 to vector<2x32xf32>
    %c0 = arith.constant 0 : index
    %c0_0 = arith.constant 0 : index
    %1 = vector.load %arg2[%c0, %c0_0] : memref<32x128xf32, #tpu.memory_space<vmem>>, vector<32x128xf32>
    %c0_1 = arith.constant 0 : index
    %c0_2 = arith.constant 0 : index
    %c0_3 = arith.constant 0 : index
    %2 = vector.load %arg0[%c0_1, %c0_2, %c0_3] : memref<16x2x128xf32, #tpu.memory_space<vmem>>, vector<1x2x128xf32>
    %3 = vector.shape_cast %2 : vector<1x2x128xf32> to vector<2x128xf32>
    %cst_4 = arith.constant dense<0.000000e+00> : vector<2x128xf32>
    %4 = tpu.matmul %0, %1, %cst_4 {dimension_numbers = #tpu.dot_dimension_numbers<[1], [0], [0], [1], [0, 0, 1, 1], [], []>} : vector<2x32xf32>, vector<32x128xf32>, vector<2x128xf32> -> vector<2x128xf32>
    %5 = arith.addf %3, %4 : vector<2x128xf32>
    %6 = vector.extract_strided_slice %5 {offsets = [0, 0], sizes = [2, 32], strides = [1, 1]} : vector<2x128xf32> to vector<2x32xf32>
    %7 = arith.negf %6 : vector<2x32xf32>
    %8 = math.exp %7 : vector<2x32xf32>
    %cst_5 = arith.constant 1.000000e+00 : f32
    %9 = vector.broadcast %cst_5 : f32 to vector<2x32xf32>
    %10 = arith.addf %9, %8 : vector<2x32xf32>
    %11 = arith.divf %9, %10 : vector<2x32xf32>
    %12 = vector.extract_strided_slice %5 {offsets = [0, 32], sizes = [2, 32], strides = [1, 1]} : vector<2x128xf32> to vector<2x32xf32>
    %13 = arith.negf %12 : vector<2x32xf32>
    %14 = math.exp %13 : vector<2x32xf32>
    %cst_6 = arith.constant 1.000000e+00 : f32
    %15 = vector.broadcast %cst_6 : f32 to vector<2x32xf32>
    %16 = arith.addf %15, %14 : vector<2x32xf32>
    %17 = arith.divf %15, %16 : vector<2x32xf32>
    %18 = vector.extract_strided_slice %5 {offsets = [0, 64], sizes = [2, 32], strides = [1, 1]} : vector<2x128xf32> to vector<2x32xf32>
    %19 = math.tanh %18 : vector<2x32xf32>
    %20 = vector.extract_strided_slice %5 {offsets = [0, 96], sizes = [2, 32], strides = [1, 1]} : vector<2x128xf32> to vector<2x32xf32>
    %21 = arith.negf %20 : vector<2x32xf32>
    %22 = math.exp %21 : vector<2x32xf32>
    %cst_7 = arith.constant 1.000000e+00 : f32
    %23 = vector.broadcast %cst_7 : f32 to vector<2x32xf32>
    %24 = arith.addf %23, %22 : vector<2x32xf32>
    %25 = arith.divf %23, %24 : vector<2x32xf32>
    %26 = arith.mulf %17, %0 : vector<2x32xf32>
    %27 = arith.mulf %11, %19 : vector<2x32xf32>
    %28 = arith.addf %26, %27 : vector<2x32xf32>
    %29 = math.tanh %28 : vector<2x32xf32>
    %30 = arith.mulf %25, %29 : vector<2x32xf32>
    %c0_8 = arith.constant 0 : index
    %c0_9 = arith.constant 0 : index
    %31 = vector.load %arg16[%c0_8, %c0_9] : memref<32x32xf32, #tpu.memory_space<vmem>>, vector<2x32xf32>
    tpu.vector_store %arg16[%c0_8, %c0_9], %30 {strides = array<i32>} : memref<32x32xf32, #tpu.memory_space<vmem>>, vector<2x32xf32>,
    %c1 = arith.constant 1 : index
    %c0_10 = arith.constant 0 : index
    %c0_11 = arith.constant 0 : index
    %32 = vector.load %arg0[%c1, %c0_10, %c0_11] : memref<16x2x128xf32, #tpu.memory_space<vmem>>, vector<1x2x128xf32>
    %33 = vector.shape_cast %32 : vector<1x2x128xf32> to vector<2x128xf32>
    %cst_12 = arith.constant dense<0.000000e+00> : vector<2x128xf32>
    %34 = tpu.matmul %30, %1, %cst_12 {dimension_numbers = #tpu.dot_dimension_numbers<[1], [0], [0], [1], [0, 0, 1, 1], [], []>} : vector<2x32xf32>, vector<32x128xf32>, vector<2x128xf32> -> vector<2x128xf32>
    %35 = arith.addf %33, %34 : vector<2x128xf32>
    %36 = vector.extract_strided_slice %35 {offsets = [0, 0], sizes = [2, 32], strides = [1, 1]} : vector<2x128xf32> to vector<2x32xf32>
    %37 = arith.negf %36 : vector<2x32xf32>
    %38 = math.exp %37 : vector<2x32xf32>
    %cst_13 = arith.constant 1.000000e+00 : f32
    %39 = vector.broadcast %cst_13 : f32 to vector<2x32xf32>
    %40 = arith.addf %39, %38 : vector<2x32xf32>
    %41 = arith.divf %39, %40 : vector<2x32xf32>
    %42 = vector.extract_strided_slice %35 {offsets = [0, 32], sizes = [2, 32], strides = [1, 1]} : vector<2x128xf32> to vector<2x32xf32>
    %43 = arith.negf %42 : vector<2x32xf32>
    %44 = math.exp %43 : vector<2x32xf32>
    %cst_14 = arith.constant 1.000000e+00 : f32
    %45 = vector.broadcast %cst_14 : f32 to vector<2x32xf32>
    %46 = arith.addf %45, %44 : vector<2x32xf32>
    %47 = arith.divf %45, %46 : vector<2x32xf32>
    %48 = vector.extract_strided_slice %35 {offsets = [0, 64], sizes = [2, 32], strides = [1, 1]} : vector<2x128xf32> to vector<2x32xf32>
    %49 = math.tanh %48 : vector<2x32xf32>
    %50 = vector.extract_strided_slice %35 {offsets = [0, 96], sizes = [2, 32], strides = [1, 1]} : vector<2x128xf32> to vector<2x32xf32>
    %51 = arith.negf %50 : vector<2x32xf32>
    %52 = math.exp %51 : vector<2x32xf32>
    %cst_15 = arith.constant 1.000000e+00 : f32
    %53 = vector.broadcast %cst_15 : f32 to vector<2x32xf32>
    %54 = arith.addf %53, %52 : vector<2x32xf32>
    %55 = arith.divf %53, %54 : vector<2x32xf32>
    %56 = arith.mulf %47, %28 : vector<2x32xf32>
    %57 = arith.mulf %41, %49 : vector<2x32xf32>
    %58 = arith.addf %56, %57 : vector<2x32xf32>
    %59 = math.tanh %58 : vector<2x32xf32>
    %60 = arith.mulf %55, %59 : vector<2x32xf32>
    %c2 = arith.constant 2 : index
    %c0_16 = arith.constant 0 : index
    %61 = vector.load %arg16[%c2, %c0_16] : memref<32x32xf32, #tpu.memory_space<vmem>>, vector<2x32xf32>
    tpu.vector_store %arg16[%c2, %c0_16], %60 {strides = array<i32>} : memref<32x32xf32, #tpu.memory_space<vmem>>, vector<2x32xf32>,
    %c2_17 = arith.constant 2 : index
    %c0_18 = arith.constant 0 : index
    %c0_19 = arith.constant 0 : index
    %62 = vector.load %arg0[%c2_17, %c0_18, %c0_19] : memref<16x2x128xf32, #tpu.memory_space<vmem>>, vector<1x2x128xf32>
    %63 = vector.shape_cast %62 : vector<1x2x128xf32> to vector<2x128xf32>
    %cst_20 = arith.constant dense<0.000000e+00> : vector<2x128xf32>
    %64 = tpu.matmul %60, %1, %cst_20 {dimension_numbers = #tpu.dot_dimension_numbers<[1], [0], [0], [1], [0, 0, 1, 1], [], []>} : vector<2x32xf32>, vector<32x128xf32>, vector<2x128xf32> -> vector<2x128xf32>
    %65 = arith.addf %63, %64 : vector<2x128xf32>
    %66 = vector.extract_strided_slice %65 {offsets = [0, 0], sizes = [2, 32], strides = [1, 1]} : vector<2x128xf32> to vector<2x32xf32>
    %67 = arith.negf %66 : vector<2x32xf32>
    %68 = math.exp %67 : vector<2x32xf32>
    %cst_21 = arith.constant 1.000000e+00 : f32
    %69 = vector.broadcast %cst_21 : f32 to vector<2x32xf32>
    %70 = arith.addf %69, %68 : vector<2x32xf32>
    %71 = arith.divf %69, %70 : vector<2x32xf32>
    %72 = vector.extract_strided_slice %65 {offsets = [0, 32], sizes = [2, 32], strides = [1, 1]} : vector<2x128xf32> to vector<2x32xf32>
    %73 = arith.negf %72 : vector<2x32xf32>
    %74 = math.exp %73 : vector<2x32xf32>
    %cst_22 = arith.constant 1.000000e+00 : f32
    %75 = vector.broadcast %cst_22 : f32 to vector<2x32xf32>
    %76 = arith.addf %75, %74 : vector<2x32xf32>
    %77 = arith.divf %75, %76 : vector<2x32xf32>
    %78 = vector.extract_strided_slice %65 {offsets = [0, 64], sizes = [2, 32], strides = [1, 1]} : vector<2x128xf32> to vector<2x32xf32>
    %79 = math.tanh %78 : vector<2x32xf32>
    %80 = vector.extract_strided_slice %65 {offsets = [0, 96], sizes = [2, 32], strides = [1, 1]} : vector<2x128xf32> to vector<2x32xf32>
    %81 = arith.negf %80 : vector<2x32xf32>
    %82 = math.exp %81 : vector<2x32xf32>
    %cst_23 = arith.constant 1.000000e+00 : f32
    %83 = vector.broadcast %cst_23 : f32 to vector<2x32xf32>
    %84 = arith.addf %83, %82 : vector<2x32xf32>
    %85 = arith.divf %83, %84 : vector<2x32xf32>
    %86 = arith.mulf %77, %58 : vector<2x32xf32>
    %87 = arith.mulf %71, %79 : vector<2x32xf32>
    %88 = arith.addf %86, %87 : vector<2x32xf32>
    %89 = math.tanh %88 : vector<2x32xf32>
    %90 = arith.mulf %85, %89 : vector<2x32xf32>
    %c4 = arith.constant 4 : index
    %c0_24 = arith.constant 0 : index
    %91 = vector.load %arg16[%c4, %c0_24] : memref<32x32xf32, #tpu.memory_space<vmem>>, vector<2x32xf32>
    tpu.vector_store %arg16[%c4, %c0_24], %90 {strides = array<i32>} : memref<32x32xf32, #tpu.memory_space<vmem>>, vector<2x32xf32>,
    %c3 = arith.constant 3 : index
    %c0_25 = arith.constant 0 : index
    %c0_26 = arith.constant 0 : index
    %92 = vector.load %arg0[%c3, %c0_25, %c0_26] : memref<16x2x128xf32, #tpu.memory_space<vmem>>, vector<1x2x128xf32>
    %93 = vector.shape_cast %92 : vector<1x2x128xf32> to vector<2x128xf32>
    %cst_27 = arith.constant dense<0.000000e+00> : vector<2x128xf32>
    %94 = tpu.matmul %90, %1, %cst_27 {dimension_numbers = #tpu.dot_dimension_numbers<[1], [0], [0], [1], [0, 0, 1, 1], [], []>} : vector<2x32xf32>, vector<32x128xf32>, vector<2x128xf32> -> vector<2x128xf32>
    %95 = arith.addf %93, %94 : vector<2x128xf32>
    %96 = vector.extract_strided_slice %95 {offsets = [0, 0], sizes = [2, 32], strides = [1, 1]} : vector<2x128xf32> to vector<2x32xf32>
    %97 = arith.negf %96 : vector<2x32xf32>
    %98 = math.exp %97 : vector<2x32xf32>
    %cst_28 = arith.constant 1.000000e+00 : f32
    %99 = vector.broadcast %cst_28 : f32 to vector<2x32xf32>
    %100 = arith.addf %99, %98 : vector<2x32xf32>
    %101 = arith.divf %99, %100 : vector<2x32xf32>
    %102 = vector.extract_strided_slice %95 {offsets = [0, 32], sizes = [2, 32], strides = [1, 1]} : vector<2x128xf32> to vector<2x32xf32>
    %103 = arith.negf %102 : vector<2x32xf32>
    %104 = math.exp %103 : vector<2x32xf32>
    %cst_29 = arith.constant 1.000000e+00 : f32
    %105 = vector.broadcast %cst_29 : f32 to vector<2x32xf32>
    %106 = arith.addf %105, %104 : vector<2x32xf32>
    %107 = arith.divf %105, %106 : vector<2x32xf32>
    %108 = vector.extract_strided_slice %95 {offsets = [0, 64], sizes = [2, 32], strides = [1, 1]} : vector<2x128xf32> to vector<2x32xf32>
    %109 = math.tanh %108 : vector<2x32xf32>
    %110 = vector.extract_strided_slice %95 {offsets = [0, 96], sizes = [2, 32], strides = [1, 1]} : vector<2x128xf32> to vector<2x32xf32>
    %111 = arith.negf %110 : vector<2x32xf32>
    %112 = math.exp %111 : vector<2x32xf32>
    %cst_30 = arith.constant 1.000000e+00 : f32
    %113 = vector.broadcast %cst_30 : f32 to vector<2x32xf32>
    %114 = arith.addf %113, %112 : vector<2x32xf32>
    %115 = arith.divf %113, %114 : vector<2x32xf32>
    %116 = arith.mulf %107, %88 : vector<2x32xf32>
    %117 = arith.mulf %101, %109 : vector<2x32xf32>
    %118 = arith.addf %116, %117 : vector<2x32xf32>
    %119 = math.tanh %118 : vector<2x32xf32>
    %120 = arith.mulf %115, %119 : vector<2x32xf32>
    %c6 = arith.constant 6 : index
    %c0_31 = arith.constant 0 : index
    %121 = vector.load %arg16[%c6, %c0_31] : memref<32x32xf32, #tpu.memory_space<vmem>>, vector<2x32xf32>
    tpu.vector_store %arg16[%c6, %c0_31], %120 {strides = array<i32>} : memref<32x32xf32, #tpu.memory_space<vmem>>, vector<2x32xf32>,
    %c4_32 = arith.constant 4 : index
    %c0_33 = arith.constant 0 : index
    %c0_34 = arith.constant 0 : index
    %122 = vector.load %arg0[%c4_32, %c0_33, %c0_34] : memref<16x2x128xf32, #tpu.memory_space<vmem>>, vector<1x2x128xf32>
    %123 = vector.shape_cast %122 : vector<1x2x128xf32> to vector<2x128xf32>
    %cst_35 = arith.constant dense<0.000000e+00> : vector<2x128xf32>
    %124 = tpu.matmul %120, %1, %cst_35 {dimension_numbers = #tpu.dot_dimension_numbers<[1], [0], [0], [1], [0, 0, 1, 1], [], []>} : vector<2x32xf32>, vector<32x128xf32>, vector<2x128xf32> -> vector<2x128xf32>
    %125 = arith.addf %123, %124 : vector<2x128xf32>
    %126 = vector.extract_strided_slice %125 {offsets = [0, 0], sizes = [2, 32], strides = [1, 1]} : vector<2x128xf32> to vector<2x32xf32>
    %127 = arith.negf %126 : vector<2x32xf32>
    %128 = math.exp %127 : vector<2x32xf32>
    %cst_36 = arith.constant 1.000000e+00 : f32
    %129 = vector.broadcast %cst_36 : f32 to vector<2x32xf32>
    %130 = arith.addf %129, %128 : vector<2x32xf32>
    %131 = arith.divf %129, %130 : vector<2x32xf32>
    %132 = vector.extract_strided_slice %125 {offsets = [0, 32], sizes = [2, 32], strides = [1, 1]} : vector<2x128xf32> to vector<2x32xf32>
    %133 = arith.negf %132 : vector<2x32xf32>
    %134 = math.exp %133 : vector<2x32xf32>
    %cst_37 = arith.constant 1.000000e+00 : f32
    %135 = vector.broadcast %cst_37 : f32 to vector<2x32xf32>
    %136 = arith.addf %135, %134 : vector<2x32xf32>
    %137 = arith.divf %135, %136 : vector<2x32xf32>
    %138 = vector.extract_strided_slice %125 {offsets = [0, 64], sizes = [2, 32], strides = [1, 1]} : vector<2x128xf32> to vector<2x32xf32>
    %139 = math.tanh %138 : vector<2x32xf32>
    %140 = vector.extract_strided_slice %125 {offsets = [0, 96], sizes = [2, 32], strides = [1, 1]} : vector<2x128xf32> to vector<2x32xf32>
    %141 = arith.negf %140 : vector<2x32xf32>
    %142 = math.exp %141 : vector<2x32xf32>
    %cst_38 = arith.constant 1.000000e+00 : f32
    %143 = vector.broadcast %cst_38 : f32 to vector<2x32xf32>
    %144 = arith.addf %143, %142 : vector<2x32xf32>
    %145 = arith.divf %143, %144 : vector<2x32xf32>
    %146 = arith.mulf %137, %118 : vector<2x32xf32>
    %147 = arith.mulf %131, %139 : vector<2x32xf32>
    %148 = arith.addf %146, %147 : vector<2x32xf32>
    %149 = math.tanh %148 : vector<2x32xf32>
    %150 = arith.mulf %145, %149 : vector<2x32xf32>
    %c8 = arith.constant 8 : index
    %c0_39 = arith.constant 0 : index
    %151 = vector.load %arg16[%c8, %c0_39] : memref<32x32xf32, #tpu.memory_space<vmem>>, vector<2x32xf32>
    tpu.vector_store %arg16[%c8, %c0_39], %150 {strides = array<i32>} : memref<32x32xf32, #tpu.memory_space<vmem>>, vector<2x32xf32>,
    %c5 = arith.constant 5 : index
    %c0_40 = arith.constant 0 : index
    %c0_41 = arith.constant 0 : index
    %152 = vector.load %arg0[%c5, %c0_40, %c0_41] : memref<16x2x128xf32, #tpu.memory_space<vmem>>, vector<1x2x128xf32>
    %153 = vector.shape_cast %152 : vector<1x2x128xf32> to vector<2x128xf32>
    %cst_42 = arith.constant dense<0.000000e+00> : vector<2x128xf32>
    %154 = tpu.matmul %150, %1, %cst_42 {dimension_numbers = #tpu.dot_dimension_numbers<[1], [0], [0], [1], [0, 0, 1, 1], [], []>} : vector<2x32xf32>, vector<32x128xf32>, vector<2x128xf32> -> vector<2x128xf32>
    %155 = arith.addf %153, %154 : vector<2x128xf32>
    %156 = vector.extract_strided_slice %155 {offsets = [0, 0], sizes = [2, 32], strides = [1, 1]} : vector<2x128xf32> to vector<2x32xf32>
    %157 = arith.negf %156 : vector<2x32xf32>
    %158 = math.exp %157 : vector<2x32xf32>
    %cst_43 = arith.constant 1.000000e+00 : f32
    %159 = vector.broadcast %cst_43 : f32 to vector<2x32xf32>
    %160 = arith.addf %159, %158 : vector<2x32xf32>
    %161 = arith.divf %159, %160 : vector<2x32xf32>
    %162 = vector.extract_strided_slice %155 {offsets = [0, 32], sizes = [2, 32], strides = [1, 1]} : vector<2x128xf32> to vector<2x32xf32>
    %163 = arith.negf %162 : vector<2x32xf32>
    %164 = math.exp %163 : vector<2x32xf32>
    %cst_44 = arith.constant 1.000000e+00 : f32
    %165 = vector.broadcast %cst_44 : f32 to vector<2x32xf32>
    %166 = arith.addf %165, %164 : vector<2x32xf32>
    %167 = arith.divf %165, %166 : vector<2x32xf32>
    %168 = vector.extract_strided_slice %155 {offsets = [0, 64], sizes = [2, 32], strides = [1, 1]} : vector<2x128xf32> to vector<2x32xf32>
    %169 = math.tanh %168 : vector<2x32xf32>
    %170 = vector.extract_strided_slice %155 {offsets = [0, 96], sizes = [2, 32], strides = [1, 1]} : vector<2x128xf32> to vector<2x32xf32>
    %171 = arith.negf %170 : vector<2x32xf32>
    %172 = math.exp %171 : vector<2x32xf32>
    %cst_45 = arith.constant 1.000000e+00 : f32
    %173 = vector.broadcast %cst_45 : f32 to vector<2x32xf32>
    %174 = arith.addf %173, %172 : vector<2x32xf32>
    %175 = arith.divf %173, %174 : vector<2x32xf32>
    %176 = arith.mulf %167, %148 : vector<2x32xf32>
    %177 = arith.mulf %161, %169 : vector<2x32xf32>
    %178 = arith.addf %176, %177 : vector<2x32xf32>
    %179 = math.tanh %178 : vector<2x32xf32>
    %180 = arith.mulf %175, %179 : vector<2x32xf32>
    %c10 = arith.constant 10 : index
    %c0_46 = arith.constant 0 : index
    %181 = vector.load %arg16[%c10, %c0_46] : memref<32x32xf32, #tpu.memory_space<vmem>>, vector<2x32xf32>
    tpu.vector_store %arg16[%c10, %c0_46], %180 {strides = array<i32>} : memref<32x32xf32, #tpu.memory_space<vmem>>, vector<2x32xf32>,
    %c6_47 = arith.constant 6 : index
    %c0_48 = arith.constant 0 : index
    %c0_49 = arith.constant 0 : index
    %182 = vector.load %arg0[%c6_47, %c0_48, %c0_49] : memref<16x2x128xf32, #tpu.memory_space<vmem>>, vector<1x2x128xf32>
    %183 = vector.shape_cast %182 : vector<1x2x128xf32> to vector<2x128xf32>
    %cst_50 = arith.constant dense<0.000000e+00> : vector<2x128xf32>
    %184 = tpu.matmul %180, %1, %cst_50 {dimension_numbers = #tpu.dot_dimension_numbers<[1], [0], [0], [1], [0, 0, 1, 1], [], []>} : vector<2x32xf32>, vector<32x128xf32>, vector<2x128xf32> -> vector<2x128xf32>
    %185 = arith.addf %183, %184 : vector<2x128xf32>
    %186 = vector.extract_strided_slice %185 {offsets = [0, 0], sizes = [2, 32], strides = [1, 1]} : vector<2x128xf32> to vector<2x32xf32>
    %187 = arith.negf %186 : vector<2x32xf32>
    %188 = math.exp %187 : vector<2x32xf32>
    %cst_51 = arith.constant 1.000000e+00 : f32
    %189 = vector.broadcast %cst_51 : f32 to vector<2x32xf32>
    %190 = arith.addf %189, %188 : vector<2x32xf32>
    %191 = arith.divf %189, %190 : vector<2x32xf32>
    %192 = vector.extract_strided_slice %185 {offsets = [0, 32], sizes = [2, 32], strides = [1, 1]} : vector<2x128xf32> to vector<2x32xf32>
    %193 = arith.negf %192 : vector<2x32xf32>
    %194 = math.exp %193 : vector<2x32xf32>
    %cst_52 = arith.constant 1.000000e+00 : f32
    %195 = vector.broadcast %cst_52 : f32 to vector<2x32xf32>
    %196 = arith.addf %195, %194 : vector<2x32xf32>
    %197 = arith.divf %195, %196 : vector<2x32xf32>
    %198 = vector.extract_strided_slice %185 {offsets = [0, 64], sizes = [2, 32], strides = [1, 1]} : vector<2x128xf32> to vector<2x32xf32>
    %199 = math.tanh %198 : vector<2x32xf32>
    %200 = vector.extract_strided_slice %185 {offsets = [0, 96], sizes = [2, 32], strides = [1, 1]} : vector<2x128xf32> to vector<2x32xf32>
    %201 = arith.negf %200 : vector<2x32xf32>
    %202 = math.exp %201 : vector<2x32xf32>
    %cst_53 = arith.constant 1.000000e+00 : f32
    %203 = vector.broadcast %cst_53 : f32 to vector<2x32xf32>
    %204 = arith.addf %203, %202 : vector<2x32xf32>
    %205 = arith.divf %203, %204 : vector<2x32xf32>
    %206 = arith.mulf %197, %178 : vector<2x32xf32>
    %207 = arith.mulf %191, %199 : vector<2x32xf32>
    %208 = arith.addf %206, %207 : vector<2x32xf32>
    %209 = math.tanh %208 : vector<2x32xf32>
    %210 = arith.mulf %205, %209 : vector<2x32xf32>
    %c12 = arith.constant 12 : index
    %c0_54 = arith.constant 0 : index
    %211 = vector.load %arg16[%c12, %c0_54] : memref<32x32xf32, #tpu.memory_space<vmem>>, vector<2x32xf32>
    tpu.vector_store %arg16[%c12, %c0_54], %210 {strides = array<i32>} : memref<32x32xf32, #tpu.memory_space<vmem>>, vector<2x32xf32>,
    %c7 = arith.constant 7 : index
    %c0_55 = arith.constant 0 : index
    %c0_56 = arith.constant 0 : index
    %212 = vector.load %arg0[%c7, %c0_55, %c0_56] : memref<16x2x128xf32, #tpu.memory_space<vmem>>, vector<1x2x128xf32>
    %213 = vector.shape_cast %212 : vector<1x2x128xf32> to vector<2x128xf32>
    %cst_57 = arith.constant dense<0.000000e+00> : vector<2x128xf32>
    %214 = tpu.matmul %210, %1, %cst_57 {dimension_numbers = #tpu.dot_dimension_numbers<[1], [0], [0], [1], [0, 0, 1, 1], [], []>} : vector<2x32xf32>, vector<32x128xf32>, vector<2x128xf32> -> vector<2x128xf32>
    %215 = arith.addf %213, %214 : vector<2x128xf32>
    %216 = vector.extract_strided_slice %215 {offsets = [0, 0], sizes = [2, 32], strides = [1, 1]} : vector<2x128xf32> to vector<2x32xf32>
    %217 = arith.negf %216 : vector<2x32xf32>
    %218 = math.exp %217 : vector<2x32xf32>
    %cst_58 = arith.constant 1.000000e+00 : f32
    %219 = vector.broadcast %cst_58 : f32 to vector<2x32xf32>
    %220 = arith.addf %219, %218 : vector<2x32xf32>
    %221 = arith.divf %219, %220 : vector<2x32xf32>
    %222 = vector.extract_strided_slice %215 {offsets = [0, 32], sizes = [2, 32], strides = [1, 1]} : vector<2x128xf32> to vector<2x32xf32>
    %223 = arith.negf %222 : vector<2x32xf32>
    %224 = math.exp %223 : vector<2x32xf32>
    %cst_59 = arith.constant 1.000000e+00 : f32
    %225 = vector.broadcast %cst_59 : f32 to vector<2x32xf32>
    %226 = arith.addf %225, %224 : vector<2x32xf32>
    %227 = arith.divf %225, %226 : vector<2x32xf32>
    %228 = vector.extract_strided_slice %215 {offsets = [0, 64], sizes = [2, 32], strides = [1, 1]} : vector<2x128xf32> to vector<2x32xf32>
    %229 = math.tanh %228 : vector<2x32xf32>
    %230 = vector.extract_strided_slice %215 {offsets = [0, 96], sizes = [2, 32], strides = [1, 1]} : vector<2x128xf32> to vector<2x32xf32>
    %231 = arith.negf %230 : vector<2x32xf32>
    %232 = math.exp %231 : vector<2x32xf32>
    %cst_60 = arith.constant 1.000000e+00 : f32
    %233 = vector.broadcast %cst_60 : f32 to vector<2x32xf32>
    %234 = arith.addf %233, %232 : vector<2x32xf32>
    %235 = arith.divf %233, %234 : vector<2x32xf32>
    %236 = arith.mulf %227, %208 : vector<2x32xf32>
    %237 = arith.mulf %221, %229 : vector<2x32xf32>
    %238 = arith.addf %236, %237 : vector<2x32xf32>
    %239 = math.tanh %238 : vector<2x32xf32>
    %240 = arith.mulf %235, %239 : vector<2x32xf32>
    %c14 = arith.constant 14 : index
    %c0_61 = arith.constant 0 : index
    %241 = vector.load %arg16[%c14, %c0_61] : memref<32x32xf32, #tpu.memory_space<vmem>>, vector<2x32xf32>
    tpu.vector_store %arg16[%c14, %c0_61], %240 {strides = array<i32>} : memref<32x32xf32, #tpu.memory_space<vmem>>, vector<2x32xf32>,
    %c8_62 = arith.constant 8 : index
    %c0_63 = arith.constant 0 : index
    %c0_64 = arith.constant 0 : index
    %242 = vector.load %arg0[%c8_62, %c0_63, %c0_64] : memref<16x2x128xf32, #tpu.memory_space<vmem>>, vector<1x2x128xf32>
    %243 = vector.shape_cast %242 : vector<1x2x128xf32> to vector<2x128xf32>
    %cst_65 = arith.constant dense<0.000000e+00> : vector<2x128xf32>
    %244 = tpu.matmul %240, %1, %cst_65 {dimension_numbers = #tpu.dot_dimension_numbers<[1], [0], [0], [1], [0, 0, 1, 1], [], []>} : vector<2x32xf32>, vector<32x128xf32>, vector<2x128xf32> -> vector<2x128xf32>
    %245 = arith.addf %243, %244 : vector<2x128xf32>
    %246 = vector.extract_strided_slice %245 {offsets = [0, 0], sizes = [2, 32], strides = [1, 1]} : vector<2x128xf32> to vector<2x32xf32>
    %247 = arith.negf %246 : vector<2x32xf32>
    %248 = math.exp %247 : vector<2x32xf32>
    %cst_66 = arith.constant 1.000000e+00 : f32
    %249 = vector.broadcast %cst_66 : f32 to vector<2x32xf32>
    %250 = arith.addf %249, %248 : vector<2x32xf32>
    %251 = arith.divf %249, %250 : vector<2x32xf32>
    %252 = vector.extract_strided_slice %245 {offsets = [0, 32], sizes = [2, 32], strides = [1, 1]} : vector<2x128xf32> to vector<2x32xf32>
    %253 = arith.negf %252 : vector<2x32xf32>
    %254 = math.exp %253 : vector<2x32xf32>
    %cst_67 = arith.constant 1.000000e+00 : f32
    %255 = vector.broadcast %cst_67 : f32 to vector<2x32xf32>
    %256 = arith.addf %255, %254 : vector<2x32xf32>
    %257 = arith.divf %255, %256 : vector<2x32xf32>
    %258 = vector.extract_strided_slice %245 {offsets = [0, 64], sizes = [2, 32], strides = [1, 1]} : vector<2x128xf32> to vector<2x32xf32>
    %259 = math.tanh %258 : vector<2x32xf32>
    %260 = vector.extract_strided_slice %245 {offsets = [0, 96], sizes = [2, 32], strides = [1, 1]} : vector<2x128xf32> to vector<2x32xf32>
    %261 = arith.negf %260 : vector<2x32xf32>
    %262 = math.exp %261 : vector<2x32xf32>
    %cst_68 = arith.constant 1.000000e+00 : f32
    %263 = vector.broadcast %cst_68 : f32 to vector<2x32xf32>
    %264 = arith.addf %263, %262 : vector<2x32xf32>
    %265 = arith.divf %263, %264 : vector<2x32xf32>
    %266 = arith.mulf %257, %238 : vector<2x32xf32>
    %267 = arith.mulf %251, %259 : vector<2x32xf32>
    %268 = arith.addf %266, %267 : vector<2x32xf32>
    %269 = math.tanh %268 : vector<2x32xf32>
    %270 = arith.mulf %265, %269 : vector<2x32xf32>
    %c16 = arith.constant 16 : index
    %c0_69 = arith.constant 0 : index
    %271 = vector.load %arg16[%c16, %c0_69] : memref<32x32xf32, #tpu.memory_space<vmem>>, vector<2x32xf32>
    tpu.vector_store %arg16[%c16, %c0_69], %270 {strides = array<i32>} : memref<32x32xf32, #tpu.memory_space<vmem>>, vector<2x32xf32>,
    %c9 = arith.constant 9 : index
    %c0_70 = arith.constant 0 : index
    %c0_71 = arith.constant 0 : index
    %272 = vector.load %arg0[%c9, %c0_70, %c0_71] : memref<16x2x128xf32, #tpu.memory_space<vmem>>, vector<1x2x128xf32>
    %273 = vector.shape_cast %272 : vector<1x2x128xf32> to vector<2x128xf32>
    %cst_72 = arith.constant dense<0.000000e+00> : vector<2x128xf32>
    %274 = tpu.matmul %270, %1, %cst_72 {dimension_numbers = #tpu.dot_dimension_numbers<[1], [0], [0], [1], [0, 0, 1, 1], [], []>} : vector<2x32xf32>, vector<32x128xf32>, vector<2x128xf32> -> vector<2x128xf32>
    %275 = arith.addf %273, %274 : vector<2x128xf32>
    %276 = vector.extract_strided_slice %275 {offsets = [0, 0], sizes = [2, 32], strides = [1, 1]} : vector<2x128xf32> to vector<2x32xf32>
    %277 = arith.negf %276 : vector<2x32xf32>
    %278 = math.exp %277 : vector<2x32xf32>
    %cst_73 = arith.constant 1.000000e+00 : f32
    %279 = vector.broadcast %cst_73 : f32 to vector<2x32xf32>
    %280 = arith.addf %279, %278 : vector<2x32xf32>
    %281 = arith.divf %279, %280 : vector<2x32xf32>
    %282 = vector.extract_strided_slice %275 {offsets = [0, 32], sizes = [2, 32], strides = [1, 1]} : vector<2x128xf32> to vector<2x32xf32>
    %283 = arith.negf %282 : vector<2x32xf32>
    %284 = math.exp %283 : vector<2x32xf32>
    %cst_74 = arith.constant 1.000000e+00 : f32
    %285 = vector.broadcast %cst_74 : f32 to vector<2x32xf32>
    %286 = arith.addf %285, %284 : vector<2x32xf32>
    %287 = arith.divf %285, %286 : vector<2x32xf32>
    %288 = vector.extract_strided_slice %275 {offsets = [0, 64], sizes = [2, 32], strides = [1, 1]} : vector<2x128xf32> to vector<2x32xf32>
    %289 = math.tanh %288 : vector<2x32xf32>
    %290 = vector.extract_strided_slice %275 {offsets = [0, 96], sizes = [2, 32], strides = [1, 1]} : vector<2x128xf32> to vector<2x32xf32>
    %291 = arith.negf %290 : vector<2x32xf32>
    %292 = math.exp %291 : vector<2x32xf32>
    %cst_75 = arith.constant 1.000000e+00 : f32
    %293 = vector.broadcast %cst_75 : f32 to vector<2x32xf32>
    %294 = arith.addf %293, %292 : vector<2x32xf32>
    %295 = arith.divf %293, %294 : vector<2x32xf32>
    %296 = arith.mulf %287, %268 : vector<2x32xf32>
    %297 = arith.mulf %281, %289 : vector<2x32xf32>
    %298 = arith.addf %296, %297 : vector<2x32xf32>
    %299 = math.tanh %298 : vector<2x32xf32>
    %300 = arith.mulf %295, %299 : vector<2x32xf32>
    %c18 = arith.constant 18 : index
    %c0_76 = arith.constant 0 : index
    %301 = vector.load %arg16[%c18, %c0_76] : memref<32x32xf32, #tpu.memory_space<vmem>>, vector<2x32xf32>
    tpu.vector_store %arg16[%c18, %c0_76], %300 {strides = array<i32>} : memref<32x32xf32, #tpu.memory_space<vmem>>, vector<2x32xf32>,
    %c10_77 = arith.constant 10 : index
    %c0_78 = arith.constant 0 : index
    %c0_79 = arith.constant 0 : index
    %302 = vector.load %arg0[%c10_77, %c0_78, %c0_79] : memref<16x2x128xf32, #tpu.memory_space<vmem>>, vector<1x2x128xf32>
    %303 = vector.shape_cast %302 : vector<1x2x128xf32> to vector<2x128xf32>
    %cst_80 = arith.constant dense<0.000000e+00> : vector<2x128xf32>
    %304 = tpu.matmul %300, %1, %cst_80 {dimension_numbers = #tpu.dot_dimension_numbers<[1], [0], [0], [1], [0, 0, 1, 1], [], []>} : vector<2x32xf32>, vector<32x128xf32>, vector<2x128xf32> -> vector<2x128xf32>
    %305 = arith.addf %303, %304 : vector<2x128xf32>
    %306 = vector.extract_strided_slice %305 {offsets = [0, 0], sizes = [2, 32], strides = [1, 1]} : vector<2x128xf32> to vector<2x32xf32>
    %307 = arith.negf %306 : vector<2x32xf32>
    %308 = math.exp %307 : vector<2x32xf32>
    %cst_81 = arith.constant 1.000000e+00 : f32
    %309 = vector.broadcast %cst_81 : f32 to vector<2x32xf32>
    %310 = arith.addf %309, %308 : vector<2x32xf32>
    %311 = arith.divf %309, %310 : vector<2x32xf32>
    %312 = vector.extract_strided_slice %305 {offsets = [0, 32], sizes = [2, 32], strides = [1, 1]} : vector<2x128xf32> to vector<2x32xf32>
    %313 = arith.negf %312 : vector<2x32xf32>
    %314 = math.exp %313 : vector<2x32xf32>
    %cst_82 = arith.constant 1.000000e+00 : f32
    %315 = vector.broadcast %cst_82 : f32 to vector<2x32xf32>
    %316 = arith.addf %315, %314 : vector<2x32xf32>
    %317 = arith.divf %315, %316 : vector<2x32xf32>
    %318 = vector.extract_strided_slice %305 {offsets = [0, 64], sizes = [2, 32], strides = [1, 1]} : vector<2x128xf32> to vector<2x32xf32>
    %319 = math.tanh %318 : vector<2x32xf32>
    %320 = vector.extract_strided_slice %305 {offsets = [0, 96], sizes = [2, 32], strides = [1, 1]} : vector<2x128xf32> to vector<2x32xf32>
    %321 = arith.negf %320 : vector<2x32xf32>
    %322 = math.exp %321 : vector<2x32xf32>
    %cst_83 = arith.constant 1.000000e+00 : f32
    %323 = vector.broadcast %cst_83 : f32 to vector<2x32xf32>
    %324 = arith.addf %323, %322 : vector<2x32xf32>
    %325 = arith.divf %323, %324 : vector<2x32xf32>
    %326 = arith.mulf %317, %298 : vector<2x32xf32>
    %327 = arith.mulf %311, %319 : vector<2x32xf32>
    %328 = arith.addf %326, %327 : vector<2x32xf32>
    %329 = math.tanh %328 : vector<2x32xf32>
    %330 = arith.mulf %325, %329 : vector<2x32xf32>
    %c20 = arith.constant 20 : index
    %c0_84 = arith.constant 0 : index
    %331 = vector.load %arg16[%c20, %c0_84] : memref<32x32xf32, #tpu.memory_space<vmem>>, vector<2x32xf32>
    tpu.vector_store %arg16[%c20, %c0_84], %330 {strides = array<i32>} : memref<32x32xf32, #tpu.memory_space<vmem>>, vector<2x32xf32>,
    %c11 = arith.constant 11 : index
    %c0_85 = arith.constant 0 : index
    %c0_86 = arith.constant 0 : index
    %332 = vector.load %arg0[%c11, %c0_85, %c0_86] : memref<16x2x128xf32, #tpu.memory_space<vmem>>, vector<1x2x128xf32>
    %333 = vector.shape_cast %332 : vector<1x2x128xf32> to vector<2x128xf32>
    %cst_87 = arith.constant dense<0.000000e+00> : vector<2x128xf32>
    %334 = tpu.matmul %330, %1, %cst_87 {dimension_numbers = #tpu.dot_dimension_numbers<[1], [0], [0], [1], [0, 0, 1, 1], [], []>} : vector<2x32xf32>, vector<32x128xf32>, vector<2x128xf32> -> vector<2x128xf32>
    %335 = arith.addf %333, %334 : vector<2x128xf32>
    %336 = vector.extract_strided_slice %335 {offsets = [0, 0], sizes = [2, 32], strides = [1, 1]} : vector<2x128xf32> to vector<2x32xf32>
    %337 = arith.negf %336 : vector<2x32xf32>
    %338 = math.exp %337 : vector<2x32xf32>
    %cst_88 = arith.constant 1.000000e+00 : f32
    %339 = vector.broadcast %cst_88 : f32 to vector<2x32xf32>
    %340 = arith.addf %339, %338 : vector<2x32xf32>
    %341 = arith.divf %339, %340 : vector<2x32xf32>
    %342 = vector.extract_strided_slice %335 {offsets = [0, 32], sizes = [2, 32], strides = [1, 1]} : vector<2x128xf32> to vector<2x32xf32>
    %343 = arith.negf %342 : vector<2x32xf32>
    %344 = math.exp %343 : vector<2x32xf32>
    %cst_89 = arith.constant 1.000000e+00 : f32
    %345 = vector.broadcast %cst_89 : f32 to vector<2x32xf32>
    %346 = arith.addf %345, %344 : vector<2x32xf32>
    %347 = arith.divf %345, %346 : vector<2x32xf32>
    %348 = vector.extract_strided_slice %335 {offsets = [0, 64], sizes = [2, 32], strides = [1, 1]} : vector<2x128xf32> to vector<2x32xf32>
    %349 = math.tanh %348 : vector<2x32xf32>
    %350 = vector.extract_strided_slice %335 {offsets = [0, 96], sizes = [2, 32], strides = [1, 1]} : vector<2x128xf32> to vector<2x32xf32>
    %351 = arith.negf %350 : vector<2x32xf32>
    %352 = math.exp %351 : vector<2x32xf32>
    %cst_90 = arith.constant 1.000000e+00 : f32
    %353 = vector.broadcast %cst_90 : f32 to vector<2x32xf32>
    %354 = arith.addf %353, %352 : vector<2x32xf32>
    %355 = arith.divf %353, %354 : vector<2x32xf32>
    %356 = arith.mulf %347, %328 : vector<2x32xf32>
    %357 = arith.mulf %341, %349 : vector<2x32xf32>
    %358 = arith.addf %356, %357 : vector<2x32xf32>
    %359 = math.tanh %358 : vector<2x32xf32>
    %360 = arith.mulf %355, %359 : vector<2x32xf32>
    %c22 = arith.constant 22 : index
    %c0_91 = arith.constant 0 : index
    %361 = vector.load %arg16[%c22, %c0_91] : memref<32x32xf32, #tpu.memory_space<vmem>>, vector<2x32xf32>
    tpu.vector_store %arg16[%c22, %c0_91], %360 {strides = array<i32>} : memref<32x32xf32, #tpu.memory_space<vmem>>, vector<2x32xf32>,
    %c12_92 = arith.constant 12 : index
    %c0_93 = arith.constant 0 : index
    %c0_94 = arith.constant 0 : index
    %362 = vector.load %arg0[%c12_92, %c0_93, %c0_94] : memref<16x2x128xf32, #tpu.memory_space<vmem>>, vector<1x2x128xf32>
    %363 = vector.shape_cast %362 : vector<1x2x128xf32> to vector<2x128xf32>
    %cst_95 = arith.constant dense<0.000000e+00> : vector<2x128xf32>
    %364 = tpu.matmul %360, %1, %cst_95 {dimension_numbers = #tpu.dot_dimension_numbers<[1], [0], [0], [1], [0, 0, 1, 1], [], []>} : vector<2x32xf32>, vector<32x128xf32>, vector<2x128xf32> -> vector<2x128xf32>
    %365 = arith.addf %363, %364 : vector<2x128xf32>
    %366 = vector.extract_strided_slice %365 {offsets = [0, 0], sizes = [2, 32], strides = [1, 1]} : vector<2x128xf32> to vector<2x32xf32>
    %367 = arith.negf %366 : vector<2x32xf32>
    %368 = math.exp %367 : vector<2x32xf32>
    %cst_96 = arith.constant 1.000000e+00 : f32
    %369 = vector.broadcast %cst_96 : f32 to vector<2x32xf32>
    %370 = arith.addf %369, %368 : vector<2x32xf32>
    %371 = arith.divf %369, %370 : vector<2x32xf32>
    %372 = vector.extract_strided_slice %365 {offsets = [0, 32], sizes = [2, 32], strides = [1, 1]} : vector<2x128xf32> to vector<2x32xf32>
    %373 = arith.negf %372 : vector<2x32xf32>
    %374 = math.exp %373 : vector<2x32xf32>
    %cst_97 = arith.constant 1.000000e+00 : f32
    %375 = vector.broadcast %cst_97 : f32 to vector<2x32xf32>
    %376 = arith.addf %375, %374 : vector<2x32xf32>
    %377 = arith.divf %375, %376 : vector<2x32xf32>
    %378 = vector.extract_strided_slice %365 {offsets = [0, 64], sizes = [2, 32], strides = [1, 1]} : vector<2x128xf32> to vector<2x32xf32>
    %379 = math.tanh %378 : vector<2x32xf32>
    %380 = vector.extract_strided_slice %365 {offsets = [0, 96], sizes = [2, 32], strides = [1, 1]} : vector<2x128xf32> to vector<2x32xf32>
    %381 = arith.negf %380 : vector<2x32xf32>
    %382 = math.exp %381 : vector<2x32xf32>
    %cst_98 = arith.constant 1.000000e+00 : f32
    %383 = vector.broadcast %cst_98 : f32 to vector<2x32xf32>
    %384 = arith.addf %383, %382 : vector<2x32xf32>
    %385 = arith.divf %383, %384 : vector<2x32xf32>
    %386 = arith.mulf %377, %358 : vector<2x32xf32>
    %387 = arith.mulf %371, %379 : vector<2x32xf32>
    %388 = arith.addf %386, %387 : vector<2x32xf32>
    %389 = math.tanh %388 : vector<2x32xf32>
    %390 = arith.mulf %385, %389 : vector<2x32xf32>
    %c24 = arith.constant 24 : index
    %c0_99 = arith.constant 0 : index
    %391 = vector.load %arg16[%c24, %c0_99] : memref<32x32xf32, #tpu.memory_space<vmem>>, vector<2x32xf32>
    tpu.vector_store %arg16[%c24, %c0_99], %390 {strides = array<i32>} : memref<32x32xf32, #tpu.memory_space<vmem>>, vector<2x32xf32>,
    %c13 = arith.constant 13 : index
    %c0_100 = arith.constant 0 : index
    %c0_101 = arith.constant 0 : index
    %392 = vector.load %arg0[%c13, %c0_100, %c0_101] : memref<16x2x128xf32, #tpu.memory_space<vmem>>, vector<1x2x128xf32>
    %393 = vector.shape_cast %392 : vector<1x2x128xf32> to vector<2x128xf32>
    %cst_102 = arith.constant dense<0.000000e+00> : vector<2x128xf32>
    %394 = tpu.matmul %390, %1, %cst_102 {dimension_numbers = #tpu.dot_dimension_numbers<[1], [0], [0], [1], [0, 0, 1, 1], [], []>} : vector<2x32xf32>, vector<32x128xf32>, vector<2x128xf32> -> vector<2x128xf32>
    %395 = arith.addf %393, %394 : vector<2x128xf32>
    %396 = vector.extract_strided_slice %395 {offsets = [0, 0], sizes = [2, 32], strides = [1, 1]} : vector<2x128xf32> to vector<2x32xf32>
    %397 = arith.negf %396 : vector<2x32xf32>
    %398 = math.exp %397 : vector<2x32xf32>
    %cst_103 = arith.constant 1.000000e+00 : f32
    %399 = vector.broadcast %cst_103 : f32 to vector<2x32xf32>
    %400 = arith.addf %399, %398 : vector<2x32xf32>
    %401 = arith.divf %399, %400 : vector<2x32xf32>
    %402 = vector.extract_strided_slice %395 {offsets = [0, 32], sizes = [2, 32], strides = [1, 1]} : vector<2x128xf32> to vector<2x32xf32>
    %403 = arith.negf %402 : vector<2x32xf32>
    %404 = math.exp %403 : vector<2x32xf32>
    %cst_104 = arith.constant 1.000000e+00 : f32
    %405 = vector.broadcast %cst_104 : f32 to vector<2x32xf32>
    %406 = arith.addf %405, %404 : vector<2x32xf32>
    %407 = arith.divf %405, %406 : vector<2x32xf32>
    %408 = vector.extract_strided_slice %395 {offsets = [0, 64], sizes = [2, 32], strides = [1, 1]} : vector<2x128xf32> to vector<2x32xf32>
    %409 = math.tanh %408 : vector<2x32xf32>
    %410 = vector.extract_strided_slice %395 {offsets = [0, 96], sizes = [2, 32], strides = [1, 1]} : vector<2x128xf32> to vector<2x32xf32>
    %411 = arith.negf %410 : vector<2x32xf32>
    %412 = math.exp %411 : vector<2x32xf32>
    %cst_105 = arith.constant 1.000000e+00 : f32
    %413 = vector.broadcast %cst_105 : f32 to vector<2x32xf32>
    %414 = arith.addf %413, %412 : vector<2x32xf32>
    %415 = arith.divf %413, %414 : vector<2x32xf32>
    %416 = arith.mulf %407, %388 : vector<2x32xf32>
    %417 = arith.mulf %401, %409 : vector<2x32xf32>
    %418 = arith.addf %416, %417 : vector<2x32xf32>
    %419 = math.tanh %418 : vector<2x32xf32>
    %420 = arith.mulf %415, %419 : vector<2x32xf32>
    %c26 = arith.constant 26 : index
    %c0_106 = arith.constant 0 : index
    %421 = vector.load %arg16[%c26, %c0_106] : memref<32x32xf32, #tpu.memory_space<vmem>>, vector<2x32xf32>
    tpu.vector_store %arg16[%c26, %c0_106], %420 {strides = array<i32>} : memref<32x32xf32, #tpu.memory_space<vmem>>, vector<2x32xf32>,
    %c14_107 = arith.constant 14 : index
    %c0_108 = arith.constant 0 : index
    %c0_109 = arith.constant 0 : index
    %422 = vector.load %arg0[%c14_107, %c0_108, %c0_109] : memref<16x2x128xf32, #tpu.memory_space<vmem>>, vector<1x2x128xf32>
    %423 = vector.shape_cast %422 : vector<1x2x128xf32> to vector<2x128xf32>
    %cst_110 = arith.constant dense<0.000000e+00> : vector<2x128xf32>
    %424 = tpu.matmul %420, %1, %cst_110 {dimension_numbers = #tpu.dot_dimension_numbers<[1], [0], [0], [1], [0, 0, 1, 1], [], []>} : vector<2x32xf32>, vector<32x128xf32>, vector<2x128xf32> -> vector<2x128xf32>
    %425 = arith.addf %423, %424 : vector<2x128xf32>
    %426 = vector.extract_strided_slice %425 {offsets = [0, 0], sizes = [2, 32], strides = [1, 1]} : vector<2x128xf32> to vector<2x32xf32>
    %427 = arith.negf %426 : vector<2x32xf32>
    %428 = math.exp %427 : vector<2x32xf32>
    %cst_111 = arith.constant 1.000000e+00 : f32
    %429 = vector.broadcast %cst_111 : f32 to vector<2x32xf32>
    %430 = arith.addf %429, %428 : vector<2x32xf32>
    %431 = arith.divf %429, %430 : vector<2x32xf32>
    %432 = vector.extract_strided_slice %425 {offsets = [0, 32], sizes = [2, 32], strides = [1, 1]} : vector<2x128xf32> to vector<2x32xf32>
    %433 = arith.negf %432 : vector<2x32xf32>
    %434 = math.exp %433 : vector<2x32xf32>
    %cst_112 = arith.constant 1.000000e+00 : f32
    %435 = vector.broadcast %cst_112 : f32 to vector<2x32xf32>
    %436 = arith.addf %435, %434 : vector<2x32xf32>
    %437 = arith.divf %435, %436 : vector<2x32xf32>
    %438 = vector.extract_strided_slice %425 {offsets = [0, 64], sizes = [2, 32], strides = [1, 1]} : vector<2x128xf32> to vector<2x32xf32>
    %439 = math.tanh %438 : vector<2x32xf32>
    %440 = vector.extract_strided_slice %425 {offsets = [0, 96], sizes = [2, 32], strides = [1, 1]} : vector<2x128xf32> to vector<2x32xf32>
    %441 = arith.negf %440 : vector<2x32xf32>
    %442 = math.exp %441 : vector<2x32xf32>
    %cst_113 = arith.constant 1.000000e+00 : f32
    %443 = vector.broadcast %cst_113 : f32 to vector<2x32xf32>
    %444 = arith.addf %443, %442 : vector<2x32xf32>
    %445 = arith.divf %443, %444 : vector<2x32xf32>
    %446 = arith.mulf %437, %418 : vector<2x32xf32>
    %447 = arith.mulf %431, %439 : vector<2x32xf32>
    %448 = arith.addf %446, %447 : vector<2x32xf32>
    %449 = math.tanh %448 : vector<2x32xf32>
    %450 = arith.mulf %445, %449 : vector<2x32xf32>
    %c28 = arith.constant 28 : index
    %c0_114 = arith.constant 0 : index
    %451 = vector.load %arg16[%c28, %c0_114] : memref<32x32xf32, #tpu.memory_space<vmem>>, vector<2x32xf32>
    tpu.vector_store %arg16[%c28, %c0_114], %450 {strides = array<i32>} : memref<32x32xf32, #tpu.memory_space<vmem>>, vector<2x32xf32>,
    %c15 = arith.constant 15 : index
    %c0_115 = arith.constant 0 : index
    %c0_116 = arith.constant 0 : index
    %452 = vector.load %arg0[%c15, %c0_115, %c0_116] : memref<16x2x128xf32, #tpu.memory_space<vmem>>, vector<1x2x128xf32>
    %453 = vector.shape_cast %452 : vector<1x2x128xf32> to vector<2x128xf32>
    %cst_117 = arith.constant dense<0.000000e+00> : vector<2x128xf32>
    %454 = tpu.matmul %450, %1, %cst_117 {dimension_numbers = #tpu.dot_dimension_numbers<[1], [0], [0], [1], [0, 0, 1, 1], [], []>} : vector<2x32xf32>, vector<32x128xf32>, vector<2x128xf32> -> vector<2x128xf32>
    %455 = arith.addf %453, %454 : vector<2x128xf32>
    %456 = vector.extract_strided_slice %455 {offsets = [0, 0], sizes = [2, 32], strides = [1, 1]} : vector<2x128xf32> to vector<2x32xf32>
    %457 = arith.negf %456 : vector<2x32xf32>
    %458 = math.exp %457 : vector<2x32xf32>
    %cst_118 = arith.constant 1.000000e+00 : f32
    %459 = vector.broadcast %cst_118 : f32 to vector<2x32xf32>
    %460 = arith.addf %459, %458 : vector<2x32xf32>
    %461 = arith.divf %459, %460 : vector<2x32xf32>
    %462 = vector.extract_strided_slice %455 {offsets = [0, 32], sizes = [2, 32], strides = [1, 1]} : vector<2x128xf32> to vector<2x32xf32>
    %463 = arith.negf %462 : vector<2x32xf32>
    %464 = math.exp %463 : vector<2x32xf32>
    %cst_119 = arith.constant 1.000000e+00 : f32
    %465 = vector.broadcast %cst_119 : f32 to vector<2x32xf32>
    %466 = arith.addf %465, %464 : vector<2x32xf32>
    %467 = arith.divf %465, %466 : vector<2x32xf32>
    %468 = vector.extract_strided_slice %455 {offsets = [0, 64], sizes = [2, 32], strides = [1, 1]} : vector<2x128xf32> to vector<2x32xf32>
    %469 = math.tanh %468 : vector<2x32xf32>
    %470 = vector.extract_strided_slice %455 {offsets = [0, 96], sizes = [2, 32], strides = [1, 1]} : vector<2x128xf32> to vector<2x32xf32>
    %471 = arith.negf %470 : vector<2x32xf32>
    %472 = math.exp %471 : vector<2x32xf32>
    %cst_120 = arith.constant 1.000000e+00 : f32
    %473 = vector.broadcast %cst_120 : f32 to vector<2x32xf32>
    %474 = arith.addf %473, %472 : vector<2x32xf32>
    %475 = arith.divf %473, %474 : vector<2x32xf32>
    %476 = arith.mulf %467, %448 : vector<2x32xf32>
    %477 = arith.mulf %461, %469 : vector<2x32xf32>
    %478 = arith.addf %476, %477 : vector<2x32xf32>
    %479 = math.tanh %478 : vector<2x32xf32>
    %480 = arith.mulf %475, %479 : vector<2x32xf32>
    %c30 = arith.constant 30 : index
    %c0_121 = arith.constant 0 : index
    %481 = vector.load %arg16[%c30, %c0_121] : memref<32x32xf32, #tpu.memory_space<vmem>>, vector<2x32xf32>
    tpu.vector_store %arg16[%c30, %c0_121], %480 {strides = array<i32>} : memref<32x32xf32, #tpu.memory_space<vmem>>, vector<2x32xf32>,
    %c0_122 = arith.constant 0 : index
    %c0_123 = arith.constant 0 : index
    %482 = vector.load %arg16[%c0_122, %c0_123] : memref<32x32xf32, #tpu.memory_space<vmem>>, vector<32x32xf32>
    %c0_124 = arith.constant 0 : index
    %c0_125 = arith.constant 0 : index
    %483 = vector.load %arg3[%c0_124, %c0_125] : memref<32x128xf32, #tpu.memory_space<vmem>>, vector<32x128xf32>
    %cst_126 = arith.constant dense<0.000000e+00> : vector<32x128xf32>
    %484 = tpu.matmul %482, %483, %cst_126 {dimension_numbers = #tpu.dot_dimension_numbers<[1], [0], [0], [1], [0, 0, 1, 1], [], []>} : vector<32x32xf32>, vector<32x128xf32>, vector<32x128xf32> -> vector<32x128xf32>
    %c0_127 = arith.constant 0 : index
    %c0_128 = arith.constant 0 : index
    %485 = vector.load %arg5[%c0_127, %c0_128] : memref<1x128xf32, #tpu.memory_space<vmem>>, vector<1x128xf32>
    %486 = vector.broadcast %485 : vector<1x128xf32> to vector<32x128xf32>
    %487 = arith.addf %484, %486 : vector<32x128xf32>
    %c0_129 = arith.constant 0 : index
    %c0_130 = arith.constant 0 : index
    %488 = vector.load %arg4[%c0_129, %c0_130] : memref<32x128xf32, #tpu.memory_space<vmem>>, vector<32x128xf32>
    %489 = vector.extract_strided_slice %487 {offsets = [0, 0], sizes = [2, 128], strides = [1, 1]} : vector<32x128xf32> to vector<2x128xf32>
    %cst_131 = arith.constant dense<0.000000e+00> : vector<2x128xf32>
    %490 = tpu.matmul %0, %488, %cst_131 {dimension_numbers = #tpu.dot_dimension_numbers<[1], [0], [0], [1], [0, 0, 1, 1], [], []>} : vector<2x32xf32>, vector<32x128xf32>, vector<2x128xf32> -> vector<2x128xf32>
    %491 = arith.addf %489, %490 : vector<2x128xf32>
    %492 = vector.extract_strided_slice %491 {offsets = [0, 0], sizes = [2, 32], strides = [1, 1]} : vector<2x128xf32> to vector<2x32xf32>
    %493 = arith.negf %492 : vector<2x32xf32>
    %494 = math.exp %493 : vector<2x32xf32>
    %cst_132 = arith.constant 1.000000e+00 : f32
    %495 = vector.broadcast %cst_132 : f32 to vector<2x32xf32>
    %496 = arith.addf %495, %494 : vector<2x32xf32>
    %497 = arith.divf %495, %496 : vector<2x32xf32>
    %498 = vector.extract_strided_slice %491 {offsets = [0, 32], sizes = [2, 32], strides = [1, 1]} : vector<2x128xf32> to vector<2x32xf32>
    %499 = arith.negf %498 : vector<2x32xf32>
    %500 = math.exp %499 : vector<2x32xf32>
    %cst_133 = arith.constant 1.000000e+00 : f32
    %501 = vector.broadcast %cst_133 : f32 to vector<2x32xf32>
    %502 = arith.addf %501, %500 : vector<2x32xf32>
    %503 = arith.divf %501, %502 : vector<2x32xf32>
    %504 = vector.extract_strided_slice %491 {offsets = [0, 64], sizes = [2, 32], strides = [1, 1]} : vector<2x128xf32> to vector<2x32xf32>
    %505 = math.tanh %504 : vector<2x32xf32>
    %506 = vector.extract_strided_slice %491 {offsets = [0, 96], sizes = [2, 32], strides = [1, 1]} : vector<2x128xf32> to vector<2x32xf32>
    %507 = arith.negf %506 : vector<2x32xf32>
    %508 = math.exp %507 : vector<2x32xf32>
    %cst_134 = arith.constant 1.000000e+00 : f32
    %509 = vector.broadcast %cst_134 : f32 to vector<2x32xf32>
    %510 = arith.addf %509, %508 : vector<2x32xf32>
    %511 = arith.divf %509, %510 : vector<2x32xf32>
    %512 = arith.mulf %503, %0 : vector<2x32xf32>
    %513 = arith.mulf %497, %505 : vector<2x32xf32>
    %514 = arith.addf %512, %513 : vector<2x32xf32>
    %515 = math.tanh %514 : vector<2x32xf32>
    %516 = arith.mulf %511, %515 : vector<2x32xf32>
    %517 = vector.extract_strided_slice %516 {offsets = [0, 0], sizes = [1, 32], strides = [1, 1]} : vector<2x32xf32> to vector<1x32xf32>
    %c0_135 = arith.constant 0 : index
    %c0_136 = arith.constant 0 : index
    %c0_137 = arith.constant 0 : index
    %518 = vector.load %arg18[%c0_135, %c0_136, %c0_137] : memref<2x16x32xf32, #tpu.memory_space<vmem>>, vector<1x1x32xf32>
    %519 = vector.shape_cast %518 : vector<1x1x32xf32> to vector<1x32xf32>
    %520 = vector.shape_cast %517 : vector<1x32xf32> to vector<1x1x32xf32>
    tpu.vector_store %arg18[%c0_135, %c0_136, %c0_137], %520 {strides = array<i32>} : memref<2x16x32xf32, #tpu.memory_space<vmem>>, vector<1x1x32xf32>,
    %521 = vector.extract_strided_slice %516 {offsets = [1, 0], sizes = [1, 32], strides = [1, 1]} : vector<2x32xf32> to vector<1x32xf32>
    %c1_138 = arith.constant 1 : index
    %c0_139 = arith.constant 0 : index
    %c0_140 = arith.constant 0 : index
    %522 = vector.load %arg18[%c1_138, %c0_139, %c0_140] : memref<2x16x32xf32, #tpu.memory_space<vmem>>, vector<1x1x32xf32>
    %523 = vector.shape_cast %522 : vector<1x1x32xf32> to vector<1x32xf32>
    %524 = vector.shape_cast %521 : vector<1x32xf32> to vector<1x1x32xf32>
    tpu.vector_store %arg18[%c1_138, %c0_139, %c0_140], %524 {strides = array<i32>} : memref<2x16x32xf32, #tpu.memory_space<vmem>>, vector<1x1x32xf32>,
    %525 = vector.extract_strided_slice %487 {offsets = [2, 0], sizes = [2, 128], strides = [1, 1]} : vector<32x128xf32> to vector<2x128xf32>
    %cst_141 = arith.constant dense<0.000000e+00> : vector<2x128xf32>
    %526 = tpu.matmul %516, %488, %cst_141 {dimension_numbers = #tpu.dot_dimension_numbers<[1], [0], [0], [1], [0, 0, 1, 1], [], []>} : vector<2x32xf32>, vector<32x128xf32>, vector<2x128xf32> -> vector<2x128xf32>
    %527 = arith.addf %525, %526 : vector<2x128xf32>
    %528 = vector.extract_strided_slice %527 {offsets = [0, 0], sizes = [2, 32], strides = [1, 1]} : vector<2x128xf32> to vector<2x32xf32>
    %529 = arith.negf %528 : vector<2x32xf32>
    %530 = math.exp %529 : vector<2x32xf32>
    %cst_142 = arith.constant 1.000000e+00 : f32
    %531 = vector.broadcast %cst_142 : f32 to vector<2x32xf32>
    %532 = arith.addf %531, %530 : vector<2x32xf32>
    %533 = arith.divf %531, %532 : vector<2x32xf32>
    %534 = vector.extract_strided_slice %527 {offsets = [0, 32], sizes = [2, 32], strides = [1, 1]} : vector<2x128xf32> to vector<2x32xf32>
    %535 = arith.negf %534 : vector<2x32xf32>
    %536 = math.exp %535 : vector<2x32xf32>
    %cst_143 = arith.constant 1.000000e+00 : f32
    %537 = vector.broadcast %cst_143 : f32 to vector<2x32xf32>
    %538 = arith.addf %537, %536 : vector<2x32xf32>
    %539 = arith.divf %537, %538 : vector<2x32xf32>
    %540 = vector.extract_strided_slice %527 {offsets = [0, 64], sizes = [2, 32], strides = [1, 1]} : vector<2x128xf32> to vector<2x32xf32>
    %541 = math.tanh %540 : vector<2x32xf32>
    %542 = vector.extract_strided_slice %527 {offsets = [0, 96], sizes = [2, 32], strides = [1, 1]} : vector<2x128xf32> to vector<2x32xf32>
    %543 = arith.negf %542 : vector<2x32xf32>
    %544 = math.exp %543 : vector<2x32xf32>
    %cst_144 = arith.constant 1.000000e+00 : f32
    %545 = vector.broadcast %cst_144 : f32 to vector<2x32xf32>
    %546 = arith.addf %545, %544 : vector<2x32xf32>
    %547 = arith.divf %545, %546 : vector<2x32xf32>
    %548 = arith.mulf %539, %514 : vector<2x32xf32>
    %549 = arith.mulf %533, %541 : vector<2x32xf32>
    %550 = arith.addf %548, %549 : vector<2x32xf32>
    %551 = math.tanh %550 : vector<2x32xf32>
    %552 = arith.mulf %547, %551 : vector<2x32xf32>
    %553 = vector.extract_strided_slice %552 {offsets = [0, 0], sizes = [1, 32], strides = [1, 1]} : vector<2x32xf32> to vector<1x32xf32>
    %c0_145 = arith.constant 0 : index
    %c1_146 = arith.constant 1 : index
    %c0_147 = arith.constant 0 : index
    %554 = vector.load %arg18[%c0_145, %c1_146, %c0_147] : memref<2x16x32xf32, #tpu.memory_space<vmem>>, vector<1x1x32xf32>
    %555 = vector.shape_cast %554 : vector<1x1x32xf32> to vector<1x32xf32>
    %556 = vector.shape_cast %553 : vector<1x32xf32> to vector<1x1x32xf32>
    tpu.vector_store %arg18[%c0_145, %c1_146, %c0_147], %556 {strides = array<i32>} : memref<2x16x32xf32, #tpu.memory_space<vmem>>, vector<1x1x32xf32>,
    %557 = vector.extract_strided_slice %552 {offsets = [1, 0], sizes = [1, 32], strides = [1, 1]} : vector<2x32xf32> to vector<1x32xf32>
    %c1_148 = arith.constant 1 : index
    %c1_149 = arith.constant 1 : index
    %c0_150 = arith.constant 0 : index
    %558 = vector.load %arg18[%c1_148, %c1_149, %c0_150] : memref<2x16x32xf32, #tpu.memory_space<vmem>>, vector<1x1x32xf32>
    %559 = vector.shape_cast %558 : vector<1x1x32xf32> to vector<1x32xf32>
    %560 = vector.shape_cast %557 : vector<1x32xf32> to vector<1x1x32xf32>
    tpu.vector_store %arg18[%c1_148, %c1_149, %c0_150], %560 {strides = array<i32>} : memref<2x16x32xf32, #tpu.memory_space<vmem>>, vector<1x1x32xf32>,
    %561 = vector.extract_strided_slice %487 {offsets = [4, 0], sizes = [2, 128], strides = [1, 1]} : vector<32x128xf32> to vector<2x128xf32>
    %cst_151 = arith.constant dense<0.000000e+00> : vector<2x128xf32>
    %562 = tpu.matmul %552, %488, %cst_151 {dimension_numbers = #tpu.dot_dimension_numbers<[1], [0], [0], [1], [0, 0, 1, 1], [], []>} : vector<2x32xf32>, vector<32x128xf32>, vector<2x128xf32> -> vector<2x128xf32>
    %563 = arith.addf %561, %562 : vector<2x128xf32>
    %564 = vector.extract_strided_slice %563 {offsets = [0, 0], sizes = [2, 32], strides = [1, 1]} : vector<2x128xf32> to vector<2x32xf32>
    %565 = arith.negf %564 : vector<2x32xf32>
    %566 = math.exp %565 : vector<2x32xf32>
    %cst_152 = arith.constant 1.000000e+00 : f32
    %567 = vector.broadcast %cst_152 : f32 to vector<2x32xf32>
    %568 = arith.addf %567, %566 : vector<2x32xf32>
    %569 = arith.divf %567, %568 : vector<2x32xf32>
    %570 = vector.extract_strided_slice %563 {offsets = [0, 32], sizes = [2, 32], strides = [1, 1]} : vector<2x128xf32> to vector<2x32xf32>
    %571 = arith.negf %570 : vector<2x32xf32>
    %572 = math.exp %571 : vector<2x32xf32>
    %cst_153 = arith.constant 1.000000e+00 : f32
    %573 = vector.broadcast %cst_153 : f32 to vector<2x32xf32>
    %574 = arith.addf %573, %572 : vector<2x32xf32>
    %575 = arith.divf %573, %574 : vector<2x32xf32>
    %576 = vector.extract_strided_slice %563 {offsets = [0, 64], sizes = [2, 32], strides = [1, 1]} : vector<2x128xf32> to vector<2x32xf32>
    %577 = math.tanh %576 : vector<2x32xf32>
    %578 = vector.extract_strided_slice %563 {offsets = [0, 96], sizes = [2, 32], strides = [1, 1]} : vector<2x128xf32> to vector<2x32xf32>
    %579 = arith.negf %578 : vector<2x32xf32>
    %580 = math.exp %579 : vector<2x32xf32>
    %cst_154 = arith.constant 1.000000e+00 : f32
    %581 = vector.broadcast %cst_154 : f32 to vector<2x32xf32>
    %582 = arith.addf %581, %580 : vector<2x32xf32>
    %583 = arith.divf %581, %582 : vector<2x32xf32>
    %584 = arith.mulf %575, %550 : vector<2x32xf32>
    %585 = arith.mulf %569, %577 : vector<2x32xf32>
    %586 = arith.addf %584, %585 : vector<2x32xf32>
    %587 = math.tanh %586 : vector<2x32xf32>
    %588 = arith.mulf %583, %587 : vector<2x32xf32>
    %589 = vector.extract_strided_slice %588 {offsets = [0, 0], sizes = [1, 32], strides = [1, 1]} : vector<2x32xf32> to vector<1x32xf32>
    %c0_155 = arith.constant 0 : index
    %c2_156 = arith.constant 2 : index
    %c0_157 = arith.constant 0 : index
    %590 = vector.load %arg18[%c0_155, %c2_156, %c0_157] : memref<2x16x32xf32, #tpu.memory_space<vmem>>, vector<1x1x32xf32>
    %591 = vector.shape_cast %590 : vector<1x1x32xf32> to vector<1x32xf32>
    %592 = vector.shape_cast %589 : vector<1x32xf32> to vector<1x1x32xf32>
    tpu.vector_store %arg18[%c0_155, %c2_156, %c0_157], %592 {strides = array<i32>} : memref<2x16x32xf32, #tpu.memory_space<vmem>>, vector<1x1x32xf32>,
    %593 = vector.extract_strided_slice %588 {offsets = [1, 0], sizes = [1, 32], strides = [1, 1]} : vector<2x32xf32> to vector<1x32xf32>
    %c1_158 = arith.constant 1 : index
    %c2_159 = arith.constant 2 : index
    %c0_160 = arith.constant 0 : index
    %594 = vector.load %arg18[%c1_158, %c2_159, %c0_160] : memref<2x16x32xf32, #tpu.memory_space<vmem>>, vector<1x1x32xf32>
    %595 = vector.shape_cast %594 : vector<1x1x32xf32> to vector<1x32xf32>
    %596 = vector.shape_cast %593 : vector<1x32xf32> to vector<1x1x32xf32>
    tpu.vector_store %arg18[%c1_158, %c2_159, %c0_160], %596 {strides = array<i32>} : memref<2x16x32xf32, #tpu.memory_space<vmem>>, vector<1x1x32xf32>,
    %597 = vector.extract_strided_slice %487 {offsets = [6, 0], sizes = [2, 128], strides = [1, 1]} : vector<32x128xf32> to vector<2x128xf32>
    %cst_161 = arith.constant dense<0.000000e+00> : vector<2x128xf32>
    %598 = tpu.matmul %588, %488, %cst_161 {dimension_numbers = #tpu.dot_dimension_numbers<[1], [0], [0], [1], [0, 0, 1, 1], [], []>} : vector<2x32xf32>, vector<32x128xf32>, vector<2x128xf32> -> vector<2x128xf32>
    %599 = arith.addf %597, %598 : vector<2x128xf32>
    %600 = vector.extract_strided_slice %599 {offsets = [0, 0], sizes = [2, 32], strides = [1, 1]} : vector<2x128xf32> to vector<2x32xf32>
    %601 = arith.negf %600 : vector<2x32xf32>
    %602 = math.exp %601 : vector<2x32xf32>
    %cst_162 = arith.constant 1.000000e+00 : f32
    %603 = vector.broadcast %cst_162 : f32 to vector<2x32xf32>
    %604 = arith.addf %603, %602 : vector<2x32xf32>
    %605 = arith.divf %603, %604 : vector<2x32xf32>
    %606 = vector.extract_strided_slice %599 {offsets = [0, 32], sizes = [2, 32], strides = [1, 1]} : vector<2x128xf32> to vector<2x32xf32>
    %607 = arith.negf %606 : vector<2x32xf32>
    %608 = math.exp %607 : vector<2x32xf32>
    %cst_163 = arith.constant 1.000000e+00 : f32
    %609 = vector.broadcast %cst_163 : f32 to vector<2x32xf32>
    %610 = arith.addf %609, %608 : vector<2x32xf32>
    %611 = arith.divf %609, %610 : vector<2x32xf32>
    %612 = vector.extract_strided_slice %599 {offsets = [0, 64], sizes = [2, 32], strides = [1, 1]} : vector<2x128xf32> to vector<2x32xf32>
    %613 = math.tanh %612 : vector<2x32xf32>
    %614 = vector.extract_strided_slice %599 {offsets = [0, 96], sizes = [2, 32], strides = [1, 1]} : vector<2x128xf32> to vector<2x32xf32>
    %615 = arith.negf %614 : vector<2x32xf32>
    %616 = math.exp %615 : vector<2x32xf32>
    %cst_164 = arith.constant 1.000000e+00 : f32
    %617 = vector.broadcast %cst_164 : f32 to vector<2x32xf32>
    %618 = arith.addf %617, %616 : vector<2x32xf32>
    %619 = arith.divf %617, %618 : vector<2x32xf32>
    %620 = arith.mulf %611, %586 : vector<2x32xf32>
    %621 = arith.mulf %605, %613 : vector<2x32xf32>
    %622 = arith.addf %620, %621 : vector<2x32xf32>
    %623 = math.tanh %622 : vector<2x32xf32>
    %624 = arith.mulf %619, %623 : vector<2x32xf32>
    %625 = vector.extract_strided_slice %624 {offsets = [0, 0], sizes = [1, 32], strides = [1, 1]} : vector<2x32xf32> to vector<1x32xf32>
    %c0_165 = arith.constant 0 : index
    %c3_166 = arith.constant 3 : index
    %c0_167 = arith.constant 0 : index
    %626 = vector.load %arg18[%c0_165, %c3_166, %c0_167] : memref<2x16x32xf32, #tpu.memory_space<vmem>>, vector<1x1x32xf32>
    %627 = vector.shape_cast %626 : vector<1x1x32xf32> to vector<1x32xf32>
    %628 = vector.shape_cast %625 : vector<1x32xf32> to vector<1x1x32xf32>
    tpu.vector_store %arg18[%c0_165, %c3_166, %c0_167], %628 {strides = array<i32>} : memref<2x16x32xf32, #tpu.memory_space<vmem>>, vector<1x1x32xf32>,
    %629 = vector.extract_strided_slice %624 {offsets = [1, 0], sizes = [1, 32], strides = [1, 1]} : vector<2x32xf32> to vector<1x32xf32>
    %c1_168 = arith.constant 1 : index
    %c3_169 = arith.constant 3 : index
    %c0_170 = arith.constant 0 : index
    %630 = vector.load %arg18[%c1_168, %c3_169, %c0_170] : memref<2x16x32xf32, #tpu.memory_space<vmem>>, vector<1x1x32xf32>
    %631 = vector.shape_cast %630 : vector<1x1x32xf32> to vector<1x32xf32>
    %632 = vector.shape_cast %629 : vector<1x32xf32> to vector<1x1x32xf32>
    tpu.vector_store %arg18[%c1_168, %c3_169, %c0_170], %632 {strides = array<i32>} : memref<2x16x32xf32, #tpu.memory_space<vmem>>, vector<1x1x32xf32>,
    %633 = vector.extract_strided_slice %487 {offsets = [8, 0], sizes = [2, 128], strides = [1, 1]} : vector<32x128xf32> to vector<2x128xf32>
    %cst_171 = arith.constant dense<0.000000e+00> : vector<2x128xf32>
    %634 = tpu.matmul %624, %488, %cst_171 {dimension_numbers = #tpu.dot_dimension_numbers<[1], [0], [0], [1], [0, 0, 1, 1], [], []>} : vector<2x32xf32>, vector<32x128xf32>, vector<2x128xf32> -> vector<2x128xf32>
    %635 = arith.addf %633, %634 : vector<2x128xf32>
    %636 = vector.extract_strided_slice %635 {offsets = [0, 0], sizes = [2, 32], strides = [1, 1]} : vector<2x128xf32> to vector<2x32xf32>
    %637 = arith.negf %636 : vector<2x32xf32>
    %638 = math.exp %637 : vector<2x32xf32>
    %cst_172 = arith.constant 1.000000e+00 : f32
    %639 = vector.broadcast %cst_172 : f32 to vector<2x32xf32>
    %640 = arith.addf %639, %638 : vector<2x32xf32>
    %641 = arith.divf %639, %640 : vector<2x32xf32>
    %642 = vector.extract_strided_slice %635 {offsets = [0, 32], sizes = [2, 32], strides = [1, 1]} : vector<2x128xf32> to vector<2x32xf32>
    %643 = arith.negf %642 : vector<2x32xf32>
    %644 = math.exp %643 : vector<2x32xf32>
    %cst_173 = arith.constant 1.000000e+00 : f32
    %645 = vector.broadcast %cst_173 : f32 to vector<2x32xf32>
    %646 = arith.addf %645, %644 : vector<2x32xf32>
    %647 = arith.divf %645, %646 : vector<2x32xf32>
    %648 = vector.extract_strided_slice %635 {offsets = [0, 64], sizes = [2, 32], strides = [1, 1]} : vector<2x128xf32> to vector<2x32xf32>
    %649 = math.tanh %648 : vector<2x32xf32>
    %650 = vector.extract_strided_slice %635 {offsets = [0, 96], sizes = [2, 32], strides = [1, 1]} : vector<2x128xf32> to vector<2x32xf32>
    %651 = arith.negf %650 : vector<2x32xf32>
    %652 = math.exp %651 : vector<2x32xf32>
    %cst_174 = arith.constant 1.000000e+00 : f32
    %653 = vector.broadcast %cst_174 : f32 to vector<2x32xf32>
    %654 = arith.addf %653, %652 : vector<2x32xf32>
    %655 = arith.divf %653, %654 : vector<2x32xf32>
    %656 = arith.mulf %647, %622 : vector<2x32xf32>
    %657 = arith.mulf %641, %649 : vector<2x32xf32>
    %658 = arith.addf %656, %657 : vector<2x32xf32>
    %659 = math.tanh %658 : vector<2x32xf32>
    %660 = arith.mulf %655, %659 : vector<2x32xf32>
    %661 = vector.extract_strided_slice %660 {offsets = [0, 0], sizes = [1, 32], strides = [1, 1]} : vector<2x32xf32> to vector<1x32xf32>
    %c0_175 = arith.constant 0 : index
    %c4_176 = arith.constant 4 : index
    %c0_177 = arith.constant 0 : index
    %662 = vector.load %arg18[%c0_175, %c4_176, %c0_177] : memref<2x16x32xf32, #tpu.memory_space<vmem>>, vector<1x1x32xf32>
    %663 = vector.shape_cast %662 : vector<1x1x32xf32> to vector<1x32xf32>
    %664 = vector.shape_cast %661 : vector<1x32xf32> to vector<1x1x32xf32>
    tpu.vector_store %arg18[%c0_175, %c4_176, %c0_177], %664 {strides = array<i32>} : memref<2x16x32xf32, #tpu.memory_space<vmem>>, vector<1x1x32xf32>,
    %665 = vector.extract_strided_slice %660 {offsets = [1, 0], sizes = [1, 32], strides = [1, 1]} : vector<2x32xf32> to vector<1x32xf32>
    %c1_178 = arith.constant 1 : index
    %c4_179 = arith.constant 4 : index
    %c0_180 = arith.constant 0 : index
    %666 = vector.load %arg18[%c1_178, %c4_179, %c0_180] : memref<2x16x32xf32, #tpu.memory_space<vmem>>, vector<1x1x32xf32>
    %667 = vector.shape_cast %666 : vector<1x1x32xf32> to vector<1x32xf32>
    %668 = vector.shape_cast %665 : vector<1x32xf32> to vector<1x1x32xf32>
    tpu.vector_store %arg18[%c1_178, %c4_179, %c0_180], %668 {strides = array<i32>} : memref<2x16x32xf32, #tpu.memory_space<vmem>>, vector<1x1x32xf32>,
    %669 = vector.extract_strided_slice %487 {offsets = [10, 0], sizes = [2, 128], strides = [1, 1]} : vector<32x128xf32> to vector<2x128xf32>
    %cst_181 = arith.constant dense<0.000000e+00> : vector<2x128xf32>
    %670 = tpu.matmul %660, %488, %cst_181 {dimension_numbers = #tpu.dot_dimension_numbers<[1], [0], [0], [1], [0, 0, 1, 1], [], []>} : vector<2x32xf32>, vector<32x128xf32>, vector<2x128xf32> -> vector<2x128xf32>
    %671 = arith.addf %669, %670 : vector<2x128xf32>
    %672 = vector.extract_strided_slice %671 {offsets = [0, 0], sizes = [2, 32], strides = [1, 1]} : vector<2x128xf32> to vector<2x32xf32>
    %673 = arith.negf %672 : vector<2x32xf32>
    %674 = math.exp %673 : vector<2x32xf32>
    %cst_182 = arith.constant 1.000000e+00 : f32
    %675 = vector.broadcast %cst_182 : f32 to vector<2x32xf32>
    %676 = arith.addf %675, %674 : vector<2x32xf32>
    %677 = arith.divf %675, %676 : vector<2x32xf32>
    %678 = vector.extract_strided_slice %671 {offsets = [0, 32], sizes = [2, 32], strides = [1, 1]} : vector<2x128xf32> to vector<2x32xf32>
    %679 = arith.negf %678 : vector<2x32xf32>
    %680 = math.exp %679 : vector<2x32xf32>
    %cst_183 = arith.constant 1.000000e+00 : f32
    %681 = vector.broadcast %cst_183 : f32 to vector<2x32xf32>
    %682 = arith.addf %681, %680 : vector<2x32xf32>
    %683 = arith.divf %681, %682 : vector<2x32xf32>
    %684 = vector.extract_strided_slice %671 {offsets = [0, 64], sizes = [2, 32], strides = [1, 1]} : vector<2x128xf32> to vector<2x32xf32>
    %685 = math.tanh %684 : vector<2x32xf32>
    %686 = vector.extract_strided_slice %671 {offsets = [0, 96], sizes = [2, 32], strides = [1, 1]} : vector<2x128xf32> to vector<2x32xf32>
    %687 = arith.negf %686 : vector<2x32xf32>
    %688 = math.exp %687 : vector<2x32xf32>
    %cst_184 = arith.constant 1.000000e+00 : f32
    %689 = vector.broadcast %cst_184 : f32 to vector<2x32xf32>
    %690 = arith.addf %689, %688 : vector<2x32xf32>
    %691 = arith.divf %689, %690 : vector<2x32xf32>
    %692 = arith.mulf %683, %658 : vector<2x32xf32>
    %693 = arith.mulf %677, %685 : vector<2x32xf32>
    %694 = arith.addf %692, %693 : vector<2x32xf32>
    %695 = math.tanh %694 : vector<2x32xf32>
    %696 = arith.mulf %691, %695 : vector<2x32xf32>
    %697 = vector.extract_strided_slice %696 {offsets = [0, 0], sizes = [1, 32], strides = [1, 1]} : vector<2x32xf32> to vector<1x32xf32>
    %c0_185 = arith.constant 0 : index
    %c5_186 = arith.constant 5 : index
    %c0_187 = arith.constant 0 : index
    %698 = vector.load %arg18[%c0_185, %c5_186, %c0_187] : memref<2x16x32xf32, #tpu.memory_space<vmem>>, vector<1x1x32xf32>
    %699 = vector.shape_cast %698 : vector<1x1x32xf32> to vector<1x32xf32>
    %700 = vector.shape_cast %697 : vector<1x32xf32> to vector<1x1x32xf32>
    tpu.vector_store %arg18[%c0_185, %c5_186, %c0_187], %700 {strides = array<i32>} : memref<2x16x32xf32, #tpu.memory_space<vmem>>, vector<1x1x32xf32>,
    %701 = vector.extract_strided_slice %696 {offsets = [1, 0], sizes = [1, 32], strides = [1, 1]} : vector<2x32xf32> to vector<1x32xf32>
    %c1_188 = arith.constant 1 : index
    %c5_189 = arith.constant 5 : index
    %c0_190 = arith.constant 0 : index
    %702 = vector.load %arg18[%c1_188, %c5_189, %c0_190] : memref<2x16x32xf32, #tpu.memory_space<vmem>>, vector<1x1x32xf32>
    %703 = vector.shape_cast %702 : vector<1x1x32xf32> to vector<1x32xf32>
    %704 = vector.shape_cast %701 : vector<1x32xf32> to vector<1x1x32xf32>
    tpu.vector_store %arg18[%c1_188, %c5_189, %c0_190], %704 {strides = array<i32>} : memref<2x16x32xf32, #tpu.memory_space<vmem>>, vector<1x1x32xf32>,
    %705 = vector.extract_strided_slice %487 {offsets = [12, 0], sizes = [2, 128], strides = [1, 1]} : vector<32x128xf32> to vector<2x128xf32>
    %cst_191 = arith.constant dense<0.000000e+00> : vector<2x128xf32>
    %706 = tpu.matmul %696, %488, %cst_191 {dimension_numbers = #tpu.dot_dimension_numbers<[1], [0], [0], [1], [0, 0, 1, 1], [], []>} : vector<2x32xf32>, vector<32x128xf32>, vector<2x128xf32> -> vector<2x128xf32>
    %707 = arith.addf %705, %706 : vector<2x128xf32>
    %708 = vector.extract_strided_slice %707 {offsets = [0, 0], sizes = [2, 32], strides = [1, 1]} : vector<2x128xf32> to vector<2x32xf32>
    %709 = arith.negf %708 : vector<2x32xf32>
    %710 = math.exp %709 : vector<2x32xf32>
    %cst_192 = arith.constant 1.000000e+00 : f32
    %711 = vector.broadcast %cst_192 : f32 to vector<2x32xf32>
    %712 = arith.addf %711, %710 : vector<2x32xf32>
    %713 = arith.divf %711, %712 : vector<2x32xf32>
    %714 = vector.extract_strided_slice %707 {offsets = [0, 32], sizes = [2, 32], strides = [1, 1]} : vector<2x128xf32> to vector<2x32xf32>
    %715 = arith.negf %714 : vector<2x32xf32>
    %716 = math.exp %715 : vector<2x32xf32>
    %cst_193 = arith.constant 1.000000e+00 : f32
    %717 = vector.broadcast %cst_193 : f32 to vector<2x32xf32>
    %718 = arith.addf %717, %716 : vector<2x32xf32>
    %719 = arith.divf %717, %718 : vector<2x32xf32>
    %720 = vector.extract_strided_slice %707 {offsets = [0, 64], sizes = [2, 32], strides = [1, 1]} : vector<2x128xf32> to vector<2x32xf32>
    %721 = math.tanh %720 : vector<2x32xf32>
    %722 = vector.extract_strided_slice %707 {offsets = [0, 96], sizes = [2, 32], strides = [1, 1]} : vector<2x128xf32> to vector<2x32xf32>
    %723 = arith.negf %722 : vector<2x32xf32>
    %724 = math.exp %723 : vector<2x32xf32>
    %cst_194 = arith.constant 1.000000e+00 : f32
    %725 = vector.broadcast %cst_194 : f32 to vector<2x32xf32>
    %726 = arith.addf %725, %724 : vector<2x32xf32>
    %727 = arith.divf %725, %726 : vector<2x32xf32>
    %728 = arith.mulf %719, %694 : vector<2x32xf32>
    %729 = arith.mulf %713, %721 : vector<2x32xf32>
    %730 = arith.addf %728, %729 : vector<2x32xf32>
    %731 = math.tanh %730 : vector<2x32xf32>
    %732 = arith.mulf %727, %731 : vector<2x32xf32>
    %733 = vector.extract_strided_slice %732 {offsets = [0, 0], sizes = [1, 32], strides = [1, 1]} : vector<2x32xf32> to vector<1x32xf32>
    %c0_195 = arith.constant 0 : index
    %c6_196 = arith.constant 6 : index
    %c0_197 = arith.constant 0 : index
    %734 = vector.load %arg18[%c0_195, %c6_196, %c0_197] : memref<2x16x32xf32, #tpu.memory_space<vmem>>, vector<1x1x32xf32>
    %735 = vector.shape_cast %734 : vector<1x1x32xf32> to vector<1x32xf32>
    %736 = vector.shape_cast %733 : vector<1x32xf32> to vector<1x1x32xf32>
    tpu.vector_store %arg18[%c0_195, %c6_196, %c0_197], %736 {strides = array<i32>} : memref<2x16x32xf32, #tpu.memory_space<vmem>>, vector<1x1x32xf32>,
    %737 = vector.extract_strided_slice %732 {offsets = [1, 0], sizes = [1, 32], strides = [1, 1]} : vector<2x32xf32> to vector<1x32xf32>
    %c1_198 = arith.constant 1 : index
    %c6_199 = arith.constant 6 : index
    %c0_200 = arith.constant 0 : index
    %738 = vector.load %arg18[%c1_198, %c6_199, %c0_200] : memref<2x16x32xf32, #tpu.memory_space<vmem>>, vector<1x1x32xf32>
    %739 = vector.shape_cast %738 : vector<1x1x32xf32> to vector<1x32xf32>
    %740 = vector.shape_cast %737 : vector<1x32xf32> to vector<1x1x32xf32>
    tpu.vector_store %arg18[%c1_198, %c6_199, %c0_200], %740 {strides = array<i32>} : memref<2x16x32xf32, #tpu.memory_space<vmem>>, vector<1x1x32xf32>,
    %741 = vector.extract_strided_slice %487 {offsets = [14, 0], sizes = [2, 128], strides = [1, 1]} : vector<32x128xf32> to vector<2x128xf32>
    %cst_201 = arith.constant dense<0.000000e+00> : vector<2x128xf32>
    %742 = tpu.matmul %732, %488, %cst_201 {dimension_numbers = #tpu.dot_dimension_numbers<[1], [0], [0], [1], [0, 0, 1, 1], [], []>} : vector<2x32xf32>, vector<32x128xf32>, vector<2x128xf32> -> vector<2x128xf32>
    %743 = arith.addf %741, %742 : vector<2x128xf32>
    %744 = vector.extract_strided_slice %743 {offsets = [0, 0], sizes = [2, 32], strides = [1, 1]} : vector<2x128xf32> to vector<2x32xf32>
    %745 = arith.negf %744 : vector<2x32xf32>
    %746 = math.exp %745 : vector<2x32xf32>
    %cst_202 = arith.constant 1.000000e+00 : f32
    %747 = vector.broadcast %cst_202 : f32 to vector<2x32xf32>
    %748 = arith.addf %747, %746 : vector<2x32xf32>
    %749 = arith.divf %747, %748 : vector<2x32xf32>
    %750 = vector.extract_strided_slice %743 {offsets = [0, 32], sizes = [2, 32], strides = [1, 1]} : vector<2x128xf32> to vector<2x32xf32>
    %751 = arith.negf %750 : vector<2x32xf32>
    %752 = math.exp %751 : vector<2x32xf32>
    %cst_203 = arith.constant 1.000000e+00 : f32
    %753 = vector.broadcast %cst_203 : f32 to vector<2x32xf32>
    %754 = arith.addf %753, %752 : vector<2x32xf32>
    %755 = arith.divf %753, %754 : vector<2x32xf32>
    %756 = vector.extract_strided_slice %743 {offsets = [0, 64], sizes = [2, 32], strides = [1, 1]} : vector<2x128xf32> to vector<2x32xf32>
    %757 = math.tanh %756 : vector<2x32xf32>
    %758 = vector.extract_strided_slice %743 {offsets = [0, 96], sizes = [2, 32], strides = [1, 1]} : vector<2x128xf32> to vector<2x32xf32>
    %759 = arith.negf %758 : vector<2x32xf32>
    %760 = math.exp %759 : vector<2x32xf32>
    %cst_204 = arith.constant 1.000000e+00 : f32
    %761 = vector.broadcast %cst_204 : f32 to vector<2x32xf32>
    %762 = arith.addf %761, %760 : vector<2x32xf32>
    %763 = arith.divf %761, %762 : vector<2x32xf32>
    %764 = arith.mulf %755, %730 : vector<2x32xf32>
    %765 = arith.mulf %749, %757 : vector<2x32xf32>
    %766 = arith.addf %764, %765 : vector<2x32xf32>
    %767 = math.tanh %766 : vector<2x32xf32>
    %768 = arith.mulf %763, %767 : vector<2x32xf32>
    %769 = vector.extract_strided_slice %768 {offsets = [0, 0], sizes = [1, 32], strides = [1, 1]} : vector<2x32xf32> to vector<1x32xf32>
    %c0_205 = arith.constant 0 : index
    %c7_206 = arith.constant 7 : index
    %c0_207 = arith.constant 0 : index
    %770 = vector.load %arg18[%c0_205, %c7_206, %c0_207] : memref<2x16x32xf32, #tpu.memory_space<vmem>>, vector<1x1x32xf32>
    %771 = vector.shape_cast %770 : vector<1x1x32xf32> to vector<1x32xf32>
    %772 = vector.shape_cast %769 : vector<1x32xf32> to vector<1x1x32xf32>
    tpu.vector_store %arg18[%c0_205, %c7_206, %c0_207], %772 {strides = array<i32>} : memref<2x16x32xf32, #tpu.memory_space<vmem>>, vector<1x1x32xf32>,
    %773 = vector.extract_strided_slice %768 {offsets = [1, 0], sizes = [1, 32], strides = [1, 1]} : vector<2x32xf32> to vector<1x32xf32>
    %c1_208 = arith.constant 1 : index
    %c7_209 = arith.constant 7 : index
    %c0_210 = arith.constant 0 : index
    %774 = vector.load %arg18[%c1_208, %c7_209, %c0_210] : memref<2x16x32xf32, #tpu.memory_space<vmem>>, vector<1x1x32xf32>
    %775 = vector.shape_cast %774 : vector<1x1x32xf32> to vector<1x32xf32>
    %776 = vector.shape_cast %773 : vector<1x32xf32> to vector<1x1x32xf32>
    tpu.vector_store %arg18[%c1_208, %c7_209, %c0_210], %776 {strides = array<i32>} : memref<2x16x32xf32, #tpu.memory_space<vmem>>, vector<1x1x32xf32>,
    %777 = vector.extract_strided_slice %487 {offsets = [16, 0], sizes = [2, 128], strides = [1, 1]} : vector<32x128xf32> to vector<2x128xf32>
    %cst_211 = arith.constant dense<0.000000e+00> : vector<2x128xf32>
    %778 = tpu.matmul %768, %488, %cst_211 {dimension_numbers = #tpu.dot_dimension_numbers<[1], [0], [0], [1], [0, 0, 1, 1], [], []>} : vector<2x32xf32>, vector<32x128xf32>, vector<2x128xf32> -> vector<2x128xf32>
    %779 = arith.addf %777, %778 : vector<2x128xf32>
    %780 = vector.extract_strided_slice %779 {offsets = [0, 0], sizes = [2, 32], strides = [1, 1]} : vector<2x128xf32> to vector<2x32xf32>
    %781 = arith.negf %780 : vector<2x32xf32>
    %782 = math.exp %781 : vector<2x32xf32>
    %cst_212 = arith.constant 1.000000e+00 : f32
    %783 = vector.broadcast %cst_212 : f32 to vector<2x32xf32>
    %784 = arith.addf %783, %782 : vector<2x32xf32>
    %785 = arith.divf %783, %784 : vector<2x32xf32>
    %786 = vector.extract_strided_slice %779 {offsets = [0, 32], sizes = [2, 32], strides = [1, 1]} : vector<2x128xf32> to vector<2x32xf32>
    %787 = arith.negf %786 : vector<2x32xf32>
    %788 = math.exp %787 : vector<2x32xf32>
    %cst_213 = arith.constant 1.000000e+00 : f32
    %789 = vector.broadcast %cst_213 : f32 to vector<2x32xf32>
    %790 = arith.addf %789, %788 : vector<2x32xf32>
    %791 = arith.divf %789, %790 : vector<2x32xf32>
    %792 = vector.extract_strided_slice %779 {offsets = [0, 64], sizes = [2, 32], strides = [1, 1]} : vector<2x128xf32> to vector<2x32xf32>
    %793 = math.tanh %792 : vector<2x32xf32>
    %794 = vector.extract_strided_slice %779 {offsets = [0, 96], sizes = [2, 32], strides = [1, 1]} : vector<2x128xf32> to vector<2x32xf32>
    %795 = arith.negf %794 : vector<2x32xf32>
    %796 = math.exp %795 : vector<2x32xf32>
    %cst_214 = arith.constant 1.000000e+00 : f32
    %797 = vector.broadcast %cst_214 : f32 to vector<2x32xf32>
    %798 = arith.addf %797, %796 : vector<2x32xf32>
    %799 = arith.divf %797, %798 : vector<2x32xf32>
    %800 = arith.mulf %791, %766 : vector<2x32xf32>
    %801 = arith.mulf %785, %793 : vector<2x32xf32>
    %802 = arith.addf %800, %801 : vector<2x32xf32>
    %803 = math.tanh %802 : vector<2x32xf32>
    %804 = arith.mulf %799, %803 : vector<2x32xf32>
    %805 = vector.extract_strided_slice %804 {offsets = [0, 0], sizes = [1, 32], strides = [1, 1]} : vector<2x32xf32> to vector<1x32xf32>
    %c0_215 = arith.constant 0 : index
    %c8_216 = arith.constant 8 : index
    %c0_217 = arith.constant 0 : index
    %806 = vector.load %arg18[%c0_215, %c8_216, %c0_217] : memref<2x16x32xf32, #tpu.memory_space<vmem>>, vector<1x1x32xf32>
    %807 = vector.shape_cast %806 : vector<1x1x32xf32> to vector<1x32xf32>
    %808 = vector.shape_cast %805 : vector<1x32xf32> to vector<1x1x32xf32>
    tpu.vector_store %arg18[%c0_215, %c8_216, %c0_217], %808 {strides = array<i32>} : memref<2x16x32xf32, #tpu.memory_space<vmem>>, vector<1x1x32xf32>,
    %809 = vector.extract_strided_slice %804 {offsets = [1, 0], sizes = [1, 32], strides = [1, 1]} : vector<2x32xf32> to vector<1x32xf32>
    %c1_218 = arith.constant 1 : index
    %c8_219 = arith.constant 8 : index
    %c0_220 = arith.constant 0 : index
    %810 = vector.load %arg18[%c1_218, %c8_219, %c0_220] : memref<2x16x32xf32, #tpu.memory_space<vmem>>, vector<1x1x32xf32>
    %811 = vector.shape_cast %810 : vector<1x1x32xf32> to vector<1x32xf32>
    %812 = vector.shape_cast %809 : vector<1x32xf32> to vector<1x1x32xf32>
    tpu.vector_store %arg18[%c1_218, %c8_219, %c0_220], %812 {strides = array<i32>} : memref<2x16x32xf32, #tpu.memory_space<vmem>>, vector<1x1x32xf32>,
    %813 = vector.extract_strided_slice %487 {offsets = [18, 0], sizes = [2, 128], strides = [1, 1]} : vector<32x128xf32> to vector<2x128xf32>
    %cst_221 = arith.constant dense<0.000000e+00> : vector<2x128xf32>
    %814 = tpu.matmul %804, %488, %cst_221 {dimension_numbers = #tpu.dot_dimension_numbers<[1], [0], [0], [1], [0, 0, 1, 1], [], []>} : vector<2x32xf32>, vector<32x128xf32>, vector<2x128xf32> -> vector<2x128xf32>
    %815 = arith.addf %813, %814 : vector<2x128xf32>
    %816 = vector.extract_strided_slice %815 {offsets = [0, 0], sizes = [2, 32], strides = [1, 1]} : vector<2x128xf32> to vector<2x32xf32>
    %817 = arith.negf %816 : vector<2x32xf32>
    %818 = math.exp %817 : vector<2x32xf32>
    %cst_222 = arith.constant 1.000000e+00 : f32
    %819 = vector.broadcast %cst_222 : f32 to vector<2x32xf32>
    %820 = arith.addf %819, %818 : vector<2x32xf32>
    %821 = arith.divf %819, %820 : vector<2x32xf32>
    %822 = vector.extract_strided_slice %815 {offsets = [0, 32], sizes = [2, 32], strides = [1, 1]} : vector<2x128xf32> to vector<2x32xf32>
    %823 = arith.negf %822 : vector<2x32xf32>
    %824 = math.exp %823 : vector<2x32xf32>
    %cst_223 = arith.constant 1.000000e+00 : f32
    %825 = vector.broadcast %cst_223 : f32 to vector<2x32xf32>
    %826 = arith.addf %825, %824 : vector<2x32xf32>
    %827 = arith.divf %825, %826 : vector<2x32xf32>
    %828 = vector.extract_strided_slice %815 {offsets = [0, 64], sizes = [2, 32], strides = [1, 1]} : vector<2x128xf32> to vector<2x32xf32>
    %829 = math.tanh %828 : vector<2x32xf32>
    %830 = vector.extract_strided_slice %815 {offsets = [0, 96], sizes = [2, 32], strides = [1, 1]} : vector<2x128xf32> to vector<2x32xf32>
    %831 = arith.negf %830 : vector<2x32xf32>
    %832 = math.exp %831 : vector<2x32xf32>
    %cst_224 = arith.constant 1.000000e+00 : f32
    %833 = vector.broadcast %cst_224 : f32 to vector<2x32xf32>
    %834 = arith.addf %833, %832 : vector<2x32xf32>
    %835 = arith.divf %833, %834 : vector<2x32xf32>
    %836 = arith.mulf %827, %802 : vector<2x32xf32>
    %837 = arith.mulf %821, %829 : vector<2x32xf32>
    %838 = arith.addf %836, %837 : vector<2x32xf32>
    %839 = math.tanh %838 : vector<2x32xf32>
    %840 = arith.mulf %835, %839 : vector<2x32xf32>
    %841 = vector.extract_strided_slice %840 {offsets = [0, 0], sizes = [1, 32], strides = [1, 1]} : vector<2x32xf32> to vector<1x32xf32>
    %c0_225 = arith.constant 0 : index
    %c9_226 = arith.constant 9 : index
    %c0_227 = arith.constant 0 : index
    %842 = vector.load %arg18[%c0_225, %c9_226, %c0_227] : memref<2x16x32xf32, #tpu.memory_space<vmem>>, vector<1x1x32xf32>
    %843 = vector.shape_cast %842 : vector<1x1x32xf32> to vector<1x32xf32>
    %844 = vector.shape_cast %841 : vector<1x32xf32> to vector<1x1x32xf32>
    tpu.vector_store %arg18[%c0_225, %c9_226, %c0_227], %844 {strides = array<i32>} : memref<2x16x32xf32, #tpu.memory_space<vmem>>, vector<1x1x32xf32>,
    %845 = vector.extract_strided_slice %840 {offsets = [1, 0], sizes = [1, 32], strides = [1, 1]} : vector<2x32xf32> to vector<1x32xf32>
    %c1_228 = arith.constant 1 : index
    %c9_229 = arith.constant 9 : index
    %c0_230 = arith.constant 0 : index
    %846 = vector.load %arg18[%c1_228, %c9_229, %c0_230] : memref<2x16x32xf32, #tpu.memory_space<vmem>>, vector<1x1x32xf32>
    %847 = vector.shape_cast %846 : vector<1x1x32xf32> to vector<1x32xf32>
    %848 = vector.shape_cast %845 : vector<1x32xf32> to vector<1x1x32xf32>
    tpu.vector_store %arg18[%c1_228, %c9_229, %c0_230], %848 {strides = array<i32>} : memref<2x16x32xf32, #tpu.memory_space<vmem>>, vector<1x1x32xf32>,
    %849 = vector.extract_strided_slice %487 {offsets = [20, 0], sizes = [2, 128], strides = [1, 1]} : vector<32x128xf32> to vector<2x128xf32>
    %cst_231 = arith.constant dense<0.000000e+00> : vector<2x128xf32>
    %850 = tpu.matmul %840, %488, %cst_231 {dimension_numbers = #tpu.dot_dimension_numbers<[1], [0], [0], [1], [0, 0, 1, 1], [], []>} : vector<2x32xf32>, vector<32x128xf32>, vector<2x128xf32> -> vector<2x128xf32>
    %851 = arith.addf %849, %850 : vector<2x128xf32>
    %852 = vector.extract_strided_slice %851 {offsets = [0, 0], sizes = [2, 32], strides = [1, 1]} : vector<2x128xf32> to vector<2x32xf32>
    %853 = arith.negf %852 : vector<2x32xf32>
    %854 = math.exp %853 : vector<2x32xf32>
    %cst_232 = arith.constant 1.000000e+00 : f32
    %855 = vector.broadcast %cst_232 : f32 to vector<2x32xf32>
    %856 = arith.addf %855, %854 : vector<2x32xf32>
    %857 = arith.divf %855, %856 : vector<2x32xf32>
    %858 = vector.extract_strided_slice %851 {offsets = [0, 32], sizes = [2, 32], strides = [1, 1]} : vector<2x128xf32> to vector<2x32xf32>
    %859 = arith.negf %858 : vector<2x32xf32>
    %860 = math.exp %859 : vector<2x32xf32>
    %cst_233 = arith.constant 1.000000e+00 : f32
    %861 = vector.broadcast %cst_233 : f32 to vector<2x32xf32>
    %862 = arith.addf %861, %860 : vector<2x32xf32>
    %863 = arith.divf %861, %862 : vector<2x32xf32>
    %864 = vector.extract_strided_slice %851 {offsets = [0, 64], sizes = [2, 32], strides = [1, 1]} : vector<2x128xf32> to vector<2x32xf32>
    %865 = math.tanh %864 : vector<2x32xf32>
    %866 = vector.extract_strided_slice %851 {offsets = [0, 96], sizes = [2, 32], strides = [1, 1]} : vector<2x128xf32> to vector<2x32xf32>
    %867 = arith.negf %866 : vector<2x32xf32>
    %868 = math.exp %867 : vector<2x32xf32>
    %cst_234 = arith.constant 1.000000e+00 : f32
    %869 = vector.broadcast %cst_234 : f32 to vector<2x32xf32>
    %870 = arith.addf %869, %868 : vector<2x32xf32>
    %871 = arith.divf %869, %870 : vector<2x32xf32>
    %872 = arith.mulf %863, %838 : vector<2x32xf32>
    %873 = arith.mulf %857, %865 : vector<2x32xf32>
    %874 = arith.addf %872, %873 : vector<2x32xf32>
    %875 = math.tanh %874 : vector<2x32xf32>
    %876 = arith.mulf %871, %875 : vector<2x32xf32>
    %877 = vector.extract_strided_slice %876 {offsets = [0, 0], sizes = [1, 32], strides = [1, 1]} : vector<2x32xf32> to vector<1x32xf32>
    %c0_235 = arith.constant 0 : index
    %c10_236 = arith.constant 10 : index
    %c0_237 = arith.constant 0 : index
    %878 = vector.load %arg18[%c0_235, %c10_236, %c0_237] : memref<2x16x32xf32, #tpu.memory_space<vmem>>, vector<1x1x32xf32>
    %879 = vector.shape_cast %878 : vector<1x1x32xf32> to vector<1x32xf32>
    %880 = vector.shape_cast %877 : vector<1x32xf32> to vector<1x1x32xf32>
    tpu.vector_store %arg18[%c0_235, %c10_236, %c0_237], %880 {strides = array<i32>} : memref<2x16x32xf32, #tpu.memory_space<vmem>>, vector<1x1x32xf32>,
    %881 = vector.extract_strided_slice %876 {offsets = [1, 0], sizes = [1, 32], strides = [1, 1]} : vector<2x32xf32> to vector<1x32xf32>
    %c1_238 = arith.constant 1 : index
    %c10_239 = arith.constant 10 : index
    %c0_240 = arith.constant 0 : index
    %882 = vector.load %arg18[%c1_238, %c10_239, %c0_240] : memref<2x16x32xf32, #tpu.memory_space<vmem>>, vector<1x1x32xf32>
    %883 = vector.shape_cast %882 : vector<1x1x32xf32> to vector<1x32xf32>
    %884 = vector.shape_cast %881 : vector<1x32xf32> to vector<1x1x32xf32>
    tpu.vector_store %arg18[%c1_238, %c10_239, %c0_240], %884 {strides = array<i32>} : memref<2x16x32xf32, #tpu.memory_space<vmem>>, vector<1x1x32xf32>,
    %885 = vector.extract_strided_slice %487 {offsets = [22, 0], sizes = [2, 128], strides = [1, 1]} : vector<32x128xf32> to vector<2x128xf32>
    %cst_241 = arith.constant dense<0.000000e+00> : vector<2x128xf32>
    %886 = tpu.matmul %876, %488, %cst_241 {dimension_numbers = #tpu.dot_dimension_numbers<[1], [0], [0], [1], [0, 0, 1, 1], [], []>} : vector<2x32xf32>, vector<32x128xf32>, vector<2x128xf32> -> vector<2x128xf32>
    %887 = arith.addf %885, %886 : vector<2x128xf32>
    %888 = vector.extract_strided_slice %887 {offsets = [0, 0], sizes = [2, 32], strides = [1, 1]} : vector<2x128xf32> to vector<2x32xf32>
    %889 = arith.negf %888 : vector<2x32xf32>
    %890 = math.exp %889 : vector<2x32xf32>
    %cst_242 = arith.constant 1.000000e+00 : f32
    %891 = vector.broadcast %cst_242 : f32 to vector<2x32xf32>
    %892 = arith.addf %891, %890 : vector<2x32xf32>
    %893 = arith.divf %891, %892 : vector<2x32xf32>
    %894 = vector.extract_strided_slice %887 {offsets = [0, 32], sizes = [2, 32], strides = [1, 1]} : vector<2x128xf32> to vector<2x32xf32>
    %895 = arith.negf %894 : vector<2x32xf32>
    %896 = math.exp %895 : vector<2x32xf32>
    %cst_243 = arith.constant 1.000000e+00 : f32
    %897 = vector.broadcast %cst_243 : f32 to vector<2x32xf32>
    %898 = arith.addf %897, %896 : vector<2x32xf32>
    %899 = arith.divf %897, %898 : vector<2x32xf32>
    %900 = vector.extract_strided_slice %887 {offsets = [0, 64], sizes = [2, 32], strides = [1, 1]} : vector<2x128xf32> to vector<2x32xf32>
    %901 = math.tanh %900 : vector<2x32xf32>
    %902 = vector.extract_strided_slice %887 {offsets = [0, 96], sizes = [2, 32], strides = [1, 1]} : vector<2x128xf32> to vector<2x32xf32>
    %903 = arith.negf %902 : vector<2x32xf32>
    %904 = math.exp %903 : vector<2x32xf32>
    %cst_244 = arith.constant 1.000000e+00 : f32
    %905 = vector.broadcast %cst_244 : f32 to vector<2x32xf32>
    %906 = arith.addf %905, %904 : vector<2x32xf32>
    %907 = arith.divf %905, %906 : vector<2x32xf32>
    %908 = arith.mulf %899, %874 : vector<2x32xf32>
    %909 = arith.mulf %893, %901 : vector<2x32xf32>
    %910 = arith.addf %908, %909 : vector<2x32xf32>
    %911 = math.tanh %910 : vector<2x32xf32>
    %912 = arith.mulf %907, %911 : vector<2x32xf32>
    %913 = vector.extract_strided_slice %912 {offsets = [0, 0], sizes = [1, 32], strides = [1, 1]} : vector<2x32xf32> to vector<1x32xf32>
    %c0_245 = arith.constant 0 : index
    %c11_246 = arith.constant 11 : index
    %c0_247 = arith.constant 0 : index
    %914 = vector.load %arg18[%c0_245, %c11_246, %c0_247] : memref<2x16x32xf32, #tpu.memory_space<vmem>>, vector<1x1x32xf32>
    %915 = vector.shape_cast %914 : vector<1x1x32xf32> to vector<1x32xf32>
    %916 = vector.shape_cast %913 : vector<1x32xf32> to vector<1x1x32xf32>
    tpu.vector_store %arg18[%c0_245, %c11_246, %c0_247], %916 {strides = array<i32>} : memref<2x16x32xf32, #tpu.memory_space<vmem>>, vector<1x1x32xf32>,
    %917 = vector.extract_strided_slice %912 {offsets = [1, 0], sizes = [1, 32], strides = [1, 1]} : vector<2x32xf32> to vector<1x32xf32>
    %c1_248 = arith.constant 1 : index
    %c11_249 = arith.constant 11 : index
    %c0_250 = arith.constant 0 : index
    %918 = vector.load %arg18[%c1_248, %c11_249, %c0_250] : memref<2x16x32xf32, #tpu.memory_space<vmem>>, vector<1x1x32xf32>
    %919 = vector.shape_cast %918 : vector<1x1x32xf32> to vector<1x32xf32>
    %920 = vector.shape_cast %917 : vector<1x32xf32> to vector<1x1x32xf32>
    tpu.vector_store %arg18[%c1_248, %c11_249, %c0_250], %920 {strides = array<i32>} : memref<2x16x32xf32, #tpu.memory_space<vmem>>, vector<1x1x32xf32>,
    %921 = vector.extract_strided_slice %487 {offsets = [24, 0], sizes = [2, 128], strides = [1, 1]} : vector<32x128xf32> to vector<2x128xf32>
    %cst_251 = arith.constant dense<0.000000e+00> : vector<2x128xf32>
    %922 = tpu.matmul %912, %488, %cst_251 {dimension_numbers = #tpu.dot_dimension_numbers<[1], [0], [0], [1], [0, 0, 1, 1], [], []>} : vector<2x32xf32>, vector<32x128xf32>, vector<2x128xf32> -> vector<2x128xf32>
    %923 = arith.addf %921, %922 : vector<2x128xf32>
    %924 = vector.extract_strided_slice %923 {offsets = [0, 0], sizes = [2, 32], strides = [1, 1]} : vector<2x128xf32> to vector<2x32xf32>
    %925 = arith.negf %924 : vector<2x32xf32>
    %926 = math.exp %925 : vector<2x32xf32>
    %cst_252 = arith.constant 1.000000e+00 : f32
    %927 = vector.broadcast %cst_252 : f32 to vector<2x32xf32>
    %928 = arith.addf %927, %926 : vector<2x32xf32>
    %929 = arith.divf %927, %928 : vector<2x32xf32>
    %930 = vector.extract_strided_slice %923 {offsets = [0, 32], sizes = [2, 32], strides = [1, 1]} : vector<2x128xf32> to vector<2x32xf32>
    %931 = arith.negf %930 : vector<2x32xf32>
    %932 = math.exp %931 : vector<2x32xf32>
    %cst_253 = arith.constant 1.000000e+00 : f32
    %933 = vector.broadcast %cst_253 : f32 to vector<2x32xf32>
    %934 = arith.addf %933, %932 : vector<2x32xf32>
    %935 = arith.divf %933, %934 : vector<2x32xf32>
    %936 = vector.extract_strided_slice %923 {offsets = [0, 64], sizes = [2, 32], strides = [1, 1]} : vector<2x128xf32> to vector<2x32xf32>
    %937 = math.tanh %936 : vector<2x32xf32>
    %938 = vector.extract_strided_slice %923 {offsets = [0, 96], sizes = [2, 32], strides = [1, 1]} : vector<2x128xf32> to vector<2x32xf32>
    %939 = arith.negf %938 : vector<2x32xf32>
    %940 = math.exp %939 : vector<2x32xf32>
    %cst_254 = arith.constant 1.000000e+00 : f32
    %941 = vector.broadcast %cst_254 : f32 to vector<2x32xf32>
    %942 = arith.addf %941, %940 : vector<2x32xf32>
    %943 = arith.divf %941, %942 : vector<2x32xf32>
    %944 = arith.mulf %935, %910 : vector<2x32xf32>
    %945 = arith.mulf %929, %937 : vector<2x32xf32>
    %946 = arith.addf %944, %945 : vector<2x32xf32>
    %947 = math.tanh %946 : vector<2x32xf32>
    %948 = arith.mulf %943, %947 : vector<2x32xf32>
    %949 = vector.extract_strided_slice %948 {offsets = [0, 0], sizes = [1, 32], strides = [1, 1]} : vector<2x32xf32> to vector<1x32xf32>
    %c0_255 = arith.constant 0 : index
    %c12_256 = arith.constant 12 : index
    %c0_257 = arith.constant 0 : index
    %950 = vector.load %arg18[%c0_255, %c12_256, %c0_257] : memref<2x16x32xf32, #tpu.memory_space<vmem>>, vector<1x1x32xf32>
    %951 = vector.shape_cast %950 : vector<1x1x32xf32> to vector<1x32xf32>
    %952 = vector.shape_cast %949 : vector<1x32xf32> to vector<1x1x32xf32>
    tpu.vector_store %arg18[%c0_255, %c12_256, %c0_257], %952 {strides = array<i32>} : memref<2x16x32xf32, #tpu.memory_space<vmem>>, vector<1x1x32xf32>,
    %953 = vector.extract_strided_slice %948 {offsets = [1, 0], sizes = [1, 32], strides = [1, 1]} : vector<2x32xf32> to vector<1x32xf32>
    %c1_258 = arith.constant 1 : index
    %c12_259 = arith.constant 12 : index
    %c0_260 = arith.constant 0 : index
    %954 = vector.load %arg18[%c1_258, %c12_259, %c0_260] : memref<2x16x32xf32, #tpu.memory_space<vmem>>, vector<1x1x32xf32>
    %955 = vector.shape_cast %954 : vector<1x1x32xf32> to vector<1x32xf32>
    %956 = vector.shape_cast %953 : vector<1x32xf32> to vector<1x1x32xf32>
    tpu.vector_store %arg18[%c1_258, %c12_259, %c0_260], %956 {strides = array<i32>} : memref<2x16x32xf32, #tpu.memory_space<vmem>>, vector<1x1x32xf32>,
    %957 = vector.extract_strided_slice %487 {offsets = [26, 0], sizes = [2, 128], strides = [1, 1]} : vector<32x128xf32> to vector<2x128xf32>
    %cst_261 = arith.constant dense<0.000000e+00> : vector<2x128xf32>
    %958 = tpu.matmul %948, %488, %cst_261 {dimension_numbers = #tpu.dot_dimension_numbers<[1], [0], [0], [1], [0, 0, 1, 1], [], []>} : vector<2x32xf32>, vector<32x128xf32>, vector<2x128xf32> -> vector<2x128xf32>
    %959 = arith.addf %957, %958 : vector<2x128xf32>
    %960 = vector.extract_strided_slice %959 {offsets = [0, 0], sizes = [2, 32], strides = [1, 1]} : vector<2x128xf32> to vector<2x32xf32>
    %961 = arith.negf %960 : vector<2x32xf32>
    %962 = math.exp %961 : vector<2x32xf32>
    %cst_262 = arith.constant 1.000000e+00 : f32
    %963 = vector.broadcast %cst_262 : f32 to vector<2x32xf32>
    %964 = arith.addf %963, %962 : vector<2x32xf32>
    %965 = arith.divf %963, %964 : vector<2x32xf32>
    %966 = vector.extract_strided_slice %959 {offsets = [0, 32], sizes = [2, 32], strides = [1, 1]} : vector<2x128xf32> to vector<2x32xf32>
    %967 = arith.negf %966 : vector<2x32xf32>
    %968 = math.exp %967 : vector<2x32xf32>
    %cst_263 = arith.constant 1.000000e+00 : f32
    %969 = vector.broadcast %cst_263 : f32 to vector<2x32xf32>
    %970 = arith.addf %969, %968 : vector<2x32xf32>
    %971 = arith.divf %969, %970 : vector<2x32xf32>
    %972 = vector.extract_strided_slice %959 {offsets = [0, 64], sizes = [2, 32], strides = [1, 1]} : vector<2x128xf32> to vector<2x32xf32>
    %973 = math.tanh %972 : vector<2x32xf32>
    %974 = vector.extract_strided_slice %959 {offsets = [0, 96], sizes = [2, 32], strides = [1, 1]} : vector<2x128xf32> to vector<2x32xf32>
    %975 = arith.negf %974 : vector<2x32xf32>
    %976 = math.exp %975 : vector<2x32xf32>
    %cst_264 = arith.constant 1.000000e+00 : f32
    %977 = vector.broadcast %cst_264 : f32 to vector<2x32xf32>
    %978 = arith.addf %977, %976 : vector<2x32xf32>
    %979 = arith.divf %977, %978 : vector<2x32xf32>
    %980 = arith.mulf %971, %946 : vector<2x32xf32>
    %981 = arith.mulf %965, %973 : vector<2x32xf32>
    %982 = arith.addf %980, %981 : vector<2x32xf32>
    %983 = math.tanh %982 : vector<2x32xf32>
    %984 = arith.mulf %979, %983 : vector<2x32xf32>
    %985 = vector.extract_strided_slice %984 {offsets = [0, 0], sizes = [1, 32], strides = [1, 1]} : vector<2x32xf32> to vector<1x32xf32>
    %c0_265 = arith.constant 0 : index
    %c13_266 = arith.constant 13 : index
    %c0_267 = arith.constant 0 : index
    %986 = vector.load %arg18[%c0_265, %c13_266, %c0_267] : memref<2x16x32xf32, #tpu.memory_space<vmem>>, vector<1x1x32xf32>
    %987 = vector.shape_cast %986 : vector<1x1x32xf32> to vector<1x32xf32>
    %988 = vector.shape_cast %985 : vector<1x32xf32> to vector<1x1x32xf32>
    tpu.vector_store %arg18[%c0_265, %c13_266, %c0_267], %988 {strides = array<i32>} : memref<2x16x32xf32, #tpu.memory_space<vmem>>, vector<1x1x32xf32>,
    %989 = vector.extract_strided_slice %984 {offsets = [1, 0], sizes = [1, 32], strides = [1, 1]} : vector<2x32xf32> to vector<1x32xf32>
    %c1_268 = arith.constant 1 : index
    %c13_269 = arith.constant 13 : index
    %c0_270 = arith.constant 0 : index
    %990 = vector.load %arg18[%c1_268, %c13_269, %c0_270] : memref<2x16x32xf32, #tpu.memory_space<vmem>>, vector<1x1x32xf32>
    %991 = vector.shape_cast %990 : vector<1x1x32xf32> to vector<1x32xf32>
    %992 = vector.shape_cast %989 : vector<1x32xf32> to vector<1x1x32xf32>
    tpu.vector_store %arg18[%c1_268, %c13_269, %c0_270], %992 {strides = array<i32>} : memref<2x16x32xf32, #tpu.memory_space<vmem>>, vector<1x1x32xf32>,
    %993 = vector.extract_strided_slice %487 {offsets = [28, 0], sizes = [2, 128], strides = [1, 1]} : vector<32x128xf32> to vector<2x128xf32>
    %cst_271 = arith.constant dense<0.000000e+00> : vector<2x128xf32>
    %994 = tpu.matmul %984, %488, %cst_271 {dimension_numbers = #tpu.dot_dimension_numbers<[1], [0], [0], [1], [0, 0, 1, 1], [], []>} : vector<2x32xf32>, vector<32x128xf32>, vector<2x128xf32> -> vector<2x128xf32>
    %995 = arith.addf %993, %994 : vector<2x128xf32>
    %996 = vector.extract_strided_slice %995 {offsets = [0, 0], sizes = [2, 32], strides = [1, 1]} : vector<2x128xf32> to vector<2x32xf32>
    %997 = arith.negf %996 : vector<2x32xf32>
    %998 = math.exp %997 : vector<2x32xf32>
    %cst_272 = arith.constant 1.000000e+00 : f32
    %999 = vector.broadcast %cst_272 : f32 to vector<2x32xf32>
    %1000 = arith.addf %999, %998 : vector<2x32xf32>
    %1001 = arith.divf %999, %1000 : vector<2x32xf32>
    %1002 = vector.extract_strided_slice %995 {offsets = [0, 32], sizes = [2, 32], strides = [1, 1]} : vector<2x128xf32> to vector<2x32xf32>
    %1003 = arith.negf %1002 : vector<2x32xf32>
    %1004 = math.exp %1003 : vector<2x32xf32>
    %cst_273 = arith.constant 1.000000e+00 : f32
    %1005 = vector.broadcast %cst_273 : f32 to vector<2x32xf32>
    %1006 = arith.addf %1005, %1004 : vector<2x32xf32>
    %1007 = arith.divf %1005, %1006 : vector<2x32xf32>
    %1008 = vector.extract_strided_slice %995 {offsets = [0, 64], sizes = [2, 32], strides = [1, 1]} : vector<2x128xf32> to vector<2x32xf32>
    %1009 = math.tanh %1008 : vector<2x32xf32>
    %1010 = vector.extract_strided_slice %995 {offsets = [0, 96], sizes = [2, 32], strides = [1, 1]} : vector<2x128xf32> to vector<2x32xf32>
    %1011 = arith.negf %1010 : vector<2x32xf32>
    %1012 = math.exp %1011 : vector<2x32xf32>
    %cst_274 = arith.constant 1.000000e+00 : f32
    %1013 = vector.broadcast %cst_274 : f32 to vector<2x32xf32>
    %1014 = arith.addf %1013, %1012 : vector<2x32xf32>
    %1015 = arith.divf %1013, %1014 : vector<2x32xf32>
    %1016 = arith.mulf %1007, %982 : vector<2x32xf32>
    %1017 = arith.mulf %1001, %1009 : vector<2x32xf32>
    %1018 = arith.addf %1016, %1017 : vector<2x32xf32>
    %1019 = math.tanh %1018 : vector<2x32xf32>
    %1020 = arith.mulf %1015, %1019 : vector<2x32xf32>
    %1021 = vector.extract_strided_slice %1020 {offsets = [0, 0], sizes = [1, 32], strides = [1, 1]} : vector<2x32xf32> to vector<1x32xf32>
    %c0_275 = arith.constant 0 : index
    %c14_276 = arith.constant 14 : index
    %c0_277 = arith.constant 0 : index
    %1022 = vector.load %arg18[%c0_275, %c14_276, %c0_277] : memref<2x16x32xf32, #tpu.memory_space<vmem>>, vector<1x1x32xf32>
    %1023 = vector.shape_cast %1022 : vector<1x1x32xf32> to vector<1x32xf32>
    %1024 = vector.shape_cast %1021 : vector<1x32xf32> to vector<1x1x32xf32>
    tpu.vector_store %arg18[%c0_275, %c14_276, %c0_277], %1024 {strides = array<i32>} : memref<2x16x32xf32, #tpu.memory_space<vmem>>, vector<1x1x32xf32>,
    %1025 = vector.extract_strided_slice %1020 {offsets = [1, 0], sizes = [1, 32], strides = [1, 1]} : vector<2x32xf32> to vector<1x32xf32>
    %c1_278 = arith.constant 1 : index
    %c14_279 = arith.constant 14 : index
    %c0_280 = arith.constant 0 : index
    %1026 = vector.load %arg18[%c1_278, %c14_279, %c0_280] : memref<2x16x32xf32, #tpu.memory_space<vmem>>, vector<1x1x32xf32>
    %1027 = vector.shape_cast %1026 : vector<1x1x32xf32> to vector<1x32xf32>
    %1028 = vector.shape_cast %1025 : vector<1x32xf32> to vector<1x1x32xf32>
    tpu.vector_store %arg18[%c1_278, %c14_279, %c0_280], %1028 {strides = array<i32>} : memref<2x16x32xf32, #tpu.memory_space<vmem>>, vector<1x1x32xf32>,
    %1029 = vector.extract_strided_slice %487 {offsets = [30, 0], sizes = [2, 128], strides = [1, 1]} : vector<32x128xf32> to vector<2x128xf32>
    %cst_281 = arith.constant dense<0.000000e+00> : vector<2x128xf32>
    %1030 = tpu.matmul %1020, %488, %cst_281 {dimension_numbers = #tpu.dot_dimension_numbers<[1], [0], [0], [1], [0, 0, 1, 1], [], []>} : vector<2x32xf32>, vector<32x128xf32>, vector<2x128xf32> -> vector<2x128xf32>
    %1031 = arith.addf %1029, %1030 : vector<2x128xf32>
    %1032 = vector.extract_strided_slice %1031 {offsets = [0, 0], sizes = [2, 32], strides = [1, 1]} : vector<2x128xf32> to vector<2x32xf32>
    %1033 = arith.negf %1032 : vector<2x32xf32>
    %1034 = math.exp %1033 : vector<2x32xf32>
    %cst_282 = arith.constant 1.000000e+00 : f32
    %1035 = vector.broadcast %cst_282 : f32 to vector<2x32xf32>
    %1036 = arith.addf %1035, %1034 : vector<2x32xf32>
    %1037 = arith.divf %1035, %1036 : vector<2x32xf32>
    %1038 = vector.extract_strided_slice %1031 {offsets = [0, 32], sizes = [2, 32], strides = [1, 1]} : vector<2x128xf32> to vector<2x32xf32>
    %1039 = arith.negf %1038 : vector<2x32xf32>
    %1040 = math.exp %1039 : vector<2x32xf32>
    %cst_283 = arith.constant 1.000000e+00 : f32
    %1041 = vector.broadcast %cst_283 : f32 to vector<2x32xf32>
    %1042 = arith.addf %1041, %1040 : vector<2x32xf32>
    %1043 = arith.divf %1041, %1042 : vector<2x32xf32>
    %1044 = vector.extract_strided_slice %1031 {offsets = [0, 64], sizes = [2, 32], strides = [1, 1]} : vector<2x128xf32> to vector<2x32xf32>
    %1045 = math.tanh %1044 : vector<2x32xf32>
    %1046 = vector.extract_strided_slice %1031 {offsets = [0, 96], sizes = [2, 32], strides = [1, 1]} : vector<2x128xf32> to vector<2x32xf32>
    %1047 = arith.negf %1046 : vector<2x32xf32>
    %1048 = math.exp %1047 : vector<2x32xf32>
    %cst_284 = arith.constant 1.000000e+00 : f32
    %1049 = vector.broadcast %cst_284 : f32 to vector<2x32xf32>
    %1050 = arith.addf %1049, %1048 : vector<2x32xf32>
    %1051 = arith.divf %1049, %1050 : vector<2x32xf32>
    %1052 = arith.mulf %1043, %1018 : vector<2x32xf32>
    %1053 = arith.mulf %1037, %1045 : vector<2x32xf32>
    %1054 = arith.addf %1052, %1053 : vector<2x32xf32>
    %1055 = math.tanh %1054 : vector<2x32xf32>
    %1056 = arith.mulf %1051, %1055 : vector<2x32xf32>
    %1057 = vector.extract_strided_slice %1056 {offsets = [0, 0], sizes = [1, 32], strides = [1, 1]} : vector<2x32xf32> to vector<1x32xf32>
    %c0_285 = arith.constant 0 : index
    %c15_286 = arith.constant 15 : index
    %c0_287 = arith.constant 0 : index
    %1058 = vector.load %arg18[%c0_285, %c15_286, %c0_287] : memref<2x16x32xf32, #tpu.memory_space<vmem>>, vector<1x1x32xf32>
    %1059 = vector.shape_cast %1058 : vector<1x1x32xf32> to vector<1x32xf32>
    %1060 = vector.shape_cast %1057 : vector<1x32xf32> to vector<1x1x32xf32>
    tpu.vector_store %arg18[%c0_285, %c15_286, %c0_287], %1060 {strides = array<i32>} : memref<2x16x32xf32, #tpu.memory_space<vmem>>, vector<1x1x32xf32>,
    %1061 = vector.extract_strided_slice %1056 {offsets = [1, 0], sizes = [1, 32], strides = [1, 1]} : vector<2x32xf32> to vector<1x32xf32>
    %c1_288 = arith.constant 1 : index
    %c15_289 = arith.constant 15 : index
    %c0_290 = arith.constant 0 : index
    %1062 = vector.load %arg18[%c1_288, %c15_289, %c0_290] : memref<2x16x32xf32, #tpu.memory_space<vmem>>, vector<1x1x32xf32>
    %1063 = vector.shape_cast %1062 : vector<1x1x32xf32> to vector<1x32xf32>
    %1064 = vector.shape_cast %1061 : vector<1x32xf32> to vector<1x1x32xf32>
    tpu.vector_store %arg18[%c1_288, %c15_289, %c0_290], %1064 {strides = array<i32>} : memref<2x16x32xf32, #tpu.memory_space<vmem>>, vector<1x1x32xf32>,
    %c0_291 = arith.constant 0 : index
    %c0_292 = arith.constant 0 : index
    %1065 = vector.load %arg6[%c0_291, %c0_292] : memref<32x128xf32, #tpu.memory_space<vmem>>, vector<32x128xf32>
    %c0_293 = arith.constant 0 : index
    %c0_294 = arith.constant 0 : index
    %c0_295 = arith.constant 0 : index
    %1066 = vector.load %arg1[%c0_293, %c0_294, %c0_295] : memref<8x2x128xf32, #tpu.memory_space<vmem>>, vector<1x2x128xf32>
    %1067 = vector.shape_cast %1066 : vector<1x2x128xf32> to vector<2x128xf32>
    %cst_296 = arith.constant dense<0.000000e+00> : vector<2x128xf32>
    %1068 = tpu.matmul %480, %1065, %cst_296 {dimension_numbers = #tpu.dot_dimension_numbers<[1], [0], [0], [1], [0, 0, 1, 1], [], []>} : vector<2x32xf32>, vector<32x128xf32>, vector<2x128xf32> -> vector<2x128xf32>
    %1069 = arith.addf %1067, %1068 : vector<2x128xf32>
    %1070 = vector.extract_strided_slice %1069 {offsets = [0, 0], sizes = [2, 32], strides = [1, 1]} : vector<2x128xf32> to vector<2x32xf32>
    %1071 = arith.negf %1070 : vector<2x32xf32>
    %1072 = math.exp %1071 : vector<2x32xf32>
    %cst_297 = arith.constant 1.000000e+00 : f32
    %1073 = vector.broadcast %cst_297 : f32 to vector<2x32xf32>
    %1074 = arith.addf %1073, %1072 : vector<2x32xf32>
    %1075 = arith.divf %1073, %1074 : vector<2x32xf32>
    %1076 = vector.extract_strided_slice %1069 {offsets = [0, 32], sizes = [2, 32], strides = [1, 1]} : vector<2x128xf32> to vector<2x32xf32>
    %1077 = arith.negf %1076 : vector<2x32xf32>
    %1078 = math.exp %1077 : vector<2x32xf32>
    %cst_298 = arith.constant 1.000000e+00 : f32
    %1079 = vector.broadcast %cst_298 : f32 to vector<2x32xf32>
    %1080 = arith.addf %1079, %1078 : vector<2x32xf32>
    %1081 = arith.divf %1079, %1080 : vector<2x32xf32>
    %1082 = vector.extract_strided_slice %1069 {offsets = [0, 64], sizes = [2, 32], strides = [1, 1]} : vector<2x128xf32> to vector<2x32xf32>
    %1083 = math.tanh %1082 : vector<2x32xf32>
    %1084 = vector.extract_strided_slice %1069 {offsets = [0, 96], sizes = [2, 32], strides = [1, 1]} : vector<2x128xf32> to vector<2x32xf32>
    %1085 = arith.negf %1084 : vector<2x32xf32>
    %1086 = math.exp %1085 : vector<2x32xf32>
    %cst_299 = arith.constant 1.000000e+00 : f32
    %1087 = vector.broadcast %cst_299 : f32 to vector<2x32xf32>
    %1088 = arith.addf %1087, %1086 : vector<2x32xf32>
    %1089 = arith.divf %1087, %1088 : vector<2x32xf32>
    %1090 = arith.mulf %1081, %478 : vector<2x32xf32>
    %1091 = arith.mulf %1075, %1083 : vector<2x32xf32>
    %1092 = arith.addf %1090, %1091 : vector<2x32xf32>
    %1093 = math.tanh %1092 : vector<2x32xf32>
    %1094 = arith.mulf %1089, %1093 : vector<2x32xf32>
    %c0_300 = arith.constant 0 : index
    %c0_301 = arith.constant 0 : index
    %1095 = vector.load %arg17[%c0_300, %c0_301] : memref<16x32xf32, #tpu.memory_space<vmem>>, vector<2x32xf32>
    tpu.vector_store %arg17[%c0_300, %c0_301], %1094 {strides = array<i32>} : memref<16x32xf32, #tpu.memory_space<vmem>>, vector<2x32xf32>,
    %c1_302 = arith.constant 1 : index
    %c0_303 = arith.constant 0 : index
    %c0_304 = arith.constant 0 : index
    %1096 = vector.load %arg1[%c1_302, %c0_303, %c0_304] : memref<8x2x128xf32, #tpu.memory_space<vmem>>, vector<1x2x128xf32>
    %1097 = vector.shape_cast %1096 : vector<1x2x128xf32> to vector<2x128xf32>
    %cst_305 = arith.constant dense<0.000000e+00> : vector<2x128xf32>
    %1098 = tpu.matmul %1094, %1065, %cst_305 {dimension_numbers = #tpu.dot_dimension_numbers<[1], [0], [0], [1], [0, 0, 1, 1], [], []>} : vector<2x32xf32>, vector<32x128xf32>, vector<2x128xf32> -> vector<2x128xf32>
    %1099 = arith.addf %1097, %1098 : vector<2x128xf32>
    %1100 = vector.extract_strided_slice %1099 {offsets = [0, 0], sizes = [2, 32], strides = [1, 1]} : vector<2x128xf32> to vector<2x32xf32>
    %1101 = arith.negf %1100 : vector<2x32xf32>
    %1102 = math.exp %1101 : vector<2x32xf32>
    %cst_306 = arith.constant 1.000000e+00 : f32
    %1103 = vector.broadcast %cst_306 : f32 to vector<2x32xf32>
    %1104 = arith.addf %1103, %1102 : vector<2x32xf32>
    %1105 = arith.divf %1103, %1104 : vector<2x32xf32>
    %1106 = vector.extract_strided_slice %1099 {offsets = [0, 32], sizes = [2, 32], strides = [1, 1]} : vector<2x128xf32> to vector<2x32xf32>
    %1107 = arith.negf %1106 : vector<2x32xf32>
    %1108 = math.exp %1107 : vector<2x32xf32>
    %cst_307 = arith.constant 1.000000e+00 : f32
    %1109 = vector.broadcast %cst_307 : f32 to vector<2x32xf32>
    %1110 = arith.addf %1109, %1108 : vector<2x32xf32>
    %1111 = arith.divf %1109, %1110 : vector<2x32xf32>
    %1112 = vector.extract_strided_slice %1099 {offsets = [0, 64], sizes = [2, 32], strides = [1, 1]} : vector<2x128xf32> to vector<2x32xf32>
    %1113 = math.tanh %1112 : vector<2x32xf32>
    %1114 = vector.extract_strided_slice %1099 {offsets = [0, 96], sizes = [2, 32], strides = [1, 1]} : vector<2x128xf32> to vector<2x32xf32>
    %1115 = arith.negf %1114 : vector<2x32xf32>
    %1116 = math.exp %1115 : vector<2x32xf32>
    %cst_308 = arith.constant 1.000000e+00 : f32
    %1117 = vector.broadcast %cst_308 : f32 to vector<2x32xf32>
    %1118 = arith.addf %1117, %1116 : vector<2x32xf32>
    %1119 = arith.divf %1117, %1118 : vector<2x32xf32>
    %1120 = arith.mulf %1111, %1092 : vector<2x32xf32>
    %1121 = arith.mulf %1105, %1113 : vector<2x32xf32>
    %1122 = arith.addf %1120, %1121 : vector<2x32xf32>
    %1123 = math.tanh %1122 : vector<2x32xf32>
    %1124 = arith.mulf %1119, %1123 : vector<2x32xf32>
    %c2_309 = arith.constant 2 : index
    %c0_310 = arith.constant 0 : index
    %1125 = vector.load %arg17[%c2_309, %c0_310] : memref<16x32xf32, #tpu.memory_space<vmem>>, vector<2x32xf32>
    tpu.vector_store %arg17[%c2_309, %c0_310], %1124 {strides = array<i32>} : memref<16x32xf32, #tpu.memory_space<vmem>>, vector<2x32xf32>,
    %c2_311 = arith.constant 2 : index
    %c0_312 = arith.constant 0 : index
    %c0_313 = arith.constant 0 : index
    %1126 = vector.load %arg1[%c2_311, %c0_312, %c0_313] : memref<8x2x128xf32, #tpu.memory_space<vmem>>, vector<1x2x128xf32>
    %1127 = vector.shape_cast %1126 : vector<1x2x128xf32> to vector<2x128xf32>
    %cst_314 = arith.constant dense<0.000000e+00> : vector<2x128xf32>
    %1128 = tpu.matmul %1124, %1065, %cst_314 {dimension_numbers = #tpu.dot_dimension_numbers<[1], [0], [0], [1], [0, 0, 1, 1], [], []>} : vector<2x32xf32>, vector<32x128xf32>, vector<2x128xf32> -> vector<2x128xf32>
    %1129 = arith.addf %1127, %1128 : vector<2x128xf32>
    %1130 = vector.extract_strided_slice %1129 {offsets = [0, 0], sizes = [2, 32], strides = [1, 1]} : vector<2x128xf32> to vector<2x32xf32>
    %1131 = arith.negf %1130 : vector<2x32xf32>
    %1132 = math.exp %1131 : vector<2x32xf32>
    %cst_315 = arith.constant 1.000000e+00 : f32
    %1133 = vector.broadcast %cst_315 : f32 to vector<2x32xf32>
    %1134 = arith.addf %1133, %1132 : vector<2x32xf32>
    %1135 = arith.divf %1133, %1134 : vector<2x32xf32>
    %1136 = vector.extract_strided_slice %1129 {offsets = [0, 32], sizes = [2, 32], strides = [1, 1]} : vector<2x128xf32> to vector<2x32xf32>
    %1137 = arith.negf %1136 : vector<2x32xf32>
    %1138 = math.exp %1137 : vector<2x32xf32>
    %cst_316 = arith.constant 1.000000e+00 : f32
    %1139 = vector.broadcast %cst_316 : f32 to vector<2x32xf32>
    %1140 = arith.addf %1139, %1138 : vector<2x32xf32>
    %1141 = arith.divf %1139, %1140 : vector<2x32xf32>
    %1142 = vector.extract_strided_slice %1129 {offsets = [0, 64], sizes = [2, 32], strides = [1, 1]} : vector<2x128xf32> to vector<2x32xf32>
    %1143 = math.tanh %1142 : vector<2x32xf32>
    %1144 = vector.extract_strided_slice %1129 {offsets = [0, 96], sizes = [2, 32], strides = [1, 1]} : vector<2x128xf32> to vector<2x32xf32>
    %1145 = arith.negf %1144 : vector<2x32xf32>
    %1146 = math.exp %1145 : vector<2x32xf32>
    %cst_317 = arith.constant 1.000000e+00 : f32
    %1147 = vector.broadcast %cst_317 : f32 to vector<2x32xf32>
    %1148 = arith.addf %1147, %1146 : vector<2x32xf32>
    %1149 = arith.divf %1147, %1148 : vector<2x32xf32>
    %1150 = arith.mulf %1141, %1122 : vector<2x32xf32>
    %1151 = arith.mulf %1135, %1143 : vector<2x32xf32>
    %1152 = arith.addf %1150, %1151 : vector<2x32xf32>
    %1153 = math.tanh %1152 : vector<2x32xf32>
    %1154 = arith.mulf %1149, %1153 : vector<2x32xf32>
    %c4_318 = arith.constant 4 : index
    %c0_319 = arith.constant 0 : index
    %1155 = vector.load %arg17[%c4_318, %c0_319] : memref<16x32xf32, #tpu.memory_space<vmem>>, vector<2x32xf32>
    tpu.vector_store %arg17[%c4_318, %c0_319], %1154 {strides = array<i32>} : memref<16x32xf32, #tpu.memory_space<vmem>>, vector<2x32xf32>,
    %c3_320 = arith.constant 3 : index
    %c0_321 = arith.constant 0 : index
    %c0_322 = arith.constant 0 : index
    %1156 = vector.load %arg1[%c3_320, %c0_321, %c0_322] : memref<8x2x128xf32, #tpu.memory_space<vmem>>, vector<1x2x128xf32>
    %1157 = vector.shape_cast %1156 : vector<1x2x128xf32> to vector<2x128xf32>
    %cst_323 = arith.constant dense<0.000000e+00> : vector<2x128xf32>
    %1158 = tpu.matmul %1154, %1065, %cst_323 {dimension_numbers = #tpu.dot_dimension_numbers<[1], [0], [0], [1], [0, 0, 1, 1], [], []>} : vector<2x32xf32>, vector<32x128xf32>, vector<2x128xf32> -> vector<2x128xf32>
    %1159 = arith.addf %1157, %1158 : vector<2x128xf32>
    %1160 = vector.extract_strided_slice %1159 {offsets = [0, 0], sizes = [2, 32], strides = [1, 1]} : vector<2x128xf32> to vector<2x32xf32>
    %1161 = arith.negf %1160 : vector<2x32xf32>
    %1162 = math.exp %1161 : vector<2x32xf32>
    %cst_324 = arith.constant 1.000000e+00 : f32
    %1163 = vector.broadcast %cst_324 : f32 to vector<2x32xf32>
    %1164 = arith.addf %1163, %1162 : vector<2x32xf32>
    %1165 = arith.divf %1163, %1164 : vector<2x32xf32>
    %1166 = vector.extract_strided_slice %1159 {offsets = [0, 32], sizes = [2, 32], strides = [1, 1]} : vector<2x128xf32> to vector<2x32xf32>
    %1167 = arith.negf %1166 : vector<2x32xf32>
    %1168 = math.exp %1167 : vector<2x32xf32>
    %cst_325 = arith.constant 1.000000e+00 : f32
    %1169 = vector.broadcast %cst_325 : f32 to vector<2x32xf32>
    %1170 = arith.addf %1169, %1168 : vector<2x32xf32>
    %1171 = arith.divf %1169, %1170 : vector<2x32xf32>
    %1172 = vector.extract_strided_slice %1159 {offsets = [0, 64], sizes = [2, 32], strides = [1, 1]} : vector<2x128xf32> to vector<2x32xf32>
    %1173 = math.tanh %1172 : vector<2x32xf32>
    %1174 = vector.extract_strided_slice %1159 {offsets = [0, 96], sizes = [2, 32], strides = [1, 1]} : vector<2x128xf32> to vector<2x32xf32>
    %1175 = arith.negf %1174 : vector<2x32xf32>
    %1176 = math.exp %1175 : vector<2x32xf32>
    %cst_326 = arith.constant 1.000000e+00 : f32
    %1177 = vector.broadcast %cst_326 : f32 to vector<2x32xf32>
    %1178 = arith.addf %1177, %1176 : vector<2x32xf32>
    %1179 = arith.divf %1177, %1178 : vector<2x32xf32>
    %1180 = arith.mulf %1171, %1152 : vector<2x32xf32>
    %1181 = arith.mulf %1165, %1173 : vector<2x32xf32>
    %1182 = arith.addf %1180, %1181 : vector<2x32xf32>
    %1183 = math.tanh %1182 : vector<2x32xf32>
    %1184 = arith.mulf %1179, %1183 : vector<2x32xf32>
    %c6_327 = arith.constant 6 : index
    %c0_328 = arith.constant 0 : index
    %1185 = vector.load %arg17[%c6_327, %c0_328] : memref<16x32xf32, #tpu.memory_space<vmem>>, vector<2x32xf32>
    tpu.vector_store %arg17[%c6_327, %c0_328], %1184 {strides = array<i32>} : memref<16x32xf32, #tpu.memory_space<vmem>>, vector<2x32xf32>,
    %c4_329 = arith.constant 4 : index
    %c0_330 = arith.constant 0 : index
    %c0_331 = arith.constant 0 : index
    %1186 = vector.load %arg1[%c4_329, %c0_330, %c0_331] : memref<8x2x128xf32, #tpu.memory_space<vmem>>, vector<1x2x128xf32>
    %1187 = vector.shape_cast %1186 : vector<1x2x128xf32> to vector<2x128xf32>
    %cst_332 = arith.constant dense<0.000000e+00> : vector<2x128xf32>
    %1188 = tpu.matmul %1184, %1065, %cst_332 {dimension_numbers = #tpu.dot_dimension_numbers<[1], [0], [0], [1], [0, 0, 1, 1], [], []>} : vector<2x32xf32>, vector<32x128xf32>, vector<2x128xf32> -> vector<2x128xf32>
    %1189 = arith.addf %1187, %1188 : vector<2x128xf32>
    %1190 = vector.extract_strided_slice %1189 {offsets = [0, 0], sizes = [2, 32], strides = [1, 1]} : vector<2x128xf32> to vector<2x32xf32>
    %1191 = arith.negf %1190 : vector<2x32xf32>
    %1192 = math.exp %1191 : vector<2x32xf32>
    %cst_333 = arith.constant 1.000000e+00 : f32
    %1193 = vector.broadcast %cst_333 : f32 to vector<2x32xf32>
    %1194 = arith.addf %1193, %1192 : vector<2x32xf32>
    %1195 = arith.divf %1193, %1194 : vector<2x32xf32>
    %1196 = vector.extract_strided_slice %1189 {offsets = [0, 32], sizes = [2, 32], strides = [1, 1]} : vector<2x128xf32> to vector<2x32xf32>
    %1197 = arith.negf %1196 : vector<2x32xf32>
    %1198 = math.exp %1197 : vector<2x32xf32>
    %cst_334 = arith.constant 1.000000e+00 : f32
    %1199 = vector.broadcast %cst_334 : f32 to vector<2x32xf32>
    %1200 = arith.addf %1199, %1198 : vector<2x32xf32>
    %1201 = arith.divf %1199, %1200 : vector<2x32xf32>
    %1202 = vector.extract_strided_slice %1189 {offsets = [0, 64], sizes = [2, 32], strides = [1, 1]} : vector<2x128xf32> to vector<2x32xf32>
    %1203 = math.tanh %1202 : vector<2x32xf32>
    %1204 = vector.extract_strided_slice %1189 {offsets = [0, 96], sizes = [2, 32], strides = [1, 1]} : vector<2x128xf32> to vector<2x32xf32>
    %1205 = arith.negf %1204 : vector<2x32xf32>
    %1206 = math.exp %1205 : vector<2x32xf32>
    %cst_335 = arith.constant 1.000000e+00 : f32
    %1207 = vector.broadcast %cst_335 : f32 to vector<2x32xf32>
    %1208 = arith.addf %1207, %1206 : vector<2x32xf32>
    %1209 = arith.divf %1207, %1208 : vector<2x32xf32>
    %1210 = arith.mulf %1201, %1182 : vector<2x32xf32>
    %1211 = arith.mulf %1195, %1203 : vector<2x32xf32>
    %1212 = arith.addf %1210, %1211 : vector<2x32xf32>
    %1213 = math.tanh %1212 : vector<2x32xf32>
    %1214 = arith.mulf %1209, %1213 : vector<2x32xf32>
    %c8_336 = arith.constant 8 : index
    %c0_337 = arith.constant 0 : index
    %1215 = vector.load %arg17[%c8_336, %c0_337] : memref<16x32xf32, #tpu.memory_space<vmem>>, vector<2x32xf32>
    tpu.vector_store %arg17[%c8_336, %c0_337], %1214 {strides = array<i32>} : memref<16x32xf32, #tpu.memory_space<vmem>>, vector<2x32xf32>,
    %c5_338 = arith.constant 5 : index
    %c0_339 = arith.constant 0 : index
    %c0_340 = arith.constant 0 : index
    %1216 = vector.load %arg1[%c5_338, %c0_339, %c0_340] : memref<8x2x128xf32, #tpu.memory_space<vmem>>, vector<1x2x128xf32>
    %1217 = vector.shape_cast %1216 : vector<1x2x128xf32> to vector<2x128xf32>
    %cst_341 = arith.constant dense<0.000000e+00> : vector<2x128xf32>
    %1218 = tpu.matmul %1214, %1065, %cst_341 {dimension_numbers = #tpu.dot_dimension_numbers<[1], [0], [0], [1], [0, 0, 1, 1], [], []>} : vector<2x32xf32>, vector<32x128xf32>, vector<2x128xf32> -> vector<2x128xf32>
    %1219 = arith.addf %1217, %1218 : vector<2x128xf32>
    %1220 = vector.extract_strided_slice %1219 {offsets = [0, 0], sizes = [2, 32], strides = [1, 1]} : vector<2x128xf32> to vector<2x32xf32>
    %1221 = arith.negf %1220 : vector<2x32xf32>
    %1222 = math.exp %1221 : vector<2x32xf32>
    %cst_342 = arith.constant 1.000000e+00 : f32
    %1223 = vector.broadcast %cst_342 : f32 to vector<2x32xf32>
    %1224 = arith.addf %1223, %1222 : vector<2x32xf32>
    %1225 = arith.divf %1223, %1224 : vector<2x32xf32>
    %1226 = vector.extract_strided_slice %1219 {offsets = [0, 32], sizes = [2, 32], strides = [1, 1]} : vector<2x128xf32> to vector<2x32xf32>
    %1227 = arith.negf %1226 : vector<2x32xf32>
    %1228 = math.exp %1227 : vector<2x32xf32>
    %cst_343 = arith.constant 1.000000e+00 : f32
    %1229 = vector.broadcast %cst_343 : f32 to vector<2x32xf32>
    %1230 = arith.addf %1229, %1228 : vector<2x32xf32>
    %1231 = arith.divf %1229, %1230 : vector<2x32xf32>
    %1232 = vector.extract_strided_slice %1219 {offsets = [0, 64], sizes = [2, 32], strides = [1, 1]} : vector<2x128xf32> to vector<2x32xf32>
    %1233 = math.tanh %1232 : vector<2x32xf32>
    %1234 = vector.extract_strided_slice %1219 {offsets = [0, 96], sizes = [2, 32], strides = [1, 1]} : vector<2x128xf32> to vector<2x32xf32>
    %1235 = arith.negf %1234 : vector<2x32xf32>
    %1236 = math.exp %1235 : vector<2x32xf32>
    %cst_344 = arith.constant 1.000000e+00 : f32
    %1237 = vector.broadcast %cst_344 : f32 to vector<2x32xf32>
    %1238 = arith.addf %1237, %1236 : vector<2x32xf32>
    %1239 = arith.divf %1237, %1238 : vector<2x32xf32>
    %1240 = arith.mulf %1231, %1212 : vector<2x32xf32>
    %1241 = arith.mulf %1225, %1233 : vector<2x32xf32>
    %1242 = arith.addf %1240, %1241 : vector<2x32xf32>
    %1243 = math.tanh %1242 : vector<2x32xf32>
    %1244 = arith.mulf %1239, %1243 : vector<2x32xf32>
    %c10_345 = arith.constant 10 : index
    %c0_346 = arith.constant 0 : index
    %1245 = vector.load %arg17[%c10_345, %c0_346] : memref<16x32xf32, #tpu.memory_space<vmem>>, vector<2x32xf32>
    tpu.vector_store %arg17[%c10_345, %c0_346], %1244 {strides = array<i32>} : memref<16x32xf32, #tpu.memory_space<vmem>>, vector<2x32xf32>,
    %c6_347 = arith.constant 6 : index
    %c0_348 = arith.constant 0 : index
    %c0_349 = arith.constant 0 : index
    %1246 = vector.load %arg1[%c6_347, %c0_348, %c0_349] : memref<8x2x128xf32, #tpu.memory_space<vmem>>, vector<1x2x128xf32>
    %1247 = vector.shape_cast %1246 : vector<1x2x128xf32> to vector<2x128xf32>
    %cst_350 = arith.constant dense<0.000000e+00> : vector<2x128xf32>
    %1248 = tpu.matmul %1244, %1065, %cst_350 {dimension_numbers = #tpu.dot_dimension_numbers<[1], [0], [0], [1], [0, 0, 1, 1], [], []>} : vector<2x32xf32>, vector<32x128xf32>, vector<2x128xf32> -> vector<2x128xf32>
    %1249 = arith.addf %1247, %1248 : vector<2x128xf32>
    %1250 = vector.extract_strided_slice %1249 {offsets = [0, 0], sizes = [2, 32], strides = [1, 1]} : vector<2x128xf32> to vector<2x32xf32>
    %1251 = arith.negf %1250 : vector<2x32xf32>
    %1252 = math.exp %1251 : vector<2x32xf32>
    %cst_351 = arith.constant 1.000000e+00 : f32
    %1253 = vector.broadcast %cst_351 : f32 to vector<2x32xf32>
    %1254 = arith.addf %1253, %1252 : vector<2x32xf32>
    %1255 = arith.divf %1253, %1254 : vector<2x32xf32>
    %1256 = vector.extract_strided_slice %1249 {offsets = [0, 32], sizes = [2, 32], strides = [1, 1]} : vector<2x128xf32> to vector<2x32xf32>
    %1257 = arith.negf %1256 : vector<2x32xf32>
    %1258 = math.exp %1257 : vector<2x32xf32>
    %cst_352 = arith.constant 1.000000e+00 : f32
    %1259 = vector.broadcast %cst_352 : f32 to vector<2x32xf32>
    %1260 = arith.addf %1259, %1258 : vector<2x32xf32>
    %1261 = arith.divf %1259, %1260 : vector<2x32xf32>
    %1262 = vector.extract_strided_slice %1249 {offsets = [0, 64], sizes = [2, 32], strides = [1, 1]} : vector<2x128xf32> to vector<2x32xf32>
    %1263 = math.tanh %1262 : vector<2x32xf32>
    %1264 = vector.extract_strided_slice %1249 {offsets = [0, 96], sizes = [2, 32], strides = [1, 1]} : vector<2x128xf32> to vector<2x32xf32>
    %1265 = arith.negf %1264 : vector<2x32xf32>
    %1266 = math.exp %1265 : vector<2x32xf32>
    %cst_353 = arith.constant 1.000000e+00 : f32
    %1267 = vector.broadcast %cst_353 : f32 to vector<2x32xf32>
    %1268 = arith.addf %1267, %1266 : vector<2x32xf32>
    %1269 = arith.divf %1267, %1268 : vector<2x32xf32>
    %1270 = arith.mulf %1261, %1242 : vector<2x32xf32>
    %1271 = arith.mulf %1255, %1263 : vector<2x32xf32>
    %1272 = arith.addf %1270, %1271 : vector<2x32xf32>
    %1273 = math.tanh %1272 : vector<2x32xf32>
    %1274 = arith.mulf %1269, %1273 : vector<2x32xf32>
    %c12_354 = arith.constant 12 : index
    %c0_355 = arith.constant 0 : index
    %1275 = vector.load %arg17[%c12_354, %c0_355] : memref<16x32xf32, #tpu.memory_space<vmem>>, vector<2x32xf32>
    tpu.vector_store %arg17[%c12_354, %c0_355], %1274 {strides = array<i32>} : memref<16x32xf32, #tpu.memory_space<vmem>>, vector<2x32xf32>,
    %c7_356 = arith.constant 7 : index
    %c0_357 = arith.constant 0 : index
    %c0_358 = arith.constant 0 : index
    %1276 = vector.load %arg1[%c7_356, %c0_357, %c0_358] : memref<8x2x128xf32, #tpu.memory_space<vmem>>, vector<1x2x128xf32>
    %1277 = vector.shape_cast %1276 : vector<1x2x128xf32> to vector<2x128xf32>
    %cst_359 = arith.constant dense<0.000000e+00> : vector<2x128xf32>
    %1278 = tpu.matmul %1274, %1065, %cst_359 {dimension_numbers = #tpu.dot_dimension_numbers<[1], [0], [0], [1], [0, 0, 1, 1], [], []>} : vector<2x32xf32>, vector<32x128xf32>, vector<2x128xf32> -> vector<2x128xf32>
    %1279 = arith.addf %1277, %1278 : vector<2x128xf32>
    %1280 = vector.extract_strided_slice %1279 {offsets = [0, 0], sizes = [2, 32], strides = [1, 1]} : vector<2x128xf32> to vector<2x32xf32>
    %1281 = arith.negf %1280 : vector<2x32xf32>
    %1282 = math.exp %1281 : vector<2x32xf32>
    %cst_360 = arith.constant 1.000000e+00 : f32
    %1283 = vector.broadcast %cst_360 : f32 to vector<2x32xf32>
    %1284 = arith.addf %1283, %1282 : vector<2x32xf32>
    %1285 = arith.divf %1283, %1284 : vector<2x32xf32>
    %1286 = vector.extract_strided_slice %1279 {offsets = [0, 32], sizes = [2, 32], strides = [1, 1]} : vector<2x128xf32> to vector<2x32xf32>
    %1287 = arith.negf %1286 : vector<2x32xf32>
    %1288 = math.exp %1287 : vector<2x32xf32>
    %cst_361 = arith.constant 1.000000e+00 : f32
    %1289 = vector.broadcast %cst_361 : f32 to vector<2x32xf32>
    %1290 = arith.addf %1289, %1288 : vector<2x32xf32>
    %1291 = arith.divf %1289, %1290 : vector<2x32xf32>
    %1292 = vector.extract_strided_slice %1279 {offsets = [0, 64], sizes = [2, 32], strides = [1, 1]} : vector<2x128xf32> to vector<2x32xf32>
    %1293 = math.tanh %1292 : vector<2x32xf32>
    %1294 = vector.extract_strided_slice %1279 {offsets = [0, 96], sizes = [2, 32], strides = [1, 1]} : vector<2x128xf32> to vector<2x32xf32>
    %1295 = arith.negf %1294 : vector<2x32xf32>
    %1296 = math.exp %1295 : vector<2x32xf32>
    %cst_362 = arith.constant 1.000000e+00 : f32
    %1297 = vector.broadcast %cst_362 : f32 to vector<2x32xf32>
    %1298 = arith.addf %1297, %1296 : vector<2x32xf32>
    %1299 = arith.divf %1297, %1298 : vector<2x32xf32>
    %1300 = arith.mulf %1291, %1272 : vector<2x32xf32>
    %1301 = arith.mulf %1285, %1293 : vector<2x32xf32>
    %1302 = arith.addf %1300, %1301 : vector<2x32xf32>
    %1303 = math.tanh %1302 : vector<2x32xf32>
    %1304 = arith.mulf %1299, %1303 : vector<2x32xf32>
    %c14_363 = arith.constant 14 : index
    %c0_364 = arith.constant 0 : index
    %1305 = vector.load %arg17[%c14_363, %c0_364] : memref<16x32xf32, #tpu.memory_space<vmem>>, vector<2x32xf32>
    tpu.vector_store %arg17[%c14_363, %c0_364], %1304 {strides = array<i32>} : memref<16x32xf32, #tpu.memory_space<vmem>>, vector<2x32xf32>,
    %c0_365 = arith.constant 0 : index
    %c0_366 = arith.constant 0 : index
    %1306 = vector.load %arg17[%c0_365, %c0_366] : memref<16x32xf32, #tpu.memory_space<vmem>>, vector<16x32xf32>
    %c0_367 = arith.constant 0 : index
    %c0_368 = arith.constant 0 : index
    %1307 = vector.load %arg7[%c0_367, %c0_368] : memref<32x128xf32, #tpu.memory_space<vmem>>, vector<32x128xf32>
    %cst_369 = arith.constant dense<0.000000e+00> : vector<16x128xf32>
    %1308 = tpu.matmul %1306, %1307, %cst_369 {dimension_numbers = #tpu.dot_dimension_numbers<[1], [0], [0], [1], [0, 0, 1, 1], [], []>} : vector<16x32xf32>, vector<32x128xf32>, vector<16x128xf32> -> vector<16x128xf32>
    %c0_370 = arith.constant 0 : index
    %c0_371 = arith.constant 0 : index
    %1309 = vector.load %arg9[%c0_370, %c0_371] : memref<1x128xf32, #tpu.memory_space<vmem>>, vector<1x128xf32>
    %1310 = vector.broadcast %1309 : vector<1x128xf32> to vector<16x128xf32>
    %1311 = arith.addf %1308, %1310 : vector<16x128xf32>
    %c0_372 = arith.constant 0 : index
    %c0_373 = arith.constant 0 : index
    %1312 = vector.load %arg8[%c0_372, %c0_373] : memref<32x128xf32, #tpu.memory_space<vmem>>, vector<32x128xf32>
    %1313 = vector.extract_strided_slice %1311 {offsets = [0, 0], sizes = [2, 128], strides = [1, 1]} : vector<16x128xf32> to vector<2x128xf32>
    %cst_374 = arith.constant dense<0.000000e+00> : vector<2x128xf32>
    %1314 = tpu.matmul %1056, %1312, %cst_374 {dimension_numbers = #tpu.dot_dimension_numbers<[1], [0], [0], [1], [0, 0, 1, 1], [], []>} : vector<2x32xf32>, vector<32x128xf32>, vector<2x128xf32> -> vector<2x128xf32>
    %1315 = arith.addf %1313, %1314 : vector<2x128xf32>
    %1316 = vector.extract_strided_slice %1315 {offsets = [0, 0], sizes = [2, 32], strides = [1, 1]} : vector<2x128xf32> to vector<2x32xf32>
    %1317 = arith.negf %1316 : vector<2x32xf32>
    %1318 = math.exp %1317 : vector<2x32xf32>
    %cst_375 = arith.constant 1.000000e+00 : f32
    %1319 = vector.broadcast %cst_375 : f32 to vector<2x32xf32>
    %1320 = arith.addf %1319, %1318 : vector<2x32xf32>
    %1321 = arith.divf %1319, %1320 : vector<2x32xf32>
    %1322 = vector.extract_strided_slice %1315 {offsets = [0, 32], sizes = [2, 32], strides = [1, 1]} : vector<2x128xf32> to vector<2x32xf32>
    %1323 = arith.negf %1322 : vector<2x32xf32>
    %1324 = math.exp %1323 : vector<2x32xf32>
    %cst_376 = arith.constant 1.000000e+00 : f32
    %1325 = vector.broadcast %cst_376 : f32 to vector<2x32xf32>
    %1326 = arith.addf %1325, %1324 : vector<2x32xf32>
    %1327 = arith.divf %1325, %1326 : vector<2x32xf32>
    %1328 = vector.extract_strided_slice %1315 {offsets = [0, 64], sizes = [2, 32], strides = [1, 1]} : vector<2x128xf32> to vector<2x32xf32>
    %1329 = math.tanh %1328 : vector<2x32xf32>
    %1330 = vector.extract_strided_slice %1315 {offsets = [0, 96], sizes = [2, 32], strides = [1, 1]} : vector<2x128xf32> to vector<2x32xf32>
    %1331 = arith.negf %1330 : vector<2x32xf32>
    %1332 = math.exp %1331 : vector<2x32xf32>
    %cst_377 = arith.constant 1.000000e+00 : f32
    %1333 = vector.broadcast %cst_377 : f32 to vector<2x32xf32>
    %1334 = arith.addf %1333, %1332 : vector<2x32xf32>
    %1335 = arith.divf %1333, %1334 : vector<2x32xf32>
    %1336 = arith.mulf %1327, %1054 : vector<2x32xf32>
    %1337 = arith.mulf %1321, %1329 : vector<2x32xf32>
    %1338 = arith.addf %1336, %1337 : vector<2x32xf32>
    %1339 = math.tanh %1338 : vector<2x32xf32>
    %1340 = arith.mulf %1335, %1339 : vector<2x32xf32>
    %1341 = vector.extract_strided_slice %1340 {offsets = [0, 0], sizes = [1, 32], strides = [1, 1]} : vector<2x32xf32> to vector<1x32xf32>
    %c0_378 = arith.constant 0 : index
    %c0_379 = arith.constant 0 : index
    %c0_380 = arith.constant 0 : index
    %1342 = vector.load %arg19[%c0_378, %c0_379, %c0_380] : memref<2x8x32xf32, #tpu.memory_space<vmem>>, vector<1x1x32xf32>
    %1343 = vector.shape_cast %1342 : vector<1x1x32xf32> to vector<1x32xf32>
    %1344 = vector.shape_cast %1341 : vector<1x32xf32> to vector<1x1x32xf32>
    tpu.vector_store %arg19[%c0_378, %c0_379, %c0_380], %1344 {strides = array<i32>} : memref<2x8x32xf32, #tpu.memory_space<vmem>>, vector<1x1x32xf32>,
    %1345 = vector.extract_strided_slice %1340 {offsets = [1, 0], sizes = [1, 32], strides = [1, 1]} : vector<2x32xf32> to vector<1x32xf32>
    %c1_381 = arith.constant 1 : index
    %c0_382 = arith.constant 0 : index
    %c0_383 = arith.constant 0 : index
    %1346 = vector.load %arg19[%c1_381, %c0_382, %c0_383] : memref<2x8x32xf32, #tpu.memory_space<vmem>>, vector<1x1x32xf32>
    %1347 = vector.shape_cast %1346 : vector<1x1x32xf32> to vector<1x32xf32>
    %1348 = vector.shape_cast %1345 : vector<1x32xf32> to vector<1x1x32xf32>
    tpu.vector_store %arg19[%c1_381, %c0_382, %c0_383], %1348 {strides = array<i32>} : memref<2x8x32xf32, #tpu.memory_space<vmem>>, vector<1x1x32xf32>,
    %1349 = vector.extract_strided_slice %1311 {offsets = [2, 0], sizes = [2, 128], strides = [1, 1]} : vector<16x128xf32> to vector<2x128xf32>
    %cst_384 = arith.constant dense<0.000000e+00> : vector<2x128xf32>
    %1350 = tpu.matmul %1340, %1312, %cst_384 {dimension_numbers = #tpu.dot_dimension_numbers<[1], [0], [0], [1], [0, 0, 1, 1], [], []>} : vector<2x32xf32>, vector<32x128xf32>, vector<2x128xf32> -> vector<2x128xf32>
    %1351 = arith.addf %1349, %1350 : vector<2x128xf32>
    %1352 = vector.extract_strided_slice %1351 {offsets = [0, 0], sizes = [2, 32], strides = [1, 1]} : vector<2x128xf32> to vector<2x32xf32>
    %1353 = arith.negf %1352 : vector<2x32xf32>
    %1354 = math.exp %1353 : vector<2x32xf32>
    %cst_385 = arith.constant 1.000000e+00 : f32
    %1355 = vector.broadcast %cst_385 : f32 to vector<2x32xf32>
    %1356 = arith.addf %1355, %1354 : vector<2x32xf32>
    %1357 = arith.divf %1355, %1356 : vector<2x32xf32>
    %1358 = vector.extract_strided_slice %1351 {offsets = [0, 32], sizes = [2, 32], strides = [1, 1]} : vector<2x128xf32> to vector<2x32xf32>
    %1359 = arith.negf %1358 : vector<2x32xf32>
    %1360 = math.exp %1359 : vector<2x32xf32>
    %cst_386 = arith.constant 1.000000e+00 : f32
    %1361 = vector.broadcast %cst_386 : f32 to vector<2x32xf32>
    %1362 = arith.addf %1361, %1360 : vector<2x32xf32>
    %1363 = arith.divf %1361, %1362 : vector<2x32xf32>
    %1364 = vector.extract_strided_slice %1351 {offsets = [0, 64], sizes = [2, 32], strides = [1, 1]} : vector<2x128xf32> to vector<2x32xf32>
    %1365 = math.tanh %1364 : vector<2x32xf32>
    %1366 = vector.extract_strided_slice %1351 {offsets = [0, 96], sizes = [2, 32], strides = [1, 1]} : vector<2x128xf32> to vector<2x32xf32>
    %1367 = arith.negf %1366 : vector<2x32xf32>
    %1368 = math.exp %1367 : vector<2x32xf32>
    %cst_387 = arith.constant 1.000000e+00 : f32
    %1369 = vector.broadcast %cst_387 : f32 to vector<2x32xf32>
    %1370 = arith.addf %1369, %1368 : vector<2x32xf32>
    %1371 = arith.divf %1369, %1370 : vector<2x32xf32>
    %1372 = arith.mulf %1363, %1338 : vector<2x32xf32>
    %1373 = arith.mulf %1357, %1365 : vector<2x32xf32>
    %1374 = arith.addf %1372, %1373 : vector<2x32xf32>
    %1375 = math.tanh %1374 : vector<2x32xf32>
    %1376 = arith.mulf %1371, %1375 : vector<2x32xf32>
    %1377 = vector.extract_strided_slice %1376 {offsets = [0, 0], sizes = [1, 32], strides = [1, 1]} : vector<2x32xf32> to vector<1x32xf32>
    %c0_388 = arith.constant 0 : index
    %c1_389 = arith.constant 1 : index
    %c0_390 = arith.constant 0 : index
    %1378 = vector.load %arg19[%c0_388, %c1_389, %c0_390] : memref<2x8x32xf32, #tpu.memory_space<vmem>>, vector<1x1x32xf32>
    %1379 = vector.shape_cast %1378 : vector<1x1x32xf32> to vector<1x32xf32>
    %1380 = vector.shape_cast %1377 : vector<1x32xf32> to vector<1x1x32xf32>
    tpu.vector_store %arg19[%c0_388, %c1_389, %c0_390], %1380 {strides = array<i32>} : memref<2x8x32xf32, #tpu.memory_space<vmem>>, vector<1x1x32xf32>,
    %1381 = vector.extract_strided_slice %1376 {offsets = [1, 0], sizes = [1, 32], strides = [1, 1]} : vector<2x32xf32> to vector<1x32xf32>
    %c1_391 = arith.constant 1 : index
    %c1_392 = arith.constant 1 : index
    %c0_393 = arith.constant 0 : index
    %1382 = vector.load %arg19[%c1_391, %c1_392, %c0_393] : memref<2x8x32xf32, #tpu.memory_space<vmem>>, vector<1x1x32xf32>
    %1383 = vector.shape_cast %1382 : vector<1x1x32xf32> to vector<1x32xf32>
    %1384 = vector.shape_cast %1381 : vector<1x32xf32> to vector<1x1x32xf32>
    tpu.vector_store %arg19[%c1_391, %c1_392, %c0_393], %1384 {strides = array<i32>} : memref<2x8x32xf32, #tpu.memory_space<vmem>>, vector<1x1x32xf32>,
    %1385 = vector.extract_strided_slice %1311 {offsets = [4, 0], sizes = [2, 128], strides = [1, 1]} : vector<16x128xf32> to vector<2x128xf32>
    %cst_394 = arith.constant dense<0.000000e+00> : vector<2x128xf32>
    %1386 = tpu.matmul %1376, %1312, %cst_394 {dimension_numbers = #tpu.dot_dimension_numbers<[1], [0], [0], [1], [0, 0, 1, 1], [], []>} : vector<2x32xf32>, vector<32x128xf32>, vector<2x128xf32> -> vector<2x128xf32>
    %1387 = arith.addf %1385, %1386 : vector<2x128xf32>
    %1388 = vector.extract_strided_slice %1387 {offsets = [0, 0], sizes = [2, 32], strides = [1, 1]} : vector<2x128xf32> to vector<2x32xf32>
    %1389 = arith.negf %1388 : vector<2x32xf32>
    %1390 = math.exp %1389 : vector<2x32xf32>
    %cst_395 = arith.constant 1.000000e+00 : f32
    %1391 = vector.broadcast %cst_395 : f32 to vector<2x32xf32>
    %1392 = arith.addf %1391, %1390 : vector<2x32xf32>
    %1393 = arith.divf %1391, %1392 : vector<2x32xf32>
    %1394 = vector.extract_strided_slice %1387 {offsets = [0, 32], sizes = [2, 32], strides = [1, 1]} : vector<2x128xf32> to vector<2x32xf32>
    %1395 = arith.negf %1394 : vector<2x32xf32>
    %1396 = math.exp %1395 : vector<2x32xf32>
    %cst_396 = arith.constant 1.000000e+00 : f32
    %1397 = vector.broadcast %cst_396 : f32 to vector<2x32xf32>
    %1398 = arith.addf %1397, %1396 : vector<2x32xf32>
    %1399 = arith.divf %1397, %1398 : vector<2x32xf32>
    %1400 = vector.extract_strided_slice %1387 {offsets = [0, 64], sizes = [2, 32], strides = [1, 1]} : vector<2x128xf32> to vector<2x32xf32>
    %1401 = math.tanh %1400 : vector<2x32xf32>
    %1402 = vector.extract_strided_slice %1387 {offsets = [0, 96], sizes = [2, 32], strides = [1, 1]} : vector<2x128xf32> to vector<2x32xf32>
    %1403 = arith.negf %1402 : vector<2x32xf32>
    %1404 = math.exp %1403 : vector<2x32xf32>
    %cst_397 = arith.constant 1.000000e+00 : f32
    %1405 = vector.broadcast %cst_397 : f32 to vector<2x32xf32>
    %1406 = arith.addf %1405, %1404 : vector<2x32xf32>
    %1407 = arith.divf %1405, %1406 : vector<2x32xf32>
    %1408 = arith.mulf %1399, %1374 : vector<2x32xf32>
    %1409 = arith.mulf %1393, %1401 : vector<2x32xf32>
    %1410 = arith.addf %1408, %1409 : vector<2x32xf32>
    %1411 = math.tanh %1410 : vector<2x32xf32>
    %1412 = arith.mulf %1407, %1411 : vector<2x32xf32>
    %1413 = vector.extract_strided_slice %1412 {offsets = [0, 0], sizes = [1, 32], strides = [1, 1]} : vector<2x32xf32> to vector<1x32xf32>
    %c0_398 = arith.constant 0 : index
    %c2_399 = arith.constant 2 : index
    %c0_400 = arith.constant 0 : index
    %1414 = vector.load %arg19[%c0_398, %c2_399, %c0_400] : memref<2x8x32xf32, #tpu.memory_space<vmem>>, vector<1x1x32xf32>
    %1415 = vector.shape_cast %1414 : vector<1x1x32xf32> to vector<1x32xf32>
    %1416 = vector.shape_cast %1413 : vector<1x32xf32> to vector<1x1x32xf32>
    tpu.vector_store %arg19[%c0_398, %c2_399, %c0_400], %1416 {strides = array<i32>} : memref<2x8x32xf32, #tpu.memory_space<vmem>>, vector<1x1x32xf32>,
    %1417 = vector.extract_strided_slice %1412 {offsets = [1, 0], sizes = [1, 32], strides = [1, 1]} : vector<2x32xf32> to vector<1x32xf32>
    %c1_401 = arith.constant 1 : index
    %c2_402 = arith.constant 2 : index
    %c0_403 = arith.constant 0 : index
    %1418 = vector.load %arg19[%c1_401, %c2_402, %c0_403] : memref<2x8x32xf32, #tpu.memory_space<vmem>>, vector<1x1x32xf32>
    %1419 = vector.shape_cast %1418 : vector<1x1x32xf32> to vector<1x32xf32>
    %1420 = vector.shape_cast %1417 : vector<1x32xf32> to vector<1x1x32xf32>
    tpu.vector_store %arg19[%c1_401, %c2_402, %c0_403], %1420 {strides = array<i32>} : memref<2x8x32xf32, #tpu.memory_space<vmem>>, vector<1x1x32xf32>,
    %1421 = vector.extract_strided_slice %1311 {offsets = [6, 0], sizes = [2, 128], strides = [1, 1]} : vector<16x128xf32> to vector<2x128xf32>
    %cst_404 = arith.constant dense<0.000000e+00> : vector<2x128xf32>
    %1422 = tpu.matmul %1412, %1312, %cst_404 {dimension_numbers = #tpu.dot_dimension_numbers<[1], [0], [0], [1], [0, 0, 1, 1], [], []>} : vector<2x32xf32>, vector<32x128xf32>, vector<2x128xf32> -> vector<2x128xf32>
    %1423 = arith.addf %1421, %1422 : vector<2x128xf32>
    %1424 = vector.extract_strided_slice %1423 {offsets = [0, 0], sizes = [2, 32], strides = [1, 1]} : vector<2x128xf32> to vector<2x32xf32>
    %1425 = arith.negf %1424 : vector<2x32xf32>
    %1426 = math.exp %1425 : vector<2x32xf32>
    %cst_405 = arith.constant 1.000000e+00 : f32
    %1427 = vector.broadcast %cst_405 : f32 to vector<2x32xf32>
    %1428 = arith.addf %1427, %1426 : vector<2x32xf32>
    %1429 = arith.divf %1427, %1428 : vector<2x32xf32>
    %1430 = vector.extract_strided_slice %1423 {offsets = [0, 32], sizes = [2, 32], strides = [1, 1]} : vector<2x128xf32> to vector<2x32xf32>
    %1431 = arith.negf %1430 : vector<2x32xf32>
    %1432 = math.exp %1431 : vector<2x32xf32>
    %cst_406 = arith.constant 1.000000e+00 : f32
    %1433 = vector.broadcast %cst_406 : f32 to vector<2x32xf32>
    %1434 = arith.addf %1433, %1432 : vector<2x32xf32>
    %1435 = arith.divf %1433, %1434 : vector<2x32xf32>
    %1436 = vector.extract_strided_slice %1423 {offsets = [0, 64], sizes = [2, 32], strides = [1, 1]} : vector<2x128xf32> to vector<2x32xf32>
    %1437 = math.tanh %1436 : vector<2x32xf32>
    %1438 = vector.extract_strided_slice %1423 {offsets = [0, 96], sizes = [2, 32], strides = [1, 1]} : vector<2x128xf32> to vector<2x32xf32>
    %1439 = arith.negf %1438 : vector<2x32xf32>
    %1440 = math.exp %1439 : vector<2x32xf32>
    %cst_407 = arith.constant 1.000000e+00 : f32
    %1441 = vector.broadcast %cst_407 : f32 to vector<2x32xf32>
    %1442 = arith.addf %1441, %1440 : vector<2x32xf32>
    %1443 = arith.divf %1441, %1442 : vector<2x32xf32>
    %1444 = arith.mulf %1435, %1410 : vector<2x32xf32>
    %1445 = arith.mulf %1429, %1437 : vector<2x32xf32>
    %1446 = arith.addf %1444, %1445 : vector<2x32xf32>
    %1447 = math.tanh %1446 : vector<2x32xf32>
    %1448 = arith.mulf %1443, %1447 : vector<2x32xf32>
    %1449 = vector.extract_strided_slice %1448 {offsets = [0, 0], sizes = [1, 32], strides = [1, 1]} : vector<2x32xf32> to vector<1x32xf32>
    %c0_408 = arith.constant 0 : index
    %c3_409 = arith.constant 3 : index
    %c0_410 = arith.constant 0 : index
    %1450 = vector.load %arg19[%c0_408, %c3_409, %c0_410] : memref<2x8x32xf32, #tpu.memory_space<vmem>>, vector<1x1x32xf32>
    %1451 = vector.shape_cast %1450 : vector<1x1x32xf32> to vector<1x32xf32>
    %1452 = vector.shape_cast %1449 : vector<1x32xf32> to vector<1x1x32xf32>
    tpu.vector_store %arg19[%c0_408, %c3_409, %c0_410], %1452 {strides = array<i32>} : memref<2x8x32xf32, #tpu.memory_space<vmem>>, vector<1x1x32xf32>,
    %1453 = vector.extract_strided_slice %1448 {offsets = [1, 0], sizes = [1, 32], strides = [1, 1]} : vector<2x32xf32> to vector<1x32xf32>
    %c1_411 = arith.constant 1 : index
    %c3_412 = arith.constant 3 : index
    %c0_413 = arith.constant 0 : index
    %1454 = vector.load %arg19[%c1_411, %c3_412, %c0_413] : memref<2x8x32xf32, #tpu.memory_space<vmem>>, vector<1x1x32xf32>
    %1455 = vector.shape_cast %1454 : vector<1x1x32xf32> to vector<1x32xf32>
    %1456 = vector.shape_cast %1453 : vector<1x32xf32> to vector<1x1x32xf32>
    tpu.vector_store %arg19[%c1_411, %c3_412, %c0_413], %1456 {strides = array<i32>} : memref<2x8x32xf32, #tpu.memory_space<vmem>>, vector<1x1x32xf32>,
    %1457 = vector.extract_strided_slice %1311 {offsets = [8, 0], sizes = [2, 128], strides = [1, 1]} : vector<16x128xf32> to vector<2x128xf32>
    %cst_414 = arith.constant dense<0.000000e+00> : vector<2x128xf32>
    %1458 = tpu.matmul %1448, %1312, %cst_414 {dimension_numbers = #tpu.dot_dimension_numbers<[1], [0], [0], [1], [0, 0, 1, 1], [], []>} : vector<2x32xf32>, vector<32x128xf32>, vector<2x128xf32> -> vector<2x128xf32>
    %1459 = arith.addf %1457, %1458 : vector<2x128xf32>
    %1460 = vector.extract_strided_slice %1459 {offsets = [0, 0], sizes = [2, 32], strides = [1, 1]} : vector<2x128xf32> to vector<2x32xf32>
    %1461 = arith.negf %1460 : vector<2x32xf32>
    %1462 = math.exp %1461 : vector<2x32xf32>
    %cst_415 = arith.constant 1.000000e+00 : f32
    %1463 = vector.broadcast %cst_415 : f32 to vector<2x32xf32>
    %1464 = arith.addf %1463, %1462 : vector<2x32xf32>
    %1465 = arith.divf %1463, %1464 : vector<2x32xf32>
    %1466 = vector.extract_strided_slice %1459 {offsets = [0, 32], sizes = [2, 32], strides = [1, 1]} : vector<2x128xf32> to vector<2x32xf32>
    %1467 = arith.negf %1466 : vector<2x32xf32>
    %1468 = math.exp %1467 : vector<2x32xf32>
    %cst_416 = arith.constant 1.000000e+00 : f32
    %1469 = vector.broadcast %cst_416 : f32 to vector<2x32xf32>
    %1470 = arith.addf %1469, %1468 : vector<2x32xf32>
    %1471 = arith.divf %1469, %1470 : vector<2x32xf32>
    %1472 = vector.extract_strided_slice %1459 {offsets = [0, 64], sizes = [2, 32], strides = [1, 1]} : vector<2x128xf32> to vector<2x32xf32>
    %1473 = math.tanh %1472 : vector<2x32xf32>
    %1474 = vector.extract_strided_slice %1459 {offsets = [0, 96], sizes = [2, 32], strides = [1, 1]} : vector<2x128xf32> to vector<2x32xf32>
    %1475 = arith.negf %1474 : vector<2x32xf32>
    %1476 = math.exp %1475 : vector<2x32xf32>
    %cst_417 = arith.constant 1.000000e+00 : f32
    %1477 = vector.broadcast %cst_417 : f32 to vector<2x32xf32>
    %1478 = arith.addf %1477, %1476 : vector<2x32xf32>
    %1479 = arith.divf %1477, %1478 : vector<2x32xf32>
    %1480 = arith.mulf %1471, %1446 : vector<2x32xf32>
    %1481 = arith.mulf %1465, %1473 : vector<2x32xf32>
    %1482 = arith.addf %1480, %1481 : vector<2x32xf32>
    %1483 = math.tanh %1482 : vector<2x32xf32>
    %1484 = arith.mulf %1479, %1483 : vector<2x32xf32>
    %1485 = vector.extract_strided_slice %1484 {offsets = [0, 0], sizes = [1, 32], strides = [1, 1]} : vector<2x32xf32> to vector<1x32xf32>
    %c0_418 = arith.constant 0 : index
    %c4_419 = arith.constant 4 : index
    %c0_420 = arith.constant 0 : index
    %1486 = vector.load %arg19[%c0_418, %c4_419, %c0_420] : memref<2x8x32xf32, #tpu.memory_space<vmem>>, vector<1x1x32xf32>
    %1487 = vector.shape_cast %1486 : vector<1x1x32xf32> to vector<1x32xf32>
    %1488 = vector.shape_cast %1485 : vector<1x32xf32> to vector<1x1x32xf32>
    tpu.vector_store %arg19[%c0_418, %c4_419, %c0_420], %1488 {strides = array<i32>} : memref<2x8x32xf32, #tpu.memory_space<vmem>>, vector<1x1x32xf32>,
    %1489 = vector.extract_strided_slice %1484 {offsets = [1, 0], sizes = [1, 32], strides = [1, 1]} : vector<2x32xf32> to vector<1x32xf32>
    %c1_421 = arith.constant 1 : index
    %c4_422 = arith.constant 4 : index
    %c0_423 = arith.constant 0 : index
    %1490 = vector.load %arg19[%c1_421, %c4_422, %c0_423] : memref<2x8x32xf32, #tpu.memory_space<vmem>>, vector<1x1x32xf32>
    %1491 = vector.shape_cast %1490 : vector<1x1x32xf32> to vector<1x32xf32>
    %1492 = vector.shape_cast %1489 : vector<1x32xf32> to vector<1x1x32xf32>
    tpu.vector_store %arg19[%c1_421, %c4_422, %c0_423], %1492 {strides = array<i32>} : memref<2x8x32xf32, #tpu.memory_space<vmem>>, vector<1x1x32xf32>,
    %1493 = vector.extract_strided_slice %1311 {offsets = [10, 0], sizes = [2, 128], strides = [1, 1]} : vector<16x128xf32> to vector<2x128xf32>
    %cst_424 = arith.constant dense<0.000000e+00> : vector<2x128xf32>
    %1494 = tpu.matmul %1484, %1312, %cst_424 {dimension_numbers = #tpu.dot_dimension_numbers<[1], [0], [0], [1], [0, 0, 1, 1], [], []>} : vector<2x32xf32>, vector<32x128xf32>, vector<2x128xf32> -> vector<2x128xf32>
    %1495 = arith.addf %1493, %1494 : vector<2x128xf32>
    %1496 = vector.extract_strided_slice %1495 {offsets = [0, 0], sizes = [2, 32], strides = [1, 1]} : vector<2x128xf32> to vector<2x32xf32>
    %1497 = arith.negf %1496 : vector<2x32xf32>
    %1498 = math.exp %1497 : vector<2x32xf32>
    %cst_425 = arith.constant 1.000000e+00 : f32
    %1499 = vector.broadcast %cst_425 : f32 to vector<2x32xf32>
    %1500 = arith.addf %1499, %1498 : vector<2x32xf32>
    %1501 = arith.divf %1499, %1500 : vector<2x32xf32>
    %1502 = vector.extract_strided_slice %1495 {offsets = [0, 32], sizes = [2, 32], strides = [1, 1]} : vector<2x128xf32> to vector<2x32xf32>
    %1503 = arith.negf %1502 : vector<2x32xf32>
    %1504 = math.exp %1503 : vector<2x32xf32>
    %cst_426 = arith.constant 1.000000e+00 : f32
    %1505 = vector.broadcast %cst_426 : f32 to vector<2x32xf32>
    %1506 = arith.addf %1505, %1504 : vector<2x32xf32>
    %1507 = arith.divf %1505, %1506 : vector<2x32xf32>
    %1508 = vector.extract_strided_slice %1495 {offsets = [0, 64], sizes = [2, 32], strides = [1, 1]} : vector<2x128xf32> to vector<2x32xf32>
    %1509 = math.tanh %1508 : vector<2x32xf32>
    %1510 = vector.extract_strided_slice %1495 {offsets = [0, 96], sizes = [2, 32], strides = [1, 1]} : vector<2x128xf32> to vector<2x32xf32>
    %1511 = arith.negf %1510 : vector<2x32xf32>
    %1512 = math.exp %1511 : vector<2x32xf32>
    %cst_427 = arith.constant 1.000000e+00 : f32
    %1513 = vector.broadcast %cst_427 : f32 to vector<2x32xf32>
    %1514 = arith.addf %1513, %1512 : vector<2x32xf32>
    %1515 = arith.divf %1513, %1514 : vector<2x32xf32>
    %1516 = arith.mulf %1507, %1482 : vector<2x32xf32>
    %1517 = arith.mulf %1501, %1509 : vector<2x32xf32>
    %1518 = arith.addf %1516, %1517 : vector<2x32xf32>
    %1519 = math.tanh %1518 : vector<2x32xf32>
    %1520 = arith.mulf %1515, %1519 : vector<2x32xf32>
    %1521 = vector.extract_strided_slice %1520 {offsets = [0, 0], sizes = [1, 32], strides = [1, 1]} : vector<2x32xf32> to vector<1x32xf32>
    %c0_428 = arith.constant 0 : index
    %c5_429 = arith.constant 5 : index
    %c0_430 = arith.constant 0 : index
    %1522 = vector.load %arg19[%c0_428, %c5_429, %c0_430] : memref<2x8x32xf32, #tpu.memory_space<vmem>>, vector<1x1x32xf32>
    %1523 = vector.shape_cast %1522 : vector<1x1x32xf32> to vector<1x32xf32>
    %1524 = vector.shape_cast %1521 : vector<1x32xf32> to vector<1x1x32xf32>
    tpu.vector_store %arg19[%c0_428, %c5_429, %c0_430], %1524 {strides = array<i32>} : memref<2x8x32xf32, #tpu.memory_space<vmem>>, vector<1x1x32xf32>,
    %1525 = vector.extract_strided_slice %1520 {offsets = [1, 0], sizes = [1, 32], strides = [1, 1]} : vector<2x32xf32> to vector<1x32xf32>
    %c1_431 = arith.constant 1 : index
    %c5_432 = arith.constant 5 : index
    %c0_433 = arith.constant 0 : index
    %1526 = vector.load %arg19[%c1_431, %c5_432, %c0_433] : memref<2x8x32xf32, #tpu.memory_space<vmem>>, vector<1x1x32xf32>
    %1527 = vector.shape_cast %1526 : vector<1x1x32xf32> to vector<1x32xf32>
    %1528 = vector.shape_cast %1525 : vector<1x32xf32> to vector<1x1x32xf32>
    tpu.vector_store %arg19[%c1_431, %c5_432, %c0_433], %1528 {strides = array<i32>} : memref<2x8x32xf32, #tpu.memory_space<vmem>>, vector<1x1x32xf32>,
    %1529 = vector.extract_strided_slice %1311 {offsets = [12, 0], sizes = [2, 128], strides = [1, 1]} : vector<16x128xf32> to vector<2x128xf32>
    %cst_434 = arith.constant dense<0.000000e+00> : vector<2x128xf32>
    %1530 = tpu.matmul %1520, %1312, %cst_434 {dimension_numbers = #tpu.dot_dimension_numbers<[1], [0], [0], [1], [0, 0, 1, 1], [], []>} : vector<2x32xf32>, vector<32x128xf32>, vector<2x128xf32> -> vector<2x128xf32>
    %1531 = arith.addf %1529, %1530 : vector<2x128xf32>
    %1532 = vector.extract_strided_slice %1531 {offsets = [0, 0], sizes = [2, 32], strides = [1, 1]} : vector<2x128xf32> to vector<2x32xf32>
    %1533 = arith.negf %1532 : vector<2x32xf32>
    %1534 = math.exp %1533 : vector<2x32xf32>
    %cst_435 = arith.constant 1.000000e+00 : f32
    %1535 = vector.broadcast %cst_435 : f32 to vector<2x32xf32>
    %1536 = arith.addf %1535, %1534 : vector<2x32xf32>
    %1537 = arith.divf %1535, %1536 : vector<2x32xf32>
    %1538 = vector.extract_strided_slice %1531 {offsets = [0, 32], sizes = [2, 32], strides = [1, 1]} : vector<2x128xf32> to vector<2x32xf32>
    %1539 = arith.negf %1538 : vector<2x32xf32>
    %1540 = math.exp %1539 : vector<2x32xf32>
    %cst_436 = arith.constant 1.000000e+00 : f32
    %1541 = vector.broadcast %cst_436 : f32 to vector<2x32xf32>
    %1542 = arith.addf %1541, %1540 : vector<2x32xf32>
    %1543 = arith.divf %1541, %1542 : vector<2x32xf32>
    %1544 = vector.extract_strided_slice %1531 {offsets = [0, 64], sizes = [2, 32], strides = [1, 1]} : vector<2x128xf32> to vector<2x32xf32>
    %1545 = math.tanh %1544 : vector<2x32xf32>
    %1546 = vector.extract_strided_slice %1531 {offsets = [0, 96], sizes = [2, 32], strides = [1, 1]} : vector<2x128xf32> to vector<2x32xf32>
    %1547 = arith.negf %1546 : vector<2x32xf32>
    %1548 = math.exp %1547 : vector<2x32xf32>
    %cst_437 = arith.constant 1.000000e+00 : f32
    %1549 = vector.broadcast %cst_437 : f32 to vector<2x32xf32>
    %1550 = arith.addf %1549, %1548 : vector<2x32xf32>
    %1551 = arith.divf %1549, %1550 : vector<2x32xf32>
    %1552 = arith.mulf %1543, %1518 : vector<2x32xf32>
    %1553 = arith.mulf %1537, %1545 : vector<2x32xf32>
    %1554 = arith.addf %1552, %1553 : vector<2x32xf32>
    %1555 = math.tanh %1554 : vector<2x32xf32>
    %1556 = arith.mulf %1551, %1555 : vector<2x32xf32>
    %1557 = vector.extract_strided_slice %1556 {offsets = [0, 0], sizes = [1, 32], strides = [1, 1]} : vector<2x32xf32> to vector<1x32xf32>
    %c0_438 = arith.constant 0 : index
    %c6_439 = arith.constant 6 : index
    %c0_440 = arith.constant 0 : index
    %1558 = vector.load %arg19[%c0_438, %c6_439, %c0_440] : memref<2x8x32xf32, #tpu.memory_space<vmem>>, vector<1x1x32xf32>
    %1559 = vector.shape_cast %1558 : vector<1x1x32xf32> to vector<1x32xf32>
    %1560 = vector.shape_cast %1557 : vector<1x32xf32> to vector<1x1x32xf32>
    tpu.vector_store %arg19[%c0_438, %c6_439, %c0_440], %1560 {strides = array<i32>} : memref<2x8x32xf32, #tpu.memory_space<vmem>>, vector<1x1x32xf32>,
    %1561 = vector.extract_strided_slice %1556 {offsets = [1, 0], sizes = [1, 32], strides = [1, 1]} : vector<2x32xf32> to vector<1x32xf32>
    %c1_441 = arith.constant 1 : index
    %c6_442 = arith.constant 6 : index
    %c0_443 = arith.constant 0 : index
    %1562 = vector.load %arg19[%c1_441, %c6_442, %c0_443] : memref<2x8x32xf32, #tpu.memory_space<vmem>>, vector<1x1x32xf32>
    %1563 = vector.shape_cast %1562 : vector<1x1x32xf32> to vector<1x32xf32>
    %1564 = vector.shape_cast %1561 : vector<1x32xf32> to vector<1x1x32xf32>
    tpu.vector_store %arg19[%c1_441, %c6_442, %c0_443], %1564 {strides = array<i32>} : memref<2x8x32xf32, #tpu.memory_space<vmem>>, vector<1x1x32xf32>,
    %1565 = vector.extract_strided_slice %1311 {offsets = [14, 0], sizes = [2, 128], strides = [1, 1]} : vector<16x128xf32> to vector<2x128xf32>
    %cst_444 = arith.constant dense<0.000000e+00> : vector<2x128xf32>
    %1566 = tpu.matmul %1556, %1312, %cst_444 {dimension_numbers = #tpu.dot_dimension_numbers<[1], [0], [0], [1], [0, 0, 1, 1], [], []>} : vector<2x32xf32>, vector<32x128xf32>, vector<2x128xf32> -> vector<2x128xf32>
    %1567 = arith.addf %1565, %1566 : vector<2x128xf32>
    %1568 = vector.extract_strided_slice %1567 {offsets = [0, 0], sizes = [2, 32], strides = [1, 1]} : vector<2x128xf32> to vector<2x32xf32>
    %1569 = arith.negf %1568 : vector<2x32xf32>
    %1570 = math.exp %1569 : vector<2x32xf32>
    %cst_445 = arith.constant 1.000000e+00 : f32
    %1571 = vector.broadcast %cst_445 : f32 to vector<2x32xf32>
    %1572 = arith.addf %1571, %1570 : vector<2x32xf32>
    %1573 = arith.divf %1571, %1572 : vector<2x32xf32>
    %1574 = vector.extract_strided_slice %1567 {offsets = [0, 32], sizes = [2, 32], strides = [1, 1]} : vector<2x128xf32> to vector<2x32xf32>
    %1575 = arith.negf %1574 : vector<2x32xf32>
    %1576 = math.exp %1575 : vector<2x32xf32>
    %cst_446 = arith.constant 1.000000e+00 : f32
    %1577 = vector.broadcast %cst_446 : f32 to vector<2x32xf32>
    %1578 = arith.addf %1577, %1576 : vector<2x32xf32>
    %1579 = arith.divf %1577, %1578 : vector<2x32xf32>
    %1580 = vector.extract_strided_slice %1567 {offsets = [0, 64], sizes = [2, 32], strides = [1, 1]} : vector<2x128xf32> to vector<2x32xf32>
    %1581 = math.tanh %1580 : vector<2x32xf32>
    %1582 = vector.extract_strided_slice %1567 {offsets = [0, 96], sizes = [2, 32], strides = [1, 1]} : vector<2x128xf32> to vector<2x32xf32>
    %1583 = arith.negf %1582 : vector<2x32xf32>
    %1584 = math.exp %1583 : vector<2x32xf32>
    %cst_447 = arith.constant 1.000000e+00 : f32
    %1585 = vector.broadcast %cst_447 : f32 to vector<2x32xf32>
    %1586 = arith.addf %1585, %1584 : vector<2x32xf32>
    %1587 = arith.divf %1585, %1586 : vector<2x32xf32>
    %1588 = arith.mulf %1579, %1554 : vector<2x32xf32>
    %1589 = arith.mulf %1573, %1581 : vector<2x32xf32>
    %1590 = arith.addf %1588, %1589 : vector<2x32xf32>
    %1591 = math.tanh %1590 : vector<2x32xf32>
    %1592 = arith.mulf %1587, %1591 : vector<2x32xf32>
    %1593 = vector.extract_strided_slice %1592 {offsets = [0, 0], sizes = [1, 32], strides = [1, 1]} : vector<2x32xf32> to vector<1x32xf32>
    %c0_448 = arith.constant 0 : index
    %c7_449 = arith.constant 7 : index
    %c0_450 = arith.constant 0 : index
    %1594 = vector.load %arg19[%c0_448, %c7_449, %c0_450] : memref<2x8x32xf32, #tpu.memory_space<vmem>>, vector<1x1x32xf32>
    %1595 = vector.shape_cast %1594 : vector<1x1x32xf32> to vector<1x32xf32>
    %1596 = vector.shape_cast %1593 : vector<1x32xf32> to vector<1x1x32xf32>
    tpu.vector_store %arg19[%c0_448, %c7_449, %c0_450], %1596 {strides = array<i32>} : memref<2x8x32xf32, #tpu.memory_space<vmem>>, vector<1x1x32xf32>,
    %1597 = vector.extract_strided_slice %1592 {offsets = [1, 0], sizes = [1, 32], strides = [1, 1]} : vector<2x32xf32> to vector<1x32xf32>
    %c1_451 = arith.constant 1 : index
    %c7_452 = arith.constant 7 : index
    %c0_453 = arith.constant 0 : index
    %1598 = vector.load %arg19[%c1_451, %c7_452, %c0_453] : memref<2x8x32xf32, #tpu.memory_space<vmem>>, vector<1x1x32xf32>
    %1599 = vector.shape_cast %1598 : vector<1x1x32xf32> to vector<1x32xf32>
    %1600 = vector.shape_cast %1597 : vector<1x32xf32> to vector<1x1x32xf32>
    tpu.vector_store %arg19[%c1_451, %c7_452, %c0_453], %1600 {strides = array<i32>} : memref<2x8x32xf32, #tpu.memory_space<vmem>>, vector<1x1x32xf32>,
    %c0_454 = arith.constant 0 : index
    %c0_455 = arith.constant 0 : index
    %1601 = vector.load %arg10[%c0_454, %c0_455] : memref<32x32xf32, #tpu.memory_space<vmem>>, vector<32x32xf32>
    %c0_456 = arith.constant 0 : index
    %c0_457 = arith.constant 0 : index
    %1602 = vector.load %arg11[%c0_456, %c0_457] : memref<32x32xf32, #tpu.memory_space<vmem>>, vector<32x32xf32>
    %c0_458 = arith.constant 0 : index
    %c0_459 = arith.constant 0 : index
    %1603 = vector.load %arg12[%c0_458, %c0_459] : memref<1x32xf32, #tpu.memory_space<vmem>>, vector<1x32xf32>
    %c0_460 = arith.constant 0 : index
    %c0_461 = arith.constant 0 : index
    %1604 = vector.load %arg13[%c0_460, %c0_461] : memref<32x128xf32, #tpu.memory_space<vmem>>, vector<32x128xf32>
    %c0_462 = arith.constant 0 : index
    %c0_463 = arith.constant 0 : index
    %1605 = vector.load %arg14[%c0_462, %c0_463] : memref<1x128xf32, #tpu.memory_space<vmem>>, vector<1x128xf32>
    %c0_464 = arith.constant 0 : index
    %c0_465 = arith.constant 0 : index
    %c0_466 = arith.constant 0 : index
    %1606 = vector.load %arg18[%c0_464, %c0_465, %c0_466] : memref<2x16x32xf32, #tpu.memory_space<vmem>>, vector<1x16x32xf32>
    %1607 = vector.shape_cast %1606 : vector<1x16x32xf32> to vector<16x32xf32>
    %c0_467 = arith.constant 0 : index
    %c0_468 = arith.constant 0 : index
    %c0_469 = arith.constant 0 : index
    %1608 = vector.load %arg19[%c0_467, %c0_468, %c0_469] : memref<2x8x32xf32, #tpu.memory_space<vmem>>, vector<1x8x32xf32>
    %1609 = vector.shape_cast %1608 : vector<1x8x32xf32> to vector<8x32xf32>
    %cst_470 = arith.constant dense<0.000000e+00> : vector<8x16xf32>
    %1610 = tpu.matmul %1609, %1607, %cst_470 {dimension_numbers = #tpu.dot_dimension_numbers<[1], [1], [0], [0], [0, 0, 1, 0], [], []>} : vector<8x32xf32>, vector<16x32xf32>, vector<8x16xf32> -> vector<8x16xf32>
    %cst_471 = arith.constant dense<0xFF800000> : vector<8xf32>
    %1611 = vector.multi_reduction <maximumf>, %1610, %cst_471 [1] : vector<8x16xf32> to vector<8xf32>
    %1612 = vector.shape_cast %1611 : vector<8xf32> to vector<8x1xf32>
    %1613 = vector.broadcast %1612 : vector<8x1xf32> to vector<8x16xf32>
    %1614 = arith.subf %1610, %1613 : vector<8x16xf32>
    %1615 = math.exp %1614 : vector<8x16xf32>
    %cst_472 = arith.constant dense<0.000000e+00> : vector<8xf32>
    %1616 = vector.multi_reduction <add>, %1615, %cst_472 [1] : vector<8x16xf32> to vector<8xf32>
    %1617 = vector.shape_cast %1616 : vector<8xf32> to vector<8x1xf32>
    %1618 = tpu.reciprocal %1617 : vector<8x1xf32> -> vector<8x1xf32>
    %1619 = vector.broadcast %1618 : vector<8x1xf32> to vector<8x16xf32>
    %1620 = arith.mulf %1615, %1619 : vector<8x16xf32>
    %cst_473 = arith.constant dense<0.000000e+00> : vector<8x32xf32>
    %1621 = tpu.matmul %1620, %1607, %cst_473 {dimension_numbers = #tpu.dot_dimension_numbers<[1], [0], [0], [1], [0, 0, 1, 1], [], []>} : vector<8x16xf32>, vector<16x32xf32>, vector<8x32xf32> -> vector<8x32xf32>
    %cst_474 = arith.constant dense<0.000000e+00> : vector<8x32xf32>
    %1622 = tpu.matmul %1609, %1601, %cst_474 {dimension_numbers = #tpu.dot_dimension_numbers<[1], [0], [0], [1], [0, 0, 1, 1], [], []>} : vector<8x32xf32>, vector<32x32xf32>, vector<8x32xf32> -> vector<8x32xf32>
    %cst_475 = arith.constant dense<0.000000e+00> : vector<8x32xf32>
    %1623 = tpu.matmul %1621, %1602, %cst_475 {dimension_numbers = #tpu.dot_dimension_numbers<[1], [0], [0], [1], [0, 0, 1, 1], [], []>} : vector<8x32xf32>, vector<32x32xf32>, vector<8x32xf32> -> vector<8x32xf32>
    %1624 = arith.addf %1622, %1623 : vector<8x32xf32>
    %1625 = vector.broadcast %1603 : vector<1x32xf32> to vector<8x32xf32>
    %1626 = arith.addf %1624, %1625 : vector<8x32xf32>
    %cst_476 = arith.constant dense<0.000000e+00> : vector<8x128xf32>
    %1627 = tpu.matmul %1626, %1604, %cst_476 {dimension_numbers = #tpu.dot_dimension_numbers<[1], [0], [0], [1], [0, 0, 1, 1], [], []>} : vector<8x32xf32>, vector<32x128xf32>, vector<8x128xf32> -> vector<8x128xf32>
    %1628 = vector.broadcast %1605 : vector<1x128xf32> to vector<8x128xf32>
    %1629 = arith.addf %1627, %1628 : vector<8x128xf32>
    %c0_477 = arith.constant 0 : index
    %c0_478 = arith.constant 0 : index
    %c0_479 = arith.constant 0 : index
    %1630 = vector.load %arg15[%c0_477, %c0_478, %c0_479] : memref<2x8x128xf32, #tpu.memory_space<vmem>>, vector<1x8x128xf32>
    %1631 = vector.shape_cast %1630 : vector<1x8x128xf32> to vector<8x128xf32>
    %1632 = vector.shape_cast %1629 : vector<8x128xf32> to vector<1x8x128xf32>
    tpu.vector_store %arg15[%c0_477, %c0_478, %c0_479], %1632 {strides = array<i32>} : memref<2x8x128xf32, #tpu.memory_space<vmem>>, vector<1x8x128xf32>,
    %c1_480 = arith.constant 1 : index
    %c0_481 = arith.constant 0 : index
    %c0_482 = arith.constant 0 : index
    %1633 = vector.load %arg18[%c1_480, %c0_481, %c0_482] : memref<2x16x32xf32, #tpu.memory_space<vmem>>, vector<1x16x32xf32>
    %1634 = vector.shape_cast %1633 : vector<1x16x32xf32> to vector<16x32xf32>
    %c1_483 = arith.constant 1 : index
    %c0_484 = arith.constant 0 : index
    %c0_485 = arith.constant 0 : index
    %1635 = vector.load %arg19[%c1_483, %c0_484, %c0_485] : memref<2x8x32xf32, #tpu.memory_space<vmem>>, vector<1x8x32xf32>
    %1636 = vector.shape_cast %1635 : vector<1x8x32xf32> to vector<8x32xf32>
    %cst_486 = arith.constant dense<0.000000e+00> : vector<8x16xf32>
    %1637 = tpu.matmul %1636, %1634, %cst_486 {dimension_numbers = #tpu.dot_dimension_numbers<[1], [1], [0], [0], [0, 0, 1, 0], [], []>} : vector<8x32xf32>, vector<16x32xf32>, vector<8x16xf32> -> vector<8x16xf32>
    %cst_487 = arith.constant dense<0xFF800000> : vector<8xf32>
    %1638 = vector.multi_reduction <maximumf>, %1637, %cst_487 [1] : vector<8x16xf32> to vector<8xf32>
    %1639 = vector.shape_cast %1638 : vector<8xf32> to vector<8x1xf32>
    %1640 = vector.broadcast %1639 : vector<8x1xf32> to vector<8x16xf32>
    %1641 = arith.subf %1637, %1640 : vector<8x16xf32>
    %1642 = math.exp %1641 : vector<8x16xf32>
    %cst_488 = arith.constant dense<0.000000e+00> : vector<8xf32>
    %1643 = vector.multi_reduction <add>, %1642, %cst_488 [1] : vector<8x16xf32> to vector<8xf32>
    %1644 = vector.shape_cast %1643 : vector<8xf32> to vector<8x1xf32>
    %1645 = tpu.reciprocal %1644 : vector<8x1xf32> -> vector<8x1xf32>
    %1646 = vector.broadcast %1645 : vector<8x1xf32> to vector<8x16xf32>
    %1647 = arith.mulf %1642, %1646 : vector<8x16xf32>
    %cst_489 = arith.constant dense<0.000000e+00> : vector<8x32xf32>
    %1648 = tpu.matmul %1647, %1634, %cst_489 {dimension_numbers = #tpu.dot_dimension_numbers<[1], [0], [0], [1], [0, 0, 1, 1], [], []>} : vector<8x16xf32>, vector<16x32xf32>, vector<8x32xf32> -> vector<8x32xf32>
    %cst_490 = arith.constant dense<0.000000e+00> : vector<8x32xf32>
    %1649 = tpu.matmul %1636, %1601, %cst_490 {dimension_numbers = #tpu.dot_dimension_numbers<[1], [0], [0], [1], [0, 0, 1, 1], [], []>} : vector<8x32xf32>, vector<32x32xf32>, vector<8x32xf32> -> vector<8x32xf32>
    %cst_491 = arith.constant dense<0.000000e+00> : vector<8x32xf32>
    %1650 = tpu.matmul %1648, %1602, %cst_491 {dimension_numbers = #tpu.dot_dimension_numbers<[1], [0], [0], [1], [0, 0, 1, 1], [], []>} : vector<8x32xf32>, vector<32x32xf32>, vector<8x32xf32> -> vector<8x32xf32>
    %1651 = arith.addf %1649, %1650 : vector<8x32xf32>
    %1652 = vector.broadcast %1603 : vector<1x32xf32> to vector<8x32xf32>
    %1653 = arith.addf %1651, %1652 : vector<8x32xf32>
    %cst_492 = arith.constant dense<0.000000e+00> : vector<8x128xf32>
    %1654 = tpu.matmul %1653, %1604, %cst_492 {dimension_numbers = #tpu.dot_dimension_numbers<[1], [0], [0], [1], [0, 0, 1, 1], [], []>} : vector<8x32xf32>, vector<32x128xf32>, vector<8x128xf32> -> vector<8x128xf32>
    %1655 = vector.broadcast %1605 : vector<1x128xf32> to vector<8x128xf32>
    %1656 = arith.addf %1654, %1655 : vector<8x128xf32>
    %c1_493 = arith.constant 1 : index
    %c0_494 = arith.constant 0 : index
    %c0_495 = arith.constant 0 : index
    %1657 = vector.load %arg15[%c1_493, %c0_494, %c0_495] : memref<2x8x128xf32, #tpu.memory_space<vmem>>, vector<1x8x128xf32>
    %1658 = vector.shape_cast %1657 : vector<1x8x128xf32> to vector<8x128xf32>
    %1659 = vector.shape_cast %1656 : vector<8x128xf32> to vector<1x8x128xf32>
    tpu.vector_store %arg15[%c1_493, %c0_494, %c0_495], %1659 {strides = array<i32>} : memref<2x8x128xf32, #tpu.memory_space<vmem>>, vector<1x8x128xf32>,
    return
  }
}

</mosaic_0001>

<llo_original>
// kernel: lstm_with_att_forward.1
$region0: #{lstm_with_att_forward.1}
  #allocation0 [shape = 'u32[]', space=smem, size = 0x4, offset = 0x4, fixed_abs, tag = 'smem constant byte address 0x4 - core index']
  #allocation1 [shape = 'u32[144,128]{1,0:T(1,128)}', space=vmem, size = 0x12000, scoped, tag = 'internal scratch']
  #allocation2 [shape = 'f32[32,32]{1,0:T(8,128)}', space=vmem, size = 0x4000, scoped, tag = 'scratch operand']
  #allocation3 [shape = 'f32[16,32]{1,0:T(8,128)}', space=vmem, size = 0x2000, scoped, tag = 'scratch operand']
  #allocation4 [shape = 'f32[2,16,32]{2,1,0:T(8,128)}', space=vmem, size = 0x4000, scoped, tag = 'scratch operand']
  #allocation5 [shape = 'f32[2,8,32]{2,1,0:T(8,128)}', space=vmem, size = 0x2000, scoped, tag = 'scratch operand']
  %s0 = inlined_call_operand.vmem [shape: f32[16,2,128], index: 0, kind: input, shape index: {}]
  %s1 = inlined_call_operand.vmem [shape: f32[8,2,128], index: 1, kind: input, shape index: {}]
  %s2 = inlined_call_operand.vmem [shape: f32[32,128], index: 2, kind: input, shape index: {}]
  %s3 = inlined_call_operand.vmem [shape: f32[32,128], index: 3, kind: input, shape index: {}]
  %s4 = inlined_call_operand.vmem [shape: f32[32,128], index: 4, kind: input, shape index: {}]
  %s5 = inlined_call_operand.vmem [shape: f32[1,128], index: 5, kind: input, shape index: {}]
  %s6 = inlined_call_operand.vmem [shape: f32[32,128], index: 6, kind: input, shape index: {}]
  %s7 = inlined_call_operand.vmem [shape: f32[32,128], index: 7, kind: input, shape index: {}]
  %s8 = inlined_call_operand.vmem [shape: f32[32,128], index: 8, kind: input, shape index: {}]
  %s9 = inlined_call_operand.vmem [shape: f32[1,128], index: 9, kind: input, shape index: {}]
  %s10 = inlined_call_operand.vmem [shape: f32[32,32], index: 10, kind: input, shape index: {}]
  %s11 = inlined_call_operand.vmem [shape: f32[32,32], index: 11, kind: input, shape index: {}]
  %s12 = inlined_call_operand.vmem [shape: f32[1,32], index: 12, kind: input, shape index: {}]
  %s13 = inlined_call_operand.vmem [shape: f32[32,128], index: 13, kind: input, shape index: {}]
  %s14 = inlined_call_operand.vmem [shape: f32[1,128], index: 14, kind: input, shape index: {}]
  %s15 = inlined_call_operand.hbm [shape: f32[2,8,128], index: 15, kind: output, shape index: {}]
  %s16 = sld [smem:[#allocation0]]
  $region70: #{lstm_with_att_forward.1} parent=0
    _
  %s18 = ssub.s32 1, %s16
  %s19 = scalar_select 0, %s18, %s16
  $region1: #{lstm_with_att_forward.1} parent=0
    #allocation6 [shape = 'u8[8192]{0}', space=vmem, size = 0x2000, scoped, tag = 'output window, operand 0, single buffered']
    #allocation7 [shape = 's32[1]{0}', space=sflag, size = 0x4, scoped, tag = 'scoped memory for lstm_with_att_forward.1']
    %20 = vsyncpa [#allocation7], 0
    // Predicated region
    $region2: #{lstm_with_att_forward.1} parent=1 // pred_check
      _
    $region3: #{lstm_with_att_forward.1} parent=1 // pred_check_branch
      %22 = sbr.rel (0) target = $region5
    $region4: #{lstm_with_att_forward.1} parent=1 // pred_region
      _
    $region5: #{lstm_with_att_forward.1} parent=1 // pred_fallthru
      _
    // Predicated region
    $region6: #{lstm_with_att_forward.1} parent=1 // pred_check
      _
    $region7: #{lstm_with_att_forward.1} parent=1 // pred_check_branch
      %24 = sbr.rel (0) target = $region9
    $region8: #{lstm_with_att_forward.1} parent=1 // pred_region
      _
    $region9: #{lstm_with_att_forward.1} parent=1 // pred_fallthru
      _
    // Predicated region
    $region10: #{lstm_with_att_forward.1} parent=1 // pred_check
      _
    $region11: #{lstm_with_att_forward.1} parent=1 // pred_check_branch
      %26 = sbr.rel (0) target = $region13
    $region12: #{lstm_with_att_forward.1} parent=1 // pred_region
      _
    $region13: #{lstm_with_att_forward.1} parent=1 // pred_fallthru
      _
    // Predicated region
    $region14: #{lstm_with_att_forward.1} parent=1 // pred_check
      _
    $region15: #{lstm_with_att_forward.1} parent=1 // pred_check_branch
      %28 = sbr.rel (0) target = $region17
    $region16: #{lstm_with_att_forward.1} parent=1 // pred_region
      _
    $region17: #{lstm_with_att_forward.1} parent=1 // pred_fallthru
      _
    // Predicated region
    $region18: #{lstm_with_att_forward.1} parent=1 // pred_check
      _
    $region19: #{lstm_with_att_forward.1} parent=1 // pred_check_branch
      %30 = sbr.rel (0) target = $region21
    $region20: #{lstm_with_att_forward.1} parent=1 // pred_region
      _
    $region21: #{lstm_with_att_forward.1} parent=1 // pred_fallthru
      _
    // Predicated region
    $region22: #{lstm_with_att_forward.1} parent=1 // pred_check
      _
    $region23: #{lstm_with_att_forward.1} parent=1 // pred_check_branch
      %32 = sbr.rel (0) target = $region25
    $region24: #{lstm_with_att_forward.1} parent=1 // pred_region
      _
    $region25: #{lstm_with_att_forward.1} parent=1 // pred_fallthru
      _
    // Predicated region
    $region26: #{lstm_with_att_forward.1} parent=1 // pred_check
      _
    $region27: #{lstm_with_att_forward.1} parent=1 // pred_check_branch
      %34 = sbr.rel (0) target = $region29
    $region28: #{lstm_with_att_forward.1} parent=1 // pred_region
      _
    $region29: #{lstm_with_att_forward.1} parent=1 // pred_fallthru
      _
    // Predicated region
    $region30: #{lstm_with_att_forward.1} parent=1 // pred_check
      _
    $region31: #{lstm_with_att_forward.1} parent=1 // pred_check_branch
      %36 = sbr.rel (0) target = $region33
    $region32: #{lstm_with_att_forward.1} parent=1 // pred_region
      _
    $region33: #{lstm_with_att_forward.1} parent=1 // pred_fallthru
      _
    // Predicated region
    $region34: #{lstm_with_att_forward.1} parent=1 // pred_check
      _
    $region35: #{lstm_with_att_forward.1} parent=1 // pred_check_branch
      %38 = sbr.rel (0) target = $region37
    $region36: #{lstm_with_att_forward.1} parent=1 // pred_region
      _
    $region37: #{lstm_with_att_forward.1} parent=1 // pred_fallthru
      _
    // Predicated region
    $region38: #{lstm_with_att_forward.1} parent=1 // pred_check
      _
    $region39: #{lstm_with_att_forward.1} parent=1 // pred_check_branch
      %40 = sbr.rel (0) target = $region41
    $region40: #{lstm_with_att_forward.1} parent=1 // pred_region
      _
    $region41: #{lstm_with_att_forward.1} parent=1 // pred_fallthru
      _
    // Predicated region
    $region42: #{lstm_with_att_forward.1} parent=1 // pred_check
      _
    $region43: #{lstm_with_att_forward.1} parent=1 // pred_check_branch
      %42 = sbr.rel (0) target = $region45
    $region44: #{lstm_with_att_forward.1} parent=1 // pred_region
      _
    $region45: #{lstm_with_att_forward.1} parent=1 // pred_fallthru
      _
    // Predicated region
    $region46: #{lstm_with_att_forward.1} parent=1 // pred_check
      _
    $region47: #{lstm_with_att_forward.1} parent=1 // pred_check_branch
      %44 = sbr.rel (0) target = $region49
    $region48: #{lstm_with_att_forward.1} parent=1 // pred_region
      _
    $region49: #{lstm_with_att_forward.1} parent=1 // pred_fallthru
      _
    // Predicated region
    $region50: #{lstm_with_att_forward.1} parent=1 // pred_check
      _
    $region51: #{lstm_with_att_forward.1} parent=1 // pred_check_branch
      %46 = sbr.rel (0) target = $region53
    $region52: #{lstm_with_att_forward.1} parent=1 // pred_region
      _
    $region53: #{lstm_with_att_forward.1} parent=1 // pred_fallthru
      _
    // Predicated region
    $region54: #{lstm_with_att_forward.1} parent=1 // pred_check
      _
    $region55: #{lstm_with_att_forward.1} parent=1 // pred_check_branch
      %48 = sbr.rel (0) target = $region57
    $region56: #{lstm_with_att_forward.1} parent=1 // pred_region
      _
    $region57: #{lstm_with_att_forward.1} parent=1 // pred_fallthru
      _
    // Predicated region
    $region58: #{lstm_with_att_forward.1} parent=1 // pred_check
      _
    $region59: #{lstm_with_att_forward.1} parent=1 // pred_check_branch
      %50 = sbr.rel (0) target = $region61
    $region60: #{lstm_with_att_forward.1} parent=1 // pred_region
      _
    $region61: #{lstm_with_att_forward.1} parent=1 // pred_fallthru
      _
    %v51 = vld [vmem:[%s2] sm:$0xff]
    %v52 = vld [vmem:[%s2 + $0x8] sm:$0xff]
    %v53 = vld [vmem:[%s2 + $0x10] sm:$0xff]
    %v54 = vld [vmem:[%s2 + $0x18] sm:$0xff]
    %v55 = vld [vmem:[%s0] sm:$0x3]
    %vm56 = vcmask 261120
    %v58 = vsel %vm56, 0.0, 0
    %60 = vmatprep.subr.mxu0 0.0
    %61 = vmatpush1.msra.mxu0 %v51
    %62 = vmatprep.subr.mxu0 0.0
    %63 = vmatpush1.msra.mxu0 %v52
    %64 = vmatprep.subr.mxu0 0.0
    %65 = vmatpush1.msra.mxu0 %v53
    %66 = vmatprep.subr.mxu0 0.0
    %67 = vmatpush1.msra.mxu0 %v54
    %68 = vmatprep.subr.mxu0 0.0
    %69 = vmatpush1.msra.mxu0 0.0
    %70 = vmatprep.subr.mxu0 0.0
    %71 = vmatpush1.msra.mxu0 0.0
    %72 = vmatprep.subr.mxu0 0.0
    %73 = vmatpush1.msra.mxu0 0.0
    %74 = vmatprep.subr.mxu0 0.0
    %75 = vmatpush1.msra.mxu0 0.0
    %76 = vmatprep.subr.mxu0 0.0
    %77 = vmatpush1.msra.mxu0 0.0
    %78 = vmatprep.subr.mxu0 0.0
    %79 = vmatpush1.msra.mxu0 0.0
    %80 = vmatprep.subr.mxu0 0.0
    %81 = vmatpush1.msra.mxu0 0.0
    %82 = vmatprep.subr.mxu0 0.0
    %83 = vmatpush1.msra.mxu0 0.0
    %84 = vmatprep.subr.mxu0 0.0
    %85 = vmatpush1.msra.mxu0 0.0
    %86 = vmatprep.subr.mxu0 0.0
    %87 = vmatpush1.msra.mxu0 0.0
    %88 = vmatprep.subr.mxu0 0.0
    %89 = vmatpush1.msra.mxu0 0.0
    %90 = vmatprep.subr.mxu0 0.0
    %91 = vmatpush1.msra.mxu0 0.0
    %92 = vmatprep.subr.mxu0 0.0
    %93 = vmatpush1.msra.mxu0 0.0
    %94 = vmatprep.subr.mxu0 0.0
    %95 = vmatpush1.msra.mxu0 0.0
    %96 = vmatprep.subr.mxu0 0.0
    %97 = vmatpush1.msra.mxu0 0.0
    %98 = vmatprep.subr.mxu0 0.0
    %99 = vmatpush1.msra.mxu0 0.0
    %100 = vmatprep.subr.mxu0 0.0
    %101 = vmatpush1.msra.mxu0 0.0
    %102 = vmatprep.subr.mxu0 0.0
    %103 = vmatpush1.msra.mxu0 0.0
    %104 = vmatprep.subr.mxu0 0.0
    %105 = vmatpush1.msra.mxu0 0.0
    %106 = vmatprep.subr.mxu0 0.0
    %107 = vmatpush1.msra.mxu0 0.0
    %108 = vmatprep.subr.mxu0 0.0
    %109 = vmatpush1.msra.mxu0 0.0
    %110 = vmatprep.subr.mxu0 0.0
    %111 = vmatpush1.msra.mxu0 0.0
    %112 = vmatprep.subr.mxu0 0.0
    %113 = vmatpush1.msra.mxu0 0.0
    %114 = vmatprep.subr.mxu0 0.0
    %115 = vmatpush1.msra.mxu0 0.0
    %116 = vmatprep.subr.mxu0 0.0
    %117 = vmatpush1.msra.mxu0 0.0
    %118 = vmatprep.subr.mxu0 0.0
    %119 = vmatpush1.msra.mxu0 0.0
    %120 = vmatprep.subr.mxu0 0.0
    %121 = vmatpush1.msra.mxu0 0.0
    %122 = vmatprep.subr.mxu0 0.0
    %123 = vmatpush1.msra.mxu0 0.0
    %124 = vmatprep.mubr.f32.mxu0 0.0
    %125 = vmatmul.mubr.f32.gmra.mrb[0].mxu0 %v58
    %v126 = vpop.f32.mrb[0].mxu0
    %v127 = vadd.f32 0.0, %v126
    %v128 = vpop.f32.mrb[0].mxu0
    %129 = vdwg.mxu0
    %v130 = vadd.f32 %v55, %v127
    %v131 = vxor.u32 %v130, 2147483648
    %v132 = vmul.f32 %v131, 1.442695
    %v133 = vpow.pop %v132
    %v134 = vadd.f32 %v133, 1.0
    %v135 = vrcp.pop %v134
    %v136 = vmul.f32 1.0, %v135
    %v137 = vtanh.pop %v130
    %v138 = vmul.f32 %v136, 0.0
    %140 = vrot.lane.b32.xlu0 %v137, 64
    %v141 = vpop.permute.xlu0 %140
    %v143 = vmul.f32 %v136, %v141
    %145 = vrot.lane.b32.xlu0 %v143, 32
    %v146 = vpop.permute.xlu0 %145
    %v148 = vadd.f32 %v138, %v146
    %v149 = vtanh.pop %v148
    %151 = vrot.lane.b32.xlu0 %v149, 64
    %v152 = vpop.permute.xlu0 %151
    %v154 = vmul.f32 %v136, %v152
    %156 = vrot.lane.b32.xlu0 %v154, 32
    %v157 = vpop.permute.xlu0 %156
    %vm159 = vcmask 254976
    %160 = vst.msk [vmem:[#allocation2] sm:$0x3] %vm159, %v157
    %s161 = scalar_lea.vmem %s0, 2
    %v162 = vld [vmem:[%s161] sm:$0x3]
    %v163 = vsel %vm56, %v157, 0
    %165 = vmatprep.subr.mxu0 0.0
    %166 = vmatpush1.msra.mxu0 %v51
    %167 = vmatprep.subr.mxu0 0.0
    %168 = vmatpush1.msra.mxu0 %v52
    %169 = vmatprep.subr.mxu0 0.0
    %170 = vmatpush1.msra.mxu0 %v53
    %171 = vmatprep.subr.mxu0 0.0
    %172 = vmatpush1.msra.mxu0 %v54
    %173 = vmatprep.subr.mxu0 0.0
    %174 = vmatpush1.msra.mxu0 0.0
    %175 = vmatprep.subr.mxu0 0.0
    %176 = vmatpush1.msra.mxu0 0.0
    %177 = vmatprep.subr.mxu0 0.0
    %178 = vmatpush1.msra.mxu0 0.0
    %179 = vmatprep.subr.mxu0 0.0
    %180 = vmatpush1.msra.mxu0 0.0
    %181 = vmatprep.subr.mxu0 0.0
    %182 = vmatpush1.msra.mxu0 0.0
    %183 = vmatprep.subr.mxu0 0.0
    %184 = vmatpush1.msra.mxu0 0.0
    %185 = vmatprep.subr.mxu0 0.0
    %186 = vmatpush1.msra.mxu0 0.0
    %187 = vmatprep.subr.mxu0 0.0
    %188 = vmatpush1.msra.mxu0 0.0
    %189 = vmatprep.subr.mxu0 0.0
    %190 = vmatpush1.msra.mxu0 0.0
    %191 = vmatprep.subr.mxu0 0.0
    %192 = vmatpush1.msra.mxu0 0.0
    %193 = vmatprep.subr.mxu0 0.0
    %194 = vmatpush1.msra.mxu0 0.0
    %195 = vmatprep.subr.mxu0 0.0
    %196 = vmatpush1.msra.mxu0 0.0
    %197 = vmatprep.subr.mxu0 0.0
    %198 = vmatpush1.msra.mxu0 0.0
    %199 = vmatprep.subr.mxu0 0.0
    %200 = vmatpush1.msra.mxu0 0.0
    %201 = vmatprep.subr.mxu0 0.0
    %202 = vmatpush1.msra.mxu0 0.0
    %203 = vmatprep.subr.mxu0 0.0
    %204 = vmatpush1.msra.mxu0 0.0
    %205 = vmatprep.subr.mxu0 0.0
    %206 = vmatpush1.msra.mxu0 0.0
    %207 = vmatprep.subr.mxu0 0.0
    %208 = vmatpush1.msra.mxu0 0.0
    %209 = vmatprep.subr.mxu0 0.0
    %210 = vmatpush1.msra.mxu0 0.0
    %211 = vmatprep.subr.mxu0 0.0
    %212 = vmatpush1.msra.mxu0 0.0
    %213 = vmatprep.subr.mxu0 0.0
    %214 = vmatpush1.msra.mxu0 0.0
    %215 = vmatprep.subr.mxu0 0.0
    %216 = vmatpush1.msra.mxu0 0.0
    %217 = vmatprep.subr.mxu0 0.0
    %218 = vmatpush1.msra.mxu0 0.0
    %219 = vmatprep.subr.mxu0 0.0
    %220 = vmatpush1.msra.mxu0 0.0
    %221 = vmatprep.subr.mxu0 0.0
    %222 = vmatpush1.msra.mxu0 0.0
    %223 = vmatprep.subr.mxu0 0.0
    %224 = vmatpush1.msra.mxu0 0.0
    %225 = vmatprep.subr.mxu0 0.0
    %226 = vmatpush1.msra.mxu0 0.0
    %227 = vmatprep.subr.mxu0 0.0
    %228 = vmatpush1.msra.mxu0 0.0
    %229 = vmatprep.mubr.f32.mxu0 0.0
    %230 = vmatmul.mubr.f32.gmra.mrb[0].mxu0 %v163
    %v231 = vpop.f32.mrb[0].mxu0
    %v232 = vadd.f32 0.0, %v231
    %v233 = vpop.f32.mrb[0].mxu0
    %234 = vdwg.mxu0
    %v235 = vadd.f32 %v162, %v232
    %v236 = vxor.u32 %v235, 2147483648
    %v237 = vmul.f32 %v236, 1.442695
    %v238 = vpow.pop %v237
    %v239 = vadd.f32 %v238, 1.0
    %v240 = vrcp.pop %v239
    %v241 = vmul.f32 1.0, %v240
    %v242 = vtanh.pop %v235
    %v243 = vmul.f32 %v241, %v148
    %245 = vrot.lane.b32.xlu0 %v242, 64
    %v246 = vpop.permute.xlu0 %245
    %v248 = vmul.f32 %v241, %v246
    %250 = vrot.lane.b32.xlu0 %v248, 32
    %v251 = vpop.permute.xlu0 %250
    %v253 = vadd.f32 %v243, %v251
    %v254 = vtanh.pop %v253
    %256 = vrot.lane.b32.xlu0 %v254, 64
    %v257 = vpop.permute.xlu0 %256
    %v259 = vmul.f32 %v241, %v257
    %261 = vrot.lane.b32.xlu0 %v259, 32
    %v262 = vpop.permute.xlu0 %261
    %264 = vst.msk [vmem:[#allocation2 + $0x2] sm:$0x3] %vm159, %v262
    %s265 = scalar_lea.vmem %s0, 4
    %v266 = vld [vmem:[%s265] sm:$0x3]
    %v267 = vsel %vm56, %v262, 0
    %269 = vmatprep.subr.mxu0 0.0
    %270 = vmatpush1.msra.mxu0 %v51
    %271 = vmatprep.subr.mxu0 0.0
    %272 = vmatpush1.msra.mxu0 %v52
    %273 = vmatprep.subr.mxu0 0.0
    %274 = vmatpush1.msra.mxu0 %v53
    %275 = vmatprep.subr.mxu0 0.0
    %276 = vmatpush1.msra.mxu0 %v54
    %277 = vmatprep.subr.mxu0 0.0
    %278 = vmatpush1.msra.mxu0 0.0
    %279 = vmatprep.subr.mxu0 0.0
    %280 = vmatpush1.msra.mxu0 0.0
    %281 = vmatprep.subr.mxu0 0.0
    %282 = vmatpush1.msra.mxu0 0.0
    %283 = vmatprep.subr.mxu0 0.0
    %284 = vmatpush1.msra.mxu0 0.0
    %285 = vmatprep.subr.mxu0 0.0
    %286 = vmatpush1.msra.mxu0 0.0
    %287 = vmatprep.subr.mxu0 0.0
    %288 = vmatpush1.msra.mxu0 0.0
    %289 = vmatprep.subr.mxu0 0.0
    %290 = vmatpush1.msra.mxu0 0.0
    %291 = vmatprep.subr.mxu0 0.0
    %292 = vmatpush1.msra.mxu0 0.0
    %293 = vmatprep.subr.mxu0 0.0
    %294 = vmatpush1.msra.mxu0 0.0
    %295 = vmatprep.subr.mxu0 0.0
    %296 = vmatpush1.msra.mxu0 0.0
    %297 = vmatprep.subr.mxu0 0.0
    %298 = vmatpush1.msra.mxu0 0.0
    %299 = vmatprep.subr.mxu0 0.0
    %300 = vmatpush1.msra.mxu0 0.0
    %301 = vmatprep.subr.mxu0 0.0
    %302 = vmatpush1.msra.mxu0 0.0
    %303 = vmatprep.subr.mxu0 0.0
    %304 = vmatpush1.msra.mxu0 0.0
    %305 = vmatprep.subr.mxu0 0.0
    %306 = vmatpush1.msra.mxu0 0.0
    %307 = vmatprep.subr.mxu0 0.0
    %308 = vmatpush1.msra.mxu0 0.0
    %309 = vmatprep.subr.mxu0 0.0
    %310 = vmatpush1.msra.mxu0 0.0
    %311 = vmatprep.subr.mxu0 0.0
    %312 = vmatpush1.msra.mxu0 0.0
    %313 = vmatprep.subr.mxu0 0.0
    %314 = vmatpush1.msra.mxu0 0.0
    %315 = vmatprep.subr.mxu0 0.0
    %316 = vmatpush1.msra.mxu0 0.0
    %317 = vmatprep.subr.mxu0 0.0
    %318 = vmatpush1.msra.mxu0 0.0
    %319 = vmatprep.subr.mxu0 0.0
    %320 = vmatpush1.msra.mxu0 0.0
    %321 = vmatprep.subr.mxu0 0.0
    %322 = vmatpush1.msra.mxu0 0.0
    %323 = vmatprep.subr.mxu0 0.0
    %324 = vmatpush1.msra.mxu0 0.0
    %325 = vmatprep.subr.mxu0 0.0
    %326 = vmatpush1.msra.mxu0 0.0
    %327 = vmatprep.subr.mxu0 0.0
    %328 = vmatpush1.msra.mxu0 0.0
    %329 = vmatprep.subr.mxu0 0.0
    %330 = vmatpush1.msra.mxu0 0.0
    %331 = vmatprep.subr.mxu0 0.0
    %332 = vmatpush1.msra.mxu0 0.0
    %333 = vmatprep.mubr.f32.mxu0 0.0
    %334 = vmatmul.mubr.f32.gmra.mrb[0].mxu0 %v267
    %v335 = vpop.f32.mrb[0].mxu0
    %v336 = vadd.f32 0.0, %v335
    %v337 = vpop.f32.mrb[0].mxu0
    %338 = vdwg.mxu0
    %v339 = vadd.f32 %v266, %v336
    %v340 = vxor.u32 %v339, 2147483648
    %v341 = vmul.f32 %v340, 1.442695
    %v342 = vpow.pop %v341
    %v343 = vadd.f32 %v342, 1.0
    %v344 = vrcp.pop %v343
    %v345 = vmul.f32 1.0, %v344
    %v346 = vtanh.pop %v339
    %v347 = vmul.f32 %v345, %v253
    %349 = vrot.lane.b32.xlu0 %v346, 64
    %v350 = vpop.permute.xlu0 %349
    %v352 = vmul.f32 %v345, %v350
    %354 = vrot.lane.b32.xlu0 %v352, 32
    %v355 = vpop.permute.xlu0 %354
    %v357 = vadd.f32 %v347, %v355
    %v358 = vtanh.pop %v357
    %360 = vrot.lane.b32.xlu0 %v358, 64
    %v361 = vpop.permute.xlu0 %360
    %v363 = vmul.f32 %v345, %v361
    %365 = vrot.lane.b32.xlu0 %v363, 32
    %v366 = vpop.permute.xlu0 %365
    %368 = vst.msk [vmem:[#allocation2 + $0x4] sm:$0x3] %vm159, %v366
    %s369 = scalar_lea.vmem %s0, 6
    %v370 = vld [vmem:[%s369] sm:$0x3]
    %v371 = vsel %vm56, %v366, 0
    %373 = vmatprep.subr.mxu0 0.0
    %374 = vmatpush1.msra.mxu0 %v51
    %375 = vmatprep.subr.mxu0 0.0
    %376 = vmatpush1.msra.mxu0 %v52
    %377 = vmatprep.subr.mxu0 0.0
    %378 = vmatpush1.msra.mxu0 %v53
    %379 = vmatprep.subr.mxu0 0.0
    %380 = vmatpush1.msra.mxu0 %v54
    %381 = vmatprep.subr.mxu0 0.0
    %382 = vmatpush1.msra.mxu0 0.0
    %383 = vmatprep.subr.mxu0 0.0
    %384 = vmatpush1.msra.mxu0 0.0
    %385 = vmatprep.subr.mxu0 0.0
    %386 = vmatpush1.msra.mxu0 0.0
    %387 = vmatprep.subr.mxu0 0.0
    %388 = vmatpush1.msra.mxu0 0.0
    %389 = vmatprep.subr.mxu0 0.0
    %390 = vmatpush1.msra.mxu0 0.0
    %391 = vmatprep.subr.mxu0 0.0
    %392 = vmatpush1.msra.mxu0 0.0
    %393 = vmatprep.subr.mxu0 0.0
    %394 = vmatpush1.msra.mxu0 0.0
    %395 = vmatprep.subr.mxu0 0.0
    %396 = vmatpush1.msra.mxu0 0.0
    %397 = vmatprep.subr.mxu0 0.0
    %398 = vmatpush1.msra.mxu0 0.0
    %399 = vmatprep.subr.mxu0 0.0
    %400 = vmatpush1.msra.mxu0 0.0
    %401 = vmatprep.subr.mxu0 0.0
    %402 = vmatpush1.msra.mxu0 0.0
    %403 = vmatprep.subr.mxu0 0.0
    %404 = vmatpush1.msra.mxu0 0.0
    %405 = vmatprep.subr.mxu0 0.0
    %406 = vmatpush1.msra.mxu0 0.0
    %407 = vmatprep.subr.mxu0 0.0
    %408 = vmatpush1.msra.mxu0 0.0
    %409 = vmatprep.subr.mxu0 0.0
    %410 = vmatpush1.msra.mxu0 0.0
    %411 = vmatprep.subr.mxu0 0.0
    %412 = vmatpush1.msra.mxu0 0.0
    %413 = vmatprep.subr.mxu0 0.0
    %414 = vmatpush1.msra.mxu0 0.0
    %415 = vmatprep.subr.mxu0 0.0
    %416 = vmatpush1.msra.mxu0 0.0
    %417 = vmatprep.subr.mxu0 0.0
    %418 = vmatpush1.msra.mxu0 0.0
    %419 = vmatprep.subr.mxu0 0.0
    %420 = vmatpush1.msra.mxu0 0.0
    %421 = vmatprep.subr.mxu0 0.0
    %422 = vmatpush1.msra.mxu0 0.0
    %423 = vmatprep.subr.mxu0 0.0
    %424 = vmatpush1.msra.mxu0 0.0
    %425 = vmatprep.subr.mxu0 0.0
    %426 = vmatpush1.msra.mxu0 0.0
    %427 = vmatprep.subr.mxu0 0.0
    %428 = vmatpush1.msra.mxu0 0.0
    %429 = vmatprep.subr.mxu0 0.0
    %430 = vmatpush1.msra.mxu0 0.0
    %431 = vmatprep.subr.mxu0 0.0
    %432 = vmatpush1.msra.mxu0 0.0
    %433 = vmatprep.subr.mxu0 0.0
    %434 = vmatpush1.msra.mxu0 0.0
    %435 = vmatprep.subr.mxu0 0.0
    %436 = vmatpush1.msra.mxu0 0.0
    %437 = vmatprep.mubr.f32.mxu0 0.0
    %438 = vmatmul.mubr.f32.gmra.mrb[0].mxu0 %v371
    %v439 = vpop.f32.mrb[0].mxu0
    %v440 = vadd.f32 0.0, %v439
    %v441 = vpop.f32.mrb[0].mxu0
    %442 = vdwg.mxu0
    %v443 = vadd.f32 %v370, %v440
    %v444 = vxor.u32 %v443, 2147483648
    %v445 = vmul.f32 %v444, 1.442695
    %v446 = vpow.pop %v445
    %v447 = vadd.f32 %v446, 1.0
    %v448 = vrcp.pop %v447
    %v449 = vmul.f32 1.0, %v448
    %v450 = vtanh.pop %v443
    %v451 = vmul.f32 %v449, %v357
    %453 = vrot.lane.b32.xlu0 %v450, 64
    %v454 = vpop.permute.xlu0 %453
    %v456 = vmul.f32 %v449, %v454
    %458 = vrot.lane.b32.xlu0 %v456, 32
    %v459 = vpop.permute.xlu0 %458
    %v461 = vadd.f32 %v451, %v459
    %v462 = vtanh.pop %v461
    %464 = vrot.lane.b32.xlu0 %v462, 64
    %v465 = vpop.permute.xlu0 %464
    %v467 = vmul.f32 %v449, %v465
    %469 = vrot.lane.b32.xlu0 %v467, 32
    %v470 = vpop.permute.xlu0 %469
    %472 = vst.msk [vmem:[#allocation2 + $0x6] sm:$0x3] %vm159, %v470
    %s473 = scalar_lea.vmem %s0, 8
    %v474 = vld [vmem:[%s473] sm:$0x3]
    %v475 = vsel %vm56, %v470, 0
    %477 = vmatprep.subr.mxu0 0.0
    %478 = vmatpush1.msra.mxu0 %v51
    %479 = vmatprep.subr.mxu0 0.0
    %480 = vmatpush1.msra.mxu0 %v52
    %481 = vmatprep.subr.mxu0 0.0
    %482 = vmatpush1.msra.mxu0 %v53
    %483 = vmatprep.subr.mxu0 0.0
    %484 = vmatpush1.msra.mxu0 %v54
    %485 = vmatprep.subr.mxu0 0.0
    %486 = vmatpush1.msra.mxu0 0.0
    %487 = vmatprep.subr.mxu0 0.0
    %488 = vmatpush1.msra.mxu0 0.0
    %489 = vmatprep.subr.mxu0 0.0
    %490 = vmatpush1.msra.mxu0 0.0
    %491 = vmatprep.subr.mxu0 0.0
    %492 = vmatpush1.msra.mxu0 0.0
    %493 = vmatprep.subr.mxu0 0.0
    %494 = vmatpush1.msra.mxu0 0.0
    %495 = vmatprep.subr.mxu0 0.0
    %496 = vmatpush1.msra.mxu0 0.0
    %497 = vmatprep.subr.mxu0 0.0
    %498 = vmatpush1.msra.mxu0 0.0
    %499 = vmatprep.subr.mxu0 0.0
    %500 = vmatpush1.msra.mxu0 0.0
    %501 = vmatprep.subr.mxu0 0.0
    %502 = vmatpush1.msra.mxu0 0.0
    %503 = vmatprep.subr.mxu0 0.0
    %504 = vmatpush1.msra.mxu0 0.0
    %505 = vmatprep.subr.mxu0 0.0
    %506 = vmatpush1.msra.mxu0 0.0
    %507 = vmatprep.subr.mxu0 0.0
    %508 = vmatpush1.msra.mxu0 0.0
    %509 = vmatprep.subr.mxu0 0.0
    %510 = vmatpush1.msra.mxu0 0.0
    %511 = vmatprep.subr.mxu0 0.0
    %512 = vmatpush1.msra.mxu0 0.0
    %513 = vmatprep.subr.mxu0 0.0
    %514 = vmatpush1.msra.mxu0 0.0
    %515 = vmatprep.subr.mxu0 0.0
    %516 = vmatpush1.msra.mxu0 0.0
    %517 = vmatprep.subr.mxu0 0.0
    %518 = vmatpush1.msra.mxu0 0.0
    %519 = vmatprep.subr.mxu0 0.0
    %520 = vmatpush1.msra.mxu0 0.0
    %521 = vmatprep.subr.mxu0 0.0
    %522 = vmatpush1.msra.mxu0 0.0
    %523 = vmatprep.subr.mxu0 0.0
    %524 = vmatpush1.msra.mxu0 0.0
    %525 = vmatprep.subr.mxu0 0.0
    %526 = vmatpush1.msra.mxu0 0.0
    %527 = vmatprep.subr.mxu0 0.0
    %528 = vmatpush1.msra.mxu0 0.0
    %529 = vmatprep.subr.mxu0 0.0
    %530 = vmatpush1.msra.mxu0 0.0
    %531 = vmatprep.subr.mxu0 0.0
    %532 = vmatpush1.msra.mxu0 0.0
    %533 = vmatprep.subr.mxu0 0.0
    %534 = vmatpush1.msra.mxu0 0.0
    %535 = vmatprep.subr.mxu0 0.0
    %536 = vmatpush1.msra.mxu0 0.0
    %537 = vmatprep.subr.mxu0 0.0
    %538 = vmatpush1.msra.mxu0 0.0
    %539 = vmatprep.subr.mxu0 0.0
    %540 = vmatpush1.msra.mxu0 0.0
    %541 = vmatprep.mubr.f32.mxu0 0.0
    %542 = vmatmul.mubr.f32.gmra.mrb[0].mxu0 %v475
    %v543 = vpop.f32.mrb[0].mxu0
    %v544 = vadd.f32 0.0, %v543
    %v545 = vpop.f32.mrb[0].mxu0
    %546 = vdwg.mxu0
    %v547 = vadd.f32 %v474, %v544
    %v548 = vxor.u32 %v547, 2147483648
    %v549 = vmul.f32 %v548, 1.442695
    %v550 = vpow.pop %v549
    %v551 = vadd.f32 %v550, 1.0
    %v552 = vrcp.pop %v551
    %v553 = vmul.f32 1.0, %v552
    %v554 = vtanh.pop %v547
    %v555 = vmul.f32 %v553, %v461
    %557 = vrot.lane.b32.xlu0 %v554, 64
    %v558 = vpop.permute.xlu0 %557
    %v560 = vmul.f32 %v553, %v558
    %562 = vrot.lane.b32.xlu0 %v560, 32
    %v563 = vpop.permute.xlu0 %562
    %v565 = vadd.f32 %v555, %v563
    %v566 = vtanh.pop %v565
    %568 = vrot.lane.b32.xlu0 %v566, 64
    %v569 = vpop.permute.xlu0 %568
    %v571 = vmul.f32 %v553, %v569
    %573 = vrot.lane.b32.xlu0 %v571, 32
    %v574 = vpop.permute.xlu0 %573
    %576 = vst.msk [vmem:[#allocation2 + $0x8] sm:$0x3] %vm159, %v574
    %s577 = scalar_lea.vmem %s0, 10
    %v578 = vld [vmem:[%s577] sm:$0x3]
    %v579 = vsel %vm56, %v574, 0
    %581 = vmatprep.subr.mxu0 0.0
    %582 = vmatpush1.msra.mxu0 %v51
    %583 = vmatprep.subr.mxu0 0.0
    %584 = vmatpush1.msra.mxu0 %v52
    %585 = vmatprep.subr.mxu0 0.0
    %586 = vmatpush1.msra.mxu0 %v53
    %587 = vmatprep.subr.mxu0 0.0
    %588 = vmatpush1.msra.mxu0 %v54
    %589 = vmatprep.subr.mxu0 0.0
    %590 = vmatpush1.msra.mxu0 0.0
    %591 = vmatprep.subr.mxu0 0.0
    %592 = vmatpush1.msra.mxu0 0.0
    %593 = vmatprep.subr.mxu0 0.0
    %594 = vmatpush1.msra.mxu0 0.0
    %595 = vmatprep.subr.mxu0 0.0
    %596 = vmatpush1.msra.mxu0 0.0
    %597 = vmatprep.subr.mxu0 0.0
    %598 = vmatpush1.msra.mxu0 0.0
    %599 = vmatprep.subr.mxu0 0.0
    %600 = vmatpush1.msra.mxu0 0.0
    %601 = vmatprep.subr.mxu0 0.0
    %602 = vmatpush1.msra.mxu0 0.0
    %603 = vmatprep.subr.mxu0 0.0
    %604 = vmatpush1.msra.mxu0 0.0
    %605 = vmatprep.subr.mxu0 0.0
    %606 = vmatpush1.msra.mxu0 0.0
    %607 = vmatprep.subr.mxu0 0.0
    %608 = vmatpush1.msra.mxu0 0.0
    %609 = vmatprep.subr.mxu0 0.0
    %610 = vmatpush1.msra.mxu0 0.0
    %611 = vmatprep.subr.mxu0 0.0
    %612 = vmatpush1.msra.mxu0 0.0
    %613 = vmatprep.subr.mxu0 0.0
    %614 = vmatpush1.msra.mxu0 0.0
    %615 = vmatprep.subr.mxu0 0.0
    %616 = vmatpush1.msra.mxu0 0.0
    %617 = vmatprep.subr.mxu0 0.0
    %618 = vmatpush1.msra.mxu0 0.0
    %619 = vmatprep.subr.mxu0 0.0
    %620 = vmatpush1.msra.mxu0 0.0
    %621 = vmatprep.subr.mxu0 0.0
    %622 = vmatpush1.msra.mxu0 0.0
    %623 = vmatprep.subr.mxu0 0.0
    %624 = vmatpush1.msra.mxu0 0.0
    %625 = vmatprep.subr.mxu0 0.0
    %626 = vmatpush1.msra.mxu0 0.0
    %627 = vmatprep.subr.mxu0 0.0
    %628 = vmatpush1.msra.mxu0 0.0
    %629 = vmatprep.subr.mxu0 0.0
    %630 = vmatpush1.msra.mxu0 0.0
    %631 = vmatprep.subr.mxu0 0.0
    %632 = vmatpush1.msra.mxu0 0.0
    %633 = vmatprep.subr.mxu0 0.0
    %634 = vmatpush1.msra.mxu0 0.0
    %635 = vmatprep.subr.mxu0 0.0
    %636 = vmatpush1.msra.mxu0 0.0
    %637 = vmatprep.subr.mxu0 0.0
    %638 = vmatpush1.msra.mxu0 0.0
    %639 = vmatprep.subr.mxu0 0.0
    %640 = vmatpush1.msra.mxu0 0.0
    %641 = vmatprep.subr.mxu0 0.0
    %642 = vmatpush1.msra.mxu0 0.0
    %643 = vmatprep.subr.mxu0 0.0
    %644 = vmatpush1.msra.mxu0 0.0
    %645 = vmatprep.mubr.f32.mxu0 0.0
    %646 = vmatmul.mubr.f32.gmra.mrb[0].mxu0 %v579
    %v647 = vpop.f32.mrb[0].mxu0
    %v648 = vadd.f32 0.0, %v647
    %v649 = vpop.f32.mrb[0].mxu0
    %650 = vdwg.mxu0
    %v651 = vadd.f32 %v578, %v648
    %v652 = vxor.u32 %v651, 2147483648
    %v653 = vmul.f32 %v652, 1.442695
    %v654 = vpow.pop %v653
    %v655 = vadd.f32 %v654, 1.0
    %v656 = vrcp.pop %v655
    %v657 = vmul.f32 1.0, %v656
    %v658 = vtanh.pop %v651
    %v659 = vmul.f32 %v657, %v565
    %661 = vrot.lane.b32.xlu0 %v658, 64
    %v662 = vpop.permute.xlu0 %661
    %v664 = vmul.f32 %v657, %v662
    %666 = vrot.lane.b32.xlu0 %v664, 32
    %v667 = vpop.permute.xlu0 %666
    %v669 = vadd.f32 %v659, %v667
    %v670 = vtanh.pop %v669
    %672 = vrot.lane.b32.xlu0 %v670, 64
    %v673 = vpop.permute.xlu0 %672
    %v675 = vmul.f32 %v657, %v673
    %677 = vrot.lane.b32.xlu0 %v675, 32
    %v678 = vpop.permute.xlu0 %677
    %680 = vst.msk [vmem:[#allocation2 + $0xa] sm:$0x3] %vm159, %v678
    %s681 = scalar_lea.vmem %s0, 12
    %v682 = vld [vmem:[%s681] sm:$0x3]
    %v683 = vsel %vm56, %v678, 0
    %685 = vmatprep.subr.mxu0 0.0
    %686 = vmatpush1.msra.mxu0 %v51
    %687 = vmatprep.subr.mxu0 0.0
    %688 = vmatpush1.msra.mxu0 %v52
    %689 = vmatprep.subr.mxu0 0.0
    %690 = vmatpush1.msra.mxu0 %v53
    %691 = vmatprep.subr.mxu0 0.0
    %692 = vmatpush1.msra.mxu0 %v54
    %693 = vmatprep.subr.mxu0 0.0
    %694 = vmatpush1.msra.mxu0 0.0
    %695 = vmatprep.subr.mxu0 0.0
    %696 = vmatpush1.msra.mxu0 0.0
    %697 = vmatprep.subr.mxu0 0.0
    %698 = vmatpush1.msra.mxu0 0.0
    %699 = vmatprep.subr.mxu0 0.0
    %700 = vmatpush1.msra.mxu0 0.0
    %701 = vmatprep.subr.mxu0 0.0
    %702 = vmatpush1.msra.mxu0 0.0
    %703 = vmatprep.subr.mxu0 0.0
    %704 = vmatpush1.msra.mxu0 0.0
    %705 = vmatprep.subr.mxu0 0.0
    %706 = vmatpush1.msra.mxu0 0.0
    %707 = vmatprep.subr.mxu0 0.0
    %708 = vmatpush1.msra.mxu0 0.0
    %709 = vmatprep.subr.mxu0 0.0
    %710 = vmatpush1.msra.mxu0 0.0
    %711 = vmatprep.subr.mxu0 0.0
    %712 = vmatpush1.msra.mxu0 0.0
    %713 = vmatprep.subr.mxu0 0.0
    %714 = vmatpush1.msra.mxu0 0.0
    %715 = vmatprep.subr.mxu0 0.0
    %716 = vmatpush1.msra.mxu0 0.0
    %717 = vmatprep.subr.mxu0 0.0
    %718 = vmatpush1.msra.mxu0 0.0
    %719 = vmatprep.subr.mxu0 0.0
    %720 = vmatpush1.msra.mxu0 0.0
    %721 = vmatprep.subr.mxu0 0.0
    %722 = vmatpush1.msra.mxu0 0.0
    %723 = vmatprep.subr.mxu0 0.0
    %724 = vmatpush1.msra.mxu0 0.0
    %725 = vmatprep.subr.mxu0 0.0
    %726 = vmatpush1.msra.mxu0 0.0
    %727 = vmatprep.subr.mxu0 0.0
    %728 = vmatpush1.msra.mxu0 0.0
    %729 = vmatprep.subr.mxu0 0.0
    %730 = vmatpush1.msra.mxu0 0.0
    %731 = vmatprep.subr.mxu0 0.0
    %732 = vmatpush1.msra.mxu0 0.0
    %733 = vmatprep.subr.mxu0 0.0
    %734 = vmatpush1.msra.mxu0 0.0
    %735 = vmatprep.subr.mxu0 0.0
    %736 = vmatpush1.msra.mxu0 0.0
    %737 = vmatprep.subr.mxu0 0.0
    %738 = vmatpush1.msra.mxu0 0.0
    %739 = vmatprep.subr.mxu0 0.0
    %740 = vmatpush1.msra.mxu0 0.0
    %741 = vmatprep.subr.mxu0 0.0
    %742 = vmatpush1.msra.mxu0 0.0
    %743 = vmatprep.subr.mxu0 0.0
    %744 = vmatpush1.msra.mxu0 0.0
    %745 = vmatprep.subr.mxu0 0.0
    %746 = vmatpush1.msra.mxu0 0.0
    %747 = vmatprep.subr.mxu0 0.0
    %748 = vmatpush1.msra.mxu0 0.0
    %749 = vmatprep.mubr.f32.mxu0 0.0
    %750 = vmatmul.mubr.f32.gmra.mrb[0].mxu0 %v683
    %v751 = vpop.f32.mrb[0].mxu0
    %v752 = vadd.f32 0.0, %v751
    %v753 = vpop.f32.mrb[0].mxu0
    %754 = vdwg.mxu0
    %v755 = vadd.f32 %v682, %v752
    %v756 = vxor.u32 %v755, 2147483648
    %v757 = vmul.f32 %v756, 1.442695
    %v758 = vpow.pop %v757
    %v759 = vadd.f32 %v758, 1.0
    %v760 = vrcp.pop %v759
    %v761 = vmul.f32 1.0, %v760
    %v762 = vtanh.pop %v755
    %v763 = vmul.f32 %v761, %v669
    %765 = vrot.lane.b32.xlu0 %v762, 64
    %v766 = vpop.permute.xlu0 %765
    %v768 = vmul.f32 %v761, %v766
    %770 = vrot.lane.b32.xlu0 %v768, 32
    %v771 = vpop.permute.xlu0 %770
    %v773 = vadd.f32 %v763, %v771
    %v774 = vtanh.pop %v773
    %776 = vrot.lane.b32.xlu0 %v774, 64
    %v777 = vpop.permute.xlu0 %776
    %v779 = vmul.f32 %v761, %v777
    %781 = vrot.lane.b32.xlu0 %v779, 32
    %v782 = vpop.permute.xlu0 %781
    %784 = vst.msk [vmem:[#allocation2 + $0xc] sm:$0x3] %vm159, %v782
    %s785 = scalar_lea.vmem %s0, 14
    %v786 = vld [vmem:[%s785] sm:$0x3]
    %v787 = vsel %vm56, %v782, 0
    %789 = vmatprep.subr.mxu0 0.0
    %790 = vmatpush1.msra.mxu0 %v51
    %791 = vmatprep.subr.mxu0 0.0
    %792 = vmatpush1.msra.mxu0 %v52
    %793 = vmatprep.subr.mxu0 0.0
    %794 = vmatpush1.msra.mxu0 %v53
    %795 = vmatprep.subr.mxu0 0.0
    %796 = vmatpush1.msra.mxu0 %v54
    %797 = vmatprep.subr.mxu0 0.0
    %798 = vmatpush1.msra.mxu0 0.0
    %799 = vmatprep.subr.mxu0 0.0
    %800 = vmatpush1.msra.mxu0 0.0
    %801 = vmatprep.subr.mxu0 0.0
    %802 = vmatpush1.msra.mxu0 0.0
    %803 = vmatprep.subr.mxu0 0.0
    %804 = vmatpush1.msra.mxu0 0.0
    %805 = vmatprep.subr.mxu0 0.0
    %806 = vmatpush1.msra.mxu0 0.0
    %807 = vmatprep.subr.mxu0 0.0
    %808 = vmatpush1.msra.mxu0 0.0
    %809 = vmatprep.subr.mxu0 0.0
    %810 = vmatpush1.msra.mxu0 0.0
    %811 = vmatprep.subr.mxu0 0.0
    %812 = vmatpush1.msra.mxu0 0.0
    %813 = vmatprep.subr.mxu0 0.0
    %814 = vmatpush1.msra.mxu0 0.0
    %815 = vmatprep.subr.mxu0 0.0
    %816 = vmatpush1.msra.mxu0 0.0
    %817 = vmatprep.subr.mxu0 0.0
    %818 = vmatpush1.msra.mxu0 0.0
    %819 = vmatprep.subr.mxu0 0.0
    %820 = vmatpush1.msra.mxu0 0.0
    %821 = vmatprep.subr.mxu0 0.0
    %822 = vmatpush1.msra.mxu0 0.0
    %823 = vmatprep.subr.mxu0 0.0
    %824 = vmatpush1.msra.mxu0 0.0
    %825 = vmatprep.subr.mxu0 0.0
    %826 = vmatpush1.msra.mxu0 0.0
    %827 = vmatprep.subr.mxu0 0.0
    %828 = vmatpush1.msra.mxu0 0.0
    %829 = vmatprep.subr.mxu0 0.0
    %830 = vmatpush1.msra.mxu0 0.0
    %831 = vmatprep.subr.mxu0 0.0
    %832 = vmatpush1.msra.mxu0 0.0
    %833 = vmatprep.subr.mxu0 0.0
    %834 = vmatpush1.msra.mxu0 0.0
    %835 = vmatprep.subr.mxu0 0.0
    %836 = vmatpush1.msra.mxu0 0.0
    %837 = vmatprep.subr.mxu0 0.0
    %838 = vmatpush1.msra.mxu0 0.0
    %839 = vmatprep.subr.mxu0 0.0
    %840 = vmatpush1.msra.mxu0 0.0
    %841 = vmatprep.subr.mxu0 0.0
    %842 = vmatpush1.msra.mxu0 0.0
    %843 = vmatprep.subr.mxu0 0.0
    %844 = vmatpush1.msra.mxu0 0.0
    %845 = vmatprep.subr.mxu0 0.0
    %846 = vmatpush1.msra.mxu0 0.0
    %847 = vmatprep.subr.mxu0 0.0
    %848 = vmatpush1.msra.mxu0 0.0
    %849 = vmatprep.subr.mxu0 0.0
    %850 = vmatpush1.msra.mxu0 0.0
    %851 = vmatprep.subr.mxu0 0.0
    %852 = vmatpush1.msra.mxu0 0.0
    %853 = vmatprep.mubr.f32.mxu0 0.0
    %854 = vmatmul.mubr.f32.gmra.mrb[0].mxu0 %v787
    %v855 = vpop.f32.mrb[0].mxu0
    %v856 = vadd.f32 0.0, %v855
    %v857 = vpop.f32.mrb[0].mxu0
    %858 = vdwg.mxu0
    %v859 = vadd.f32 %v786, %v856
    %v860 = vxor.u32 %v859, 2147483648
    %v861 = vmul.f32 %v860, 1.442695
    %v862 = vpow.pop %v861
    %v863 = vadd.f32 %v862, 1.0
    %v864 = vrcp.pop %v863
    %v865 = vmul.f32 1.0, %v864
    %v866 = vtanh.pop %v859
    %v867 = vmul.f32 %v865, %v773
    %869 = vrot.lane.b32.xlu0 %v866, 64
    %v870 = vpop.permute.xlu0 %869
    %v872 = vmul.f32 %v865, %v870
    %874 = vrot.lane.b32.xlu0 %v872, 32
    %v875 = vpop.permute.xlu0 %874
    %v877 = vadd.f32 %v867, %v875
    %v878 = vtanh.pop %v877
    %880 = vrot.lane.b32.xlu0 %v878, 64
    %v881 = vpop.permute.xlu0 %880
    %v883 = vmul.f32 %v865, %v881
    %885 = vrot.lane.b32.xlu0 %v883, 32
    %v886 = vpop.permute.xlu0 %885
    %888 = vst.msk [vmem:[#allocation2 + $0xe] sm:$0x3] %vm159, %v886
    %s889 = scalar_lea.vmem %s0, 16
    %v890 = vld [vmem:[%s889] sm:$0x3]
    %v891 = vsel %vm56, %v886, 0
    %893 = vmatprep.subr.mxu0 0.0
    %894 = vmatpush1.msra.mxu0 %v51
    %895 = vmatprep.subr.mxu0 0.0
    %896 = vmatpush1.msra.mxu0 %v52
    %897 = vmatprep.subr.mxu0 0.0
    %898 = vmatpush1.msra.mxu0 %v53
    %899 = vmatprep.subr.mxu0 0.0
    %900 = vmatpush1.msra.mxu0 %v54
    %901 = vmatprep.subr.mxu0 0.0
    %902 = vmatpush1.msra.mxu0 0.0
    %903 = vmatprep.subr.mxu0 0.0
    %904 = vmatpush1.msra.mxu0 0.0
    %905 = vmatprep.subr.mxu0 0.0
    %906 = vmatpush1.msra.mxu0 0.0
    %907 = vmatprep.subr.mxu0 0.0
    %908 = vmatpush1.msra.mxu0 0.0
    %909 = vmatprep.subr.mxu0 0.0
    %910 = vmatpush1.msra.mxu0 0.0
    %911 = vmatprep.subr.mxu0 0.0
    %912 = vmatpush1.msra.mxu0 0.0
    %913 = vmatprep.subr.mxu0 0.0
    %914 = vmatpush1.msra.mxu0 0.0
    %915 = vmatprep.subr.mxu0 0.0
    %916 = vmatpush1.msra.mxu0 0.0
    %917 = vmatprep.subr.mxu0 0.0
    %918 = vmatpush1.msra.mxu0 0.0
    %919 = vmatprep.subr.mxu0 0.0
    %920 = vmatpush1.msra.mxu0 0.0
    %921 = vmatprep.subr.mxu0 0.0
    %922 = vmatpush1.msra.mxu0 0.0
    %923 = vmatprep.subr.mxu0 0.0
    %924 = vmatpush1.msra.mxu0 0.0
    %925 = vmatprep.subr.mxu0 0.0
    %926 = vmatpush1.msra.mxu0 0.0
    %927 = vmatprep.subr.mxu0 0.0
    %928 = vmatpush1.msra.mxu0 0.0
    %929 = vmatprep.subr.mxu0 0.0
    %930 = vmatpush1.msra.mxu0 0.0
    %931 = vmatprep.subr.mxu0 0.0
    %932 = vmatpush1.msra.mxu0 0.0
    %933 = vmatprep.subr.mxu0 0.0
    %934 = vmatpush1.msra.mxu0 0.0
    %935 = vmatprep.subr.mxu0 0.0
    %936 = vmatpush1.msra.mxu0 0.0
    %937 = vmatprep.subr.mxu0 0.0
    %938 = vmatpush1.msra.mxu0 0.0
    %939 = vmatprep.subr.mxu0 0.0
    %940 = vmatpush1.msra.mxu0 0.0
    %941 = vmatprep.subr.mxu0 0.0
    %942 = vmatpush1.msra.mxu0 0.0
    %943 = vmatprep.subr.mxu0 0.0
    %944 = vmatpush1.msra.mxu0 0.0
    %945 = vmatprep.subr.mxu0 0.0
    %946 = vmatpush1.msra.mxu0 0.0
    %947 = vmatprep.subr.mxu0 0.0
    %948 = vmatpush1.msra.mxu0 0.0
    %949 = vmatprep.subr.mxu0 0.0
    %950 = vmatpush1.msra.mxu0 0.0
    %951 = vmatprep.subr.mxu0 0.0
    %952 = vmatpush1.msra.mxu0 0.0
    %953 = vmatprep.subr.mxu0 0.0
    %954 = vmatpush1.msra.mxu0 0.0
    %955 = vmatprep.subr.mxu0 0.0
    %956 = vmatpush1.msra.mxu0 0.0
    %957 = vmatprep.mubr.f32.mxu0 0.0
    %958 = vmatmul.mubr.f32.gmra.mrb[0].mxu0 %v891
    %v959 = vpop.f32.mrb[0].mxu0
    %v960 = vadd.f32 0.0, %v959
    %v961 = vpop.f32.mrb[0].mxu0
    %962 = vdwg.mxu0
    %v963 = vadd.f32 %v890, %v960
    %v964 = vxor.u32 %v963, 2147483648
    %v965 = vmul.f32 %v964, 1.442695
    %v966 = vpow.pop %v965
    %v967 = vadd.f32 %v966, 1.0
    %v968 = vrcp.pop %v967
    %v969 = vmul.f32 1.0, %v968
    %v970 = vtanh.pop %v963
    %v971 = vmul.f32 %v969, %v877
    %973 = vrot.lane.b32.xlu0 %v970, 64
    %v974 = vpop.permute.xlu0 %973
    %v976 = vmul.f32 %v969, %v974
    %978 = vrot.lane.b32.xlu0 %v976, 32
    %v979 = vpop.permute.xlu0 %978
    %v981 = vadd.f32 %v971, %v979
    %v982 = vtanh.pop %v981
    %984 = vrot.lane.b32.xlu0 %v982, 64
    %v985 = vpop.permute.xlu0 %984
    %v987 = vmul.f32 %v969, %v985
    %989 = vrot.lane.b32.xlu0 %v987, 32
    %v990 = vpop.permute.xlu0 %989
    %992 = vst.msk [vmem:[#allocation2 + $0x10] sm:$0x3] %vm159, %v990
    %s993 = scalar_lea.vmem %s0, 18
    %v994 = vld [vmem:[%s993] sm:$0x3]
    %v995 = vsel %vm56, %v990, 0
    %997 = vmatprep.subr.mxu0 0.0
    %998 = vmatpush1.msra.mxu0 %v51
    %999 = vmatprep.subr.mxu0 0.0
    %1000 = vmatpush1.msra.mxu0 %v52
    %1001 = vmatprep.subr.mxu0 0.0
    %1002 = vmatpush1.msra.mxu0 %v53
    %1003 = vmatprep.subr.mxu0 0.0
    %1004 = vmatpush1.msra.mxu0 %v54
    %1005 = vmatprep.subr.mxu0 0.0
    %1006 = vmatpush1.msra.mxu0 0.0
    %1007 = vmatprep.subr.mxu0 0.0
    %1008 = vmatpush1.msra.mxu0 0.0
    %1009 = vmatprep.subr.mxu0 0.0
    %1010 = vmatpush1.msra.mxu0 0.0
    %1011 = vmatprep.subr.mxu0 0.0
    %1012 = vmatpush1.msra.mxu0 0.0
    %1013 = vmatprep.subr.mxu0 0.0
    %1014 = vmatpush1.msra.mxu0 0.0
    %1015 = vmatprep.subr.mxu0 0.0
    %1016 = vmatpush1.msra.mxu0 0.0
    %1017 = vmatprep.subr.mxu0 0.0
    %1018 = vmatpush1.msra.mxu0 0.0
    %1019 = vmatprep.subr.mxu0 0.0
    %1020 = vmatpush1.msra.mxu0 0.0
    %1021 = vmatprep.subr.mxu0 0.0
    %1022 = vmatpush1.msra.mxu0 0.0
    %1023 = vmatprep.subr.mxu0 0.0
    %1024 = vmatpush1.msra.mxu0 0.0
    %1025 = vmatprep.subr.mxu0 0.0
    %1026 = vmatpush1.msra.mxu0 0.0
    %1027 = vmatprep.subr.mxu0 0.0
    %1028 = vmatpush1.msra.mxu0 0.0
    %1029 = vmatprep.subr.mxu0 0.0
    %1030 = vmatpush1.msra.mxu0 0.0
    %1031 = vmatprep.subr.mxu0 0.0
    %1032 = vmatpush1.msra.mxu0 0.0
    %1033 = vmatprep.subr.mxu0 0.0
    %1034 = vmatpush1.msra.mxu0 0.0
    %1035 = vmatprep.subr.mxu0 0.0
    %1036 = vmatpush1.msra.mxu0 0.0
    %1037 = vmatprep.subr.mxu0 0.0
    %1038 = vmatpush1.msra.mxu0 0.0
    %1039 = vmatprep.subr.mxu0 0.0
    %1040 = vmatpush1.msra.mxu0 0.0
    %1041 = vmatprep.subr.mxu0 0.0
    %1042 = vmatpush1.msra.mxu0 0.0
    %1043 = vmatprep.subr.mxu0 0.0
    %1044 = vmatpush1.msra.mxu0 0.0
    %1045 = vmatprep.subr.mxu0 0.0
    %1046 = vmatpush1.msra.mxu0 0.0
    %1047 = vmatprep.subr.mxu0 0.0
    %1048 = vmatpush1.msra.mxu0 0.0
    %1049 = vmatprep.subr.mxu0 0.0
    %1050 = vmatpush1.msra.mxu0 0.0
    %1051 = vmatprep.subr.mxu0 0.0
    %1052 = vmatpush1.msra.mxu0 0.0
    %1053 = vmatprep.subr.mxu0 0.0
    %1054 = vmatpush1.msra.mxu0 0.0
    %1055 = vmatprep.subr.mxu0 0.0
    %1056 = vmatpush1.msra.mxu0 0.0
    %1057 = vmatprep.subr.mxu0 0.0
    %1058 = vmatpush1.msra.mxu0 0.0
    %1059 = vmatprep.subr.mxu0 0.0
    %1060 = vmatpush1.msra.mxu0 0.0
    %1061 = vmatprep.mubr.f32.mxu0 0.0
    %1062 = vmatmul.mubr.f32.gmra.mrb[0].mxu0 %v995
    %v1063 = vpop.f32.mrb[0].mxu0
    %v1064 = vadd.f32 0.0, %v1063
    %v1065 = vpop.f32.mrb[0].mxu0
    %1066 = vdwg.mxu0
    %v1067 = vadd.f32 %v994, %v1064
    %v1068 = vxor.u32 %v1067, 2147483648
    %v1069 = vmul.f32 %v1068, 1.442695
    %v1070 = vpow.pop %v1069
    %v1071 = vadd.f32 %v1070, 1.0
    %v1072 = vrcp.pop %v1071
    %v1073 = vmul.f32 1.0, %v1072
    %v1074 = vtanh.pop %v1067
    %v1075 = vmul.f32 %v1073, %v981
    %1077 = vrot.lane.b32.xlu0 %v1074, 64
    %v1078 = vpop.permute.xlu0 %1077
    %v1080 = vmul.f32 %v1073, %v1078
    %1082 = vrot.lane.b32.xlu0 %v1080, 32
    %v1083 = vpop.permute.xlu0 %1082
    %v1085 = vadd.f32 %v1075, %v1083
    %v1086 = vtanh.pop %v1085
    %1088 = vrot.lane.b32.xlu0 %v1086, 64
    %v1089 = vpop.permute.xlu0 %1088
    %v1091 = vmul.f32 %v1073, %v1089
    %1093 = vrot.lane.b32.xlu0 %v1091, 32
    %v1094 = vpop.permute.xlu0 %1093
    %1096 = vst.msk [vmem:[#allocation2 + $0x12] sm:$0x3] %vm159, %v1094
    %s1097 = scalar_lea.vmem %s0, 20
    %v1098 = vld [vmem:[%s1097] sm:$0x3]
    %v1099 = vsel %vm56, %v1094, 0
    %1101 = vmatprep.subr.mxu0 0.0
    %1102 = vmatpush1.msra.mxu0 %v51
    %1103 = vmatprep.subr.mxu0 0.0
    %1104 = vmatpush1.msra.mxu0 %v52
    %1105 = vmatprep.subr.mxu0 0.0
    %1106 = vmatpush1.msra.mxu0 %v53
    %1107 = vmatprep.subr.mxu0 0.0
    %1108 = vmatpush1.msra.mxu0 %v54
    %1109 = vmatprep.subr.mxu0 0.0
    %1110 = vmatpush1.msra.mxu0 0.0
    %1111 = vmatprep.subr.mxu0 0.0
    %1112 = vmatpush1.msra.mxu0 0.0
    %1113 = vmatprep.subr.mxu0 0.0
    %1114 = vmatpush1.msra.mxu0 0.0
    %1115 = vmatprep.subr.mxu0 0.0
    %1116 = vmatpush1.msra.mxu0 0.0
    %1117 = vmatprep.subr.mxu0 0.0
    %1118 = vmatpush1.msra.mxu0 0.0
    %1119 = vmatprep.subr.mxu0 0.0
    %1120 = vmatpush1.msra.mxu0 0.0
    %1121 = vmatprep.subr.mxu0 0.0
    %1122 = vmatpush1.msra.mxu0 0.0
    %1123 = vmatprep.subr.mxu0 0.0
    %1124 = vmatpush1.msra.mxu0 0.0
    %1125 = vmatprep.subr.mxu0 0.0
    %1126 = vmatpush1.msra.mxu0 0.0
    %1127 = vmatprep.subr.mxu0 0.0
    %1128 = vmatpush1.msra.mxu0 0.0
    %1129 = vmatprep.subr.mxu0 0.0
    %1130 = vmatpush1.msra.mxu0 0.0
    %1131 = vmatprep.subr.mxu0 0.0
    %1132 = vmatpush1.msra.mxu0 0.0
    %1133 = vmatprep.subr.mxu0 0.0
    %1134 = vmatpush1.msra.mxu0 0.0
    %1135 = vmatprep.subr.mxu0 0.0
    %1136 = vmatpush1.msra.mxu0 0.0
    %1137 = vmatprep.subr.mxu0 0.0
    %1138 = vmatpush1.msra.mxu0 0.0
    %1139 = vmatprep.subr.mxu0 0.0
    %1140 = vmatpush1.msra.mxu0 0.0
    %1141 = vmatprep.subr.mxu0 0.0
    %1142 = vmatpush1.msra.mxu0 0.0
    %1143 = vmatprep.subr.mxu0 0.0
    %1144 = vmatpush1.msra.mxu0 0.0
    %1145 = vmatprep.subr.mxu0 0.0
    %1146 = vmatpush1.msra.mxu0 0.0
    %1147 = vmatprep.subr.mxu0 0.0
    %1148 = vmatpush1.msra.mxu0 0.0
    %1149 = vmatprep.subr.mxu0 0.0
    %1150 = vmatpush1.msra.mxu0 0.0
    %1151 = vmatprep.subr.mxu0 0.0
    %1152 = vmatpush1.msra.mxu0 0.0
    %1153 = vmatprep.subr.mxu0 0.0
    %1154 = vmatpush1.msra.mxu0 0.0
    %1155 = vmatprep.subr.mxu0 0.0
    %1156 = vmatpush1.msra.mxu0 0.0
    %1157 = vmatprep.subr.mxu0 0.0
    %1158 = vmatpush1.msra.mxu0 0.0
    %1159 = vmatprep.subr.mxu0 0.0
    %1160 = vmatpush1.msra.mxu0 0.0
    %1161 = vmatprep.subr.mxu0 0.0
    %1162 = vmatpush1.msra.mxu0 0.0
    %1163 = vmatprep.subr.mxu0 0.0
    %1164 = vmatpush1.msra.mxu0 0.0
    %1165 = vmatprep.mubr.f32.mxu0 0.0
    %1166 = vmatmul.mubr.f32.gmra.mrb[0].mxu0 %v1099
    %v1167 = vpop.f32.mrb[0].mxu0
    %v1168 = vadd.f32 0.0, %v1167
    %v1169 = vpop.f32.mrb[0].mxu0
    %1170 = vdwg.mxu0
    %v1171 = vadd.f32 %v1098, %v1168
    %v1172 = vxor.u32 %v1171, 2147483648
    %v1173 = vmul.f32 %v1172, 1.442695
    %v1174 = vpow.pop %v1173
    %v1175 = vadd.f32 %v1174, 1.0
    %v1176 = vrcp.pop %v1175
    %v1177 = vmul.f32 1.0, %v1176
    %v1178 = vtanh.pop %v1171
    %v1179 = vmul.f32 %v1177, %v1085
    %1181 = vrot.lane.b32.xlu0 %v1178, 64
    %v1182 = vpop.permute.xlu0 %1181
    %v1184 = vmul.f32 %v1177, %v1182
    %1186 = vrot.lane.b32.xlu0 %v1184, 32
    %v1187 = vpop.permute.xlu0 %1186
    %v1189 = vadd.f32 %v1179, %v1187
    %v1190 = vtanh.pop %v1189
    %1192 = vrot.lane.b32.xlu0 %v1190, 64
    %v1193 = vpop.permute.xlu0 %1192
    %v1195 = vmul.f32 %v1177, %v1193
    %1197 = vrot.lane.b32.xlu0 %v1195, 32
    %v1198 = vpop.permute.xlu0 %1197
    %1200 = vst.msk [vmem:[#allocation2 + $0x14] sm:$0x3] %vm159, %v1198
    %s1201 = scalar_lea.vmem %s0, 22
    %v1202 = vld [vmem:[%s1201] sm:$0x3]
    %v1203 = vsel %vm56, %v1198, 0
    %1205 = vmatprep.subr.mxu0 0.0
    %1206 = vmatpush1.msra.mxu0 %v51
    %1207 = vmatprep.subr.mxu0 0.0
    %1208 = vmatpush1.msra.mxu0 %v52
    %1209 = vmatprep.subr.mxu0 0.0
    %1210 = vmatpush1.msra.mxu0 %v53
    %1211 = vmatprep.subr.mxu0 0.0
    %1212 = vmatpush1.msra.mxu0 %v54
    %1213 = vmatprep.subr.mxu0 0.0
    %1214 = vmatpush1.msra.mxu0 0.0
    %1215 = vmatprep.subr.mxu0 0.0
    %1216 = vmatpush1.msra.mxu0 0.0
    %1217 = vmatprep.subr.mxu0 0.0
    %1218 = vmatpush1.msra.mxu0 0.0
    %1219 = vmatprep.subr.mxu0 0.0
    %1220 = vmatpush1.msra.mxu0 0.0
    %1221 = vmatprep.subr.mxu0 0.0
    %1222 = vmatpush1.msra.mxu0 0.0
    %1223 = vmatprep.subr.mxu0 0.0
    %1224 = vmatpush1.msra.mxu0 0.0
    %1225 = vmatprep.subr.mxu0 0.0
    %1226 = vmatpush1.msra.mxu0 0.0
    %1227 = vmatprep.subr.mxu0 0.0
    %1228 = vmatpush1.msra.mxu0 0.0
    %1229 = vmatprep.subr.mxu0 0.0
    %1230 = vmatpush1.msra.mxu0 0.0
    %1231 = vmatprep.subr.mxu0 0.0
    %1232 = vmatpush1.msra.mxu0 0.0
    %1233 = vmatprep.subr.mxu0 0.0
    %1234 = vmatpush1.msra.mxu0 0.0
    %1235 = vmatprep.subr.mxu0 0.0
    %1236 = vmatpush1.msra.mxu0 0.0
    %1237 = vmatprep.subr.mxu0 0.0
    %1238 = vmatpush1.msra.mxu0 0.0
    %1239 = vmatprep.subr.mxu0 0.0
    %1240 = vmatpush1.msra.mxu0 0.0
    %1241 = vmatprep.subr.mxu0 0.0
    %1242 = vmatpush1.msra.mxu0 0.0
    %1243 = vmatprep.subr.mxu0 0.0
    %1244 = vmatpush1.msra.mxu0 0.0
    %1245 = vmatprep.subr.mxu0 0.0
    %1246 = vmatpush1.msra.mxu0 0.0
    %1247 = vmatprep.subr.mxu0 0.0
    %1248 = vmatpush1.msra.mxu0 0.0
    %1249 = vmatprep.subr.mxu0 0.0
    %1250 = vmatpush1.msra.mxu0 0.0
    %1251 = vmatprep.subr.mxu0 0.0
    %1252 = vmatpush1.msra.mxu0 0.0
    %1253 = vmatprep.subr.mxu0 0.0
    %1254 = vmatpush1.msra.mxu0 0.0
    %1255 = vmatprep.subr.mxu0 0.0
    %1256 = vmatpush1.msra.mxu0 0.0
    %1257 = vmatprep.subr.mxu0 0.0
    %1258 = vmatpush1.msra.mxu0 0.0
    %1259 = vmatprep.subr.mxu0 0.0
    %1260 = vmatpush1.msra.mxu0 0.0
    %1261 = vmatprep.subr.mxu0 0.0
    %1262 = vmatpush1.msra.mxu0 0.0
    %1263 = vmatprep.subr.mxu0 0.0
    %1264 = vmatpush1.msra.mxu0 0.0
    %1265 = vmatprep.subr.mxu0 0.0
    %1266 = vmatpush1.msra.mxu0 0.0
    %1267 = vmatprep.subr.mxu0 0.0
    %1268 = vmatpush1.msra.mxu0 0.0
    %1269 = vmatprep.mubr.f32.mxu0 0.0
    %1270 = vmatmul.mubr.f32.gmra.mrb[0].mxu0 %v1203
    %v1271 = vpop.f32.mrb[0].mxu0
    %v1272 = vadd.f32 0.0, %v1271
    %v1273 = vpop.f32.mrb[0].mxu0
    %1274 = vdwg.mxu0
    %v1275 = vadd.f32 %v1202, %v1272
    %v1276 = vxor.u32 %v1275, 2147483648
    %v1277 = vmul.f32 %v1276, 1.442695
    %v1278 = vpow.pop %v1277
    %v1279 = vadd.f32 %v1278, 1.0
    %v1280 = vrcp.pop %v1279
    %v1281 = vmul.f32 1.0, %v1280
    %v1282 = vtanh.pop %v1275
    %v1283 = vmul.f32 %v1281, %v1189
    %1285 = vrot.lane.b32.xlu0 %v1282, 64
    %v1286 = vpop.permute.xlu0 %1285
    %v1288 = vmul.f32 %v1281, %v1286
    %1290 = vrot.lane.b32.xlu0 %v1288, 32
    %v1291 = vpop.permute.xlu0 %1290
    %v1293 = vadd.f32 %v1283, %v1291
    %v1294 = vtanh.pop %v1293
    %1296 = vrot.lane.b32.xlu0 %v1294, 64
    %v1297 = vpop.permute.xlu0 %1296
    %v1299 = vmul.f32 %v1281, %v1297
    %1301 = vrot.lane.b32.xlu0 %v1299, 32
    %v1302 = vpop.permute.xlu0 %1301
    %1304 = vst.msk [vmem:[#allocation2 + $0x16] sm:$0x3] %vm159, %v1302
    %s1305 = scalar_lea.vmem %s0, 24
    %v1306 = vld [vmem:[%s1305] sm:$0x3]
    %v1307 = vsel %vm56, %v1302, 0
    %1309 = vmatprep.subr.mxu0 0.0
    %1310 = vmatpush1.msra.mxu0 %v51
    %1311 = vmatprep.subr.mxu0 0.0
    %1312 = vmatpush1.msra.mxu0 %v52
    %1313 = vmatprep.subr.mxu0 0.0
    %1314 = vmatpush1.msra.mxu0 %v53
    %1315 = vmatprep.subr.mxu0 0.0
    %1316 = vmatpush1.msra.mxu0 %v54
    %1317 = vmatprep.subr.mxu0 0.0
    %1318 = vmatpush1.msra.mxu0 0.0
    %1319 = vmatprep.subr.mxu0 0.0
    %1320 = vmatpush1.msra.mxu0 0.0
    %1321 = vmatprep.subr.mxu0 0.0
    %1322 = vmatpush1.msra.mxu0 0.0
    %1323 = vmatprep.subr.mxu0 0.0
    %1324 = vmatpush1.msra.mxu0 0.0
    %1325 = vmatprep.subr.mxu0 0.0
    %1326 = vmatpush1.msra.mxu0 0.0
    %1327 = vmatprep.subr.mxu0 0.0
    %1328 = vmatpush1.msra.mxu0 0.0
    %1329 = vmatprep.subr.mxu0 0.0
    %1330 = vmatpush1.msra.mxu0 0.0
    %1331 = vmatprep.subr.mxu0 0.0
    %1332 = vmatpush1.msra.mxu0 0.0
    %1333 = vmatprep.subr.mxu0 0.0
    %1334 = vmatpush1.msra.mxu0 0.0
    %1335 = vmatprep.subr.mxu0 0.0
    %1336 = vmatpush1.msra.mxu0 0.0
    %1337 = vmatprep.subr.mxu0 0.0
    %1338 = vmatpush1.msra.mxu0 0.0
    %1339 = vmatprep.subr.mxu0 0.0
    %1340 = vmatpush1.msra.mxu0 0.0
    %1341 = vmatprep.subr.mxu0 0.0
    %1342 = vmatpush1.msra.mxu0 0.0
    %1343 = vmatprep.subr.mxu0 0.0
    %1344 = vmatpush1.msra.mxu0 0.0
    %1345 = vmatprep.subr.mxu0 0.0
    %1346 = vmatpush1.msra.mxu0 0.0
    %1347 = vmatprep.subr.mxu0 0.0
    %1348 = vmatpush1.msra.mxu0 0.0
    %1349 = vmatprep.subr.mxu0 0.0
    %1350 = vmatpush1.msra.mxu0 0.0
    %1351 = vmatprep.subr.mxu0 0.0
    %1352 = vmatpush1.msra.mxu0 0.0
    %1353 = vmatprep.subr.mxu0 0.0
    %1354 = vmatpush1.msra.mxu0 0.0
    %1355 = vmatprep.subr.mxu0 0.0
    %1356 = vmatpush1.msra.mxu0 0.0
    %1357 = vmatprep.subr.mxu0 0.0
    %1358 = vmatpush1.msra.mxu0 0.0
    %1359 = vmatprep.subr.mxu0 0.0
    %1360 = vmatpush1.msra.mxu0 0.0
    %1361 = vmatprep.subr.mxu0 0.0
    %1362 = vmatpush1.msra.mxu0 0.0
    %1363 = vmatprep.subr.mxu0 0.0
    %1364 = vmatpush1.msra.mxu0 0.0
    %1365 = vmatprep.subr.mxu0 0.0
    %1366 = vmatpush1.msra.mxu0 0.0
    %1367 = vmatprep.subr.mxu0 0.0
    %1368 = vmatpush1.msra.mxu0 0.0
    %1369 = vmatprep.subr.mxu0 0.0
    %1370 = vmatpush1.msra.mxu0 0.0
    %1371 = vmatprep.subr.mxu0 0.0
    %1372 = vmatpush1.msra.mxu0 0.0
    %1373 = vmatprep.mubr.f32.mxu0 0.0
    %1374 = vmatmul.mubr.f32.gmra.mrb[0].mxu0 %v1307
    %v1375 = vpop.f32.mrb[0].mxu0
    %v1376 = vadd.f32 0.0, %v1375
    %v1377 = vpop.f32.mrb[0].mxu0
    %1378 = vdwg.mxu0
    %v1379 = vadd.f32 %v1306, %v1376
    %v1380 = vxor.u32 %v1379, 2147483648
    %v1381 = vmul.f32 %v1380, 1.442695
    %v1382 = vpow.pop %v1381
    %v1383 = vadd.f32 %v1382, 1.0
    %v1384 = vrcp.pop %v1383
    %v1385 = vmul.f32 1.0, %v1384
    %v1386 = vtanh.pop %v1379
    %v1387 = vmul.f32 %v1385, %v1293
    %1389 = vrot.lane.b32.xlu0 %v1386, 64
    %v1390 = vpop.permute.xlu0 %1389
    %v1392 = vmul.f32 %v1385, %v1390
    %1394 = vrot.lane.b32.xlu0 %v1392, 32
    %v1395 = vpop.permute.xlu0 %1394
    %v1397 = vadd.f32 %v1387, %v1395
    %v1398 = vtanh.pop %v1397
    %1400 = vrot.lane.b32.xlu0 %v1398, 64
    %v1401 = vpop.permute.xlu0 %1400
    %v1403 = vmul.f32 %v1385, %v1401
    %1405 = vrot.lane.b32.xlu0 %v1403, 32
    %v1406 = vpop.permute.xlu0 %1405
    %1408 = vst.msk [vmem:[#allocation2 + $0x18] sm:$0x3] %vm159, %v1406
    %s1409 = scalar_lea.vmem %s0, 26
    %v1410 = vld [vmem:[%s1409] sm:$0x3]
    %v1411 = vsel %vm56, %v1406, 0
    %1413 = vmatprep.subr.mxu0 0.0
    %1414 = vmatpush1.msra.mxu0 %v51
    %1415 = vmatprep.subr.mxu0 0.0
    %1416 = vmatpush1.msra.mxu0 %v52
    %1417 = vmatprep.subr.mxu0 0.0
    %1418 = vmatpush1.msra.mxu0 %v53
    %1419 = vmatprep.subr.mxu0 0.0
    %1420 = vmatpush1.msra.mxu0 %v54
    %1421 = vmatprep.subr.mxu0 0.0
    %1422 = vmatpush1.msra.mxu0 0.0
    %1423 = vmatprep.subr.mxu0 0.0
    %1424 = vmatpush1.msra.mxu0 0.0
    %1425 = vmatprep.subr.mxu0 0.0
    %1426 = vmatpush1.msra.mxu0 0.0
    %1427 = vmatprep.subr.mxu0 0.0
    %1428 = vmatpush1.msra.mxu0 0.0
    %1429 = vmatprep.subr.mxu0 0.0
    %1430 = vmatpush1.msra.mxu0 0.0
    %1431 = vmatprep.subr.mxu0 0.0
    %1432 = vmatpush1.msra.mxu0 0.0
    %1433 = vmatprep.subr.mxu0 0.0
    %1434 = vmatpush1.msra.mxu0 0.0
    %1435 = vmatprep.subr.mxu0 0.0
    %1436 = vmatpush1.msra.mxu0 0.0
    %1437 = vmatprep.subr.mxu0 0.0
    %1438 = vmatpush1.msra.mxu0 0.0
    %1439 = vmatprep.subr.mxu0 0.0
    %1440 = vmatpush1.msra.mxu0 0.0
    %1441 = vmatprep.subr.mxu0 0.0
    %1442 = vmatpush1.msra.mxu0 0.0
    %1443 = vmatprep.subr.mxu0 0.0
    %1444 = vmatpush1.msra.mxu0 0.0
    %1445 = vmatprep.subr.mxu0 0.0
    %1446 = vmatpush1.msra.mxu0 0.0
    %1447 = vmatprep.subr.mxu0 0.0
    %1448 = vmatpush1.msra.mxu0 0.0
    %1449 = vmatprep.subr.mxu0 0.0
    %1450 = vmatpush1.msra.mxu0 0.0
    %1451 = vmatprep.subr.mxu0 0.0
    %1452 = vmatpush1.msra.mxu0 0.0
    %1453 = vmatprep.subr.mxu0 0.0
    %1454 = vmatpush1.msra.mxu0 0.0
    %1455 = vmatprep.subr.mxu0 0.0
    %1456 = vmatpush1.msra.mxu0 0.0
    %1457 = vmatprep.subr.mxu0 0.0
    %1458 = vmatpush1.msra.mxu0 0.0
    %1459 = vmatprep.subr.mxu0 0.0
    %1460 = vmatpush1.msra.mxu0 0.0
    %1461 = vmatprep.subr.mxu0 0.0
    %1462 = vmatpush1.msra.mxu0 0.0
    %1463 = vmatprep.subr.mxu0 0.0
    %1464 = vmatpush1.msra.mxu0 0.0
    %1465 = vmatprep.subr.mxu0 0.0
    %1466 = vmatpush1.msra.mxu0 0.0
    %1467 = vmatprep.subr.mxu0 0.0
    %1468 = vmatpush1.msra.mxu0 0.0
    %1469 = vmatprep.subr.mxu0 0.0
    %1470 = vmatpush1.msra.mxu0 0.0
    %1471 = vmatprep.subr.mxu0 0.0
    %1472 = vmatpush1.msra.mxu0 0.0
    %1473 = vmatprep.subr.mxu0 0.0
    %1474 = vmatpush1.msra.mxu0 0.0
    %1475 = vmatprep.subr.mxu0 0.0
    %1476 = vmatpush1.msra.mxu0 0.0
    %1477 = vmatprep.mubr.f32.mxu0 0.0
    %1478 = vmatmul.mubr.f32.gmra.mrb[0].mxu0 %v1411
    %v1479 = vpop.f32.mrb[0].mxu0
    %v1480 = vadd.f32 0.0, %v1479
    %v1481 = vpop.f32.mrb[0].mxu0
    %1482 = vdwg.mxu0
    %v1483 = vadd.f32 %v1410, %v1480
    %v1484 = vxor.u32 %v1483, 2147483648
    %v1485 = vmul.f32 %v1484, 1.442695
    %v1486 = vpow.pop %v1485
    %v1487 = vadd.f32 %v1486, 1.0
    %v1488 = vrcp.pop %v1487
    %v1489 = vmul.f32 1.0, %v1488
    %v1490 = vtanh.pop %v1483
    %v1491 = vmul.f32 %v1489, %v1397
    %1493 = vrot.lane.b32.xlu0 %v1490, 64
    %v1494 = vpop.permute.xlu0 %1493
    %v1496 = vmul.f32 %v1489, %v1494
    %1498 = vrot.lane.b32.xlu0 %v1496, 32
    %v1499 = vpop.permute.xlu0 %1498
    %v1501 = vadd.f32 %v1491, %v1499
    %v1502 = vtanh.pop %v1501
    %1504 = vrot.lane.b32.xlu0 %v1502, 64
    %v1505 = vpop.permute.xlu0 %1504
    %v1507 = vmul.f32 %v1489, %v1505
    %1509 = vrot.lane.b32.xlu0 %v1507, 32
    %v1510 = vpop.permute.xlu0 %1509
    %1512 = vst.msk [vmem:[#allocation2 + $0x1a] sm:$0x3] %vm159, %v1510
    %s1513 = scalar_lea.vmem %s0, 28
    %v1514 = vld [vmem:[%s1513] sm:$0x3]
    %v1515 = vsel %vm56, %v1510, 0
    %1517 = vmatprep.subr.mxu0 0.0
    %1518 = vmatpush1.msra.mxu0 %v51
    %1519 = vmatprep.subr.mxu0 0.0
    %1520 = vmatpush1.msra.mxu0 %v52
    %1521 = vmatprep.subr.mxu0 0.0
    %1522 = vmatpush1.msra.mxu0 %v53
    %1523 = vmatprep.subr.mxu0 0.0
    %1524 = vmatpush1.msra.mxu0 %v54
    %1525 = vmatprep.subr.mxu0 0.0
    %1526 = vmatpush1.msra.mxu0 0.0
    %1527 = vmatprep.subr.mxu0 0.0
    %1528 = vmatpush1.msra.mxu0 0.0
    %1529 = vmatprep.subr.mxu0 0.0
    %1530 = vmatpush1.msra.mxu0 0.0
    %1531 = vmatprep.subr.mxu0 0.0
    %1532 = vmatpush1.msra.mxu0 0.0
    %1533 = vmatprep.subr.mxu0 0.0
    %1534 = vmatpush1.msra.mxu0 0.0
    %1535 = vmatprep.subr.mxu0 0.0
    %1536 = vmatpush1.msra.mxu0 0.0
    %1537 = vmatprep.subr.mxu0 0.0
    %1538 = vmatpush1.msra.mxu0 0.0
    %1539 = vmatprep.subr.mxu0 0.0
    %1540 = vmatpush1.msra.mxu0 0.0
    %1541 = vmatprep.subr.mxu0 0.0
    %1542 = vmatpush1.msra.mxu0 0.0
    %1543 = vmatprep.subr.mxu0 0.0
    %1544 = vmatpush1.msra.mxu0 0.0
    %1545 = vmatprep.subr.mxu0 0.0
    %1546 = vmatpush1.msra.mxu0 0.0
    %1547 = vmatprep.subr.mxu0 0.0
    %1548 = vmatpush1.msra.mxu0 0.0
    %1549 = vmatprep.subr.mxu0 0.0
    %1550 = vmatpush1.msra.mxu0 0.0
    %1551 = vmatprep.subr.mxu0 0.0
    %1552 = vmatpush1.msra.mxu0 0.0
    %1553 = vmatprep.subr.mxu0 0.0
    %1554 = vmatpush1.msra.mxu0 0.0
    %1555 = vmatprep.subr.mxu0 0.0
    %1556 = vmatpush1.msra.mxu0 0.0
    %1557 = vmatprep.subr.mxu0 0.0
    %1558 = vmatpush1.msra.mxu0 0.0
    %1559 = vmatprep.subr.mxu0 0.0
    %1560 = vmatpush1.msra.mxu0 0.0
    %1561 = vmatprep.subr.mxu0 0.0
    %1562 = vmatpush1.msra.mxu0 0.0
    %1563 = vmatprep.subr.mxu0 0.0
    %1564 = vmatpush1.msra.mxu0 0.0
    %1565 = vmatprep.subr.mxu0 0.0
    %1566 = vmatpush1.msra.mxu0 0.0
    %1567 = vmatprep.subr.mxu0 0.0
    %1568 = vmatpush1.msra.mxu0 0.0
    %1569 = vmatprep.subr.mxu0 0.0
    %1570 = vmatpush1.msra.mxu0 0.0
    %1571 = vmatprep.subr.mxu0 0.0
    %1572 = vmatpush1.msra.mxu0 0.0
    %1573 = vmatprep.subr.mxu0 0.0
    %1574 = vmatpush1.msra.mxu0 0.0
    %1575 = vmatprep.subr.mxu0 0.0
    %1576 = vmatpush1.msra.mxu0 0.0
    %1577 = vmatprep.subr.mxu0 0.0
    %1578 = vmatpush1.msra.mxu0 0.0
    %1579 = vmatprep.subr.mxu0 0.0
    %1580 = vmatpush1.msra.mxu0 0.0
    %1581 = vmatprep.mubr.f32.mxu0 0.0
    %1582 = vmatmul.mubr.f32.gmra.mrb[0].mxu0 %v1515
    %v1583 = vpop.f32.mrb[0].mxu0
    %v1584 = vadd.f32 0.0, %v1583
    %v1585 = vpop.f32.mrb[0].mxu0
    %1586 = vdwg.mxu0
    %v1587 = vadd.f32 %v1514, %v1584
    %v1588 = vxor.u32 %v1587, 2147483648
    %v1589 = vmul.f32 %v1588, 1.442695
    %v1590 = vpow.pop %v1589
    %v1591 = vadd.f32 %v1590, 1.0
    %v1592 = vrcp.pop %v1591
    %v1593 = vmul.f32 1.0, %v1592
    %v1594 = vtanh.pop %v1587
    %v1595 = vmul.f32 %v1593, %v1501
    %1597 = vrot.lane.b32.xlu0 %v1594, 64
    %v1598 = vpop.permute.xlu0 %1597
    %v1600 = vmul.f32 %v1593, %v1598
    %1602 = vrot.lane.b32.xlu0 %v1600, 32
    %v1603 = vpop.permute.xlu0 %1602
    %v1605 = vadd.f32 %v1595, %v1603
    %v1606 = vtanh.pop %v1605
    %1608 = vrot.lane.b32.xlu0 %v1606, 64
    %v1609 = vpop.permute.xlu0 %1608
    %v1611 = vmul.f32 %v1593, %v1609
    %1613 = vrot.lane.b32.xlu0 %v1611, 32
    %v1614 = vpop.permute.xlu0 %1613
    %1616 = vst.msk [vmem:[#allocation2 + $0x1c] sm:$0x3] %vm159, %v1614
    %s1617 = scalar_lea.vmem %s0, 30
    %v1618 = vld [vmem:[%s1617] sm:$0x3]
    %v1619 = vsel %vm56, %v1614, 0
    %1621 = vmatprep.subr.mxu0 0.0
    %1622 = vmatpush1.msra.mxu0 %v51
    %1623 = vmatprep.subr.mxu0 0.0
    %1624 = vmatpush1.msra.mxu0 %v52
    %1625 = vmatprep.subr.mxu0 0.0
    %1626 = vmatpush1.msra.mxu0 %v53
    %1627 = vmatprep.subr.mxu0 0.0
    %1628 = vmatpush1.msra.mxu0 %v54
    %1629 = vmatprep.subr.mxu0 0.0
    %1630 = vmatpush1.msra.mxu0 0.0
    %1631 = vmatprep.subr.mxu0 0.0
    %1632 = vmatpush1.msra.mxu0 0.0
    %1633 = vmatprep.subr.mxu0 0.0
    %1634 = vmatpush1.msra.mxu0 0.0
    %1635 = vmatprep.subr.mxu0 0.0
    %1636 = vmatpush1.msra.mxu0 0.0
    %1637 = vmatprep.subr.mxu0 0.0
    %1638 = vmatpush1.msra.mxu0 0.0
    %1639 = vmatprep.subr.mxu0 0.0
    %1640 = vmatpush1.msra.mxu0 0.0
    %1641 = vmatprep.subr.mxu0 0.0
    %1642 = vmatpush1.msra.mxu0 0.0
    %1643 = vmatprep.subr.mxu0 0.0
    %1644 = vmatpush1.msra.mxu0 0.0
    %1645 = vmatprep.subr.mxu0 0.0
    %1646 = vmatpush1.msra.mxu0 0.0
    %1647 = vmatprep.subr.mxu0 0.0
    %1648 = vmatpush1.msra.mxu0 0.0
    %1649 = vmatprep.subr.mxu0 0.0
    %1650 = vmatpush1.msra.mxu0 0.0
    %1651 = vmatprep.subr.mxu0 0.0
    %1652 = vmatpush1.msra.mxu0 0.0
    %1653 = vmatprep.subr.mxu0 0.0
    %1654 = vmatpush1.msra.mxu0 0.0
    %1655 = vmatprep.subr.mxu0 0.0
    %1656 = vmatpush1.msra.mxu0 0.0
    %1657 = vmatprep.subr.mxu0 0.0
    %1658 = vmatpush1.msra.mxu0 0.0
    %1659 = vmatprep.subr.mxu0 0.0
    %1660 = vmatpush1.msra.mxu0 0.0
    %1661 = vmatprep.subr.mxu0 0.0
    %1662 = vmatpush1.msra.mxu0 0.0
    %1663 = vmatprep.subr.mxu0 0.0
    %1664 = vmatpush1.msra.mxu0 0.0
    %1665 = vmatprep.subr.mxu0 0.0
    %1666 = vmatpush1.msra.mxu0 0.0
    %1667 = vmatprep.subr.mxu0 0.0
    %1668 = vmatpush1.msra.mxu0 0.0
    %1669 = vmatprep.subr.mxu0 0.0
    %1670 = vmatpush1.msra.mxu0 0.0
    %1671 = vmatprep.subr.mxu0 0.0
    %1672 = vmatpush1.msra.mxu0 0.0
    %1673 = vmatprep.subr.mxu0 0.0
    %1674 = vmatpush1.msra.mxu0 0.0
    %1675 = vmatprep.subr.mxu0 0.0
    %1676 = vmatpush1.msra.mxu0 0.0
    %1677 = vmatprep.subr.mxu0 0.0
    %1678 = vmatpush1.msra.mxu0 0.0
    %1679 = vmatprep.subr.mxu0 0.0
    %1680 = vmatpush1.msra.mxu0 0.0
    %1681 = vmatprep.subr.mxu0 0.0
    %1682 = vmatpush1.msra.mxu0 0.0
    %1683 = vmatprep.subr.mxu0 0.0
    %1684 = vmatpush1.msra.mxu0 0.0
    %1685 = vmatprep.mubr.f32.mxu0 0.0
    %1686 = vmatmul.mubr.f32.gmra.mrb[0].mxu0 %v1619
    %v1687 = vpop.f32.mrb[0].mxu0
    %v1688 = vadd.f32 0.0, %v1687
    %v1689 = vpop.f32.mrb[0].mxu0
    %1690 = vdwg.mxu0
    %v1691 = vadd.f32 %v1618, %v1688
    %v1692 = vxor.u32 %v1691, 2147483648
    %v1693 = vmul.f32 %v1692, 1.442695
    %v1694 = vpow.pop %v1693
    %v1695 = vadd.f32 %v1694, 1.0
    %v1696 = vrcp.pop %v1695
    %v1697 = vmul.f32 1.0, %v1696
    %v1698 = vtanh.pop %v1691
    %v1699 = vmul.f32 %v1697, %v1605
    %1701 = vrot.lane.b32.xlu0 %v1698, 64
    %v1702 = vpop.permute.xlu0 %1701
    %v1704 = vmul.f32 %v1697, %v1702
    %1706 = vrot.lane.b32.xlu0 %v1704, 32
    %v1707 = vpop.permute.xlu0 %1706
    %v1709 = vadd.f32 %v1699, %v1707
    %v1710 = vtanh.pop %v1709
    %1712 = vrot.lane.b32.xlu0 %v1710, 64
    %v1713 = vpop.permute.xlu0 %1712
    %v1715 = vmul.f32 %v1697, %v1713
    %1717 = vrot.lane.b32.xlu0 %v1715, 32
    %v1718 = vpop.permute.xlu0 %1717
    %1720 = vst.msk [vmem:[#allocation2 + $0x1e] sm:$0x3] %vm159, %v1718
    %v1721 = vld [vmem:[#allocation2] sm:$0xff]
    %v1722 = vld [vmem:[#allocation2 + $0x8] sm:$0xff]
    %v1723 = vld [vmem:[#allocation2 + $0x10] sm:$0xff]
    %v1724 = vld [vmem:[#allocation2 + $0x18] sm:$0xff]
    %v1725 = vld [vmem:[%s3] sm:$0xff]
    %v1726 = vld [vmem:[%s3 + $0x8] sm:$0xff]
    %v1727 = vld [vmem:[%s3 + $0x10] sm:$0xff]
    %v1728 = vld [vmem:[%s3 + $0x18] sm:$0xff]
    %v1729 = vld [vmem:[%s5] sm:$0x1]
    %v1731 = vlaneseq
    %v1732 = vshrl.u32 %v1731, 7
    %v1733 = vsub.s32 0, %v1732
    %v1734 = vrot.slane %v1729, %v1733
    %v1737 = vsel %vm56, %v1721, 0
    %v1740 = vsel %vm56, %v1722, 0
    %v1743 = vsel %vm56, %v1723, 0
    %v1746 = vsel %vm56, %v1724, 0
    %1748 = vmatprep.subr.mxu0 0.0
    %1749 = vmatpush1.msra.mxu0 %v1725
    %1750 = vmatprep.subr.mxu0 0.0
    %1751 = vmatpush1.msra.mxu0 %v1726
    %1752 = vmatprep.subr.mxu0 0.0
    %1753 = vmatpush1.msra.mxu0 %v1727
    %1754 = vmatprep.subr.mxu0 0.0
    %1755 = vmatpush1.msra.mxu0 %v1728
    %1756 = vmatprep.subr.mxu0 0.0
    %1757 = vmatpush1.msra.mxu0 0.0
    %1758 = vmatprep.subr.mxu0 0.0
    %1759 = vmatpush1.msra.mxu0 0.0
    %1760 = vmatprep.subr.mxu0 0.0
    %1761 = vmatpush1.msra.mxu0 0.0
    %1762 = vmatprep.subr.mxu0 0.0
    %1763 = vmatpush1.msra.mxu0 0.0
    %1764 = vmatprep.subr.mxu0 0.0
    %1765 = vmatpush1.msra.mxu0 0.0
    %1766 = vmatprep.subr.mxu0 0.0
    %1767 = vmatpush1.msra.mxu0 0.0
    %1768 = vmatprep.subr.mxu0 0.0
    %1769 = vmatpush1.msra.mxu0 0.0
    %1770 = vmatprep.subr.mxu0 0.0
    %1771 = vmatpush1.msra.mxu0 0.0
    %1772 = vmatprep.subr.mxu0 0.0
    %1773 = vmatpush1.msra.mxu0 0.0
    %1774 = vmatprep.subr.mxu0 0.0
    %1775 = vmatpush1.msra.mxu0 0.0
    %1776 = vmatprep.subr.mxu0 0.0
    %1777 = vmatpush1.msra.mxu0 0.0
    %1778 = vmatprep.subr.mxu0 0.0
    %1779 = vmatpush1.msra.mxu0 0.0
    %1780 = vmatprep.subr.mxu0 0.0
    %1781 = vmatpush1.msra.mxu0 0.0
    %1782 = vmatprep.subr.mxu0 0.0
    %1783 = vmatpush1.msra.mxu0 0.0
    %1784 = vmatprep.subr.mxu0 0.0
    %1785 = vmatpush1.msra.mxu0 0.0
    %1786 = vmatprep.subr.mxu0 0.0
    %1787 = vmatpush1.msra.mxu0 0.0
    %1788 = vmatprep.subr.mxu0 0.0
    %1789 = vmatpush1.msra.mxu0 0.0
    %1790 = vmatprep.subr.mxu0 0.0
    %1791 = vmatpush1.msra.mxu0 0.0
    %1792 = vmatprep.subr.mxu0 0.0
    %1793 = vmatpush1.msra.mxu0 0.0
    %1794 = vmatprep.subr.mxu0 0.0
    %1795 = vmatpush1.msra.mxu0 0.0
    %1796 = vmatprep.subr.mxu0 0.0
    %1797 = vmatpush1.msra.mxu0 0.0
    %1798 = vmatprep.subr.mxu0 0.0
    %1799 = vmatpush1.msra.mxu0 0.0
    %1800 = vmatprep.subr.mxu0 0.0
    %1801 = vmatpush1.msra.mxu0 0.0
    %1802 = vmatprep.subr.mxu0 0.0
    %1803 = vmatpush1.msra.mxu0 0.0
    %1804 = vmatprep.subr.mxu0 0.0
    %1805 = vmatpush1.msra.mxu0 0.0
    %1806 = vmatprep.subr.mxu0 0.0
    %1807 = vmatpush1.msra.mxu0 0.0
    %1808 = vmatprep.subr.mxu0 0.0
    %1809 = vmatpush1.msra.mxu0 0.0
    %1810 = vmatprep.subr.mxu0 0.0
    %1811 = vmatpush1.msra.mxu0 0.0
    %1812 = vmatprep.mubr.f32.mxu0 0.0
    %1813 = vmatmul.mubr.f32.gmra.mrb[0].mxu0 %v1737
    %v1814 = vpop.f32.mrb[0].mxu0
    %v1815 = vadd.f32 %v1734, %v1814
    %v1816 = vpop.f32.mrb[0].mxu0
    %1817 = vmatprep.mubr.f32.mxu0 0.0
    %1818 = vmatmul.mubr.f32.gmra.mrb[0].mxu0 %v1740
    %v1819 = vpop.f32.mrb[0].mxu0
    %v1820 = vadd.f32 %v1734, %v1819
    %v1821 = vpop.f32.mrb[0].mxu0
    %1822 = vmatprep.mubr.f32.mxu0 0.0
    %1823 = vmatmul.mubr.f32.gmra.mrb[0].mxu0 %v1743
    %v1824 = vpop.f32.mrb[0].mxu0
    %v1825 = vadd.f32 %v1734, %v1824
    %v1826 = vpop.f32.mrb[0].mxu0
    %1827 = vmatprep.mubr.f32.mxu0 0.0
    %1828 = vmatmul.mubr.f32.gmra.mrb[0].mxu0 %v1746
    %v1829 = vpop.f32.mrb[0].mxu0
    %v1830 = vadd.f32 %v1734, %v1829
    %v1831 = vpop.f32.mrb[0].mxu0
    %1832 = vdwg.mxu0
    %v1833 = vld [vmem:[%s4] sm:$0xff]
    %v1834 = vld [vmem:[%s4 + $0x8] sm:$0xff]
    %v1835 = vld [vmem:[%s4 + $0x10] sm:$0xff]
    %v1836 = vld [vmem:[%s4 + $0x18] sm:$0xff]
    %1837 = vmatprep.subr.mxu0 0.0
    %1838 = vmatpush1.msra.mxu0 %v1833
    %1839 = vmatprep.subr.mxu0 0.0
    %1840 = vmatpush1.msra.mxu0 %v1834
    %1841 = vmatprep.subr.mxu0 0.0
    %1842 = vmatpush1.msra.mxu0 %v1835
    %1843 = vmatprep.subr.mxu0 0.0
    %1844 = vmatpush1.msra.mxu0 %v1836
    %1845 = vmatprep.subr.mxu0 0.0
    %1846 = vmatpush1.msra.mxu0 0.0
    %1847 = vmatprep.subr.mxu0 0.0
    %1848 = vmatpush1.msra.mxu0 0.0
    %1849 = vmatprep.subr.mxu0 0.0
    %1850 = vmatpush1.msra.mxu0 0.0
    %1851 = vmatprep.subr.mxu0 0.0
    %1852 = vmatpush1.msra.mxu0 0.0
    %1853 = vmatprep.subr.mxu0 0.0
    %1854 = vmatpush1.msra.mxu0 0.0
    %1855 = vmatprep.subr.mxu0 0.0
    %1856 = vmatpush1.msra.mxu0 0.0
    %1857 = vmatprep.subr.mxu0 0.0
    %1858 = vmatpush1.msra.mxu0 0.0
    %1859 = vmatprep.subr.mxu0 0.0
    %1860 = vmatpush1.msra.mxu0 0.0
    %1861 = vmatprep.subr.mxu0 0.0
    %1862 = vmatpush1.msra.mxu0 0.0
    %1863 = vmatprep.subr.mxu0 0.0
    %1864 = vmatpush1.msra.mxu0 0.0
    %1865 = vmatprep.subr.mxu0 0.0
    %1866 = vmatpush1.msra.mxu0 0.0
    %1867 = vmatprep.subr.mxu0 0.0
    %1868 = vmatpush1.msra.mxu0 0.0
    %1869 = vmatprep.subr.mxu0 0.0
    %1870 = vmatpush1.msra.mxu0 0.0
    %1871 = vmatprep.subr.mxu0 0.0
    %1872 = vmatpush1.msra.mxu0 0.0
    %1873 = vmatprep.subr.mxu0 0.0
    %1874 = vmatpush1.msra.mxu0 0.0
    %1875 = vmatprep.subr.mxu0 0.0
    %1876 = vmatpush1.msra.mxu0 0.0
    %1877 = vmatprep.subr.mxu0 0.0
    %1878 = vmatpush1.msra.mxu0 0.0
    %1879 = vmatprep.subr.mxu0 0.0
    %1880 = vmatpush1.msra.mxu0 0.0
    %1881 = vmatprep.subr.mxu0 0.0
    %1882 = vmatpush1.msra.mxu0 0.0
    %1883 = vmatprep.subr.mxu0 0.0
    %1884 = vmatpush1.msra.mxu0 0.0
    %1885 = vmatprep.subr.mxu0 0.0
    %1886 = vmatpush1.msra.mxu0 0.0
    %1887 = vmatprep.subr.mxu0 0.0
    %1888 = vmatpush1.msra.mxu0 0.0
    %1889 = vmatprep.subr.mxu0 0.0
    %1890 = vmatpush1.msra.mxu0 0.0
    %1891 = vmatprep.subr.mxu0 0.0
    %1892 = vmatpush1.msra.mxu0 0.0
    %1893 = vmatprep.subr.mxu0 0.0
    %1894 = vmatpush1.msra.mxu0 0.0
    %1895 = vmatprep.subr.mxu0 0.0
    %1896 = vmatpush1.msra.mxu0 0.0
    %1897 = vmatprep.subr.mxu0 0.0
    %1898 = vmatpush1.msra.mxu0 0.0
    %1899 = vmatprep.subr.mxu0 0.0
    %1900 = vmatpush1.msra.mxu0 0.0
    %1901 = vmatprep.mubr.f32.mxu0 0.0
    %1902 = vmatmul.mubr.f32.gmra.mrb[0].mxu0 %v58
    %v1903 = vpop.f32.mrb[0].mxu0
    %v1904 = vadd.f32 0.0, %v1903
    %v1905 = vpop.f32.mrb[0].mxu0
    %1906 = vdwg.mxu0
    %v1907 = vadd.f32 %v1815, %v1904
    %v1908 = vxor.u32 %v1907, 2147483648
    %v1909 = vmul.f32 %v1908, 1.442695
    %v1910 = vpow.pop %v1909
    %v1911 = vadd.f32 %v1910, 1.0
    %v1912 = vrcp.pop %v1911
    %v1913 = vmul.f32 1.0, %v1912
    %v1914 = vtanh.pop %v1907
    %v1915 = vmul.f32 %v1913, 0.0
    %1917 = vrot.lane.b32.xlu0 %v1914, 64
    %v1918 = vpop.permute.xlu0 %1917
    %v1920 = vmul.f32 %v1913, %v1918
    %1922 = vrot.lane.b32.xlu0 %v1920, 32
    %v1923 = vpop.permute.xlu0 %1922
    %v1925 = vadd.f32 %v1915, %v1923
    %v1926 = vtanh.pop %v1925
    %1928 = vrot.lane.b32.xlu0 %v1926, 64
    %v1929 = vpop.permute.xlu0 %1928
    %v1931 = vmul.f32 %v1913, %v1929
    %1933 = vrot.lane.b32.xlu0 %v1931, 32
    %v1934 = vpop.permute.xlu0 %1933
    %vm1936 = vcmask 253952
    %1937 = vst.msk [vmem:[#allocation4] sm:$0x1] %vm1936, %v1934
    %s1938 = scalar_lea.vmem [#allocation4], 16
    %vm1939 = vcmask 254977
    %1940 = vst.msk [vmem:[%s1938 - $0x1] sm:$0x2] %vm1939, %v1934
    %v1941 = vsel %vm56, %v1934, 0
    %1943 = vmatprep.subr.mxu0 0.0
    %1944 = vmatpush1.msra.mxu0 %v1833
    %1945 = vmatprep.subr.mxu0 0.0
    %1946 = vmatpush1.msra.mxu0 %v1834
    %1947 = vmatprep.subr.mxu0 0.0
    %1948 = vmatpush1.msra.mxu0 %v1835
    %1949 = vmatprep.subr.mxu0 0.0
    %1950 = vmatpush1.msra.mxu0 %v1836
    %1951 = vmatprep.subr.mxu0 0.0
    %1952 = vmatpush1.msra.mxu0 0.0
    %1953 = vmatprep.subr.mxu0 0.0
    %1954 = vmatpush1.msra.mxu0 0.0
    %1955 = vmatprep.subr.mxu0 0.0
    %1956 = vmatpush1.msra.mxu0 0.0
    %1957 = vmatprep.subr.mxu0 0.0
    %1958 = vmatpush1.msra.mxu0 0.0
    %1959 = vmatprep.subr.mxu0 0.0
    %1960 = vmatpush1.msra.mxu0 0.0
    %1961 = vmatprep.subr.mxu0 0.0
    %1962 = vmatpush1.msra.mxu0 0.0
    %1963 = vmatprep.subr.mxu0 0.0
    %1964 = vmatpush1.msra.mxu0 0.0
    %1965 = vmatprep.subr.mxu0 0.0
    %1966 = vmatpush1.msra.mxu0 0.0
    %1967 = vmatprep.subr.mxu0 0.0
    %1968 = vmatpush1.msra.mxu0 0.0
    %1969 = vmatprep.subr.mxu0 0.0
    %1970 = vmatpush1.msra.mxu0 0.0
    %1971 = vmatprep.subr.mxu0 0.0
    %1972 = vmatpush1.msra.mxu0 0.0
    %1973 = vmatprep.subr.mxu0 0.0
    %1974 = vmatpush1.msra.mxu0 0.0
    %1975 = vmatprep.subr.mxu0 0.0
    %1976 = vmatpush1.msra.mxu0 0.0
    %1977 = vmatprep.subr.mxu0 0.0
    %1978 = vmatpush1.msra.mxu0 0.0
    %1979 = vmatprep.subr.mxu0 0.0
    %1980 = vmatpush1.msra.mxu0 0.0
    %1981 = vmatprep.subr.mxu0 0.0
    %1982 = vmatpush1.msra.mxu0 0.0
    %1983 = vmatprep.subr.mxu0 0.0
    %1984 = vmatpush1.msra.mxu0 0.0
    %1985 = vmatprep.subr.mxu0 0.0
    %1986 = vmatpush1.msra.mxu0 0.0
    %1987 = vmatprep.subr.mxu0 0.0
    %1988 = vmatpush1.msra.mxu0 0.0
    %1989 = vmatprep.subr.mxu0 0.0
    %1990 = vmatpush1.msra.mxu0 0.0
    %1991 = vmatprep.subr.mxu0 0.0
    %1992 = vmatpush1.msra.mxu0 0.0
    %1993 = vmatprep.subr.mxu0 0.0
    %1994 = vmatpush1.msra.mxu0 0.0
    %1995 = vmatprep.subr.mxu0 0.0
    %1996 = vmatpush1.msra.mxu0 0.0
    %1997 = vmatprep.subr.mxu0 0.0
    %1998 = vmatpush1.msra.mxu0 0.0
    %1999 = vmatprep.subr.mxu0 0.0
    %2000 = vmatpush1.msra.mxu0 0.0
    %2001 = vmatprep.subr.mxu0 0.0
    %2002 = vmatpush1.msra.mxu0 0.0
    %2003 = vmatprep.subr.mxu0 0.0
    %2004 = vmatpush1.msra.mxu0 0.0
    %2005 = vmatprep.subr.mxu0 0.0
    %2006 = vmatpush1.msra.mxu0 0.0
    %2007 = vmatprep.mubr.f32.mxu0 0.0
    %2008 = vmatmul.mubr.f32.gmra.mrb[0].mxu0 %v1941
    %v2009 = vpop.f32.mrb[0].mxu0
    %v2010 = vadd.f32 0.0, %v2009
    %v2011 = vpop.f32.mrb[0].mxu0
    %2012 = vdwg.mxu0
    %v2014 = vrot.slane %v2010, 6
    %v2016 = vadd.f32 %v1815, %v2014
    %v2017 = vxor.u32 %v2016, 2147483648
    %v2018 = vmul.f32 %v2017, 1.442695
    %v2019 = vpow.pop %v2018
    %v2020 = vadd.f32 %v2019, 1.0
    %v2021 = vrcp.pop %v2020
    %v2022 = vmul.f32 1.0, %v2021
    %v2023 = vtanh.pop %v2016
    %v2025 = vrot.slane %v1925, 6
    %v2027 = vmul.f32 %v2022, %v2025
    %2029 = vrot.lane.b32.xlu0 %v2023, 64
    %v2030 = vpop.permute.xlu0 %2029
    %v2032 = vmul.f32 %v2022, %v2030
    %2034 = vrot.lane.b32.xlu0 %v2032, 32
    %v2035 = vpop.permute.xlu0 %2034
    %v2037 = vadd.f32 %v2027, %v2035
    %v2038 = vtanh.pop %v2037
    %2040 = vrot.lane.b32.xlu0 %v2038, 64
    %v2041 = vpop.permute.xlu0 %2040
    %v2043 = vmul.f32 %v2022, %v2041
    %2045 = vrot.lane.b32.xlu0 %v2043, 32
    %v2046 = vpop.permute.xlu0 %2045
    %vm2048 = vcmask 256002
    %2049 = vst.msk [vmem:[#allocation4 - $0x1] sm:$0x4] %vm2048, %v2046
    %vm2050 = vcmask 257027
    %2051 = vst.msk [vmem:[%s1938 - $0x2] sm:$0x8] %vm2050, %v2046
    %v2052 = vrot.slane %v2043, 2
    %2053 = vrot.lane.b32.xlu0 %v2052, 32
    %v2054 = vpop.permute.xlu0 %2053
    %v2055 = vsel %vm56, %v2054, 0
    %2057 = vmatprep.subr.mxu0 0.0
    %2058 = vmatpush1.msra.mxu0 %v1833
    %2059 = vmatprep.subr.mxu0 0.0
    %2060 = vmatpush1.msra.mxu0 %v1834
    %2061 = vmatprep.subr.mxu0 0.0
    %2062 = vmatpush1.msra.mxu0 %v1835
    %2063 = vmatprep.subr.mxu0 0.0
    %2064 = vmatpush1.msra.mxu0 %v1836
    %2065 = vmatprep.subr.mxu0 0.0
    %2066 = vmatpush1.msra.mxu0 0.0
    %2067 = vmatprep.subr.mxu0 0.0
    %2068 = vmatpush1.msra.mxu0 0.0
    %2069 = vmatprep.subr.mxu0 0.0
    %2070 = vmatpush1.msra.mxu0 0.0
    %2071 = vmatprep.subr.mxu0 0.0
    %2072 = vmatpush1.msra.mxu0 0.0
    %2073 = vmatprep.subr.mxu0 0.0
    %2074 = vmatpush1.msra.mxu0 0.0
    %2075 = vmatprep.subr.mxu0 0.0
    %2076 = vmatpush1.msra.mxu0 0.0
    %2077 = vmatprep.subr.mxu0 0.0
    %2078 = vmatpush1.msra.mxu0 0.0
    %2079 = vmatprep.subr.mxu0 0.0
    %2080 = vmatpush1.msra.mxu0 0.0
    %2081 = vmatprep.subr.mxu0 0.0
    %2082 = vmatpush1.msra.mxu0 0.0
    %2083 = vmatprep.subr.mxu0 0.0
    %2084 = vmatpush1.msra.mxu0 0.0
    %2085 = vmatprep.subr.mxu0 0.0
    %2086 = vmatpush1.msra.mxu0 0.0
    %2087 = vmatprep.subr.mxu0 0.0
    %2088 = vmatpush1.msra.mxu0 0.0
    %2089 = vmatprep.subr.mxu0 0.0
    %2090 = vmatpush1.msra.mxu0 0.0
    %2091 = vmatprep.subr.mxu0 0.0
    %2092 = vmatpush1.msra.mxu0 0.0
    %2093 = vmatprep.subr.mxu0 0.0
    %2094 = vmatpush1.msra.mxu0 0.0
    %2095 = vmatprep.subr.mxu0 0.0
    %2096 = vmatpush1.msra.mxu0 0.0
    %2097 = vmatprep.subr.mxu0 0.0
    %2098 = vmatpush1.msra.mxu0 0.0
    %2099 = vmatprep.subr.mxu0 0.0
    %2100 = vmatpush1.msra.mxu0 0.0
    %2101 = vmatprep.subr.mxu0 0.0
    %2102 = vmatpush1.msra.mxu0 0.0
    %2103 = vmatprep.subr.mxu0 0.0
    %2104 = vmatpush1.msra.mxu0 0.0
    %2105 = vmatprep.subr.mxu0 0.0
    %2106 = vmatpush1.msra.mxu0 0.0
    %2107 = vmatprep.subr.mxu0 0.0
    %2108 = vmatpush1.msra.mxu0 0.0
    %2109 = vmatprep.subr.mxu0 0.0
    %2110 = vmatpush1.msra.mxu0 0.0
    %2111 = vmatprep.subr.mxu0 0.0
    %2112 = vmatpush1.msra.mxu0 0.0
    %2113 = vmatprep.subr.mxu0 0.0
    %2114 = vmatpush1.msra.mxu0 0.0
    %2115 = vmatprep.subr.mxu0 0.0
    %2116 = vmatpush1.msra.mxu0 0.0
    %2117 = vmatprep.subr.mxu0 0.0
    %2118 = vmatpush1.msra.mxu0 0.0
    %2119 = vmatprep.subr.mxu0 0.0
    %2120 = vmatpush1.msra.mxu0 0.0
    %2121 = vmatprep.mubr.f32.mxu0 0.0
    %2122 = vmatmul.mubr.f32.gmra.mrb[0].mxu0 %v2055
    %v2123 = vpop.f32.mrb[0].mxu0
    %v2124 = vadd.f32 0.0, %v2123
    %v2125 = vpop.f32.mrb[0].mxu0
    %2126 = vdwg.mxu0
    %v2128 = vrot.slane %v2124, 4
    %v2130 = vadd.f32 %v1815, %v2128
    %v2131 = vxor.u32 %v2130, 2147483648
    %v2132 = vmul.f32 %v2131, 1.442695
    %v2133 = vpow.pop %v2132
    %v2134 = vadd.f32 %v2133, 1.0
    %v2135 = vrcp.pop %v2134
    %v2136 = vmul.f32 1.0, %v2135
    %v2137 = vtanh.pop %v2130
    %v2139 = vrot.slane %v2037, 6
    %v2141 = vmul.f32 %v2136, %v2139
    %2143 = vrot.lane.b32.xlu0 %v2137, 64
    %v2144 = vpop.permute.xlu0 %2143
    %v2146 = vmul.f32 %v2136, %v2144
    %2148 = vrot.lane.b32.xlu0 %v2146, 32
    %v2149 = vpop.permute.xlu0 %2148
    %v2151 = vadd.f32 %v2141, %v2149
    %v2152 = vtanh.pop %v2151
    %2154 = vrot.lane.b32.xlu0 %v2152, 64
    %v2155 = vpop.permute.xlu0 %2154
    %v2157 = vmul.f32 %v2136, %v2155
    %2159 = vrot.lane.b32.xlu0 %v2157, 32
    %v2160 = vpop.permute.xlu0 %2159
    %vm2162 = vcmask 258052
    %2163 = vst.msk [vmem:[#allocation4 - $0x2] sm:$0x10] %vm2162, %v2160
    %vm2164 = vcmask 259077
    %2165 = vst.msk [vmem:[%s1938 - $0x3] sm:$0x20] %vm2164, %v2160
    %v2166 = vrot.slane %v2157, 4
    %2167 = vrot.lane.b32.xlu0 %v2166, 32
    %v2168 = vpop.permute.xlu0 %2167
    %v2169 = vsel %vm56, %v2168, 0
    %2171 = vmatprep.subr.mxu0 0.0
    %2172 = vmatpush1.msra.mxu0 %v1833
    %2173 = vmatprep.subr.mxu0 0.0
    %2174 = vmatpush1.msra.mxu0 %v1834
    %2175 = vmatprep.subr.mxu0 0.0
    %2176 = vmatpush1.msra.mxu0 %v1835
    %2177 = vmatprep.subr.mxu0 0.0
    %2178 = vmatpush1.msra.mxu0 %v1836
    %2179 = vmatprep.subr.mxu0 0.0
    %2180 = vmatpush1.msra.mxu0 0.0
    %2181 = vmatprep.subr.mxu0 0.0
    %2182 = vmatpush1.msra.mxu0 0.0
    %2183 = vmatprep.subr.mxu0 0.0
    %2184 = vmatpush1.msra.mxu0 0.0
    %2185 = vmatprep.subr.mxu0 0.0
    %2186 = vmatpush1.msra.mxu0 0.0
    %2187 = vmatprep.subr.mxu0 0.0
    %2188 = vmatpush1.msra.mxu0 0.0
    %2189 = vmatprep.subr.mxu0 0.0
    %2190 = vmatpush1.msra.mxu0 0.0
    %2191 = vmatprep.subr.mxu0 0.0
    %2192 = vmatpush1.msra.mxu0 0.0
    %2193 = vmatprep.subr.mxu0 0.0
    %2194 = vmatpush1.msra.mxu0 0.0
    %2195 = vmatprep.subr.mxu0 0.0
    %2196 = vmatpush1.msra.mxu0 0.0
    %2197 = vmatprep.subr.mxu0 0.0
    %2198 = vmatpush1.msra.mxu0 0.0
    %2199 = vmatprep.subr.mxu0 0.0
    %2200 = vmatpush1.msra.mxu0 0.0
    %2201 = vmatprep.subr.mxu0 0.0
    %2202 = vmatpush1.msra.mxu0 0.0
    %2203 = vmatprep.subr.mxu0 0.0
    %2204 = vmatpush1.msra.mxu0 0.0
    %2205 = vmatprep.subr.mxu0 0.0
    %2206 = vmatpush1.msra.mxu0 0.0
    %2207 = vmatprep.subr.mxu0 0.0
    %2208 = vmatpush1.msra.mxu0 0.0
    %2209 = vmatprep.subr.mxu0 0.0
    %2210 = vmatpush1.msra.mxu0 0.0
    %2211 = vmatprep.subr.mxu0 0.0
    %2212 = vmatpush1.msra.mxu0 0.0
    %2213 = vmatprep.subr.mxu0 0.0
    %2214 = vmatpush1.msra.mxu0 0.0
    %2215 = vmatprep.subr.mxu0 0.0
    %2216 = vmatpush1.msra.mxu0 0.0
    %2217 = vmatprep.subr.mxu0 0.0
    %2218 = vmatpush1.msra.mxu0 0.0
    %2219 = vmatprep.subr.mxu0 0.0
    %2220 = vmatpush1.msra.mxu0 0.0
    %2221 = vmatprep.subr.mxu0 0.0
    %2222 = vmatpush1.msra.mxu0 0.0
    %2223 = vmatprep.subr.mxu0 0.0
    %2224 = vmatpush1.msra.mxu0 0.0
    %2225 = vmatprep.subr.mxu0 0.0
    %2226 = vmatpush1.msra.mxu0 0.0
    %2227 = vmatprep.subr.mxu0 0.0
    %2228 = vmatpush1.msra.mxu0 0.0
    %2229 = vmatprep.subr.mxu0 0.0
    %2230 = vmatpush1.msra.mxu0 0.0
    %2231 = vmatprep.subr.mxu0 0.0
    %2232 = vmatpush1.msra.mxu0 0.0
    %2233 = vmatprep.subr.mxu0 0.0
    %2234 = vmatpush1.msra.mxu0 0.0
    %2235 = vmatprep.mubr.f32.mxu0 0.0
    %2236 = vmatmul.mubr.f32.gmra.mrb[0].mxu0 %v2169
    %v2237 = vpop.f32.mrb[0].mxu0
    %v2238 = vadd.f32 0.0, %v2237
    %v2239 = vpop.f32.mrb[0].mxu0
    %2240 = vdwg.mxu0
    %v2242 = vrot.slane %v2238, 2
    %v2244 = vadd.f32 %v1815, %v2242
    %v2245 = vxor.u32 %v2244, 2147483648
    %v2246 = vmul.f32 %v2245, 1.442695
    %v2247 = vpow.pop %v2246
    %v2248 = vadd.f32 %v2247, 1.0
    %v2249 = vrcp.pop %v2248
    %v2250 = vmul.f32 1.0, %v2249
    %v2251 = vtanh.pop %v2244
    %v2253 = vrot.slane %v2151, 6
    %v2255 = vmul.f32 %v2250, %v2253
    %2257 = vrot.lane.b32.xlu0 %v2251, 64
    %v2258 = vpop.permute.xlu0 %2257
    %v2260 = vmul.f32 %v2250, %v2258
    %2262 = vrot.lane.b32.xlu0 %v2260, 32
    %v2263 = vpop.permute.xlu0 %2262
    %v2265 = vadd.f32 %v2255, %v2263
    %v2266 = vtanh.pop %v2265
    %2268 = vrot.lane.b32.xlu0 %v2266, 64
    %v2269 = vpop.permute.xlu0 %2268
    %v2271 = vmul.f32 %v2250, %v2269
    %2273 = vrot.lane.b32.xlu0 %v2271, 32
    %v2274 = vpop.permute.xlu0 %2273
    %vm2276 = vcmask 260102
    %2277 = vst.msk [vmem:[#allocation4 - $0x3] sm:$0x40] %vm2276, %v2274
    %vm2278 = vcmask 261127
    %2279 = vst.msk [vmem:[%s1938 - $0x4] sm:$0x80] %vm2278, %v2274
    %v2280 = vrot.slane %v2271, 6
    %2281 = vrot.lane.b32.xlu0 %v2280, 32
    %v2282 = vpop.permute.xlu0 %2281
    %v2283 = vsel %vm56, %v2282, 0
    %2285 = vmatprep.subr.mxu0 0.0
    %2286 = vmatpush1.msra.mxu0 %v1833
    %2287 = vmatprep.subr.mxu0 0.0
    %2288 = vmatpush1.msra.mxu0 %v1834
    %2289 = vmatprep.subr.mxu0 0.0
    %2290 = vmatpush1.msra.mxu0 %v1835
    %2291 = vmatprep.subr.mxu0 0.0
    %2292 = vmatpush1.msra.mxu0 %v1836
    %2293 = vmatprep.subr.mxu0 0.0
    %2294 = vmatpush1.msra.mxu0 0.0
    %2295 = vmatprep.subr.mxu0 0.0
    %2296 = vmatpush1.msra.mxu0 0.0
    %2297 = vmatprep.subr.mxu0 0.0
    %2298 = vmatpush1.msra.mxu0 0.0
    %2299 = vmatprep.subr.mxu0 0.0
    %2300 = vmatpush1.msra.mxu0 0.0
    %2301 = vmatprep.subr.mxu0 0.0
    %2302 = vmatpush1.msra.mxu0 0.0
    %2303 = vmatprep.subr.mxu0 0.0
    %2304 = vmatpush1.msra.mxu0 0.0
    %2305 = vmatprep.subr.mxu0 0.0
    %2306 = vmatpush1.msra.mxu0 0.0
    %2307 = vmatprep.subr.mxu0 0.0
    %2308 = vmatpush1.msra.mxu0 0.0
    %2309 = vmatprep.subr.mxu0 0.0
    %2310 = vmatpush1.msra.mxu0 0.0
    %2311 = vmatprep.subr.mxu0 0.0
    %2312 = vmatpush1.msra.mxu0 0.0
    %2313 = vmatprep.subr.mxu0 0.0
    %2314 = vmatpush1.msra.mxu0 0.0
    %2315 = vmatprep.subr.mxu0 0.0
    %2316 = vmatpush1.msra.mxu0 0.0
    %2317 = vmatprep.subr.mxu0 0.0
    %2318 = vmatpush1.msra.mxu0 0.0
    %2319 = vmatprep.subr.mxu0 0.0
    %2320 = vmatpush1.msra.mxu0 0.0
    %2321 = vmatprep.subr.mxu0 0.0
    %2322 = vmatpush1.msra.mxu0 0.0
    %2323 = vmatprep.subr.mxu0 0.0
    %2324 = vmatpush1.msra.mxu0 0.0
    %2325 = vmatprep.subr.mxu0 0.0
    %2326 = vmatpush1.msra.mxu0 0.0
    %2327 = vmatprep.subr.mxu0 0.0
    %2328 = vmatpush1.msra.mxu0 0.0
    %2329 = vmatprep.subr.mxu0 0.0
    %2330 = vmatpush1.msra.mxu0 0.0
    %2331 = vmatprep.subr.mxu0 0.0
    %2332 = vmatpush1.msra.mxu0 0.0
    %2333 = vmatprep.subr.mxu0 0.0
    %2334 = vmatpush1.msra.mxu0 0.0
    %2335 = vmatprep.subr.mxu0 0.0
    %2336 = vmatpush1.msra.mxu0 0.0
    %2337 = vmatprep.subr.mxu0 0.0
    %2338 = vmatpush1.msra.mxu0 0.0
    %2339 = vmatprep.subr.mxu0 0.0
    %2340 = vmatpush1.msra.mxu0 0.0
    %2341 = vmatprep.subr.mxu0 0.0
    %2342 = vmatpush1.msra.mxu0 0.0
    %2343 = vmatprep.subr.mxu0 0.0
    %2344 = vmatpush1.msra.mxu0 0.0
    %2345 = vmatprep.subr.mxu0 0.0
    %2346 = vmatpush1.msra.mxu0 0.0
    %2347 = vmatprep.subr.mxu0 0.0
    %2348 = vmatpush1.msra.mxu0 0.0
    %2349 = vmatprep.mubr.f32.mxu0 0.0
    %2350 = vmatmul.mubr.f32.gmra.mrb[0].mxu0 %v2283
    %v2351 = vpop.f32.mrb[0].mxu0
    %v2352 = vadd.f32 0.0, %v2351
    %v2353 = vpop.f32.mrb[0].mxu0
    %2354 = vdwg.mxu0
    %v2355 = vadd.f32 %v1820, %v2352
    %v2356 = vxor.u32 %v2355, 2147483648
    %v2357 = vmul.f32 %v2356, 1.442695
    %v2358 = vpow.pop %v2357
    %v2359 = vadd.f32 %v2358, 1.0
    %v2360 = vrcp.pop %v2359
    %v2361 = vmul.f32 1.0, %v2360
    %v2362 = vtanh.pop %v2355
    %v2364 = vrot.slane %v2265, 6
    %v2366 = vmul.f32 %v2361, %v2364
    %2368 = vrot.lane.b32.xlu0 %v2362, 64
    %v2369 = vpop.permute.xlu0 %2368
    %v2371 = vmul.f32 %v2361, %v2369
    %2373 = vrot.lane.b32.xlu0 %v2371, 32
    %v2374 = vpop.permute.xlu0 %2373
    %v2376 = vadd.f32 %v2366, %v2374
    %v2377 = vtanh.pop %v2376
    %2379 = vrot.lane.b32.xlu0 %v2377, 64
    %v2380 = vpop.permute.xlu0 %2379
    %v2382 = vmul.f32 %v2361, %v2380
    %2384 = vrot.lane.b32.xlu0 %v2382, 32
    %v2385 = vpop.permute.xlu0 %2384
    %2387 = vst.msk [vmem:[#allocation4 + $0x4] sm:$0x1] %vm1936, %v2385
    %2388 = vst.msk [vmem:[%s1938 + $0x3] sm:$0x2] %vm1939, %v2385
    %v2389 = vsel %vm56, %v2385, 0
    %2391 = vmatprep.subr.mxu0 0.0
    %2392 = vmatpush1.msra.mxu0 %v1833
    %2393 = vmatprep.subr.mxu0 0.0
    %2394 = vmatpush1.msra.mxu0 %v1834
    %2395 = vmatprep.subr.mxu0 0.0
    %2396 = vmatpush1.msra.mxu0 %v1835
    %2397 = vmatprep.subr.mxu0 0.0
    %2398 = vmatpush1.msra.mxu0 %v1836
    %2399 = vmatprep.subr.mxu0 0.0
    %2400 = vmatpush1.msra.mxu0 0.0
    %2401 = vmatprep.subr.mxu0 0.0
    %2402 = vmatpush1.msra.mxu0 0.0
    %2403 = vmatprep.subr.mxu0 0.0
    %2404 = vmatpush1.msra.mxu0 0.0
    %2405 = vmatprep.subr.mxu0 0.0
    %2406 = vmatpush1.msra.mxu0 0.0
    %2407 = vmatprep.subr.mxu0 0.0
    %2408 = vmatpush1.msra.mxu0 0.0
    %2409 = vmatprep.subr.mxu0 0.0
    %2410 = vmatpush1.msra.mxu0 0.0
    %2411 = vmatprep.subr.mxu0 0.0
    %2412 = vmatpush1.msra.mxu0 0.0
    %2413 = vmatprep.subr.mxu0 0.0
    %2414 = vmatpush1.msra.mxu0 0.0
    %2415 = vmatprep.subr.mxu0 0.0
    %2416 = vmatpush1.msra.mxu0 0.0
    %2417 = vmatprep.subr.mxu0 0.0
    %2418 = vmatpush1.msra.mxu0 0.0
    %2419 = vmatprep.subr.mxu0 0.0
    %2420 = vmatpush1.msra.mxu0 0.0
    %2421 = vmatprep.subr.mxu0 0.0
    %2422 = vmatpush1.msra.mxu0 0.0
    %2423 = vmatprep.subr.mxu0 0.0
    %2424 = vmatpush1.msra.mxu0 0.0
    %2425 = vmatprep.subr.mxu0 0.0
    %2426 = vmatpush1.msra.mxu0 0.0
    %2427 = vmatprep.subr.mxu0 0.0
    %2428 = vmatpush1.msra.mxu0 0.0
    %2429 = vmatprep.subr.mxu0 0.0
    %2430 = vmatpush1.msra.mxu0 0.0
    %2431 = vmatprep.subr.mxu0 0.0
    %2432 = vmatpush1.msra.mxu0 0.0
    %2433 = vmatprep.subr.mxu0 0.0
    %2434 = vmatpush1.msra.mxu0 0.0
    %2435 = vmatprep.subr.mxu0 0.0
    %2436 = vmatpush1.msra.mxu0 0.0
    %2437 = vmatprep.subr.mxu0 0.0
    %2438 = vmatpush1.msra.mxu0 0.0
    %2439 = vmatprep.subr.mxu0 0.0
    %2440 = vmatpush1.msra.mxu0 0.0
    %2441 = vmatprep.subr.mxu0 0.0
    %2442 = vmatpush1.msra.mxu0 0.0
    %2443 = vmatprep.subr.mxu0 0.0
    %2444 = vmatpush1.msra.mxu0 0.0
    %2445 = vmatprep.subr.mxu0 0.0
    %2446 = vmatpush1.msra.mxu0 0.0
    %2447 = vmatprep.subr.mxu0 0.0
    %2448 = vmatpush1.msra.mxu0 0.0
    %2449 = vmatprep.subr.mxu0 0.0
    %2450 = vmatpush1.msra.mxu0 0.0
    %2451 = vmatprep.subr.mxu0 0.0
    %2452 = vmatpush1.msra.mxu0 0.0
    %2453 = vmatprep.subr.mxu0 0.0
    %2454 = vmatpush1.msra.mxu0 0.0
    %2455 = vmatprep.mubr.f32.mxu0 0.0
    %2456 = vmatmul.mubr.f32.gmra.mrb[0].mxu0 %v2389
    %v2457 = vpop.f32.mrb[0].mxu0
    %v2458 = vadd.f32 0.0, %v2457
    %v2459 = vpop.f32.mrb[0].mxu0
    %2460 = vdwg.mxu0
    %v2462 = vrot.slane %v2458, 6
    %v2464 = vadd.f32 %v1820, %v2462
    %v2465 = vxor.u32 %v2464, 2147483648
    %v2466 = vmul.f32 %v2465, 1.442695
    %v2467 = vpow.pop %v2466
    %v2468 = vadd.f32 %v2467, 1.0
    %v2469 = vrcp.pop %v2468
    %v2470 = vmul.f32 1.0, %v2469
    %v2471 = vtanh.pop %v2464
    %v2473 = vrot.slane %v2376, 6
    %v2475 = vmul.f32 %v2470, %v2473
    %2477 = vrot.lane.b32.xlu0 %v2471, 64
    %v2478 = vpop.permute.xlu0 %2477
    %v2480 = vmul.f32 %v2470, %v2478
    %2482 = vrot.lane.b32.xlu0 %v2480, 32
    %v2483 = vpop.permute.xlu0 %2482
    %v2485 = vadd.f32 %v2475, %v2483
    %v2486 = vtanh.pop %v2485
    %2488 = vrot.lane.b32.xlu0 %v2486, 64
    %v2489 = vpop.permute.xlu0 %2488
    %v2491 = vmul.f32 %v2470, %v2489
    %2493 = vrot.lane.b32.xlu0 %v2491, 32
    %v2494 = vpop.permute.xlu0 %2493
    %2496 = vst.msk [vmem:[#allocation4 + $0x3] sm:$0x4] %vm2048, %v2494
    %2497 = vst.msk [vmem:[%s1938 + $0x2] sm:$0x8] %vm2050, %v2494
    %v2498 = vrot.slane %v2491, 2
    %2499 = vrot.lane.b32.xlu0 %v2498, 32
    %v2500 = vpop.permute.xlu0 %2499
    %v2501 = vsel %vm56, %v2500, 0
    %2503 = vmatprep.subr.mxu0 0.0
    %2504 = vmatpush1.msra.mxu0 %v1833
    %2505 = vmatprep.subr.mxu0 0.0
    %2506 = vmatpush1.msra.mxu0 %v1834
    %2507 = vmatprep.subr.mxu0 0.0
    %2508 = vmatpush1.msra.mxu0 %v1835
    %2509 = vmatprep.subr.mxu0 0.0
    %2510 = vmatpush1.msra.mxu0 %v1836
    %2511 = vmatprep.subr.mxu0 0.0
    %2512 = vmatpush1.msra.mxu0 0.0
    %2513 = vmatprep.subr.mxu0 0.0
    %2514 = vmatpush1.msra.mxu0 0.0
    %2515 = vmatprep.subr.mxu0 0.0
    %2516 = vmatpush1.msra.mxu0 0.0
    %2517 = vmatprep.subr.mxu0 0.0
    %2518 = vmatpush1.msra.mxu0 0.0
    %2519 = vmatprep.subr.mxu0 0.0
    %2520 = vmatpush1.msra.mxu0 0.0
    %2521 = vmatprep.subr.mxu0 0.0
    %2522 = vmatpush1.msra.mxu0 0.0
    %2523 = vmatprep.subr.mxu0 0.0
    %2524 = vmatpush1.msra.mxu0 0.0
    %2525 = vmatprep.subr.mxu0 0.0
    %2526 = vmatpush1.msra.mxu0 0.0
    %2527 = vmatprep.subr.mxu0 0.0
    %2528 = vmatpush1.msra.mxu0 0.0
    %2529 = vmatprep.subr.mxu0 0.0
    %2530 = vmatpush1.msra.mxu0 0.0
    %2531 = vmatprep.subr.mxu0 0.0
    %2532 = vmatpush1.msra.mxu0 0.0
    %2533 = vmatprep.subr.mxu0 0.0
    %2534 = vmatpush1.msra.mxu0 0.0
    %2535 = vmatprep.subr.mxu0 0.0
    %2536 = vmatpush1.msra.mxu0 0.0
    %2537 = vmatprep.subr.mxu0 0.0
    %2538 = vmatpush1.msra.mxu0 0.0
    %2539 = vmatprep.subr.mxu0 0.0
    %2540 = vmatpush1.msra.mxu0 0.0
    %2541 = vmatprep.subr.mxu0 0.0
    %2542 = vmatpush1.msra.mxu0 0.0
    %2543 = vmatprep.subr.mxu0 0.0
    %2544 = vmatpush1.msra.mxu0 0.0
    %2545 = vmatprep.subr.mxu0 0.0
    %2546 = vmatpush1.msra.mxu0 0.0
    %2547 = vmatprep.subr.mxu0 0.0
    %2548 = vmatpush1.msra.mxu0 0.0
    %2549 = vmatprep.subr.mxu0 0.0
    %2550 = vmatpush1.msra.mxu0 0.0
    %2551 = vmatprep.subr.mxu0 0.0
    %2552 = vmatpush1.msra.mxu0 0.0
    %2553 = vmatprep.subr.mxu0 0.0
    %2554 = vmatpush1.msra.mxu0 0.0
    %2555 = vmatprep.subr.mxu0 0.0
    %2556 = vmatpush1.msra.mxu0 0.0
    %2557 = vmatprep.subr.mxu0 0.0
    %2558 = vmatpush1.msra.mxu0 0.0
    %2559 = vmatprep.subr.mxu0 0.0
    %2560 = vmatpush1.msra.mxu0 0.0
    %2561 = vmatprep.subr.mxu0 0.0
    %2562 = vmatpush1.msra.mxu0 0.0
    %2563 = vmatprep.subr.mxu0 0.0
    %2564 = vmatpush1.msra.mxu0 0.0
    %2565 = vmatprep.subr.mxu0 0.0
    %2566 = vmatpush1.msra.mxu0 0.0
    %2567 = vmatprep.mubr.f32.mxu0 0.0
    %2568 = vmatmul.mubr.f32.gmra.mrb[0].mxu0 %v2501
    %v2569 = vpop.f32.mrb[0].mxu0
    %v2570 = vadd.f32 0.0, %v2569
    %v2571 = vpop.f32.mrb[0].mxu0
    %2572 = vdwg.mxu0
    %v2574 = vrot.slane %v2570, 4
    %v2576 = vadd.f32 %v1820, %v2574
    %v2577 = vxor.u32 %v2576, 2147483648
    %v2578 = vmul.f32 %v2577, 1.442695
    %v2579 = vpow.pop %v2578
    %v2580 = vadd.f32 %v2579, 1.0
    %v2581 = vrcp.pop %v2580
    %v2582 = vmul.f32 1.0, %v2581
    %v2583 = vtanh.pop %v2576
    %v2585 = vrot.slane %v2485, 6
    %v2587 = vmul.f32 %v2582, %v2585
    %2589 = vrot.lane.b32.xlu0 %v2583, 64
    %v2590 = vpop.permute.xlu0 %2589
    %v2592 = vmul.f32 %v2582, %v2590
    %2594 = vrot.lane.b32.xlu0 %v2592, 32
    %v2595 = vpop.permute.xlu0 %2594
    %v2597 = vadd.f32 %v2587, %v2595
    %v2598 = vtanh.pop %v2597
    %2600 = vrot.lane.b32.xlu0 %v2598, 64
    %v2601 = vpop.permute.xlu0 %2600
    %v2603 = vmul.f32 %v2582, %v2601
    %2605 = vrot.lane.b32.xlu0 %v2603, 32
    %v2606 = vpop.permute.xlu0 %2605
    %2608 = vst.msk [vmem:[#allocation4 + $0x2] sm:$0x10] %vm2162, %v2606
    %2609 = vst.msk [vmem:[%s1938 + $0x1] sm:$0x20] %vm2164, %v2606
    %v2610 = vrot.slane %v2603, 4
    %2611 = vrot.lane.b32.xlu0 %v2610, 32
    %v2612 = vpop.permute.xlu0 %2611
    %v2613 = vsel %vm56, %v2612, 0
    %2615 = vmatprep.subr.mxu0 0.0
    %2616 = vmatpush1.msra.mxu0 %v1833
    %2617 = vmatprep.subr.mxu0 0.0
    %2618 = vmatpush1.msra.mxu0 %v1834
    %2619 = vmatprep.subr.mxu0 0.0
    %2620 = vmatpush1.msra.mxu0 %v1835
    %2621 = vmatprep.subr.mxu0 0.0
    %2622 = vmatpush1.msra.mxu0 %v1836
    %2623 = vmatprep.subr.mxu0 0.0
    %2624 = vmatpush1.msra.mxu0 0.0
    %2625 = vmatprep.subr.mxu0 0.0
    %2626 = vmatpush1.msra.mxu0 0.0
    %2627 = vmatprep.subr.mxu0 0.0
    %2628 = vmatpush1.msra.mxu0 0.0
    %2629 = vmatprep.subr.mxu0 0.0
    %2630 = vmatpush1.msra.mxu0 0.0
    %2631 = vmatprep.subr.mxu0 0.0
    %2632 = vmatpush1.msra.mxu0 0.0
    %2633 = vmatprep.subr.mxu0 0.0
    %2634 = vmatpush1.msra.mxu0 0.0
    %2635 = vmatprep.subr.mxu0 0.0
    %2636 = vmatpush1.msra.mxu0 0.0
    %2637 = vmatprep.subr.mxu0 0.0
    %2638 = vmatpush1.msra.mxu0 0.0
    %2639 = vmatprep.subr.mxu0 0.0
    %2640 = vmatpush1.msra.mxu0 0.0
    %2641 = vmatprep.subr.mxu0 0.0
    %2642 = vmatpush1.msra.mxu0 0.0
    %2643 = vmatprep.subr.mxu0 0.0
    %2644 = vmatpush1.msra.mxu0 0.0
    %2645 = vmatprep.subr.mxu0 0.0
    %2646 = vmatpush1.msra.mxu0 0.0
    %2647 = vmatprep.subr.mxu0 0.0
    %2648 = vmatpush1.msra.mxu0 0.0
    %2649 = vmatprep.subr.mxu0 0.0
    %2650 = vmatpush1.msra.mxu0 0.0
    %2651 = vmatprep.subr.mxu0 0.0
    %2652 = vmatpush1.msra.mxu0 0.0
    %2653 = vmatprep.subr.mxu0 0.0
    %2654 = vmatpush1.msra.mxu0 0.0
    %2655 = vmatprep.subr.mxu0 0.0
    %2656 = vmatpush1.msra.mxu0 0.0
    %2657 = vmatprep.subr.mxu0 0.0
    %2658 = vmatpush1.msra.mxu0 0.0
    %2659 = vmatprep.subr.mxu0 0.0
    %2660 = vmatpush1.msra.mxu0 0.0
    %2661 = vmatprep.subr.mxu0 0.0
    %2662 = vmatpush1.msra.mxu0 0.0
    %2663 = vmatprep.subr.mxu0 0.0
    %2664 = vmatpush1.msra.mxu0 0.0
    %2665 = vmatprep.subr.mxu0 0.0
    %2666 = vmatpush1.msra.mxu0 0.0
    %2667 = vmatprep.subr.mxu0 0.0
    %2668 = vmatpush1.msra.mxu0 0.0
    %2669 = vmatprep.subr.mxu0 0.0
    %2670 = vmatpush1.msra.mxu0 0.0
    %2671 = vmatprep.subr.mxu0 0.0
    %2672 = vmatpush1.msra.mxu0 0.0
    %2673 = vmatprep.subr.mxu0 0.0
    %2674 = vmatpush1.msra.mxu0 0.0
    %2675 = vmatprep.subr.mxu0 0.0
    %2676 = vmatpush1.msra.mxu0 0.0
    %2677 = vmatprep.subr.mxu0 0.0
    %2678 = vmatpush1.msra.mxu0 0.0
    %2679 = vmatprep.mubr.f32.mxu0 0.0
    %2680 = vmatmul.mubr.f32.gmra.mrb[0].mxu0 %v2613
    %v2681 = vpop.f32.mrb[0].mxu0
    %v2682 = vadd.f32 0.0, %v2681
    %v2683 = vpop.f32.mrb[0].mxu0
    %2684 = vdwg.mxu0
    %v2686 = vrot.slane %v2682, 2
    %v2688 = vadd.f32 %v1820, %v2686
    %v2689 = vxor.u32 %v2688, 2147483648
    %v2690 = vmul.f32 %v2689, 1.442695
    %v2691 = vpow.pop %v2690
    %v2692 = vadd.f32 %v2691, 1.0
    %v2693 = vrcp.pop %v2692
    %v2694 = vmul.f32 1.0, %v2693
    %v2695 = vtanh.pop %v2688
    %v2697 = vrot.slane %v2597, 6
    %v2699 = vmul.f32 %v2694, %v2697
    %2701 = vrot.lane.b32.xlu0 %v2695, 64
    %v2702 = vpop.permute.xlu0 %2701
    %v2704 = vmul.f32 %v2694, %v2702
    %2706 = vrot.lane.b32.xlu0 %v2704, 32
    %v2707 = vpop.permute.xlu0 %2706
    %v2709 = vadd.f32 %v2699, %v2707
    %v2710 = vtanh.pop %v2709
    %2712 = vrot.lane.b32.xlu0 %v2710, 64
    %v2713 = vpop.permute.xlu0 %2712
    %v2715 = vmul.f32 %v2694, %v2713
    %2717 = vrot.lane.b32.xlu0 %v2715, 32
    %v2718 = vpop.permute.xlu0 %2717
    %2720 = vst.msk [vmem:[#allocation4 + $0x1] sm:$0x40] %vm2276, %v2718
    %2721 = vst.msk [vmem:[%s1938] sm:$0x80] %vm2278, %v2718
    %v2722 = vrot.slane %v2715, 6
    %2723 = vrot.lane.b32.xlu0 %v2722, 32
    %v2724 = vpop.permute.xlu0 %2723
    %v2725 = vsel %vm56, %v2724, 0
    %2727 = vmatprep.subr.mxu0 0.0
    %2728 = vmatpush1.msra.mxu0 %v1833
    %2729 = vmatprep.subr.mxu0 0.0
    %2730 = vmatpush1.msra.mxu0 %v1834
    %2731 = vmatprep.subr.mxu0 0.0
    %2732 = vmatpush1.msra.mxu0 %v1835
    %2733 = vmatprep.subr.mxu0 0.0
    %2734 = vmatpush1.msra.mxu0 %v1836
    %2735 = vmatprep.subr.mxu0 0.0
    %2736 = vmatpush1.msra.mxu0 0.0
    %2737 = vmatprep.subr.mxu0 0.0
    %2738 = vmatpush1.msra.mxu0 0.0
    %2739 = vmatprep.subr.mxu0 0.0
    %2740 = vmatpush1.msra.mxu0 0.0
    %2741 = vmatprep.subr.mxu0 0.0
    %2742 = vmatpush1.msra.mxu0 0.0
    %2743 = vmatprep.subr.mxu0 0.0
    %2744 = vmatpush1.msra.mxu0 0.0
    %2745 = vmatprep.subr.mxu0 0.0
    %2746 = vmatpush1.msra.mxu0 0.0
    %2747 = vmatprep.subr.mxu0 0.0
    %2748 = vmatpush1.msra.mxu0 0.0
    %2749 = vmatprep.subr.mxu0 0.0
    %2750 = vmatpush1.msra.mxu0 0.0
    %2751 = vmatprep.subr.mxu0 0.0
    %2752 = vmatpush1.msra.mxu0 0.0
    %2753 = vmatprep.subr.mxu0 0.0
    %2754 = vmatpush1.msra.mxu0 0.0
    %2755 = vmatprep.subr.mxu0 0.0
    %2756 = vmatpush1.msra.mxu0 0.0
    %2757 = vmatprep.subr.mxu0 0.0
    %2758 = vmatpush1.msra.mxu0 0.0
    %2759 = vmatprep.subr.mxu0 0.0
    %2760 = vmatpush1.msra.mxu0 0.0
    %2761 = vmatprep.subr.mxu0 0.0
    %2762 = vmatpush1.msra.mxu0 0.0
    %2763 = vmatprep.subr.mxu0 0.0
    %2764 = vmatpush1.msra.mxu0 0.0
    %2765 = vmatprep.subr.mxu0 0.0
    %2766 = vmatpush1.msra.mxu0 0.0
    %2767 = vmatprep.subr.mxu0 0.0
    %2768 = vmatpush1.msra.mxu0 0.0
    %2769 = vmatprep.subr.mxu0 0.0
    %2770 = vmatpush1.msra.mxu0 0.0
    %2771 = vmatprep.subr.mxu0 0.0
    %2772 = vmatpush1.msra.mxu0 0.0
    %2773 = vmatprep.subr.mxu0 0.0
    %2774 = vmatpush1.msra.mxu0 0.0
    %2775 = vmatprep.subr.mxu0 0.0
    %2776 = vmatpush1.msra.mxu0 0.0
    %2777 = vmatprep.subr.mxu0 0.0
    %2778 = vmatpush1.msra.mxu0 0.0
    %2779 = vmatprep.subr.mxu0 0.0
    %2780 = vmatpush1.msra.mxu0 0.0
    %2781 = vmatprep.subr.mxu0 0.0
    %2782 = vmatpush1.msra.mxu0 0.0
    %2783 = vmatprep.subr.mxu0 0.0
    %2784 = vmatpush1.msra.mxu0 0.0
    %2785 = vmatprep.subr.mxu0 0.0
    %2786 = vmatpush1.msra.mxu0 0.0
    %2787 = vmatprep.subr.mxu0 0.0
    %2788 = vmatpush1.msra.mxu0 0.0
    %2789 = vmatprep.subr.mxu0 0.0
    %2790 = vmatpush1.msra.mxu0 0.0
    %2791 = vmatprep.mubr.f32.mxu0 0.0
    %2792 = vmatmul.mubr.f32.gmra.mrb[0].mxu0 %v2725
    %v2793 = vpop.f32.mrb[0].mxu0
    %v2794 = vadd.f32 0.0, %v2793
    %v2795 = vpop.f32.mrb[0].mxu0
    %2796 = vdwg.mxu0
    %v2797 = vadd.f32 %v1825, %v2794
    %v2798 = vxor.u32 %v2797, 2147483648
    %v2799 = vmul.f32 %v2798, 1.442695
    %v2800 = vpow.pop %v2799
    %v2801 = vadd.f32 %v2800, 1.0
    %v2802 = vrcp.pop %v2801
    %v2803 = vmul.f32 1.0, %v2802
    %v2804 = vtanh.pop %v2797
    %v2806 = vrot.slane %v2709, 6
    %v2808 = vmul.f32 %v2803, %v2806
    %2810 = vrot.lane.b32.xlu0 %v2804, 64
    %v2811 = vpop.permute.xlu0 %2810
    %v2813 = vmul.f32 %v2803, %v2811
    %2815 = vrot.lane.b32.xlu0 %v2813, 32
    %v2816 = vpop.permute.xlu0 %2815
    %v2818 = vadd.f32 %v2808, %v2816
    %v2819 = vtanh.pop %v2818
    %2821 = vrot.lane.b32.xlu0 %v2819, 64
    %v2822 = vpop.permute.xlu0 %2821
    %v2824 = vmul.f32 %v2803, %v2822
    %2826 = vrot.lane.b32.xlu0 %v2824, 32
    %v2827 = vpop.permute.xlu0 %2826
    %2829 = vst.msk [vmem:[#allocation4 + $0x8] sm:$0x1] %vm1936, %v2827
    %2830 = vst.msk [vmem:[%s1938 + $0x7] sm:$0x2] %vm1939, %v2827
    %v2831 = vsel %vm56, %v2827, 0
    %2833 = vmatprep.subr.mxu0 0.0
    %2834 = vmatpush1.msra.mxu0 %v1833
    %2835 = vmatprep.subr.mxu0 0.0
    %2836 = vmatpush1.msra.mxu0 %v1834
    %2837 = vmatprep.subr.mxu0 0.0
    %2838 = vmatpush1.msra.mxu0 %v1835
    %2839 = vmatprep.subr.mxu0 0.0
    %2840 = vmatpush1.msra.mxu0 %v1836
    %2841 = vmatprep.subr.mxu0 0.0
    %2842 = vmatpush1.msra.mxu0 0.0
    %2843 = vmatprep.subr.mxu0 0.0
    %2844 = vmatpush1.msra.mxu0 0.0
    %2845 = vmatprep.subr.mxu0 0.0
    %2846 = vmatpush1.msra.mxu0 0.0
    %2847 = vmatprep.subr.mxu0 0.0
    %2848 = vmatpush1.msra.mxu0 0.0
    %2849 = vmatprep.subr.mxu0 0.0
    %2850 = vmatpush1.msra.mxu0 0.0
    %2851 = vmatprep.subr.mxu0 0.0
    %2852 = vmatpush1.msra.mxu0 0.0
    %2853 = vmatprep.subr.mxu0 0.0
    %2854 = vmatpush1.msra.mxu0 0.0
    %2855 = vmatprep.subr.mxu0 0.0
    %2856 = vmatpush1.msra.mxu0 0.0
    %2857 = vmatprep.subr.mxu0 0.0
    %2858 = vmatpush1.msra.mxu0 0.0
    %2859 = vmatprep.subr.mxu0 0.0
    %2860 = vmatpush1.msra.mxu0 0.0
    %2861 = vmatprep.subr.mxu0 0.0
    %2862 = vmatpush1.msra.mxu0 0.0
    %2863 = vmatprep.subr.mxu0 0.0
    %2864 = vmatpush1.msra.mxu0 0.0
    %2865 = vmatprep.subr.mxu0 0.0
    %2866 = vmatpush1.msra.mxu0 0.0
    %2867 = vmatprep.subr.mxu0 0.0
    %2868 = vmatpush1.msra.mxu0 0.0
    %2869 = vmatprep.subr.mxu0 0.0
    %2870 = vmatpush1.msra.mxu0 0.0
    %2871 = vmatprep.subr.mxu0 0.0
    %2872 = vmatpush1.msra.mxu0 0.0
    %2873 = vmatprep.subr.mxu0 0.0
    %2874 = vmatpush1.msra.mxu0 0.0
    %2875 = vmatprep.subr.mxu0 0.0
    %2876 = vmatpush1.msra.mxu0 0.0
    %2877 = vmatprep.subr.mxu0 0.0
    %2878 = vmatpush1.msra.mxu0 0.0
    %2879 = vmatprep.subr.mxu0 0.0
    %2880 = vmatpush1.msra.mxu0 0.0
    %2881 = vmatprep.subr.mxu0 0.0
    %2882 = vmatpush1.msra.mxu0 0.0
    %2883 = vmatprep.subr.mxu0 0.0
    %2884 = vmatpush1.msra.mxu0 0.0
    %2885 = vmatprep.subr.mxu0 0.0
    %2886 = vmatpush1.msra.mxu0 0.0
    %2887 = vmatprep.subr.mxu0 0.0
    %2888 = vmatpush1.msra.mxu0 0.0
    %2889 = vmatprep.subr.mxu0 0.0
    %2890 = vmatpush1.msra.mxu0 0.0
    %2891 = vmatprep.subr.mxu0 0.0
    %2892 = vmatpush1.msra.mxu0 0.0
    %2893 = vmatprep.subr.mxu0 0.0
    %2894 = vmatpush1.msra.mxu0 0.0
    %2895 = vmatprep.subr.mxu0 0.0
    %2896 = vmatpush1.msra.mxu0 0.0
    %2897 = vmatprep.mubr.f32.mxu0 0.0
    %2898 = vmatmul.mubr.f32.gmra.mrb[0].mxu0 %v2831
    %v2899 = vpop.f32.mrb[0].mxu0
    %v2900 = vadd.f32 0.0, %v2899
    %v2901 = vpop.f32.mrb[0].mxu0
    %2902 = vdwg.mxu0
    %v2904 = vrot.slane %v2900, 6
    %v2906 = vadd.f32 %v1825, %v2904
    %v2907 = vxor.u32 %v2906, 2147483648
    %v2908 = vmul.f32 %v2907, 1.442695
    %v2909 = vpow.pop %v2908
    %v2910 = vadd.f32 %v2909, 1.0
    %v2911 = vrcp.pop %v2910
    %v2912 = vmul.f32 1.0, %v2911
    %v2913 = vtanh.pop %v2906
    %v2915 = vrot.slane %v2818, 6
    %v2917 = vmul.f32 %v2912, %v2915
    %2919 = vrot.lane.b32.xlu0 %v2913, 64
    %v2920 = vpop.permute.xlu0 %2919
    %v2922 = vmul.f32 %v2912, %v2920
    %2924 = vrot.lane.b32.xlu0 %v2922, 32
    %v2925 = vpop.permute.xlu0 %2924
    %v2927 = vadd.f32 %v2917, %v2925
    %v2928 = vtanh.pop %v2927
    %2930 = vrot.lane.b32.xlu0 %v2928, 64
    %v2931 = vpop.permute.xlu0 %2930
    %v2933 = vmul.f32 %v2912, %v2931
    %2935 = vrot.lane.b32.xlu0 %v2933, 32
    %v2936 = vpop.permute.xlu0 %2935
    %2938 = vst.msk [vmem:[#allocation4 + $0x7] sm:$0x4] %vm2048, %v2936
    %2939 = vst.msk [vmem:[%s1938 + $0x6] sm:$0x8] %vm2050, %v2936
    %v2940 = vrot.slane %v2933, 2
    %2941 = vrot.lane.b32.xlu0 %v2940, 32
    %v2942 = vpop.permute.xlu0 %2941
    %v2943 = vsel %vm56, %v2942, 0
    %2945 = vmatprep.subr.mxu0 0.0
    %2946 = vmatpush1.msra.mxu0 %v1833
    %2947 = vmatprep.subr.mxu0 0.0
    %2948 = vmatpush1.msra.mxu0 %v1834
    %2949 = vmatprep.subr.mxu0 0.0
    %2950 = vmatpush1.msra.mxu0 %v1835
    %2951 = vmatprep.subr.mxu0 0.0
    %2952 = vmatpush1.msra.mxu0 %v1836
    %2953 = vmatprep.subr.mxu0 0.0
    %2954 = vmatpush1.msra.mxu0 0.0
    %2955 = vmatprep.subr.mxu0 0.0
    %2956 = vmatpush1.msra.mxu0 0.0
    %2957 = vmatprep.subr.mxu0 0.0
    %2958 = vmatpush1.msra.mxu0 0.0
    %2959 = vmatprep.subr.mxu0 0.0
    %2960 = vmatpush1.msra.mxu0 0.0
    %2961 = vmatprep.subr.mxu0 0.0
    %2962 = vmatpush1.msra.mxu0 0.0
    %2963 = vmatprep.subr.mxu0 0.0
    %2964 = vmatpush1.msra.mxu0 0.0
    %2965 = vmatprep.subr.mxu0 0.0
    %2966 = vmatpush1.msra.mxu0 0.0
    %2967 = vmatprep.subr.mxu0 0.0
    %2968 = vmatpush1.msra.mxu0 0.0
    %2969 = vmatprep.subr.mxu0 0.0
    %2970 = vmatpush1.msra.mxu0 0.0
    %2971 = vmatprep.subr.mxu0 0.0
    %2972 = vmatpush1.msra.mxu0 0.0
    %2973 = vmatprep.subr.mxu0 0.0
    %2974 = vmatpush1.msra.mxu0 0.0
    %2975 = vmatprep.subr.mxu0 0.0
    %2976 = vmatpush1.msra.mxu0 0.0
    %2977 = vmatprep.subr.mxu0 0.0
    %2978 = vmatpush1.msra.mxu0 0.0
    %2979 = vmatprep.subr.mxu0 0.0
    %2980 = vmatpush1.msra.mxu0 0.0
    %2981 = vmatprep.subr.mxu0 0.0
    %2982 = vmatpush1.msra.mxu0 0.0
    %2983 = vmatprep.subr.mxu0 0.0
    %2984 = vmatpush1.msra.mxu0 0.0
    %2985 = vmatprep.subr.mxu0 0.0
    %2986 = vmatpush1.msra.mxu0 0.0
    %2987 = vmatprep.subr.mxu0 0.0
    %2988 = vmatpush1.msra.mxu0 0.0
    %2989 = vmatprep.subr.mxu0 0.0
    %2990 = vmatpush1.msra.mxu0 0.0
    %2991 = vmatprep.subr.mxu0 0.0
    %2992 = vmatpush1.msra.mxu0 0.0
    %2993 = vmatprep.subr.mxu0 0.0
    %2994 = vmatpush1.msra.mxu0 0.0
    %2995 = vmatprep.subr.mxu0 0.0
    %2996 = vmatpush1.msra.mxu0 0.0
    %2997 = vmatprep.subr.mxu0 0.0
    %2998 = vmatpush1.msra.mxu0 0.0
    %2999 = vmatprep.subr.mxu0 0.0
    %3000 = vmatpush1.msra.mxu0 0.0
    %3001 = vmatprep.subr.mxu0 0.0
    %3002 = vmatpush1.msra.mxu0 0.0
    %3003 = vmatprep.subr.mxu0 0.0
    %3004 = vmatpush1.msra.mxu0 0.0
    %3005 = vmatprep.subr.mxu0 0.0
    %3006 = vmatpush1.msra.mxu0 0.0
    %3007 = vmatprep.subr.mxu0 0.0
    %3008 = vmatpush1.msra.mxu0 0.0
    %3009 = vmatprep.mubr.f32.mxu0 0.0
    %3010 = vmatmul.mubr.f32.gmra.mrb[0].mxu0 %v2943
    %v3011 = vpop.f32.mrb[0].mxu0
    %v3012 = vadd.f32 0.0, %v3011
    %v3013 = vpop.f32.mrb[0].mxu0
    %3014 = vdwg.mxu0
    %v3016 = vrot.slane %v3012, 4
    %v3018 = vadd.f32 %v1825, %v3016
    %v3019 = vxor.u32 %v3018, 2147483648
    %v3020 = vmul.f32 %v3019, 1.442695
    %v3021 = vpow.pop %v3020
    %v3022 = vadd.f32 %v3021, 1.0
    %v3023 = vrcp.pop %v3022
    %v3024 = vmul.f32 1.0, %v3023
    %v3025 = vtanh.pop %v3018
    %v3027 = vrot.slane %v2927, 6
    %v3029 = vmul.f32 %v3024, %v3027
    %3031 = vrot.lane.b32.xlu0 %v3025, 64
    %v3032 = vpop.permute.xlu0 %3031
    %v3034 = vmul.f32 %v3024, %v3032
    %3036 = vrot.lane.b32.xlu0 %v3034, 32
    %v3037 = vpop.permute.xlu0 %3036
    %v3039 = vadd.f32 %v3029, %v3037
    %v3040 = vtanh.pop %v3039
    %3042 = vrot.lane.b32.xlu0 %v3040, 64
    %v3043 = vpop.permute.xlu0 %3042
    %v3045 = vmul.f32 %v3024, %v3043
    %3047 = vrot.lane.b32.xlu0 %v3045, 32
    %v3048 = vpop.permute.xlu0 %3047
    %3050 = vst.msk [vmem:[#allocation4 + $0x6] sm:$0x10] %vm2162, %v3048
    %3051 = vst.msk [vmem:[%s1938 + $0x5] sm:$0x20] %vm2164, %v3048
    %v3052 = vrot.slane %v3045, 4
    %3053 = vrot.lane.b32.xlu0 %v3052, 32
    %v3054 = vpop.permute.xlu0 %3053
    %v3055 = vsel %vm56, %v3054, 0
    %3057 = vmatprep.subr.mxu0 0.0
    %3058 = vmatpush1.msra.mxu0 %v1833
    %3059 = vmatprep.subr.mxu0 0.0
    %3060 = vmatpush1.msra.mxu0 %v1834
    %3061 = vmatprep.subr.mxu0 0.0
    %3062 = vmatpush1.msra.mxu0 %v1835
    %3063 = vmatprep.subr.mxu0 0.0
    %3064 = vmatpush1.msra.mxu0 %v1836
    %3065 = vmatprep.subr.mxu0 0.0
    %3066 = vmatpush1.msra.mxu0 0.0
    %3067 = vmatprep.subr.mxu0 0.0
    %3068 = vmatpush1.msra.mxu0 0.0
    %3069 = vmatprep.subr.mxu0 0.0
    %3070 = vmatpush1.msra.mxu0 0.0
    %3071 = vmatprep.subr.mxu0 0.0
    %3072 = vmatpush1.msra.mxu0 0.0
    %3073 = vmatprep.subr.mxu0 0.0
    %3074 = vmatpush1.msra.mxu0 0.0
    %3075 = vmatprep.subr.mxu0 0.0
    %3076 = vmatpush1.msra.mxu0 0.0
    %3077 = vmatprep.subr.mxu0 0.0
    %3078 = vmatpush1.msra.mxu0 0.0
    %3079 = vmatprep.subr.mxu0 0.0
    %3080 = vmatpush1.msra.mxu0 0.0
    %3081 = vmatprep.subr.mxu0 0.0
    %3082 = vmatpush1.msra.mxu0 0.0
    %3083 = vmatprep.subr.mxu0 0.0
    %3084 = vmatpush1.msra.mxu0 0.0
    %3085 = vmatprep.subr.mxu0 0.0
    %3086 = vmatpush1.msra.mxu0 0.0
    %3087 = vmatprep.subr.mxu0 0.0
    %3088 = vmatpush1.msra.mxu0 0.0
    %3089 = vmatprep.subr.mxu0 0.0
    %3090 = vmatpush1.msra.mxu0 0.0
    %3091 = vmatprep.subr.mxu0 0.0
    %3092 = vmatpush1.msra.mxu0 0.0
    %3093 = vmatprep.subr.mxu0 0.0
    %3094 = vmatpush1.msra.mxu0 0.0
    %3095 = vmatprep.subr.mxu0 0.0
    %3096 = vmatpush1.msra.mxu0 0.0
    %3097 = vmatprep.subr.mxu0 0.0
    %3098 = vmatpush1.msra.mxu0 0.0
    %3099 = vmatprep.subr.mxu0 0.0
    %3100 = vmatpush1.msra.mxu0 0.0
    %3101 = vmatprep.subr.mxu0 0.0
    %3102 = vmatpush1.msra.mxu0 0.0
    %3103 = vmatprep.subr.mxu0 0.0
    %3104 = vmatpush1.msra.mxu0 0.0
    %3105 = vmatprep.subr.mxu0 0.0
    %3106 = vmatpush1.msra.mxu0 0.0
    %3107 = vmatprep.subr.mxu0 0.0
    %3108 = vmatpush1.msra.mxu0 0.0
    %3109 = vmatprep.subr.mxu0 0.0
    %3110 = vmatpush1.msra.mxu0 0.0
    %3111 = vmatprep.subr.mxu0 0.0
    %3112 = vmatpush1.msra.mxu0 0.0
    %3113 = vmatprep.subr.mxu0 0.0
    %3114 = vmatpush1.msra.mxu0 0.0
    %3115 = vmatprep.subr.mxu0 0.0
    %3116 = vmatpush1.msra.mxu0 0.0
    %3117 = vmatprep.subr.mxu0 0.0
    %3118 = vmatpush1.msra.mxu0 0.0
    %3119 = vmatprep.subr.mxu0 0.0
    %3120 = vmatpush1.msra.mxu0 0.0
    %3121 = vmatprep.mubr.f32.mxu0 0.0
    %3122 = vmatmul.mubr.f32.gmra.mrb[0].mxu0 %v3055
    %v3123 = vpop.f32.mrb[0].mxu0
    %v3124 = vadd.f32 0.0, %v3123
    %v3125 = vpop.f32.mrb[0].mxu0
    %3126 = vdwg.mxu0
    %v3128 = vrot.slane %v3124, 2
    %v3130 = vadd.f32 %v1825, %v3128
    %v3131 = vxor.u32 %v3130, 2147483648
    %v3132 = vmul.f32 %v3131, 1.442695
    %v3133 = vpow.pop %v3132
    %v3134 = vadd.f32 %v3133, 1.0
    %v3135 = vrcp.pop %v3134
    %v3136 = vmul.f32 1.0, %v3135
    %v3137 = vtanh.pop %v3130
    %v3139 = vrot.slane %v3039, 6
    %v3141 = vmul.f32 %v3136, %v3139
    %3143 = vrot.lane.b32.xlu0 %v3137, 64
    %v3144 = vpop.permute.xlu0 %3143
    %v3146 = vmul.f32 %v3136, %v3144
    %3148 = vrot.lane.b32.xlu0 %v3146, 32
    %v3149 = vpop.permute.xlu0 %3148
    %v3151 = vadd.f32 %v3141, %v3149
    %v3152 = vtanh.pop %v3151
    %3154 = vrot.lane.b32.xlu0 %v3152, 64
    %v3155 = vpop.permute.xlu0 %3154
    %v3157 = vmul.f32 %v3136, %v3155
    %3159 = vrot.lane.b32.xlu0 %v3157, 32
    %v3160 = vpop.permute.xlu0 %3159
    %3162 = vst.msk [vmem:[#allocation4 + $0x5] sm:$0x40] %vm2276, %v3160
    %3163 = vst.msk [vmem:[%s1938 + $0x4] sm:$0x80] %vm2278, %v3160
    %v3164 = vrot.slane %v3157, 6
    %3165 = vrot.lane.b32.xlu0 %v3164, 32
    %v3166 = vpop.permute.xlu0 %3165
    %v3167 = vsel %vm56, %v3166, 0
    %3169 = vmatprep.subr.mxu0 0.0
    %3170 = vmatpush1.msra.mxu0 %v1833
    %3171 = vmatprep.subr.mxu0 0.0
    %3172 = vmatpush1.msra.mxu0 %v1834
    %3173 = vmatprep.subr.mxu0 0.0
    %3174 = vmatpush1.msra.mxu0 %v1835
    %3175 = vmatprep.subr.mxu0 0.0
    %3176 = vmatpush1.msra.mxu0 %v1836
    %3177 = vmatprep.subr.mxu0 0.0
    %3178 = vmatpush1.msra.mxu0 0.0
    %3179 = vmatprep.subr.mxu0 0.0
    %3180 = vmatpush1.msra.mxu0 0.0
    %3181 = vmatprep.subr.mxu0 0.0
    %3182 = vmatpush1.msra.mxu0 0.0
    %3183 = vmatprep.subr.mxu0 0.0
    %3184 = vmatpush1.msra.mxu0 0.0
    %3185 = vmatprep.subr.mxu0 0.0
    %3186 = vmatpush1.msra.mxu0 0.0
    %3187 = vmatprep.subr.mxu0 0.0
    %3188 = vmatpush1.msra.mxu0 0.0
    %3189 = vmatprep.subr.mxu0 0.0
    %3190 = vmatpush1.msra.mxu0 0.0
    %3191 = vmatprep.subr.mxu0 0.0
    %3192 = vmatpush1.msra.mxu0 0.0
    %3193 = vmatprep.subr.mxu0 0.0
    %3194 = vmatpush1.msra.mxu0 0.0
    %3195 = vmatprep.subr.mxu0 0.0
    %3196 = vmatpush1.msra.mxu0 0.0
    %3197 = vmatprep.subr.mxu0 0.0
    %3198 = vmatpush1.msra.mxu0 0.0
    %3199 = vmatprep.subr.mxu0 0.0
    %3200 = vmatpush1.msra.mxu0 0.0
    %3201 = vmatprep.subr.mxu0 0.0
    %3202 = vmatpush1.msra.mxu0 0.0
    %3203 = vmatprep.subr.mxu0 0.0
    %3204 = vmatpush1.msra.mxu0 0.0
    %3205 = vmatprep.subr.mxu0 0.0
    %3206 = vmatpush1.msra.mxu0 0.0
    %3207 = vmatprep.subr.mxu0 0.0
    %3208 = vmatpush1.msra.mxu0 0.0
    %3209 = vmatprep.subr.mxu0 0.0
    %3210 = vmatpush1.msra.mxu0 0.0
    %3211 = vmatprep.subr.mxu0 0.0
    %3212 = vmatpush1.msra.mxu0 0.0
    %3213 = vmatprep.subr.mxu0 0.0
    %3214 = vmatpush1.msra.mxu0 0.0
    %3215 = vmatprep.subr.mxu0 0.0
    %3216 = vmatpush1.msra.mxu0 0.0
    %3217 = vmatprep.subr.mxu0 0.0
    %3218 = vmatpush1.msra.mxu0 0.0
    %3219 = vmatprep.subr.mxu0 0.0
    %3220 = vmatpush1.msra.mxu0 0.0
    %3221 = vmatprep.subr.mxu0 0.0
    %3222 = vmatpush1.msra.mxu0 0.0
    %3223 = vmatprep.subr.mxu0 0.0
    %3224 = vmatpush1.msra.mxu0 0.0
    %3225 = vmatprep.subr.mxu0 0.0
    %3226 = vmatpush1.msra.mxu0 0.0
    %3227 = vmatprep.subr.mxu0 0.0
    %3228 = vmatpush1.msra.mxu0 0.0
    %3229 = vmatprep.subr.mxu0 0.0
    %3230 = vmatpush1.msra.mxu0 0.0
    %3231 = vmatprep.subr.mxu0 0.0
    %3232 = vmatpush1.msra.mxu0 0.0
    %3233 = vmatprep.mubr.f32.mxu0 0.0
    %3234 = vmatmul.mubr.f32.gmra.mrb[0].mxu0 %v3167
    %v3235 = vpop.f32.mrb[0].mxu0
    %v3236 = vadd.f32 0.0, %v3235
    %v3237 = vpop.f32.mrb[0].mxu0
    %3238 = vdwg.mxu0
    %v3239 = vadd.f32 %v1830, %v3236
    %v3240 = vxor.u32 %v3239, 2147483648
    %v3241 = vmul.f32 %v3240, 1.442695
    %v3242 = vpow.pop %v3241
    %v3243 = vadd.f32 %v3242, 1.0
    %v3244 = vrcp.pop %v3243
    %v3245 = vmul.f32 1.0, %v3244
    %v3246 = vtanh.pop %v3239
    %v3248 = vrot.slane %v3151, 6
    %v3250 = vmul.f32 %v3245, %v3248
    %3252 = vrot.lane.b32.xlu0 %v3246, 64
    %v3253 = vpop.permute.xlu0 %3252
    %v3255 = vmul.f32 %v3245, %v3253
    %3257 = vrot.lane.b32.xlu0 %v3255, 32
    %v3258 = vpop.permute.xlu0 %3257
    %v3260 = vadd.f32 %v3250, %v3258
    %v3261 = vtanh.pop %v3260
    %3263 = vrot.lane.b32.xlu0 %v3261, 64
    %v3264 = vpop.permute.xlu0 %3263
    %v3266 = vmul.f32 %v3245, %v3264
    %3268 = vrot.lane.b32.xlu0 %v3266, 32
    %v3269 = vpop.permute.xlu0 %3268
    %3271 = vst.msk [vmem:[#allocation4 + $0xc] sm:$0x1] %vm1936, %v3269
    %3272 = vst.msk [vmem:[%s1938 + $0xb] sm:$0x2] %vm1939, %v3269
    %v3273 = vsel %vm56, %v3269, 0
    %3275 = vmatprep.subr.mxu0 0.0
    %3276 = vmatpush1.msra.mxu0 %v1833
    %3277 = vmatprep.subr.mxu0 0.0
    %3278 = vmatpush1.msra.mxu0 %v1834
    %3279 = vmatprep.subr.mxu0 0.0
    %3280 = vmatpush1.msra.mxu0 %v1835
    %3281 = vmatprep.subr.mxu0 0.0
    %3282 = vmatpush1.msra.mxu0 %v1836
    %3283 = vmatprep.subr.mxu0 0.0
    %3284 = vmatpush1.msra.mxu0 0.0
    %3285 = vmatprep.subr.mxu0 0.0
    %3286 = vmatpush1.msra.mxu0 0.0
    %3287 = vmatprep.subr.mxu0 0.0
    %3288 = vmatpush1.msra.mxu0 0.0
    %3289 = vmatprep.subr.mxu0 0.0
    %3290 = vmatpush1.msra.mxu0 0.0
    %3291 = vmatprep.subr.mxu0 0.0
    %3292 = vmatpush1.msra.mxu0 0.0
    %3293 = vmatprep.subr.mxu0 0.0
    %3294 = vmatpush1.msra.mxu0 0.0
    %3295 = vmatprep.subr.mxu0 0.0
    %3296 = vmatpush1.msra.mxu0 0.0
    %3297 = vmatprep.subr.mxu0 0.0
    %3298 = vmatpush1.msra.mxu0 0.0
    %3299 = vmatprep.subr.mxu0 0.0
    %3300 = vmatpush1.msra.mxu0 0.0
    %3301 = vmatprep.subr.mxu0 0.0
    %3302 = vmatpush1.msra.mxu0 0.0
    %3303 = vmatprep.subr.mxu0 0.0
    %3304 = vmatpush1.msra.mxu0 0.0
    %3305 = vmatprep.subr.mxu0 0.0
    %3306 = vmatpush1.msra.mxu0 0.0
    %3307 = vmatprep.subr.mxu0 0.0
    %3308 = vmatpush1.msra.mxu0 0.0
    %3309 = vmatprep.subr.mxu0 0.0
    %3310 = vmatpush1.msra.mxu0 0.0
    %3311 = vmatprep.subr.mxu0 0.0
    %3312 = vmatpush1.msra.mxu0 0.0
    %3313 = vmatprep.subr.mxu0 0.0
    %3314 = vmatpush1.msra.mxu0 0.0
    %3315 = vmatprep.subr.mxu0 0.0
    %3316 = vmatpush1.msra.mxu0 0.0
    %3317 = vmatprep.subr.mxu0 0.0
    %3318 = vmatpush1.msra.mxu0 0.0
    %3319 = vmatprep.subr.mxu0 0.0
    %3320 = vmatpush1.msra.mxu0 0.0
    %3321 = vmatprep.subr.mxu0 0.0
    %3322 = vmatpush1.msra.mxu0 0.0
    %3323 = vmatprep.subr.mxu0 0.0
    %3324 = vmatpush1.msra.mxu0 0.0
    %3325 = vmatprep.subr.mxu0 0.0
    %3326 = vmatpush1.msra.mxu0 0.0
    %3327 = vmatprep.subr.mxu0 0.0
    %3328 = vmatpush1.msra.mxu0 0.0
    %3329 = vmatprep.subr.mxu0 0.0
    %3330 = vmatpush1.msra.mxu0 0.0
    %3331 = vmatprep.subr.mxu0 0.0
    %3332 = vmatpush1.msra.mxu0 0.0
    %3333 = vmatprep.subr.mxu0 0.0
    %3334 = vmatpush1.msra.mxu0 0.0
    %3335 = vmatprep.subr.mxu0 0.0
    %3336 = vmatpush1.msra.mxu0 0.0
    %3337 = vmatprep.subr.mxu0 0.0
    %3338 = vmatpush1.msra.mxu0 0.0
    %3339 = vmatprep.mubr.f32.mxu0 0.0
    %3340 = vmatmul.mubr.f32.gmra.mrb[0].mxu0 %v3273
    %v3341 = vpop.f32.mrb[0].mxu0
    %v3342 = vadd.f32 0.0, %v3341
    %v3343 = vpop.f32.mrb[0].mxu0
    %3344 = vdwg.mxu0
    %v3346 = vrot.slane %v3342, 6
    %v3348 = vadd.f32 %v1830, %v3346
    %v3349 = vxor.u32 %v3348, 2147483648
    %v3350 = vmul.f32 %v3349, 1.442695
    %v3351 = vpow.pop %v3350
    %v3352 = vadd.f32 %v3351, 1.0
    %v3353 = vrcp.pop %v3352
    %v3354 = vmul.f32 1.0, %v3353
    %v3355 = vtanh.pop %v3348
    %v3357 = vrot.slane %v3260, 6
    %v3359 = vmul.f32 %v3354, %v3357
    %3361 = vrot.lane.b32.xlu0 %v3355, 64
    %v3362 = vpop.permute.xlu0 %3361
    %v3364 = vmul.f32 %v3354, %v3362
    %3366 = vrot.lane.b32.xlu0 %v3364, 32
    %v3367 = vpop.permute.xlu0 %3366
    %v3369 = vadd.f32 %v3359, %v3367
    %v3370 = vtanh.pop %v3369
    %3372 = vrot.lane.b32.xlu0 %v3370, 64
    %v3373 = vpop.permute.xlu0 %3372
    %v3375 = vmul.f32 %v3354, %v3373
    %3377 = vrot.lane.b32.xlu0 %v3375, 32
    %v3378 = vpop.permute.xlu0 %3377
    %3380 = vst.msk [vmem:[#allocation4 + $0xb] sm:$0x4] %vm2048, %v3378
    %3381 = vst.msk [vmem:[%s1938 + $0xa] sm:$0x8] %vm2050, %v3378
    %v3382 = vrot.slane %v3375, 2
    %3383 = vrot.lane.b32.xlu0 %v3382, 32
    %v3384 = vpop.permute.xlu0 %3383
    %v3385 = vsel %vm56, %v3384, 0
    %3387 = vmatprep.subr.mxu0 0.0
    %3388 = vmatpush1.msra.mxu0 %v1833
    %3389 = vmatprep.subr.mxu0 0.0
    %3390 = vmatpush1.msra.mxu0 %v1834
    %3391 = vmatprep.subr.mxu0 0.0
    %3392 = vmatpush1.msra.mxu0 %v1835
    %3393 = vmatprep.subr.mxu0 0.0
    %3394 = vmatpush1.msra.mxu0 %v1836
    %3395 = vmatprep.subr.mxu0 0.0
    %3396 = vmatpush1.msra.mxu0 0.0
    %3397 = vmatprep.subr.mxu0 0.0
    %3398 = vmatpush1.msra.mxu0 0.0
    %3399 = vmatprep.subr.mxu0 0.0
    %3400 = vmatpush1.msra.mxu0 0.0
    %3401 = vmatprep.subr.mxu0 0.0
    %3402 = vmatpush1.msra.mxu0 0.0
    %3403 = vmatprep.subr.mxu0 0.0
    %3404 = vmatpush1.msra.mxu0 0.0
    %3405 = vmatprep.subr.mxu0 0.0
    %3406 = vmatpush1.msra.mxu0 0.0
    %3407 = vmatprep.subr.mxu0 0.0
    %3408 = vmatpush1.msra.mxu0 0.0
    %3409 = vmatprep.subr.mxu0 0.0
    %3410 = vmatpush1.msra.mxu0 0.0
    %3411 = vmatprep.subr.mxu0 0.0
    %3412 = vmatpush1.msra.mxu0 0.0
    %3413 = vmatprep.subr.mxu0 0.0
    %3414 = vmatpush1.msra.mxu0 0.0
    %3415 = vmatprep.subr.mxu0 0.0
    %3416 = vmatpush1.msra.mxu0 0.0
    %3417 = vmatprep.subr.mxu0 0.0
    %3418 = vmatpush1.msra.mxu0 0.0
    %3419 = vmatprep.subr.mxu0 0.0
    %3420 = vmatpush1.msra.mxu0 0.0
    %3421 = vmatprep.subr.mxu0 0.0
    %3422 = vmatpush1.msra.mxu0 0.0
    %3423 = vmatprep.subr.mxu0 0.0
    %3424 = vmatpush1.msra.mxu0 0.0
    %3425 = vmatprep.subr.mxu0 0.0
    %3426 = vmatpush1.msra.mxu0 0.0
    %3427 = vmatprep.subr.mxu0 0.0
    %3428 = vmatpush1.msra.mxu0 0.0
    %3429 = vmatprep.subr.mxu0 0.0
    %3430 = vmatpush1.msra.mxu0 0.0
    %3431 = vmatprep.subr.mxu0 0.0
    %3432 = vmatpush1.msra.mxu0 0.0
    %3433 = vmatprep.subr.mxu0 0.0
    %3434 = vmatpush1.msra.mxu0 0.0
    %3435 = vmatprep.subr.mxu0 0.0
    %3436 = vmatpush1.msra.mxu0 0.0
    %3437 = vmatprep.subr.mxu0 0.0
    %3438 = vmatpush1.msra.mxu0 0.0
    %3439 = vmatprep.subr.mxu0 0.0
    %3440 = vmatpush1.msra.mxu0 0.0
    %3441 = vmatprep.subr.mxu0 0.0
    %3442 = vmatpush1.msra.mxu0 0.0
    %3443 = vmatprep.subr.mxu0 0.0
    %3444 = vmatpush1.msra.mxu0 0.0
    %3445 = vmatprep.subr.mxu0 0.0
    %3446 = vmatpush1.msra.mxu0 0.0
    %3447 = vmatprep.subr.mxu0 0.0
    %3448 = vmatpush1.msra.mxu0 0.0
    %3449 = vmatprep.subr.mxu0 0.0
    %3450 = vmatpush1.msra.mxu0 0.0
    %3451 = vmatprep.mubr.f32.mxu0 0.0
    %3452 = vmatmul.mubr.f32.gmra.mrb[0].mxu0 %v3385
    %v3453 = vpop.f32.mrb[0].mxu0
    %v3454 = vadd.f32 0.0, %v3453
    %v3455 = vpop.f32.mrb[0].mxu0
    %3456 = vdwg.mxu0
    %v3458 = vrot.slane %v3454, 4
    %v3460 = vadd.f32 %v1830, %v3458
    %v3461 = vxor.u32 %v3460, 2147483648
    %v3462 = vmul.f32 %v3461, 1.442695
    %v3463 = vpow.pop %v3462
    %v3464 = vadd.f32 %v3463, 1.0
    %v3465 = vrcp.pop %v3464
    %v3466 = vmul.f32 1.0, %v3465
    %v3467 = vtanh.pop %v3460
    %v3469 = vrot.slane %v3369, 6
    %v3471 = vmul.f32 %v3466, %v3469
    %3473 = vrot.lane.b32.xlu0 %v3467, 64
    %v3474 = vpop.permute.xlu0 %3473
    %v3476 = vmul.f32 %v3466, %v3474
    %3478 = vrot.lane.b32.xlu0 %v3476, 32
    %v3479 = vpop.permute.xlu0 %3478
    %v3481 = vadd.f32 %v3471, %v3479
    %v3482 = vtanh.pop %v3481
    %3484 = vrot.lane.b32.xlu0 %v3482, 64
    %v3485 = vpop.permute.xlu0 %3484
    %v3487 = vmul.f32 %v3466, %v3485
    %3489 = vrot.lane.b32.xlu0 %v3487, 32
    %v3490 = vpop.permute.xlu0 %3489
    %3492 = vst.msk [vmem:[#allocation4 + $0xa] sm:$0x10] %vm2162, %v3490
    %3493 = vst.msk [vmem:[%s1938 + $0x9] sm:$0x20] %vm2164, %v3490
    %v3494 = vrot.slane %v3487, 4
    %3495 = vrot.lane.b32.xlu0 %v3494, 32
    %v3496 = vpop.permute.xlu0 %3495
    %v3497 = vsel %vm56, %v3496, 0
    %3499 = vmatprep.subr.mxu0 0.0
    %3500 = vmatpush1.msra.mxu0 %v1833
    %3501 = vmatprep.subr.mxu0 0.0
    %3502 = vmatpush1.msra.mxu0 %v1834
    %3503 = vmatprep.subr.mxu0 0.0
    %3504 = vmatpush1.msra.mxu0 %v1835
    %3505 = vmatprep.subr.mxu0 0.0
    %3506 = vmatpush1.msra.mxu0 %v1836
    %3507 = vmatprep.subr.mxu0 0.0
    %3508 = vmatpush1.msra.mxu0 0.0
    %3509 = vmatprep.subr.mxu0 0.0
    %3510 = vmatpush1.msra.mxu0 0.0
    %3511 = vmatprep.subr.mxu0 0.0
    %3512 = vmatpush1.msra.mxu0 0.0
    %3513 = vmatprep.subr.mxu0 0.0
    %3514 = vmatpush1.msra.mxu0 0.0
    %3515 = vmatprep.subr.mxu0 0.0
    %3516 = vmatpush1.msra.mxu0 0.0
    %3517 = vmatprep.subr.mxu0 0.0
    %3518 = vmatpush1.msra.mxu0 0.0
    %3519 = vmatprep.subr.mxu0 0.0
    %3520 = vmatpush1.msra.mxu0 0.0
    %3521 = vmatprep.subr.mxu0 0.0
    %3522 = vmatpush1.msra.mxu0 0.0
    %3523 = vmatprep.subr.mxu0 0.0
    %3524 = vmatpush1.msra.mxu0 0.0
    %3525 = vmatprep.subr.mxu0 0.0
    %3526 = vmatpush1.msra.mxu0 0.0
    %3527 = vmatprep.subr.mxu0 0.0
    %3528 = vmatpush1.msra.mxu0 0.0
    %3529 = vmatprep.subr.mxu0 0.0
    %3530 = vmatpush1.msra.mxu0 0.0
    %3531 = vmatprep.subr.mxu0 0.0
    %3532 = vmatpush1.msra.mxu0 0.0
    %3533 = vmatprep.subr.mxu0 0.0
    %3534 = vmatpush1.msra.mxu0 0.0
    %3535 = vmatprep.subr.mxu0 0.0
    %3536 = vmatpush1.msra.mxu0 0.0
    %3537 = vmatprep.subr.mxu0 0.0
    %3538 = vmatpush1.msra.mxu0 0.0
    %3539 = vmatprep.subr.mxu0 0.0
    %3540 = vmatpush1.msra.mxu0 0.0
    %3541 = vmatprep.subr.mxu0 0.0
    %3542 = vmatpush1.msra.mxu0 0.0
    %3543 = vmatprep.subr.mxu0 0.0
    %3544 = vmatpush1.msra.mxu0 0.0
    %3545 = vmatprep.subr.mxu0 0.0
    %3546 = vmatpush1.msra.mxu0 0.0
    %3547 = vmatprep.subr.mxu0 0.0
    %3548 = vmatpush1.msra.mxu0 0.0
    %3549 = vmatprep.subr.mxu0 0.0
    %3550 = vmatpush1.msra.mxu0 0.0
    %3551 = vmatprep.subr.mxu0 0.0
    %3552 = vmatpush1.msra.mxu0 0.0
    %3553 = vmatprep.subr.mxu0 0.0
    %3554 = vmatpush1.msra.mxu0 0.0
    %3555 = vmatprep.subr.mxu0 0.0
    %3556 = vmatpush1.msra.mxu0 0.0
    %3557 = vmatprep.subr.mxu0 0.0
    %3558 = vmatpush1.msra.mxu0 0.0
    %3559 = vmatprep.subr.mxu0 0.0
    %3560 = vmatpush1.msra.mxu0 0.0
    %3561 = vmatprep.subr.mxu0 0.0
    %3562 = vmatpush1.msra.mxu0 0.0
    %3563 = vmatprep.mubr.f32.mxu0 0.0
    %3564 = vmatmul.mubr.f32.gmra.mrb[0].mxu0 %v3497
    %v3565 = vpop.f32.mrb[0].mxu0
    %v3566 = vadd.f32 0.0, %v3565
    %v3567 = vpop.f32.mrb[0].mxu0
    %3568 = vdwg.mxu0
    %v3570 = vrot.slane %v3566, 2
    %v3572 = vadd.f32 %v1830, %v3570
    %v3573 = vxor.u32 %v3572, 2147483648
    %v3574 = vmul.f32 %v3573, 1.442695
    %v3575 = vpow.pop %v3574
    %v3576 = vadd.f32 %v3575, 1.0
    %v3577 = vrcp.pop %v3576
    %v3578 = vmul.f32 1.0, %v3577
    %v3579 = vtanh.pop %v3572
    %v3581 = vrot.slane %v3481, 6
    %v3583 = vmul.f32 %v3578, %v3581
    %3585 = vrot.lane.b32.xlu0 %v3579, 64
    %v3586 = vpop.permute.xlu0 %3585
    %v3588 = vmul.f32 %v3578, %v3586
    %3590 = vrot.lane.b32.xlu0 %v3588, 32
    %v3591 = vpop.permute.xlu0 %3590
    %v3593 = vadd.f32 %v3583, %v3591
    %v3594 = vtanh.pop %v3593
    %3596 = vrot.lane.b32.xlu0 %v3594, 64
    %v3597 = vpop.permute.xlu0 %3596
    %v3599 = vmul.f32 %v3578, %v3597
    %3601 = vrot.lane.b32.xlu0 %v3599, 32
    %v3602 = vpop.permute.xlu0 %3601
    %3604 = vst.msk [vmem:[#allocation4 + $0x9] sm:$0x40] %vm2276, %v3602
    %3605 = vst.msk [vmem:[%s1938 + $0x8] sm:$0x80] %vm2278, %v3602
    %v3606 = vld [vmem:[%s6] sm:$0xff]
    %v3607 = vld [vmem:[%s6 + $0x8] sm:$0xff]
    %v3608 = vld [vmem:[%s6 + $0x10] sm:$0xff]
    %v3609 = vld [vmem:[%s6 + $0x18] sm:$0xff]
    %v3610 = vld [vmem:[%s1] sm:$0x3]
    %v3611 = vsel %vm56, %v1718, 0
    %3613 = vmatprep.subr.mxu0 0.0
    %3614 = vmatpush1.msra.mxu0 %v3606
    %3615 = vmatprep.subr.mxu0 0.0
    %3616 = vmatpush1.msra.mxu0 %v3607
    %3617 = vmatprep.subr.mxu0 0.0
    %3618 = vmatpush1.msra.mxu0 %v3608
    %3619 = vmatprep.subr.mxu0 0.0
    %3620 = vmatpush1.msra.mxu0 %v3609
    %3621 = vmatprep.subr.mxu0 0.0
    %3622 = vmatpush1.msra.mxu0 0.0
    %3623 = vmatprep.subr.mxu0 0.0
    %3624 = vmatpush1.msra.mxu0 0.0
    %3625 = vmatprep.subr.mxu0 0.0
    %3626 = vmatpush1.msra.mxu0 0.0
    %3627 = vmatprep.subr.mxu0 0.0
    %3628 = vmatpush1.msra.mxu0 0.0
    %3629 = vmatprep.subr.mxu0 0.0
    %3630 = vmatpush1.msra.mxu0 0.0
    %3631 = vmatprep.subr.mxu0 0.0
    %3632 = vmatpush1.msra.mxu0 0.0
    %3633 = vmatprep.subr.mxu0 0.0
    %3634 = vmatpush1.msra.mxu0 0.0
    %3635 = vmatprep.subr.mxu0 0.0
    %3636 = vmatpush1.msra.mxu0 0.0
    %3637 = vmatprep.subr.mxu0 0.0
    %3638 = vmatpush1.msra.mxu0 0.0
    %3639 = vmatprep.subr.mxu0 0.0
    %3640 = vmatpush1.msra.mxu0 0.0
    %3641 = vmatprep.subr.mxu0 0.0
    %3642 = vmatpush1.msra.mxu0 0.0
    %3643 = vmatprep.subr.mxu0 0.0
    %3644 = vmatpush1.msra.mxu0 0.0
    %3645 = vmatprep.subr.mxu0 0.0
    %3646 = vmatpush1.msra.mxu0 0.0
    %3647 = vmatprep.subr.mxu0 0.0
    %3648 = vmatpush1.msra.mxu0 0.0
    %3649 = vmatprep.subr.mxu0 0.0
    %3650 = vmatpush1.msra.mxu0 0.0
    %3651 = vmatprep.subr.mxu0 0.0
    %3652 = vmatpush1.msra.mxu0 0.0
    %3653 = vmatprep.subr.mxu0 0.0
    %3654 = vmatpush1.msra.mxu0 0.0
    %3655 = vmatprep.subr.mxu0 0.0
    %3656 = vmatpush1.msra.mxu0 0.0
    %3657 = vmatprep.subr.mxu0 0.0
    %3658 = vmatpush1.msra.mxu0 0.0
    %3659 = vmatprep.subr.mxu0 0.0
    %3660 = vmatpush1.msra.mxu0 0.0
    %3661 = vmatprep.subr.mxu0 0.0
    %3662 = vmatpush1.msra.mxu0 0.0
    %3663 = vmatprep.subr.mxu0 0.0
    %3664 = vmatpush1.msra.mxu0 0.0
    %3665 = vmatprep.subr.mxu0 0.0
    %3666 = vmatpush1.msra.mxu0 0.0
    %3667 = vmatprep.subr.mxu0 0.0
    %3668 = vmatpush1.msra.mxu0 0.0
    %3669 = vmatprep.subr.mxu0 0.0
    %3670 = vmatpush1.msra.mxu0 0.0
    %3671 = vmatprep.subr.mxu0 0.0
    %3672 = vmatpush1.msra.mxu0 0.0
    %3673 = vmatprep.subr.mxu0 0.0
    %3674 = vmatpush1.msra.mxu0 0.0
    %3675 = vmatprep.subr.mxu0 0.0
    %3676 = vmatpush1.msra.mxu0 0.0
    %3677 = vmatprep.mubr.f32.mxu0 0.0
    %3678 = vmatmul.mubr.f32.gmra.mrb[0].mxu0 %v3611
    %v3679 = vpop.f32.mrb[0].mxu0
    %v3680 = vadd.f32 0.0, %v3679
    %v3681 = vpop.f32.mrb[0].mxu0
    %3682 = vdwg.mxu0
    %v3683 = vadd.f32 %v3610, %v3680
    %v3684 = vxor.u32 %v3683, 2147483648
    %v3685 = vmul.f32 %v3684, 1.442695
    %v3686 = vpow.pop %v3685
    %v3687 = vadd.f32 %v3686, 1.0
    %v3688 = vrcp.pop %v3687
    %v3689 = vmul.f32 1.0, %v3688
    %v3690 = vtanh.pop %v3683
    %v3691 = vmul.f32 %v3689, %v1709
    %3693 = vrot.lane.b32.xlu0 %v3690, 64
    %v3694 = vpop.permute.xlu0 %3693
    %v3696 = vmul.f32 %v3689, %v3694
    %3698 = vrot.lane.b32.xlu0 %v3696, 32
    %v3699 = vpop.permute.xlu0 %3698
    %v3701 = vadd.f32 %v3691, %v3699
    %v3702 = vtanh.pop %v3701
    %3704 = vrot.lane.b32.xlu0 %v3702, 64
    %v3705 = vpop.permute.xlu0 %3704
    %v3707 = vmul.f32 %v3689, %v3705
    %3709 = vrot.lane.b32.xlu0 %v3707, 32
    %v3710 = vpop.permute.xlu0 %3709
    %3712 = vst.msk [vmem:[#allocation3] sm:$0x3] %vm159, %v3710
    %s3713 = scalar_lea.vmem %s1, 2
    %v3714 = vld [vmem:[%s3713] sm:$0x3]
    %v3715 = vsel %vm56, %v3710, 0
    %3717 = vmatprep.subr.mxu0 0.0
    %3718 = vmatpush1.msra.mxu0 %v3606
    %3719 = vmatprep.subr.mxu0 0.0
    %3720 = vmatpush1.msra.mxu0 %v3607
    %3721 = vmatprep.subr.mxu0 0.0
    %3722 = vmatpush1.msra.mxu0 %v3608
    %3723 = vmatprep.subr.mxu0 0.0
    %3724 = vmatpush1.msra.mxu0 %v3609
    %3725 = vmatprep.subr.mxu0 0.0
    %3726 = vmatpush1.msra.mxu0 0.0
    %3727 = vmatprep.subr.mxu0 0.0
    %3728 = vmatpush1.msra.mxu0 0.0
    %3729 = vmatprep.subr.mxu0 0.0
    %3730 = vmatpush1.msra.mxu0 0.0
    %3731 = vmatprep.subr.mxu0 0.0
    %3732 = vmatpush1.msra.mxu0 0.0
    %3733 = vmatprep.subr.mxu0 0.0
    %3734 = vmatpush1.msra.mxu0 0.0
    %3735 = vmatprep.subr.mxu0 0.0
    %3736 = vmatpush1.msra.mxu0 0.0
    %3737 = vmatprep.subr.mxu0 0.0
    %3738 = vmatpush1.msra.mxu0 0.0
    %3739 = vmatprep.subr.mxu0 0.0
    %3740 = vmatpush1.msra.mxu0 0.0
    %3741 = vmatprep.subr.mxu0 0.0
    %3742 = vmatpush1.msra.mxu0 0.0
    %3743 = vmatprep.subr.mxu0 0.0
    %3744 = vmatpush1.msra.mxu0 0.0
    %3745 = vmatprep.subr.mxu0 0.0
    %3746 = vmatpush1.msra.mxu0 0.0
    %3747 = vmatprep.subr.mxu0 0.0
    %3748 = vmatpush1.msra.mxu0 0.0
    %3749 = vmatprep.subr.mxu0 0.0
    %3750 = vmatpush1.msra.mxu0 0.0
    %3751 = vmatprep.subr.mxu0 0.0
    %3752 = vmatpush1.msra.mxu0 0.0
    %3753 = vmatprep.subr.mxu0 0.0
    %3754 = vmatpush1.msra.mxu0 0.0
    %3755 = vmatprep.subr.mxu0 0.0
    %3756 = vmatpush1.msra.mxu0 0.0
    %3757 = vmatprep.subr.mxu0 0.0
    %3758 = vmatpush1.msra.mxu0 0.0
    %3759 = vmatprep.subr.mxu0 0.0
    %3760 = vmatpush1.msra.mxu0 0.0
    %3761 = vmatprep.subr.mxu0 0.0
    %3762 = vmatpush1.msra.mxu0 0.0
    %3763 = vmatprep.subr.mxu0 0.0
    %3764 = vmatpush1.msra.mxu0 0.0
    %3765 = vmatprep.subr.mxu0 0.0
    %3766 = vmatpush1.msra.mxu0 0.0
    %3767 = vmatprep.subr.mxu0 0.0
    %3768 = vmatpush1.msra.mxu0 0.0
    %3769 = vmatprep.subr.mxu0 0.0
    %3770 = vmatpush1.msra.mxu0 0.0
    %3771 = vmatprep.subr.mxu0 0.0
    %3772 = vmatpush1.msra.mxu0 0.0
    %3773 = vmatprep.subr.mxu0 0.0
    %3774 = vmatpush1.msra.mxu0 0.0
    %3775 = vmatprep.subr.mxu0 0.0
    %3776 = vmatpush1.msra.mxu0 0.0
    %3777 = vmatprep.subr.mxu0 0.0
    %3778 = vmatpush1.msra.mxu0 0.0
    %3779 = vmatprep.subr.mxu0 0.0
    %3780 = vmatpush1.msra.mxu0 0.0
    %3781 = vmatprep.mubr.f32.mxu0 0.0
    %3782 = vmatmul.mubr.f32.gmra.mrb[0].mxu0 %v3715
    %v3783 = vpop.f32.mrb[0].mxu0
    %v3784 = vadd.f32 0.0, %v3783
    %v3785 = vpop.f32.mrb[0].mxu0
    %3786 = vdwg.mxu0
    %v3787 = vadd.f32 %v3714, %v3784
    %v3788 = vxor.u32 %v3787, 2147483648
    %v3789 = vmul.f32 %v3788, 1.442695
    %v3790 = vpow.pop %v3789
    %v3791 = vadd.f32 %v3790, 1.0
    %v3792 = vrcp.pop %v3791
    %v3793 = vmul.f32 1.0, %v3792
    %v3794 = vtanh.pop %v3787
    %v3795 = vmul.f32 %v3793, %v3701
    %3797 = vrot.lane.b32.xlu0 %v3794, 64
    %v3798 = vpop.permute.xlu0 %3797
    %v3800 = vmul.f32 %v3793, %v3798
    %3802 = vrot.lane.b32.xlu0 %v3800, 32
    %v3803 = vpop.permute.xlu0 %3802
    %v3805 = vadd.f32 %v3795, %v3803
    %v3806 = vtanh.pop %v3805
    %3808 = vrot.lane.b32.xlu0 %v3806, 64
    %v3809 = vpop.permute.xlu0 %3808
    %v3811 = vmul.f32 %v3793, %v3809
    %3813 = vrot.lane.b32.xlu0 %v3811, 32
    %v3814 = vpop.permute.xlu0 %3813
    %3816 = vst.msk [vmem:[#allocation3 + $0x2] sm:$0x3] %vm159, %v3814
    %s3817 = scalar_lea.vmem %s1, 4
    %v3818 = vld [vmem:[%s3817] sm:$0x3]
    %v3819 = vsel %vm56, %v3814, 0
    %3821 = vmatprep.subr.mxu0 0.0
    %3822 = vmatpush1.msra.mxu0 %v3606
    %3823 = vmatprep.subr.mxu0 0.0
    %3824 = vmatpush1.msra.mxu0 %v3607
    %3825 = vmatprep.subr.mxu0 0.0
    %3826 = vmatpush1.msra.mxu0 %v3608
    %3827 = vmatprep.subr.mxu0 0.0
    %3828 = vmatpush1.msra.mxu0 %v3609
    %3829 = vmatprep.subr.mxu0 0.0
    %3830 = vmatpush1.msra.mxu0 0.0
    %3831 = vmatprep.subr.mxu0 0.0
    %3832 = vmatpush1.msra.mxu0 0.0
    %3833 = vmatprep.subr.mxu0 0.0
    %3834 = vmatpush1.msra.mxu0 0.0
    %3835 = vmatprep.subr.mxu0 0.0
    %3836 = vmatpush1.msra.mxu0 0.0
    %3837 = vmatprep.subr.mxu0 0.0
    %3838 = vmatpush1.msra.mxu0 0.0
    %3839 = vmatprep.subr.mxu0 0.0
    %3840 = vmatpush1.msra.mxu0 0.0
    %3841 = vmatprep.subr.mxu0 0.0
    %3842 = vmatpush1.msra.mxu0 0.0
    %3843 = vmatprep.subr.mxu0 0.0
    %3844 = vmatpush1.msra.mxu0 0.0
    %3845 = vmatprep.subr.mxu0 0.0
    %3846 = vmatpush1.msra.mxu0 0.0
    %3847 = vmatprep.subr.mxu0 0.0
    %3848 = vmatpush1.msra.mxu0 0.0
    %3849 = vmatprep.subr.mxu0 0.0
    %3850 = vmatpush1.msra.mxu0 0.0
    %3851 = vmatprep.subr.mxu0 0.0
    %3852 = vmatpush1.msra.mxu0 0.0
    %3853 = vmatprep.subr.mxu0 0.0
    %3854 = vmatpush1.msra.mxu0 0.0
    %3855 = vmatprep.subr.mxu0 0.0
    %3856 = vmatpush1.msra.mxu0 0.0
    %3857 = vmatprep.subr.mxu0 0.0
    %3858 = vmatpush1.msra.mxu0 0.0
    %3859 = vmatprep.subr.mxu0 0.0
    %3860 = vmatpush1.msra.mxu0 0.0
    %3861 = vmatprep.subr.mxu0 0.0
    %3862 = vmatpush1.msra.mxu0 0.0
    %3863 = vmatprep.subr.mxu0 0.0
    %3864 = vmatpush1.msra.mxu0 0.0
    %3865 = vmatprep.subr.mxu0 0.0
    %3866 = vmatpush1.msra.mxu0 0.0
    %3867 = vmatprep.subr.mxu0 0.0
    %3868 = vmatpush1.msra.mxu0 0.0
    %3869 = vmatprep.subr.mxu0 0.0
    %3870 = vmatpush1.msra.mxu0 0.0
    %3871 = vmatprep.subr.mxu0 0.0
    %3872 = vmatpush1.msra.mxu0 0.0
    %3873 = vmatprep.subr.mxu0 0.0
    %3874 = vmatpush1.msra.mxu0 0.0
    %3875 = vmatprep.subr.mxu0 0.0
    %3876 = vmatpush1.msra.mxu0 0.0
    %3877 = vmatprep.subr.mxu0 0.0
    %3878 = vmatpush1.msra.mxu0 0.0
    %3879 = vmatprep.subr.mxu0 0.0
    %3880 = vmatpush1.msra.mxu0 0.0
    %3881 = vmatprep.subr.mxu0 0.0
    %3882 = vmatpush1.msra.mxu0 0.0
    %3883 = vmatprep.subr.mxu0 0.0
    %3884 = vmatpush1.msra.mxu0 0.0
    %3885 = vmatprep.mubr.f32.mxu0 0.0
    %3886 = vmatmul.mubr.f32.gmra.mrb[0].mxu0 %v3819
    %v3887 = vpop.f32.mrb[0].mxu0
    %v3888 = vadd.f32 0.0, %v3887
    %v3889 = vpop.f32.mrb[0].mxu0
    %3890 = vdwg.mxu0
    %v3891 = vadd.f32 %v3818, %v3888
    %v3892 = vxor.u32 %v3891, 2147483648
    %v3893 = vmul.f32 %v3892, 1.442695
    %v3894 = vpow.pop %v3893
    %v3895 = vadd.f32 %v3894, 1.0
    %v3896 = vrcp.pop %v3895
    %v3897 = vmul.f32 1.0, %v3896
    %v3898 = vtanh.pop %v3891
    %v3899 = vmul.f32 %v3897, %v3805
    %3901 = vrot.lane.b32.xlu0 %v3898, 64
    %v3902 = vpop.permute.xlu0 %3901
    %v3904 = vmul.f32 %v3897, %v3902
    %3906 = vrot.lane.b32.xlu0 %v3904, 32
    %v3907 = vpop.permute.xlu0 %3906
    %v3909 = vadd.f32 %v3899, %v3907
    %v3910 = vtanh.pop %v3909
    %3912 = vrot.lane.b32.xlu0 %v3910, 64
    %v3913 = vpop.permute.xlu0 %3912
    %v3915 = vmul.f32 %v3897, %v3913
    %3917 = vrot.lane.b32.xlu0 %v3915, 32
    %v3918 = vpop.permute.xlu0 %3917
    %3920 = vst.msk [vmem:[#allocation3 + $0x4] sm:$0x3] %vm159, %v3918
    %s3921 = scalar_lea.vmem %s1, 6
    %v3922 = vld [vmem:[%s3921] sm:$0x3]
    %v3923 = vsel %vm56, %v3918, 0
    %3925 = vmatprep.subr.mxu0 0.0
    %3926 = vmatpush1.msra.mxu0 %v3606
    %3927 = vmatprep.subr.mxu0 0.0
    %3928 = vmatpush1.msra.mxu0 %v3607
    %3929 = vmatprep.subr.mxu0 0.0
    %3930 = vmatpush1.msra.mxu0 %v3608
    %3931 = vmatprep.subr.mxu0 0.0
    %3932 = vmatpush1.msra.mxu0 %v3609
    %3933 = vmatprep.subr.mxu0 0.0
    %3934 = vmatpush1.msra.mxu0 0.0
    %3935 = vmatprep.subr.mxu0 0.0
    %3936 = vmatpush1.msra.mxu0 0.0
    %3937 = vmatprep.subr.mxu0 0.0
    %3938 = vmatpush1.msra.mxu0 0.0
    %3939 = vmatprep.subr.mxu0 0.0
    %3940 = vmatpush1.msra.mxu0 0.0
    %3941 = vmatprep.subr.mxu0 0.0
    %3942 = vmatpush1.msra.mxu0 0.0
    %3943 = vmatprep.subr.mxu0 0.0
    %3944 = vmatpush1.msra.mxu0 0.0
    %3945 = vmatprep.subr.mxu0 0.0
    %3946 = vmatpush1.msra.mxu0 0.0
    %3947 = vmatprep.subr.mxu0 0.0
    %3948 = vmatpush1.msra.mxu0 0.0
    %3949 = vmatprep.subr.mxu0 0.0
    %3950 = vmatpush1.msra.mxu0 0.0
    %3951 = vmatprep.subr.mxu0 0.0
    %3952 = vmatpush1.msra.mxu0 0.0
    %3953 = vmatprep.subr.mxu0 0.0
    %3954 = vmatpush1.msra.mxu0 0.0
    %3955 = vmatprep.subr.mxu0 0.0
    %3956 = vmatpush1.msra.mxu0 0.0
    %3957 = vmatprep.subr.mxu0 0.0
    %3958 = vmatpush1.msra.mxu0 0.0
    %3959 = vmatprep.subr.mxu0 0.0
    %3960 = vmatpush1.msra.mxu0 0.0
    %3961 = vmatprep.subr.mxu0 0.0
    %3962 = vmatpush1.msra.mxu0 0.0
    %3963 = vmatprep.subr.mxu0 0.0
    %3964 = vmatpush1.msra.mxu0 0.0
    %3965 = vmatprep.subr.mxu0 0.0
    %3966 = vmatpush1.msra.mxu0 0.0
    %3967 = vmatprep.subr.mxu0 0.0
    %3968 = vmatpush1.msra.mxu0 0.0
    %3969 = vmatprep.subr.mxu0 0.0
    %3970 = vmatpush1.msra.mxu0 0.0
    %3971 = vmatprep.subr.mxu0 0.0
    %3972 = vmatpush1.msra.mxu0 0.0
    %3973 = vmatprep.subr.mxu0 0.0
    %3974 = vmatpush1.msra.mxu0 0.0
    %3975 = vmatprep.subr.mxu0 0.0
    %3976 = vmatpush1.msra.mxu0 0.0
    %3977 = vmatprep.subr.mxu0 0.0
    %3978 = vmatpush1.msra.mxu0 0.0
    %3979 = vmatprep.subr.mxu0 0.0
    %3980 = vmatpush1.msra.mxu0 0.0
    %3981 = vmatprep.subr.mxu0 0.0
    %3982 = vmatpush1.msra.mxu0 0.0
    %3983 = vmatprep.subr.mxu0 0.0
    %3984 = vmatpush1.msra.mxu0 0.0
    %3985 = vmatprep.subr.mxu0 0.0
    %3986 = vmatpush1.msra.mxu0 0.0
    %3987 = vmatprep.subr.mxu0 0.0
    %3988 = vmatpush1.msra.mxu0 0.0
    %3989 = vmatprep.mubr.f32.mxu0 0.0
    %3990 = vmatmul.mubr.f32.gmra.mrb[0].mxu0 %v3923
    %v3991 = vpop.f32.mrb[0].mxu0
    %v3992 = vadd.f32 0.0, %v3991
    %v3993 = vpop.f32.mrb[0].mxu0
    %3994 = vdwg.mxu0
    %v3995 = vadd.f32 %v3922, %v3992
    %v3996 = vxor.u32 %v3995, 2147483648
    %v3997 = vmul.f32 %v3996, 1.442695
    %v3998 = vpow.pop %v3997
    %v3999 = vadd.f32 %v3998, 1.0
    %v4000 = vrcp.pop %v3999
    %v4001 = vmul.f32 1.0, %v4000
    %v4002 = vtanh.pop %v3995
    %v4003 = vmul.f32 %v4001, %v3909
    %4005 = vrot.lane.b32.xlu0 %v4002, 64
    %v4006 = vpop.permute.xlu0 %4005
    %v4008 = vmul.f32 %v4001, %v4006
    %4010 = vrot.lane.b32.xlu0 %v4008, 32
    %v4011 = vpop.permute.xlu0 %4010
    %v4013 = vadd.f32 %v4003, %v4011
    %v4014 = vtanh.pop %v4013
    %4016 = vrot.lane.b32.xlu0 %v4014, 64
    %v4017 = vpop.permute.xlu0 %4016
    %v4019 = vmul.f32 %v4001, %v4017
    %4021 = vrot.lane.b32.xlu0 %v4019, 32
    %v4022 = vpop.permute.xlu0 %4021
    %4024 = vst.msk [vmem:[#allocation3 + $0x6] sm:$0x3] %vm159, %v4022
    %s4025 = scalar_lea.vmem %s1, 8
    %v4026 = vld [vmem:[%s4025] sm:$0x3]
    %v4027 = vsel %vm56, %v4022, 0
    %4029 = vmatprep.subr.mxu0 0.0
    %4030 = vmatpush1.msra.mxu0 %v3606
    %4031 = vmatprep.subr.mxu0 0.0
    %4032 = vmatpush1.msra.mxu0 %v3607
    %4033 = vmatprep.subr.mxu0 0.0
    %4034 = vmatpush1.msra.mxu0 %v3608
    %4035 = vmatprep.subr.mxu0 0.0
    %4036 = vmatpush1.msra.mxu0 %v3609
    %4037 = vmatprep.subr.mxu0 0.0
    %4038 = vmatpush1.msra.mxu0 0.0
    %4039 = vmatprep.subr.mxu0 0.0
    %4040 = vmatpush1.msra.mxu0 0.0
    %4041 = vmatprep.subr.mxu0 0.0
    %4042 = vmatpush1.msra.mxu0 0.0
    %4043 = vmatprep.subr.mxu0 0.0
    %4044 = vmatpush1.msra.mxu0 0.0
    %4045 = vmatprep.subr.mxu0 0.0
    %4046 = vmatpush1.msra.mxu0 0.0
    %4047 = vmatprep.subr.mxu0 0.0
    %4048 = vmatpush1.msra.mxu0 0.0
    %4049 = vmatprep.subr.mxu0 0.0
    %4050 = vmatpush1.msra.mxu0 0.0
    %4051 = vmatprep.subr.mxu0 0.0
    %4052 = vmatpush1.msra.mxu0 0.0
    %4053 = vmatprep.subr.mxu0 0.0
    %4054 = vmatpush1.msra.mxu0 0.0
    %4055 = vmatprep.subr.mxu0 0.0
    %4056 = vmatpush1.msra.mxu0 0.0
    %4057 = vmatprep.subr.mxu0 0.0
    %4058 = vmatpush1.msra.mxu0 0.0
    %4059 = vmatprep.subr.mxu0 0.0
    %4060 = vmatpush1.msra.mxu0 0.0
    %4061 = vmatprep.subr.mxu0 0.0
    %4062 = vmatpush1.msra.mxu0 0.0
    %4063 = vmatprep.subr.mxu0 0.0
    %4064 = vmatpush1.msra.mxu0 0.0
    %4065 = vmatprep.subr.mxu0 0.0
    %4066 = vmatpush1.msra.mxu0 0.0
    %4067 = vmatprep.subr.mxu0 0.0
    %4068 = vmatpush1.msra.mxu0 0.0
    %4069 = vmatprep.subr.mxu0 0.0
    %4070 = vmatpush1.msra.mxu0 0.0
    %4071 = vmatprep.subr.mxu0 0.0
    %4072 = vmatpush1.msra.mxu0 0.0
    %4073 = vmatprep.subr.mxu0 0.0
    %4074 = vmatpush1.msra.mxu0 0.0
    %4075 = vmatprep.subr.mxu0 0.0
    %4076 = vmatpush1.msra.mxu0 0.0
    %4077 = vmatprep.subr.mxu0 0.0
    %4078 = vmatpush1.msra.mxu0 0.0
    %4079 = vmatprep.subr.mxu0 0.0
    %4080 = vmatpush1.msra.mxu0 0.0
    %4081 = vmatprep.subr.mxu0 0.0
    %4082 = vmatpush1.msra.mxu0 0.0
    %4083 = vmatprep.subr.mxu0 0.0
    %4084 = vmatpush1.msra.mxu0 0.0
    %4085 = vmatprep.subr.mxu0 0.0
    %4086 = vmatpush1.msra.mxu0 0.0
    %4087 = vmatprep.subr.mxu0 0.0
    %4088 = vmatpush1.msra.mxu0 0.0
    %4089 = vmatprep.subr.mxu0 0.0
    %4090 = vmatpush1.msra.mxu0 0.0
    %4091 = vmatprep.subr.mxu0 0.0
    %4092 = vmatpush1.msra.mxu0 0.0
    %4093 = vmatprep.mubr.f32.mxu0 0.0
    %4094 = vmatmul.mubr.f32.gmra.mrb[0].mxu0 %v4027
    %v4095 = vpop.f32.mrb[0].mxu0
    %v4096 = vadd.f32 0.0, %v4095
    %v4097 = vpop.f32.mrb[0].mxu0
    %4098 = vdwg.mxu0
    %v4099 = vadd.f32 %v4026, %v4096
    %v4100 = vxor.u32 %v4099, 2147483648
    %v4101 = vmul.f32 %v4100, 1.442695
    %v4102 = vpow.pop %v4101
    %v4103 = vadd.f32 %v4102, 1.0
    %v4104 = vrcp.pop %v4103
    %v4105 = vmul.f32 1.0, %v4104
    %v4106 = vtanh.pop %v4099
    %v4107 = vmul.f32 %v4105, %v4013
    %4109 = vrot.lane.b32.xlu0 %v4106, 64
    %v4110 = vpop.permute.xlu0 %4109
    %v4112 = vmul.f32 %v4105, %v4110
    %4114 = vrot.lane.b32.xlu0 %v4112, 32
    %v4115 = vpop.permute.xlu0 %4114
    %v4117 = vadd.f32 %v4107, %v4115
    %v4118 = vtanh.pop %v4117
    %4120 = vrot.lane.b32.xlu0 %v4118, 64
    %v4121 = vpop.permute.xlu0 %4120
    %v4123 = vmul.f32 %v4105, %v4121
    %4125 = vrot.lane.b32.xlu0 %v4123, 32
    %v4126 = vpop.permute.xlu0 %4125
    %4128 = vst.msk [vmem:[#allocation3 + $0x8] sm:$0x3] %vm159, %v4126
    %s4129 = scalar_lea.vmem %s1, 10
    %v4130 = vld [vmem:[%s4129] sm:$0x3]
    %v4131 = vsel %vm56, %v4126, 0
    %4133 = vmatprep.subr.mxu0 0.0
    %4134 = vmatpush1.msra.mxu0 %v3606
    %4135 = vmatprep.subr.mxu0 0.0
    %4136 = vmatpush1.msra.mxu0 %v3607
    %4137 = vmatprep.subr.mxu0 0.0
    %4138 = vmatpush1.msra.mxu0 %v3608
    %4139 = vmatprep.subr.mxu0 0.0
    %4140 = vmatpush1.msra.mxu0 %v3609
    %4141 = vmatprep.subr.mxu0 0.0
    %4142 = vmatpush1.msra.mxu0 0.0
    %4143 = vmatprep.subr.mxu0 0.0
    %4144 = vmatpush1.msra.mxu0 0.0
    %4145 = vmatprep.subr.mxu0 0.0
    %4146 = vmatpush1.msra.mxu0 0.0
    %4147 = vmatprep.subr.mxu0 0.0
    %4148 = vmatpush1.msra.mxu0 0.0
    %4149 = vmatprep.subr.mxu0 0.0
    %4150 = vmatpush1.msra.mxu0 0.0
    %4151 = vmatprep.subr.mxu0 0.0
    %4152 = vmatpush1.msra.mxu0 0.0
    %4153 = vmatprep.subr.mxu0 0.0
    %4154 = vmatpush1.msra.mxu0 0.0
    %4155 = vmatprep.subr.mxu0 0.0
    %4156 = vmatpush1.msra.mxu0 0.0
    %4157 = vmatprep.subr.mxu0 0.0
    %4158 = vmatpush1.msra.mxu0 0.0
    %4159 = vmatprep.subr.mxu0 0.0
    %4160 = vmatpush1.msra.mxu0 0.0
    %4161 = vmatprep.subr.mxu0 0.0
    %4162 = vmatpush1.msra.mxu0 0.0
    %4163 = vmatprep.subr.mxu0 0.0
    %4164 = vmatpush1.msra.mxu0 0.0
    %4165 = vmatprep.subr.mxu0 0.0
    %4166 = vmatpush1.msra.mxu0 0.0
    %4167 = vmatprep.subr.mxu0 0.0
    %4168 = vmatpush1.msra.mxu0 0.0
    %4169 = vmatprep.subr.mxu0 0.0
    %4170 = vmatpush1.msra.mxu0 0.0
    %4171 = vmatprep.subr.mxu0 0.0
    %4172 = vmatpush1.msra.mxu0 0.0
    %4173 = vmatprep.subr.mxu0 0.0
    %4174 = vmatpush1.msra.mxu0 0.0
    %4175 = vmatprep.subr.mxu0 0.0
    %4176 = vmatpush1.msra.mxu0 0.0
    %4177 = vmatprep.subr.mxu0 0.0
    %4178 = vmatpush1.msra.mxu0 0.0
    %4179 = vmatprep.subr.mxu0 0.0
    %4180 = vmatpush1.msra.mxu0 0.0
    %4181 = vmatprep.subr.mxu0 0.0
    %4182 = vmatpush1.msra.mxu0 0.0
    %4183 = vmatprep.subr.mxu0 0.0
    %4184 = vmatpush1.msra.mxu0 0.0
    %4185 = vmatprep.subr.mxu0 0.0
    %4186 = vmatpush1.msra.mxu0 0.0
    %4187 = vmatprep.subr.mxu0 0.0
    %4188 = vmatpush1.msra.mxu0 0.0
    %4189 = vmatprep.subr.mxu0 0.0
    %4190 = vmatpush1.msra.mxu0 0.0
    %4191 = vmatprep.subr.mxu0 0.0
    %4192 = vmatpush1.msra.mxu0 0.0
    %4193 = vmatprep.subr.mxu0 0.0
    %4194 = vmatpush1.msra.mxu0 0.0
    %4195 = vmatprep.subr.mxu0 0.0
    %4196 = vmatpush1.msra.mxu0 0.0
    %4197 = vmatprep.mubr.f32.mxu0 0.0
    %4198 = vmatmul.mubr.f32.gmra.mrb[0].mxu0 %v4131
    %v4199 = vpop.f32.mrb[0].mxu0
    %v4200 = vadd.f32 0.0, %v4199
    %v4201 = vpop.f32.mrb[0].mxu0
    %4202 = vdwg.mxu0
    %v4203 = vadd.f32 %v4130, %v4200
    %v4204 = vxor.u32 %v4203, 2147483648
    %v4205 = vmul.f32 %v4204, 1.442695
    %v4206 = vpow.pop %v4205
    %v4207 = vadd.f32 %v4206, 1.0
    %v4208 = vrcp.pop %v4207
    %v4209 = vmul.f32 1.0, %v4208
    %v4210 = vtanh.pop %v4203
    %v4211 = vmul.f32 %v4209, %v4117
    %4213 = vrot.lane.b32.xlu0 %v4210, 64
    %v4214 = vpop.permute.xlu0 %4213
    %v4216 = vmul.f32 %v4209, %v4214
    %4218 = vrot.lane.b32.xlu0 %v4216, 32
    %v4219 = vpop.permute.xlu0 %4218
    %v4221 = vadd.f32 %v4211, %v4219
    %v4222 = vtanh.pop %v4221
    %4224 = vrot.lane.b32.xlu0 %v4222, 64
    %v4225 = vpop.permute.xlu0 %4224
    %v4227 = vmul.f32 %v4209, %v4225
    %4229 = vrot.lane.b32.xlu0 %v4227, 32
    %v4230 = vpop.permute.xlu0 %4229
    %4232 = vst.msk [vmem:[#allocation3 + $0xa] sm:$0x3] %vm159, %v4230
    %s4233 = scalar_lea.vmem %s1, 12
    %v4234 = vld [vmem:[%s4233] sm:$0x3]
    %v4235 = vsel %vm56, %v4230, 0
    %4237 = vmatprep.subr.mxu0 0.0
    %4238 = vmatpush1.msra.mxu0 %v3606
    %4239 = vmatprep.subr.mxu0 0.0
    %4240 = vmatpush1.msra.mxu0 %v3607
    %4241 = vmatprep.subr.mxu0 0.0
    %4242 = vmatpush1.msra.mxu0 %v3608
    %4243 = vmatprep.subr.mxu0 0.0
    %4244 = vmatpush1.msra.mxu0 %v3609
    %4245 = vmatprep.subr.mxu0 0.0
    %4246 = vmatpush1.msra.mxu0 0.0
    %4247 = vmatprep.subr.mxu0 0.0
    %4248 = vmatpush1.msra.mxu0 0.0
    %4249 = vmatprep.subr.mxu0 0.0
    %4250 = vmatpush1.msra.mxu0 0.0
    %4251 = vmatprep.subr.mxu0 0.0
    %4252 = vmatpush1.msra.mxu0 0.0
    %4253 = vmatprep.subr.mxu0 0.0
    %4254 = vmatpush1.msra.mxu0 0.0
    %4255 = vmatprep.subr.mxu0 0.0
    %4256 = vmatpush1.msra.mxu0 0.0
    %4257 = vmatprep.subr.mxu0 0.0
    %4258 = vmatpush1.msra.mxu0 0.0
    %4259 = vmatprep.subr.mxu0 0.0
    %4260 = vmatpush1.msra.mxu0 0.0
    %4261 = vmatprep.subr.mxu0 0.0
    %4262 = vmatpush1.msra.mxu0 0.0
    %4263 = vmatprep.subr.mxu0 0.0
    %4264 = vmatpush1.msra.mxu0 0.0
    %4265 = vmatprep.subr.mxu0 0.0
    %4266 = vmatpush1.msra.mxu0 0.0
    %4267 = vmatprep.subr.mxu0 0.0
    %4268 = vmatpush1.msra.mxu0 0.0
    %4269 = vmatprep.subr.mxu0 0.0
    %4270 = vmatpush1.msra.mxu0 0.0
    %4271 = vmatprep.subr.mxu0 0.0
    %4272 = vmatpush1.msra.mxu0 0.0
    %4273 = vmatprep.subr.mxu0 0.0
    %4274 = vmatpush1.msra.mxu0 0.0
    %4275 = vmatprep.subr.mxu0 0.0
    %4276 = vmatpush1.msra.mxu0 0.0
    %4277 = vmatprep.subr.mxu0 0.0
    %4278 = vmatpush1.msra.mxu0 0.0
    %4279 = vmatprep.subr.mxu0 0.0
    %4280 = vmatpush1.msra.mxu0 0.0
    %4281 = vmatprep.subr.mxu0 0.0
    %4282 = vmatpush1.msra.mxu0 0.0
    %4283 = vmatprep.subr.mxu0 0.0
    %4284 = vmatpush1.msra.mxu0 0.0
    %4285 = vmatprep.subr.mxu0 0.0
    %4286 = vmatpush1.msra.mxu0 0.0
    %4287 = vmatprep.subr.mxu0 0.0
    %4288 = vmatpush1.msra.mxu0 0.0
    %4289 = vmatprep.subr.mxu0 0.0
    %4290 = vmatpush1.msra.mxu0 0.0
    %4291 = vmatprep.subr.mxu0 0.0
    %4292 = vmatpush1.msra.mxu0 0.0
    %4293 = vmatprep.subr.mxu0 0.0
    %4294 = vmatpush1.msra.mxu0 0.0
    %4295 = vmatprep.subr.mxu0 0.0
    %4296 = vmatpush1.msra.mxu0 0.0
    %4297 = vmatprep.subr.mxu0 0.0
    %4298 = vmatpush1.msra.mxu0 0.0
    %4299 = vmatprep.subr.mxu0 0.0
    %4300 = vmatpush1.msra.mxu0 0.0
    %4301 = vmatprep.mubr.f32.mxu0 0.0
    %4302 = vmatmul.mubr.f32.gmra.mrb[0].mxu0 %v4235
    %v4303 = vpop.f32.mrb[0].mxu0
    %v4304 = vadd.f32 0.0, %v4303
    %v4305 = vpop.f32.mrb[0].mxu0
    %4306 = vdwg.mxu0
    %v4307 = vadd.f32 %v4234, %v4304
    %v4308 = vxor.u32 %v4307, 2147483648
    %v4309 = vmul.f32 %v4308, 1.442695
    %v4310 = vpow.pop %v4309
    %v4311 = vadd.f32 %v4310, 1.0
    %v4312 = vrcp.pop %v4311
    %v4313 = vmul.f32 1.0, %v4312
    %v4314 = vtanh.pop %v4307
    %v4315 = vmul.f32 %v4313, %v4221
    %4317 = vrot.lane.b32.xlu0 %v4314, 64
    %v4318 = vpop.permute.xlu0 %4317
    %v4320 = vmul.f32 %v4313, %v4318
    %4322 = vrot.lane.b32.xlu0 %v4320, 32
    %v4323 = vpop.permute.xlu0 %4322
    %v4325 = vadd.f32 %v4315, %v4323
    %v4326 = vtanh.pop %v4325
    %4328 = vrot.lane.b32.xlu0 %v4326, 64
    %v4329 = vpop.permute.xlu0 %4328
    %v4331 = vmul.f32 %v4313, %v4329
    %4333 = vrot.lane.b32.xlu0 %v4331, 32
    %v4334 = vpop.permute.xlu0 %4333
    %4336 = vst.msk [vmem:[#allocation3 + $0xc] sm:$0x3] %vm159, %v4334
    %s4337 = scalar_lea.vmem %s1, 14
    %v4338 = vld [vmem:[%s4337] sm:$0x3]
    %v4339 = vsel %vm56, %v4334, 0
    %4341 = vmatprep.subr.mxu0 0.0
    %4342 = vmatpush1.msra.mxu0 %v3606
    %4343 = vmatprep.subr.mxu0 0.0
    %4344 = vmatpush1.msra.mxu0 %v3607
    %4345 = vmatprep.subr.mxu0 0.0
    %4346 = vmatpush1.msra.mxu0 %v3608
    %4347 = vmatprep.subr.mxu0 0.0
    %4348 = vmatpush1.msra.mxu0 %v3609
    %4349 = vmatprep.subr.mxu0 0.0
    %4350 = vmatpush1.msra.mxu0 0.0
    %4351 = vmatprep.subr.mxu0 0.0
    %4352 = vmatpush1.msra.mxu0 0.0
    %4353 = vmatprep.subr.mxu0 0.0
    %4354 = vmatpush1.msra.mxu0 0.0
    %4355 = vmatprep.subr.mxu0 0.0
    %4356 = vmatpush1.msra.mxu0 0.0
    %4357 = vmatprep.subr.mxu0 0.0
    %4358 = vmatpush1.msra.mxu0 0.0
    %4359 = vmatprep.subr.mxu0 0.0
    %4360 = vmatpush1.msra.mxu0 0.0
    %4361 = vmatprep.subr.mxu0 0.0
    %4362 = vmatpush1.msra.mxu0 0.0
    %4363 = vmatprep.subr.mxu0 0.0
    %4364 = vmatpush1.msra.mxu0 0.0
    %4365 = vmatprep.subr.mxu0 0.0
    %4366 = vmatpush1.msra.mxu0 0.0
    %4367 = vmatprep.subr.mxu0 0.0
    %4368 = vmatpush1.msra.mxu0 0.0
    %4369 = vmatprep.subr.mxu0 0.0
    %4370 = vmatpush1.msra.mxu0 0.0
    %4371 = vmatprep.subr.mxu0 0.0
    %4372 = vmatpush1.msra.mxu0 0.0
    %4373 = vmatprep.subr.mxu0 0.0
    %4374 = vmatpush1.msra.mxu0 0.0
    %4375 = vmatprep.subr.mxu0 0.0
    %4376 = vmatpush1.msra.mxu0 0.0
    %4377 = vmatprep.subr.mxu0 0.0
    %4378 = vmatpush1.msra.mxu0 0.0
    %4379 = vmatprep.subr.mxu0 0.0
    %4380 = vmatpush1.msra.mxu0 0.0
    %4381 = vmatprep.subr.mxu0 0.0
    %4382 = vmatpush1.msra.mxu0 0.0
    %4383 = vmatprep.subr.mxu0 0.0
    %4384 = vmatpush1.msra.mxu0 0.0
    %4385 = vmatprep.subr.mxu0 0.0
    %4386 = vmatpush1.msra.mxu0 0.0
    %4387 = vmatprep.subr.mxu0 0.0
    %4388 = vmatpush1.msra.mxu0 0.0
    %4389 = vmatprep.subr.mxu0 0.0
    %4390 = vmatpush1.msra.mxu0 0.0
    %4391 = vmatprep.subr.mxu0 0.0
    %4392 = vmatpush1.msra.mxu0 0.0
    %4393 = vmatprep.subr.mxu0 0.0
    %4394 = vmatpush1.msra.mxu0 0.0
    %4395 = vmatprep.subr.mxu0 0.0
    %4396 = vmatpush1.msra.mxu0 0.0
    %4397 = vmatprep.subr.mxu0 0.0
    %4398 = vmatpush1.msra.mxu0 0.0
    %4399 = vmatprep.subr.mxu0 0.0
    %4400 = vmatpush1.msra.mxu0 0.0
    %4401 = vmatprep.subr.mxu0 0.0
    %4402 = vmatpush1.msra.mxu0 0.0
    %4403 = vmatprep.subr.mxu0 0.0
    %4404 = vmatpush1.msra.mxu0 0.0
    %4405 = vmatprep.mubr.f32.mxu0 0.0
    %4406 = vmatmul.mubr.f32.gmra.mrb[0].mxu0 %v4339
    %v4407 = vpop.f32.mrb[0].mxu0
    %v4408 = vadd.f32 0.0, %v4407
    %v4409 = vpop.f32.mrb[0].mxu0
    %4410 = vdwg.mxu0
    %v4411 = vadd.f32 %v4338, %v4408
    %v4412 = vxor.u32 %v4411, 2147483648
    %v4413 = vmul.f32 %v4412, 1.442695
    %v4414 = vpow.pop %v4413
    %v4415 = vadd.f32 %v4414, 1.0
    %v4416 = vrcp.pop %v4415
    %v4417 = vmul.f32 1.0, %v4416
    %v4418 = vtanh.pop %v4411
    %v4419 = vmul.f32 %v4417, %v4325
    %4421 = vrot.lane.b32.xlu0 %v4418, 64
    %v4422 = vpop.permute.xlu0 %4421
    %v4424 = vmul.f32 %v4417, %v4422
    %4426 = vrot.lane.b32.xlu0 %v4424, 32
    %v4427 = vpop.permute.xlu0 %4426
    %v4429 = vadd.f32 %v4419, %v4427
    %v4430 = vtanh.pop %v4429
    %4432 = vrot.lane.b32.xlu0 %v4430, 64
    %v4433 = vpop.permute.xlu0 %4432
    %v4435 = vmul.f32 %v4417, %v4433
    %4437 = vrot.lane.b32.xlu0 %v4435, 32
    %v4438 = vpop.permute.xlu0 %4437
    %4440 = vst.msk [vmem:[#allocation3 + $0xe] sm:$0x3] %vm159, %v4438
    %v4441 = vld [vmem:[#allocation3] sm:$0xff]
    %v4442 = vld [vmem:[#allocation3 + $0x8] sm:$0xff]
    %v4443 = vld [vmem:[%s7] sm:$0xff]
    %v4444 = vld [vmem:[%s7 + $0x8] sm:$0xff]
    %v4445 = vld [vmem:[%s7 + $0x10] sm:$0xff]
    %v4446 = vld [vmem:[%s7 + $0x18] sm:$0xff]
    %v4447 = vld [vmem:[%s9] sm:$0x1]
    %v4449 = vlaneseq
    %v4450 = vshrl.u32 %v4449, 7
    %v4451 = vsub.s32 0, %v4450
    %v4452 = vrot.slane %v4447, %v4451
    %v4455 = vsel %vm56, %v4441, 0
    %v4458 = vsel %vm56, %v4442, 0
    %4460 = vmatprep.subr.mxu0 0.0
    %4461 = vmatpush1.msra.mxu0 %v4443
    %4462 = vmatprep.subr.mxu0 0.0
    %4463 = vmatpush1.msra.mxu0 %v4444
    %4464 = vmatprep.subr.mxu0 0.0
    %4465 = vmatpush1.msra.mxu0 %v4445
    %4466 = vmatprep.subr.mxu0 0.0
    %4467 = vmatpush1.msra.mxu0 %v4446
    %4468 = vmatprep.subr.mxu0 0.0
    %4469 = vmatpush1.msra.mxu0 0.0
    %4470 = vmatprep.subr.mxu0 0.0
    %4471 = vmatpush1.msra.mxu0 0.0
    %4472 = vmatprep.subr.mxu0 0.0
    %4473 = vmatpush1.msra.mxu0 0.0
    %4474 = vmatprep.subr.mxu0 0.0
    %4475 = vmatpush1.msra.mxu0 0.0
    %4476 = vmatprep.subr.mxu0 0.0
    %4477 = vmatpush1.msra.mxu0 0.0
    %4478 = vmatprep.subr.mxu0 0.0
    %4479 = vmatpush1.msra.mxu0 0.0
    %4480 = vmatprep.subr.mxu0 0.0
    %4481 = vmatpush1.msra.mxu0 0.0
    %4482 = vmatprep.subr.mxu0 0.0
    %4483 = vmatpush1.msra.mxu0 0.0
    %4484 = vmatprep.subr.mxu0 0.0
    %4485 = vmatpush1.msra.mxu0 0.0
    %4486 = vmatprep.subr.mxu0 0.0
    %4487 = vmatpush1.msra.mxu0 0.0
    %4488 = vmatprep.subr.mxu0 0.0
    %4489 = vmatpush1.msra.mxu0 0.0
    %4490 = vmatprep.subr.mxu0 0.0
    %4491 = vmatpush1.msra.mxu0 0.0
    %4492 = vmatprep.subr.mxu0 0.0
    %4493 = vmatpush1.msra.mxu0 0.0
    %4494 = vmatprep.subr.mxu0 0.0
    %4495 = vmatpush1.msra.mxu0 0.0
    %4496 = vmatprep.subr.mxu0 0.0
    %4497 = vmatpush1.msra.mxu0 0.0
    %4498 = vmatprep.subr.mxu0 0.0
    %4499 = vmatpush1.msra.mxu0 0.0
    %4500 = vmatprep.subr.mxu0 0.0
    %4501 = vmatpush1.msra.mxu0 0.0
    %4502 = vmatprep.subr.mxu0 0.0
    %4503 = vmatpush1.msra.mxu0 0.0
    %4504 = vmatprep.subr.mxu0 0.0
    %4505 = vmatpush1.msra.mxu0 0.0
    %4506 = vmatprep.subr.mxu0 0.0
    %4507 = vmatpush1.msra.mxu0 0.0
    %4508 = vmatprep.subr.mxu0 0.0
    %4509 = vmatpush1.msra.mxu0 0.0
    %4510 = vmatprep.subr.mxu0 0.0
    %4511 = vmatpush1.msra.mxu0 0.0
    %4512 = vmatprep.subr.mxu0 0.0
    %4513 = vmatpush1.msra.mxu0 0.0
    %4514 = vmatprep.subr.mxu0 0.0
    %4515 = vmatpush1.msra.mxu0 0.0
    %4516 = vmatprep.subr.mxu0 0.0
    %4517 = vmatpush1.msra.mxu0 0.0
    %4518 = vmatprep.subr.mxu0 0.0
    %4519 = vmatpush1.msra.mxu0 0.0
    %4520 = vmatprep.subr.mxu0 0.0
    %4521 = vmatpush1.msra.mxu0 0.0
    %4522 = vmatprep.subr.mxu0 0.0
    %4523 = vmatpush1.msra.mxu0 0.0
    %4524 = vmatprep.mubr.f32.mxu0 0.0
    %4525 = vmatmul.mubr.f32.gmra.mrb[0].mxu0 %v4455
    %v4526 = vpop.f32.mrb[0].mxu0
    %v4527 = vadd.f32 %v4452, %v4526
    %v4528 = vpop.f32.mrb[0].mxu0
    %4529 = vmatprep.mubr.f32.mxu0 0.0
    %4530 = vmatmul.mubr.f32.gmra.mrb[0].mxu0 %v4458
    %v4531 = vpop.f32.mrb[0].mxu0
    %v4532 = vadd.f32 %v4452, %v4531
    %v4533 = vpop.f32.mrb[0].mxu0
    %4534 = vdwg.mxu0
    %v4535 = vld [vmem:[%s8] sm:$0xff]
    %v4536 = vld [vmem:[%s8 + $0x8] sm:$0xff]
    %v4537 = vld [vmem:[%s8 + $0x10] sm:$0xff]
    %v4538 = vld [vmem:[%s8 + $0x18] sm:$0xff]
    %v4539 = vrot.slane %v3599, 6
    %4540 = vrot.lane.b32.xlu0 %v4539, 32
    %v4541 = vpop.permute.xlu0 %4540
    %v4542 = vsel %vm56, %v4541, 0
    %4544 = vmatprep.subr.mxu0 0.0
    %4545 = vmatpush1.msra.mxu0 %v4535
    %4546 = vmatprep.subr.mxu0 0.0
    %4547 = vmatpush1.msra.mxu0 %v4536
    %4548 = vmatprep.subr.mxu0 0.0
    %4549 = vmatpush1.msra.mxu0 %v4537
    %4550 = vmatprep.subr.mxu0 0.0
    %4551 = vmatpush1.msra.mxu0 %v4538
    %4552 = vmatprep.subr.mxu0 0.0
    %4553 = vmatpush1.msra.mxu0 0.0
    %4554 = vmatprep.subr.mxu0 0.0
    %4555 = vmatpush1.msra.mxu0 0.0
    %4556 = vmatprep.subr.mxu0 0.0
    %4557 = vmatpush1.msra.mxu0 0.0
    %4558 = vmatprep.subr.mxu0 0.0
    %4559 = vmatpush1.msra.mxu0 0.0
    %4560 = vmatprep.subr.mxu0 0.0
    %4561 = vmatpush1.msra.mxu0 0.0
    %4562 = vmatprep.subr.mxu0 0.0
    %4563 = vmatpush1.msra.mxu0 0.0
    %4564 = vmatprep.subr.mxu0 0.0
    %4565 = vmatpush1.msra.mxu0 0.0
    %4566 = vmatprep.subr.mxu0 0.0
    %4567 = vmatpush1.msra.mxu0 0.0
    %4568 = vmatprep.subr.mxu0 0.0
    %4569 = vmatpush1.msra.mxu0 0.0
    %4570 = vmatprep.subr.mxu0 0.0
    %4571 = vmatpush1.msra.mxu0 0.0
    %4572 = vmatprep.subr.mxu0 0.0
    %4573 = vmatpush1.msra.mxu0 0.0
    %4574 = vmatprep.subr.mxu0 0.0
    %4575 = vmatpush1.msra.mxu0 0.0
    %4576 = vmatprep.subr.mxu0 0.0
    %4577 = vmatpush1.msra.mxu0 0.0
    %4578 = vmatprep.subr.mxu0 0.0
    %4579 = vmatpush1.msra.mxu0 0.0
    %4580 = vmatprep.subr.mxu0 0.0
    %4581 = vmatpush1.msra.mxu0 0.0
    %4582 = vmatprep.subr.mxu0 0.0
    %4583 = vmatpush1.msra.mxu0 0.0
    %4584 = vmatprep.subr.mxu0 0.0
    %4585 = vmatpush1.msra.mxu0 0.0
    %4586 = vmatprep.subr.mxu0 0.0
    %4587 = vmatpush1.msra.mxu0 0.0
    %4588 = vmatprep.subr.mxu0 0.0
    %4589 = vmatpush1.msra.mxu0 0.0
    %4590 = vmatprep.subr.mxu0 0.0
    %4591 = vmatpush1.msra.mxu0 0.0
    %4592 = vmatprep.subr.mxu0 0.0
    %4593 = vmatpush1.msra.mxu0 0.0
    %4594 = vmatprep.subr.mxu0 0.0
    %4595 = vmatpush1.msra.mxu0 0.0
    %4596 = vmatprep.subr.mxu0 0.0
    %4597 = vmatpush1.msra.mxu0 0.0
    %4598 = vmatprep.subr.mxu0 0.0
    %4599 = vmatpush1.msra.mxu0 0.0
    %4600 = vmatprep.subr.mxu0 0.0
    %4601 = vmatpush1.msra.mxu0 0.0
    %4602 = vmatprep.subr.mxu0 0.0
    %4603 = vmatpush1.msra.mxu0 0.0
    %4604 = vmatprep.subr.mxu0 0.0
    %4605 = vmatpush1.msra.mxu0 0.0
    %4606 = vmatprep.subr.mxu0 0.0
    %4607 = vmatpush1.msra.mxu0 0.0
    %4608 = vmatprep.mubr.f32.mxu0 0.0
    %4609 = vmatmul.mubr.f32.gmra.mrb[0].mxu0 %v4542
    %v4610 = vpop.f32.mrb[0].mxu0
    %v4611 = vadd.f32 0.0, %v4610
    %v4612 = vpop.f32.mrb[0].mxu0
    %4613 = vdwg.mxu0
    %v4614 = vadd.f32 %v4527, %v4611
    %v4615 = vxor.u32 %v4614, 2147483648
    %v4616 = vmul.f32 %v4615, 1.442695
    %v4617 = vpow.pop %v4616
    %v4618 = vadd.f32 %v4617, 1.0
    %v4619 = vrcp.pop %v4618
    %v4620 = vmul.f32 1.0, %v4619
    %v4621 = vtanh.pop %v4614
    %v4623 = vrot.slane %v3593, 6
    %v4625 = vmul.f32 %v4620, %v4623
    %4627 = vrot.lane.b32.xlu0 %v4621, 64
    %v4628 = vpop.permute.xlu0 %4627
    %v4630 = vmul.f32 %v4620, %v4628
    %4632 = vrot.lane.b32.xlu0 %v4630, 32
    %v4633 = vpop.permute.xlu0 %4632
    %v4635 = vadd.f32 %v4625, %v4633
    %v4636 = vtanh.pop %v4635
    %4638 = vrot.lane.b32.xlu0 %v4636, 64
    %v4639 = vpop.permute.xlu0 %4638
    %v4641 = vmul.f32 %v4620, %v4639
    %4643 = vrot.lane.b32.xlu0 %v4641, 32
    %v4644 = vpop.permute.xlu0 %4643
    %4646 = vst.msk [vmem:[#allocation5] sm:$0x1] %vm1936, %v4644
    %s4647 = scalar_lea.vmem [#allocation5], 8
    %4648 = vst.msk [vmem:[%s4647 - $0x1] sm:$0x2] %vm1939, %v4644
    %v4649 = vsel %vm56, %v4644, 0
    %4651 = vmatprep.subr.mxu0 0.0
    %4652 = vmatpush1.msra.mxu0 %v4535
    %4653 = vmatprep.subr.mxu0 0.0
    %4654 = vmatpush1.msra.mxu0 %v4536
    %4655 = vmatprep.subr.mxu0 0.0
    %4656 = vmatpush1.msra.mxu0 %v4537
    %4657 = vmatprep.subr.mxu0 0.0
    %4658 = vmatpush1.msra.mxu0 %v4538
    %4659 = vmatprep.subr.mxu0 0.0
    %4660 = vmatpush1.msra.mxu0 0.0
    %4661 = vmatprep.subr.mxu0 0.0
    %4662 = vmatpush1.msra.mxu0 0.0
    %4663 = vmatprep.subr.mxu0 0.0
    %4664 = vmatpush1.msra.mxu0 0.0
    %4665 = vmatprep.subr.mxu0 0.0
    %4666 = vmatpush1.msra.mxu0 0.0
    %4667 = vmatprep.subr.mxu0 0.0
    %4668 = vmatpush1.msra.mxu0 0.0
    %4669 = vmatprep.subr.mxu0 0.0
    %4670 = vmatpush1.msra.mxu0 0.0
    %4671 = vmatprep.subr.mxu0 0.0
    %4672 = vmatpush1.msra.mxu0 0.0
    %4673 = vmatprep.subr.mxu0 0.0
    %4674 = vmatpush1.msra.mxu0 0.0
    %4675 = vmatprep.subr.mxu0 0.0
    %4676 = vmatpush1.msra.mxu0 0.0
    %4677 = vmatprep.subr.mxu0 0.0
    %4678 = vmatpush1.msra.mxu0 0.0
    %4679 = vmatprep.subr.mxu0 0.0
    %4680 = vmatpush1.msra.mxu0 0.0
    %4681 = vmatprep.subr.mxu0 0.0
    %4682 = vmatpush1.msra.mxu0 0.0
    %4683 = vmatprep.subr.mxu0 0.0
    %4684 = vmatpush1.msra.mxu0 0.0
    %4685 = vmatprep.subr.mxu0 0.0
    %4686 = vmatpush1.msra.mxu0 0.0
    %4687 = vmatprep.subr.mxu0 0.0
    %4688 = vmatpush1.msra.mxu0 0.0
    %4689 = vmatprep.subr.mxu0 0.0
    %4690 = vmatpush1.msra.mxu0 0.0
    %4691 = vmatprep.subr.mxu0 0.0
    %4692 = vmatpush1.msra.mxu0 0.0
    %4693 = vmatprep.subr.mxu0 0.0
    %4694 = vmatpush1.msra.mxu0 0.0
    %4695 = vmatprep.subr.mxu0 0.0
    %4696 = vmatpush1.msra.mxu0 0.0
    %4697 = vmatprep.subr.mxu0 0.0
    %4698 = vmatpush1.msra.mxu0 0.0
    %4699 = vmatprep.subr.mxu0 0.0
    %4700 = vmatpush1.msra.mxu0 0.0
    %4701 = vmatprep.subr.mxu0 0.0
    %4702 = vmatpush1.msra.mxu0 0.0
    %4703 = vmatprep.subr.mxu0 0.0
    %4704 = vmatpush1.msra.mxu0 0.0
    %4705 = vmatprep.subr.mxu0 0.0
    %4706 = vmatpush1.msra.mxu0 0.0
    %4707 = vmatprep.subr.mxu0 0.0
    %4708 = vmatpush1.msra.mxu0 0.0
    %4709 = vmatprep.subr.mxu0 0.0
    %4710 = vmatpush1.msra.mxu0 0.0
    %4711 = vmatprep.subr.mxu0 0.0
    %4712 = vmatpush1.msra.mxu0 0.0
    %4713 = vmatprep.subr.mxu0 0.0
    %4714 = vmatpush1.msra.mxu0 0.0
    %4715 = vmatprep.mubr.f32.mxu0 0.0
    %4716 = vmatmul.mubr.f32.gmra.mrb[0].mxu0 %v4649
    %v4717 = vpop.f32.mrb[0].mxu0
    %v4718 = vadd.f32 0.0, %v4717
    %v4719 = vpop.f32.mrb[0].mxu0
    %4720 = vdwg.mxu0
    %v4722 = vrot.slane %v4718, 6
    %v4724 = vadd.f32 %v4527, %v4722
    %v4725 = vxor.u32 %v4724, 2147483648
    %v4726 = vmul.f32 %v4725, 1.442695
    %v4727 = vpow.pop %v4726
    %v4728 = vadd.f32 %v4727, 1.0
    %v4729 = vrcp.pop %v4728
    %v4730 = vmul.f32 1.0, %v4729
    %v4731 = vtanh.pop %v4724
    %v4733 = vrot.slane %v4635, 6
    %v4735 = vmul.f32 %v4730, %v4733
    %4737 = vrot.lane.b32.xlu0 %v4731, 64
    %v4738 = vpop.permute.xlu0 %4737
    %v4740 = vmul.f32 %v4730, %v4738
    %4742 = vrot.lane.b32.xlu0 %v4740, 32
    %v4743 = vpop.permute.xlu0 %4742
    %v4745 = vadd.f32 %v4735, %v4743
    %v4746 = vtanh.pop %v4745
    %4748 = vrot.lane.b32.xlu0 %v4746, 64
    %v4749 = vpop.permute.xlu0 %4748
    %v4751 = vmul.f32 %v4730, %v4749
    %4753 = vrot.lane.b32.xlu0 %v4751, 32
    %v4754 = vpop.permute.xlu0 %4753
    %4756 = vst.msk [vmem:[#allocation5 - $0x1] sm:$0x4] %vm2048, %v4754
    %4757 = vst.msk [vmem:[%s4647 - $0x2] sm:$0x8] %vm2050, %v4754
    %v4758 = vrot.slane %v4751, 2
    %4759 = vrot.lane.b32.xlu0 %v4758, 32
    %v4760 = vpop.permute.xlu0 %4759
    %v4761 = vsel %vm56, %v4760, 0
    %4763 = vmatprep.subr.mxu0 0.0
    %4764 = vmatpush1.msra.mxu0 %v4535
    %4765 = vmatprep.subr.mxu0 0.0
    %4766 = vmatpush1.msra.mxu0 %v4536
    %4767 = vmatprep.subr.mxu0 0.0
    %4768 = vmatpush1.msra.mxu0 %v4537
    %4769 = vmatprep.subr.mxu0 0.0
    %4770 = vmatpush1.msra.mxu0 %v4538
    %4771 = vmatprep.subr.mxu0 0.0
    %4772 = vmatpush1.msra.mxu0 0.0
    %4773 = vmatprep.subr.mxu0 0.0
    %4774 = vmatpush1.msra.mxu0 0.0
    %4775 = vmatprep.subr.mxu0 0.0
    %4776 = vmatpush1.msra.mxu0 0.0
    %4777 = vmatprep.subr.mxu0 0.0
    %4778 = vmatpush1.msra.mxu0 0.0
    %4779 = vmatprep.subr.mxu0 0.0
    %4780 = vmatpush1.msra.mxu0 0.0
    %4781 = vmatprep.subr.mxu0 0.0
    %4782 = vmatpush1.msra.mxu0 0.0
    %4783 = vmatprep.subr.mxu0 0.0
    %4784 = vmatpush1.msra.mxu0 0.0
    %4785 = vmatprep.subr.mxu0 0.0
    %4786 = vmatpush1.msra.mxu0 0.0
    %4787 = vmatprep.subr.mxu0 0.0
    %4788 = vmatpush1.msra.mxu0 0.0
    %4789 = vmatprep.subr.mxu0 0.0
    %4790 = vmatpush1.msra.mxu0 0.0
    %4791 = vmatprep.subr.mxu0 0.0
    %4792 = vmatpush1.msra.mxu0 0.0
    %4793 = vmatprep.subr.mxu0 0.0
    %4794 = vmatpush1.msra.mxu0 0.0
    %4795 = vmatprep.subr.mxu0 0.0
    %4796 = vmatpush1.msra.mxu0 0.0
    %4797 = vmatprep.subr.mxu0 0.0
    %4798 = vmatpush1.msra.mxu0 0.0
    %4799 = vmatprep.subr.mxu0 0.0
    %4800 = vmatpush1.msra.mxu0 0.0
    %4801 = vmatprep.subr.mxu0 0.0
    %4802 = vmatpush1.msra.mxu0 0.0
    %4803 = vmatprep.subr.mxu0 0.0
    %4804 = vmatpush1.msra.mxu0 0.0
    %4805 = vmatprep.subr.mxu0 0.0
    %4806 = vmatpush1.msra.mxu0 0.0
    %4807 = vmatprep.subr.mxu0 0.0
    %4808 = vmatpush1.msra.mxu0 0.0
    %4809 = vmatprep.subr.mxu0 0.0
    %4810 = vmatpush1.msra.mxu0 0.0
    %4811 = vmatprep.subr.mxu0 0.0
    %4812 = vmatpush1.msra.mxu0 0.0
    %4813 = vmatprep.subr.mxu0 0.0
    %4814 = vmatpush1.msra.mxu0 0.0
    %4815 = vmatprep.subr.mxu0 0.0
    %4816 = vmatpush1.msra.mxu0 0.0
    %4817 = vmatprep.subr.mxu0 0.0
    %4818 = vmatpush1.msra.mxu0 0.0
    %4819 = vmatprep.subr.mxu0 0.0
    %4820 = vmatpush1.msra.mxu0 0.0
    %4821 = vmatprep.subr.mxu0 0.0
    %4822 = vmatpush1.msra.mxu0 0.0
    %4823 = vmatprep.subr.mxu0 0.0
    %4824 = vmatpush1.msra.mxu0 0.0
    %4825 = vmatprep.subr.mxu0 0.0
    %4826 = vmatpush1.msra.mxu0 0.0
    %4827 = vmatprep.mubr.f32.mxu0 0.0
    %4828 = vmatmul.mubr.f32.gmra.mrb[0].mxu0 %v4761
    %v4829 = vpop.f32.mrb[0].mxu0
    %v4830 = vadd.f32 0.0, %v4829
    %v4831 = vpop.f32.mrb[0].mxu0
    %4832 = vdwg.mxu0
    %v4834 = vrot.slane %v4830, 4
    %v4836 = vadd.f32 %v4527, %v4834
    %v4837 = vxor.u32 %v4836, 2147483648
    %v4838 = vmul.f32 %v4837, 1.442695
    %v4839 = vpow.pop %v4838
    %v4840 = vadd.f32 %v4839, 1.0
    %v4841 = vrcp.pop %v4840
    %v4842 = vmul.f32 1.0, %v4841
    %v4843 = vtanh.pop %v4836
    %v4845 = vrot.slane %v4745, 6
    %v4847 = vmul.f32 %v4842, %v4845
    %4849 = vrot.lane.b32.xlu0 %v4843, 64
    %v4850 = vpop.permute.xlu0 %4849
    %v4852 = vmul.f32 %v4842, %v4850
    %4854 = vrot.lane.b32.xlu0 %v4852, 32
    %v4855 = vpop.permute.xlu0 %4854
    %v4857 = vadd.f32 %v4847, %v4855
    %v4858 = vtanh.pop %v4857
    %4860 = vrot.lane.b32.xlu0 %v4858, 64
    %v4861 = vpop.permute.xlu0 %4860
    %v4863 = vmul.f32 %v4842, %v4861
    %4865 = vrot.lane.b32.xlu0 %v4863, 32
    %v4866 = vpop.permute.xlu0 %4865
    %4868 = vst.msk [vmem:[#allocation5 - $0x2] sm:$0x10] %vm2162, %v4866
    %4869 = vst.msk [vmem:[%s4647 - $0x3] sm:$0x20] %vm2164, %v4866
    %v4870 = vrot.slane %v4863, 4
    %4871 = vrot.lane.b32.xlu0 %v4870, 32
    %v4872 = vpop.permute.xlu0 %4871
    %v4873 = vsel %vm56, %v4872, 0
    %4875 = vmatprep.subr.mxu0 0.0
    %4876 = vmatpush1.msra.mxu0 %v4535
    %4877 = vmatprep.subr.mxu0 0.0
    %4878 = vmatpush1.msra.mxu0 %v4536
    %4879 = vmatprep.subr.mxu0 0.0
    %4880 = vmatpush1.msra.mxu0 %v4537
    %4881 = vmatprep.subr.mxu0 0.0
    %4882 = vmatpush1.msra.mxu0 %v4538
    %4883 = vmatprep.subr.mxu0 0.0
    %4884 = vmatpush1.msra.mxu0 0.0
    %4885 = vmatprep.subr.mxu0 0.0
    %4886 = vmatpush1.msra.mxu0 0.0
    %4887 = vmatprep.subr.mxu0 0.0
    %4888 = vmatpush1.msra.mxu0 0.0
    %4889 = vmatprep.subr.mxu0 0.0
    %4890 = vmatpush1.msra.mxu0 0.0
    %4891 = vmatprep.subr.mxu0 0.0
    %4892 = vmatpush1.msra.mxu0 0.0
    %4893 = vmatprep.subr.mxu0 0.0
    %4894 = vmatpush1.msra.mxu0 0.0
    %4895 = vmatprep.subr.mxu0 0.0
    %4896 = vmatpush1.msra.mxu0 0.0
    %4897 = vmatprep.subr.mxu0 0.0
    %4898 = vmatpush1.msra.mxu0 0.0
    %4899 = vmatprep.subr.mxu0 0.0
    %4900 = vmatpush1.msra.mxu0 0.0
    %4901 = vmatprep.subr.mxu0 0.0
    %4902 = vmatpush1.msra.mxu0 0.0
    %4903 = vmatprep.subr.mxu0 0.0
    %4904 = vmatpush1.msra.mxu0 0.0
    %4905 = vmatprep.subr.mxu0 0.0
    %4906 = vmatpush1.msra.mxu0 0.0
    %4907 = vmatprep.subr.mxu0 0.0
    %4908 = vmatpush1.msra.mxu0 0.0
    %4909 = vmatprep.subr.mxu0 0.0
    %4910 = vmatpush1.msra.mxu0 0.0
    %4911 = vmatprep.subr.mxu0 0.0
    %4912 = vmatpush1.msra.mxu0 0.0
    %4913 = vmatprep.subr.mxu0 0.0
    %4914 = vmatpush1.msra.mxu0 0.0
    %4915 = vmatprep.subr.mxu0 0.0
    %4916 = vmatpush1.msra.mxu0 0.0
    %4917 = vmatprep.subr.mxu0 0.0
    %4918 = vmatpush1.msra.mxu0 0.0
    %4919 = vmatprep.subr.mxu0 0.0
    %4920 = vmatpush1.msra.mxu0 0.0
    %4921 = vmatprep.subr.mxu0 0.0
    %4922 = vmatpush1.msra.mxu0 0.0
    %4923 = vmatprep.subr.mxu0 0.0
    %4924 = vmatpush1.msra.mxu0 0.0
    %4925 = vmatprep.subr.mxu0 0.0
    %4926 = vmatpush1.msra.mxu0 0.0
    %4927 = vmatprep.subr.mxu0 0.0
    %4928 = vmatpush1.msra.mxu0 0.0
    %4929 = vmatprep.subr.mxu0 0.0
    %4930 = vmatpush1.msra.mxu0 0.0
    %4931 = vmatprep.subr.mxu0 0.0
    %4932 = vmatpush1.msra.mxu0 0.0
    %4933 = vmatprep.subr.mxu0 0.0
    %4934 = vmatpush1.msra.mxu0 0.0
    %4935 = vmatprep.subr.mxu0 0.0
    %4936 = vmatpush1.msra.mxu0 0.0
    %4937 = vmatprep.subr.mxu0 0.0
    %4938 = vmatpush1.msra.mxu0 0.0
    %4939 = vmatprep.mubr.f32.mxu0 0.0
    %4940 = vmatmul.mubr.f32.gmra.mrb[0].mxu0 %v4873
    %v4941 = vpop.f32.mrb[0].mxu0
    %v4942 = vadd.f32 0.0, %v4941
    %v4943 = vpop.f32.mrb[0].mxu0
    %4944 = vdwg.mxu0
    %v4946 = vrot.slane %v4942, 2
    %v4948 = vadd.f32 %v4527, %v4946
    %v4949 = vxor.u32 %v4948, 2147483648
    %v4950 = vmul.f32 %v4949, 1.442695
    %v4951 = vpow.pop %v4950
    %v4952 = vadd.f32 %v4951, 1.0
    %v4953 = vrcp.pop %v4952
    %v4954 = vmul.f32 1.0, %v4953
    %v4955 = vtanh.pop %v4948
    %v4957 = vrot.slane %v4857, 6
    %v4959 = vmul.f32 %v4954, %v4957
    %4961 = vrot.lane.b32.xlu0 %v4955, 64
    %v4962 = vpop.permute.xlu0 %4961
    %v4964 = vmul.f32 %v4954, %v4962
    %4966 = vrot.lane.b32.xlu0 %v4964, 32
    %v4967 = vpop.permute.xlu0 %4966
    %v4969 = vadd.f32 %v4959, %v4967
    %v4970 = vtanh.pop %v4969
    %4972 = vrot.lane.b32.xlu0 %v4970, 64
    %v4973 = vpop.permute.xlu0 %4972
    %v4975 = vmul.f32 %v4954, %v4973
    %4977 = vrot.lane.b32.xlu0 %v4975, 32
    %v4978 = vpop.permute.xlu0 %4977
    %4980 = vst.msk [vmem:[#allocation5 - $0x3] sm:$0x40] %vm2276, %v4978
    %4981 = vst.msk [vmem:[%s4647 - $0x4] sm:$0x80] %vm2278, %v4978
    %v4982 = vrot.slane %v4975, 6
    %4983 = vrot.lane.b32.xlu0 %v4982, 32
    %v4984 = vpop.permute.xlu0 %4983
    %v4985 = vsel %vm56, %v4984, 0
    %4987 = vmatprep.subr.mxu0 0.0
    %4988 = vmatpush1.msra.mxu0 %v4535
    %4989 = vmatprep.subr.mxu0 0.0
    %4990 = vmatpush1.msra.mxu0 %v4536
    %4991 = vmatprep.subr.mxu0 0.0
    %4992 = vmatpush1.msra.mxu0 %v4537
    %4993 = vmatprep.subr.mxu0 0.0
    %4994 = vmatpush1.msra.mxu0 %v4538
    %4995 = vmatprep.subr.mxu0 0.0
    %4996 = vmatpush1.msra.mxu0 0.0
    %4997 = vmatprep.subr.mxu0 0.0
    %4998 = vmatpush1.msra.mxu0 0.0
    %4999 = vmatprep.subr.mxu0 0.0
    %5000 = vmatpush1.msra.mxu0 0.0
    %5001 = vmatprep.subr.mxu0 0.0
    %5002 = vmatpush1.msra.mxu0 0.0
    %5003 = vmatprep.subr.mxu0 0.0
    %5004 = vmatpush1.msra.mxu0 0.0
    %5005 = vmatprep.subr.mxu0 0.0
    %5006 = vmatpush1.msra.mxu0 0.0
    %5007 = vmatprep.subr.mxu0 0.0
    %5008 = vmatpush1.msra.mxu0 0.0
    %5009 = vmatprep.subr.mxu0 0.0
    %5010 = vmatpush1.msra.mxu0 0.0
    %5011 = vmatprep.subr.mxu0 0.0
    %5012 = vmatpush1.msra.mxu0 0.0
    %5013 = vmatprep.subr.mxu0 0.0
    %5014 = vmatpush1.msra.mxu0 0.0
    %5015 = vmatprep.subr.mxu0 0.0
    %5016 = vmatpush1.msra.mxu0 0.0
    %5017 = vmatprep.subr.mxu0 0.0
    %5018 = vmatpush1.msra.mxu0 0.0
    %5019 = vmatprep.subr.mxu0 0.0
    %5020 = vmatpush1.msra.mxu0 0.0
    %5021 = vmatprep.subr.mxu0 0.0
    %5022 = vmatpush1.msra.mxu0 0.0
    %5023 = vmatprep.subr.mxu0 0.0
    %5024 = vmatpush1.msra.mxu0 0.0
    %5025 = vmatprep.subr.mxu0 0.0
    %5026 = vmatpush1.msra.mxu0 0.0
    %5027 = vmatprep.subr.mxu0 0.0
    %5028 = vmatpush1.msra.mxu0 0.0
    %5029 = vmatprep.subr.mxu0 0.0
    %5030 = vmatpush1.msra.mxu0 0.0
    %5031 = vmatprep.subr.mxu0 0.0
    %5032 = vmatpush1.msra.mxu0 0.0
    %5033 = vmatprep.subr.mxu0 0.0
    %5034 = vmatpush1.msra.mxu0 0.0
    %5035 = vmatprep.subr.mxu0 0.0
    %5036 = vmatpush1.msra.mxu0 0.0
    %5037 = vmatprep.subr.mxu0 0.0
    %5038 = vmatpush1.msra.mxu0 0.0
    %5039 = vmatprep.subr.mxu0 0.0
    %5040 = vmatpush1.msra.mxu0 0.0
    %5041 = vmatprep.subr.mxu0 0.0
    %5042 = vmatpush1.msra.mxu0 0.0
    %5043 = vmatprep.subr.mxu0 0.0
    %5044 = vmatpush1.msra.mxu0 0.0
    %5045 = vmatprep.subr.mxu0 0.0
    %5046 = vmatpush1.msra.mxu0 0.0
    %5047 = vmatprep.subr.mxu0 0.0
    %5048 = vmatpush1.msra.mxu0 0.0
    %5049 = vmatprep.subr.mxu0 0.0
    %5050 = vmatpush1.msra.mxu0 0.0
    %5051 = vmatprep.mubr.f32.mxu0 0.0
    %5052 = vmatmul.mubr.f32.gmra.mrb[0].mxu0 %v4985
    %v5053 = vpop.f32.mrb[0].mxu0
    %v5054 = vadd.f32 0.0, %v5053
    %v5055 = vpop.f32.mrb[0].mxu0
    %5056 = vdwg.mxu0
    %v5057 = vadd.f32 %v4532, %v5054
    %v5058 = vxor.u32 %v5057, 2147483648
    %v5059 = vmul.f32 %v5058, 1.442695
    %v5060 = vpow.pop %v5059
    %v5061 = vadd.f32 %v5060, 1.0
    %v5062 = vrcp.pop %v5061
    %v5063 = vmul.f32 1.0, %v5062
    %v5064 = vtanh.pop %v5057
    %v5066 = vrot.slane %v4969, 6
    %v5068 = vmul.f32 %v5063, %v5066
    %5070 = vrot.lane.b32.xlu0 %v5064, 64
    %v5071 = vpop.permute.xlu0 %5070
    %v5073 = vmul.f32 %v5063, %v5071
    %5075 = vrot.lane.b32.xlu0 %v5073, 32
    %v5076 = vpop.permute.xlu0 %5075
    %v5078 = vadd.f32 %v5068, %v5076
    %v5079 = vtanh.pop %v5078
    %5081 = vrot.lane.b32.xlu0 %v5079, 64
    %v5082 = vpop.permute.xlu0 %5081
    %v5084 = vmul.f32 %v5063, %v5082
    %5086 = vrot.lane.b32.xlu0 %v5084, 32
    %v5087 = vpop.permute.xlu0 %5086
    %5089 = vst.msk [vmem:[#allocation5 + $0x4] sm:$0x1] %vm1936, %v5087
    %5090 = vst.msk [vmem:[%s4647 + $0x3] sm:$0x2] %vm1939, %v5087
    %v5091 = vsel %vm56, %v5087, 0
    %5093 = vmatprep.subr.mxu0 0.0
    %5094 = vmatpush1.msra.mxu0 %v4535
    %5095 = vmatprep.subr.mxu0 0.0
    %5096 = vmatpush1.msra.mxu0 %v4536
    %5097 = vmatprep.subr.mxu0 0.0
    %5098 = vmatpush1.msra.mxu0 %v4537
    %5099 = vmatprep.subr.mxu0 0.0
    %5100 = vmatpush1.msra.mxu0 %v4538
    %5101 = vmatprep.subr.mxu0 0.0
    %5102 = vmatpush1.msra.mxu0 0.0
    %5103 = vmatprep.subr.mxu0 0.0
    %5104 = vmatpush1.msra.mxu0 0.0
    %5105 = vmatprep.subr.mxu0 0.0
    %5106 = vmatpush1.msra.mxu0 0.0
    %5107 = vmatprep.subr.mxu0 0.0
    %5108 = vmatpush1.msra.mxu0 0.0
    %5109 = vmatprep.subr.mxu0 0.0
    %5110 = vmatpush1.msra.mxu0 0.0
    %5111 = vmatprep.subr.mxu0 0.0
    %5112 = vmatpush1.msra.mxu0 0.0
    %5113 = vmatprep.subr.mxu0 0.0
    %5114 = vmatpush1.msra.mxu0 0.0
    %5115 = vmatprep.subr.mxu0 0.0
    %5116 = vmatpush1.msra.mxu0 0.0
    %5117 = vmatprep.subr.mxu0 0.0
    %5118 = vmatpush1.msra.mxu0 0.0
    %5119 = vmatprep.subr.mxu0 0.0
    %5120 = vmatpush1.msra.mxu0 0.0
    %5121 = vmatprep.subr.mxu0 0.0
    %5122 = vmatpush1.msra.mxu0 0.0
    %5123 = vmatprep.subr.mxu0 0.0
    %5124 = vmatpush1.msra.mxu0 0.0
    %5125 = vmatprep.subr.mxu0 0.0
    %5126 = vmatpush1.msra.mxu0 0.0
    %5127 = vmatprep.subr.mxu0 0.0
    %5128 = vmatpush1.msra.mxu0 0.0
    %5129 = vmatprep.subr.mxu0 0.0
    %5130 = vmatpush1.msra.mxu0 0.0
    %5131 = vmatprep.subr.mxu0 0.0
    %5132 = vmatpush1.msra.mxu0 0.0
    %5133 = vmatprep.subr.mxu0 0.0
    %5134 = vmatpush1.msra.mxu0 0.0
    %5135 = vmatprep.subr.mxu0 0.0
    %5136 = vmatpush1.msra.mxu0 0.0
    %5137 = vmatprep.subr.mxu0 0.0
    %5138 = vmatpush1.msra.mxu0 0.0
    %5139 = vmatprep.subr.mxu0 0.0
    %5140 = vmatpush1.msra.mxu0 0.0
    %5141 = vmatprep.subr.mxu0 0.0
    %5142 = vmatpush1.msra.mxu0 0.0
    %5143 = vmatprep.subr.mxu0 0.0
    %5144 = vmatpush1.msra.mxu0 0.0
    %5145 = vmatprep.subr.mxu0 0.0
    %5146 = vmatpush1.msra.mxu0 0.0
    %5147 = vmatprep.subr.mxu0 0.0
    %5148 = vmatpush1.msra.mxu0 0.0
    %5149 = vmatprep.subr.mxu0 0.0
    %5150 = vmatpush1.msra.mxu0 0.0
    %5151 = vmatprep.subr.mxu0 0.0
    %5152 = vmatpush1.msra.mxu0 0.0
    %5153 = vmatprep.subr.mxu0 0.0
    %5154 = vmatpush1.msra.mxu0 0.0
    %5155 = vmatprep.subr.mxu0 0.0
    %5156 = vmatpush1.msra.mxu0 0.0
    %5157 = vmatprep.mubr.f32.mxu0 0.0
    %5158 = vmatmul.mubr.f32.gmra.mrb[0].mxu0 %v5091
    %v5159 = vpop.f32.mrb[0].mxu0
    %v5160 = vadd.f32 0.0, %v5159
    %v5161 = vpop.f32.mrb[0].mxu0
    %5162 = vdwg.mxu0
    %v5164 = vrot.slane %v5160, 6
    %v5166 = vadd.f32 %v4532, %v5164
    %v5167 = vxor.u32 %v5166, 2147483648
    %v5168 = vmul.f32 %v5167, 1.442695
    %v5169 = vpow.pop %v5168
    %v5170 = vadd.f32 %v5169, 1.0
    %v5171 = vrcp.pop %v5170
    %v5172 = vmul.f32 1.0, %v5171
    %v5173 = vtanh.pop %v5166
    %v5175 = vrot.slane %v5078, 6
    %v5177 = vmul.f32 %v5172, %v5175
    %5179 = vrot.lane.b32.xlu0 %v5173, 64
    %v5180 = vpop.permute.xlu0 %5179
    %v5182 = vmul.f32 %v5172, %v5180
    %5184 = vrot.lane.b32.xlu0 %v5182, 32
    %v5185 = vpop.permute.xlu0 %5184
    %v5187 = vadd.f32 %v5177, %v5185
    %v5188 = vtanh.pop %v5187
    %5190 = vrot.lane.b32.xlu0 %v5188, 64
    %v5191 = vpop.permute.xlu0 %5190
    %v5193 = vmul.f32 %v5172, %v5191
    %5195 = vrot.lane.b32.xlu0 %v5193, 32
    %v5196 = vpop.permute.xlu0 %5195
    %5198 = vst.msk [vmem:[#allocation5 + $0x3] sm:$0x4] %vm2048, %v5196
    %5199 = vst.msk [vmem:[%s4647 + $0x2] sm:$0x8] %vm2050, %v5196
    %v5200 = vrot.slane %v5193, 2
    %5201 = vrot.lane.b32.xlu0 %v5200, 32
    %v5202 = vpop.permute.xlu0 %5201
    %v5203 = vsel %vm56, %v5202, 0
    %5205 = vmatprep.subr.mxu0 0.0
    %5206 = vmatpush1.msra.mxu0 %v4535
    %5207 = vmatprep.subr.mxu0 0.0
    %5208 = vmatpush1.msra.mxu0 %v4536
    %5209 = vmatprep.subr.mxu0 0.0
    %5210 = vmatpush1.msra.mxu0 %v4537
    %5211 = vmatprep.subr.mxu0 0.0
    %5212 = vmatpush1.msra.mxu0 %v4538
    %5213 = vmatprep.subr.mxu0 0.0
    %5214 = vmatpush1.msra.mxu0 0.0
    %5215 = vmatprep.subr.mxu0 0.0
    %5216 = vmatpush1.msra.mxu0 0.0
    %5217 = vmatprep.subr.mxu0 0.0
    %5218 = vmatpush1.msra.mxu0 0.0
    %5219 = vmatprep.subr.mxu0 0.0
    %5220 = vmatpush1.msra.mxu0 0.0
    %5221 = vmatprep.subr.mxu0 0.0
    %5222 = vmatpush1.msra.mxu0 0.0
    %5223 = vmatprep.subr.mxu0 0.0
    %5224 = vmatpush1.msra.mxu0 0.0
    %5225 = vmatprep.subr.mxu0 0.0
    %5226 = vmatpush1.msra.mxu0 0.0
    %5227 = vmatprep.subr.mxu0 0.0
    %5228 = vmatpush1.msra.mxu0 0.0
    %5229 = vmatprep.subr.mxu0 0.0
    %5230 = vmatpush1.msra.mxu0 0.0
    %5231 = vmatprep.subr.mxu0 0.0
    %5232 = vmatpush1.msra.mxu0 0.0
    %5233 = vmatprep.subr.mxu0 0.0
    %5234 = vmatpush1.msra.mxu0 0.0
    %5235 = vmatprep.subr.mxu0 0.0
    %5236 = vmatpush1.msra.mxu0 0.0
    %5237 = vmatprep.subr.mxu0 0.0
    %5238 = vmatpush1.msra.mxu0 0.0
    %5239 = vmatprep.subr.mxu0 0.0
    %5240 = vmatpush1.msra.mxu0 0.0
    %5241 = vmatprep.subr.mxu0 0.0
    %5242 = vmatpush1.msra.mxu0 0.0
    %5243 = vmatprep.subr.mxu0 0.0
    %5244 = vmatpush1.msra.mxu0 0.0
    %5245 = vmatprep.subr.mxu0 0.0
    %5246 = vmatpush1.msra.mxu0 0.0
    %5247 = vmatprep.subr.mxu0 0.0
    %5248 = vmatpush1.msra.mxu0 0.0
    %5249 = vmatprep.subr.mxu0 0.0
    %5250 = vmatpush1.msra.mxu0 0.0
    %5251 = vmatprep.subr.mxu0 0.0
    %5252 = vmatpush1.msra.mxu0 0.0
    %5253 = vmatprep.subr.mxu0 0.0
    %5254 = vmatpush1.msra.mxu0 0.0
    %5255 = vmatprep.subr.mxu0 0.0
    %5256 = vmatpush1.msra.mxu0 0.0
    %5257 = vmatprep.subr.mxu0 0.0
    %5258 = vmatpush1.msra.mxu0 0.0
    %5259 = vmatprep.subr.mxu0 0.0
    %5260 = vmatpush1.msra.mxu0 0.0
    %5261 = vmatprep.subr.mxu0 0.0
    %5262 = vmatpush1.msra.mxu0 0.0
    %5263 = vmatprep.subr.mxu0 0.0
    %5264 = vmatpush1.msra.mxu0 0.0
    %5265 = vmatprep.subr.mxu0 0.0
    %5266 = vmatpush1.msra.mxu0 0.0
    %5267 = vmatprep.subr.mxu0 0.0
    %5268 = vmatpush1.msra.mxu0 0.0
    %5269 = vmatprep.mubr.f32.mxu0 0.0
    %5270 = vmatmul.mubr.f32.gmra.mrb[0].mxu0 %v5203
    %v5271 = vpop.f32.mrb[0].mxu0
    %v5272 = vadd.f32 0.0, %v5271
    %v5273 = vpop.f32.mrb[0].mxu0
    %5274 = vdwg.mxu0
    %v5276 = vrot.slane %v5272, 4
    %v5278 = vadd.f32 %v4532, %v5276
    %v5279 = vxor.u32 %v5278, 2147483648
    %v5280 = vmul.f32 %v5279, 1.442695
    %v5281 = vpow.pop %v5280
    %v5282 = vadd.f32 %v5281, 1.0
    %v5283 = vrcp.pop %v5282
    %v5284 = vmul.f32 1.0, %v5283
    %v5285 = vtanh.pop %v5278
    %v5287 = vrot.slane %v5187, 6
    %v5289 = vmul.f32 %v5284, %v5287
    %5291 = vrot.lane.b32.xlu0 %v5285, 64
    %v5292 = vpop.permute.xlu0 %5291
    %v5294 = vmul.f32 %v5284, %v5292
    %5296 = vrot.lane.b32.xlu0 %v5294, 32
    %v5297 = vpop.permute.xlu0 %5296
    %v5299 = vadd.f32 %v5289, %v5297
    %v5300 = vtanh.pop %v5299
    %5302 = vrot.lane.b32.xlu0 %v5300, 64
    %v5303 = vpop.permute.xlu0 %5302
    %v5305 = vmul.f32 %v5284, %v5303
    %5307 = vrot.lane.b32.xlu0 %v5305, 32
    %v5308 = vpop.permute.xlu0 %5307
    %5310 = vst.msk [vmem:[#allocation5 + $0x2] sm:$0x10] %vm2162, %v5308
    %5311 = vst.msk [vmem:[%s4647 + $0x1] sm:$0x20] %vm2164, %v5308
    %v5312 = vrot.slane %v5305, 4
    %5313 = vrot.lane.b32.xlu0 %v5312, 32
    %v5314 = vpop.permute.xlu0 %5313
    %v5315 = vsel %vm56, %v5314, 0
    %5317 = vmatprep.subr.mxu0 0.0
    %5318 = vmatpush1.msra.mxu0 %v4535
    %5319 = vmatprep.subr.mxu0 0.0
    %5320 = vmatpush1.msra.mxu0 %v4536
    %5321 = vmatprep.subr.mxu0 0.0
    %5322 = vmatpush1.msra.mxu0 %v4537
    %5323 = vmatprep.subr.mxu0 0.0
    %5324 = vmatpush1.msra.mxu0 %v4538
    %5325 = vmatprep.subr.mxu0 0.0
    %5326 = vmatpush1.msra.mxu0 0.0
    %5327 = vmatprep.subr.mxu0 0.0
    %5328 = vmatpush1.msra.mxu0 0.0
    %5329 = vmatprep.subr.mxu0 0.0
    %5330 = vmatpush1.msra.mxu0 0.0
    %5331 = vmatprep.subr.mxu0 0.0
    %5332 = vmatpush1.msra.mxu0 0.0
    %5333 = vmatprep.subr.mxu0 0.0
    %5334 = vmatpush1.msra.mxu0 0.0
    %5335 = vmatprep.subr.mxu0 0.0
    %5336 = vmatpush1.msra.mxu0 0.0
    %5337 = vmatprep.subr.mxu0 0.0
    %5338 = vmatpush1.msra.mxu0 0.0
    %5339 = vmatprep.subr.mxu0 0.0
    %5340 = vmatpush1.msra.mxu0 0.0
    %5341 = vmatprep.subr.mxu0 0.0
    %5342 = vmatpush1.msra.mxu0 0.0
    %5343 = vmatprep.subr.mxu0 0.0
    %5344 = vmatpush1.msra.mxu0 0.0
    %5345 = vmatprep.subr.mxu0 0.0
    %5346 = vmatpush1.msra.mxu0 0.0
    %5347 = vmatprep.subr.mxu0 0.0
    %5348 = vmatpush1.msra.mxu0 0.0
    %5349 = vmatprep.subr.mxu0 0.0
    %5350 = vmatpush1.msra.mxu0 0.0
    %5351 = vmatprep.subr.mxu0 0.0
    %5352 = vmatpush1.msra.mxu0 0.0
    %5353 = vmatprep.subr.mxu0 0.0
    %5354 = vmatpush1.msra.mxu0 0.0
    %5355 = vmatprep.subr.mxu0 0.0
    %5356 = vmatpush1.msra.mxu0 0.0
    %5357 = vmatprep.subr.mxu0 0.0
    %5358 = vmatpush1.msra.mxu0 0.0
    %5359 = vmatprep.subr.mxu0 0.0
    %5360 = vmatpush1.msra.mxu0 0.0
    %5361 = vmatprep.subr.mxu0 0.0
    %5362 = vmatpush1.msra.mxu0 0.0
    %5363 = vmatprep.subr.mxu0 0.0
    %5364 = vmatpush1.msra.mxu0 0.0
    %5365 = vmatprep.subr.mxu0 0.0
    %5366 = vmatpush1.msra.mxu0 0.0
    %5367 = vmatprep.subr.mxu0 0.0
    %5368 = vmatpush1.msra.mxu0 0.0
    %5369 = vmatprep.subr.mxu0 0.0
    %5370 = vmatpush1.msra.mxu0 0.0
    %5371 = vmatprep.subr.mxu0 0.0
    %5372 = vmatpush1.msra.mxu0 0.0
    %5373 = vmatprep.subr.mxu0 0.0
    %5374 = vmatpush1.msra.mxu0 0.0
    %5375 = vmatprep.subr.mxu0 0.0
    %5376 = vmatpush1.msra.mxu0 0.0
    %5377 = vmatprep.subr.mxu0 0.0
    %5378 = vmatpush1.msra.mxu0 0.0
    %5379 = vmatprep.subr.mxu0 0.0
    %5380 = vmatpush1.msra.mxu0 0.0
    %5381 = vmatprep.mubr.f32.mxu0 0.0
    %5382 = vmatmul.mubr.f32.gmra.mrb[0].mxu0 %v5315
    %v5383 = vpop.f32.mrb[0].mxu0
    %v5384 = vadd.f32 0.0, %v5383
    %v5385 = vpop.f32.mrb[0].mxu0
    %5386 = vdwg.mxu0
    %v5388 = vrot.slane %v5384, 2
    %v5390 = vadd.f32 %v4532, %v5388
    %v5391 = vxor.u32 %v5390, 2147483648
    %v5392 = vmul.f32 %v5391, 1.442695
    %v5393 = vpow.pop %v5392
    %v5394 = vadd.f32 %v5393, 1.0
    %v5395 = vrcp.pop %v5394
    %v5396 = vmul.f32 1.0, %v5395
    %v5397 = vtanh.pop %v5390
    %v5399 = vrot.slane %v5299, 6
    %v5401 = vmul.f32 %v5396, %v5399
    %5403 = vrot.lane.b32.xlu0 %v5397, 64
    %v5404 = vpop.permute.xlu0 %5403
    %v5406 = vmul.f32 %v5396, %v5404
    %5408 = vrot.lane.b32.xlu0 %v5406, 32
    %v5409 = vpop.permute.xlu0 %5408
    %v5411 = vadd.f32 %v5401, %v5409
    %v5412 = vtanh.pop %v5411
    %5414 = vrot.lane.b32.xlu0 %v5412, 64
    %v5415 = vpop.permute.xlu0 %5414
    %v5417 = vmul.f32 %v5396, %v5415
    %5419 = vrot.lane.b32.xlu0 %v5417, 32
    %v5420 = vpop.permute.xlu0 %5419
    %5422 = vst.msk [vmem:[#allocation5 + $0x1] sm:$0x40] %vm2276, %v5420
    %5423 = vst.msk [vmem:[%s4647] sm:$0x80] %vm2278, %v5420
    %v5424 = vld [vmem:[%s10] sm:$0xff]
    %v5425 = vld [vmem:[%s10 + $0x8] sm:$0xff]
    %v5426 = vld [vmem:[%s10 + $0x10] sm:$0xff]
    %v5427 = vld [vmem:[%s10 + $0x18] sm:$0xff]
    %v5428 = vld [vmem:[%s11] sm:$0xff]
    %v5429 = vld [vmem:[%s11 + $0x8] sm:$0xff]
    %v5430 = vld [vmem:[%s11 + $0x10] sm:$0xff]
    %v5431 = vld [vmem:[%s11 + $0x18] sm:$0xff]
    %v5432 = vld [vmem:[%s12] sm:$0x1]
    %v5433 = vld [vmem:[%s13] sm:$0xff]
    %v5434 = vld [vmem:[%s13 + $0x8] sm:$0xff]
    %v5435 = vld [vmem:[%s13 + $0x10] sm:$0xff]
    %v5436 = vld [vmem:[%s13 + $0x18] sm:$0xff]
    %v5437 = vld [vmem:[%s14] sm:$0x1]
    %v5438 = vld [vmem:[#allocation4] sm:$0xff]
    %v5439 = vld [vmem:[#allocation4 + $0x8] sm:$0xff]
    %v5440 = vld [vmem:[#allocation5] sm:$0xff]
    %v5442 = vsel %vm56, %v5440, 0
    %v5445 = vsel %vm56, %v5438, 0
    %v5448 = vsel %vm56, %v5439, 0
    %5450 = vmatprep.subr.mxu0 0.0
    %5451 = vmatpush1.xpose.msra.mxu0 %v5445
    %5452 = vmatprep.subr.mxu0 0.0
    %5453 = vmatpush1.xpose.msra.mxu0 %v5448
    %5454 = vmatprep.subr.mxu0 0.0
    %5455 = vmatpush1.xpose.msra.mxu0 0.0
    %5456 = vmatprep.subr.mxu0 0.0
    %5457 = vmatpush1.xpose.msra.mxu0 0.0
    %5458 = vmatprep.subr.mxu0 0.0
    %5459 = vmatpush1.xpose.msra.mxu0 0.0
    %5460 = vmatprep.subr.mxu0 0.0
    %5461 = vmatpush1.xpose.msra.mxu0 0.0
    %5462 = vmatprep.subr.mxu0 0.0
    %5463 = vmatpush1.xpose.msra.mxu0 0.0
    %5464 = vmatprep.subr.mxu0 0.0
    %5465 = vmatpush1.xpose.msra.mxu0 0.0
    %5466 = vmatprep.subr.mxu0 0.0
    %5467 = vmatpush1.xpose.msra.mxu0 0.0
    %5468 = vmatprep.subr.mxu0 0.0
    %5469 = vmatpush1.xpose.msra.mxu0 0.0
    %5470 = vmatprep.subr.mxu0 0.0
    %5471 = vmatpush1.xpose.msra.mxu0 0.0
    %5472 = vmatprep.subr.mxu0 0.0
    %5473 = vmatpush1.xpose.msra.mxu0 0.0
    %5474 = vmatprep.subr.mxu0 0.0
    %5475 = vmatpush1.xpose.msra.mxu0 0.0
    %5476 = vmatprep.subr.mxu0 0.0
    %5477 = vmatpush1.xpose.msra.mxu0 0.0
    %5478 = vmatprep.subr.mxu0 0.0
    %5479 = vmatpush1.xpose.msra.mxu0 0.0
    %5480 = vmatprep.subr.mxu0 0.0
    %5481 = vmatpush1.xpose.msra.mxu0 0.0
    %5482 = vmatprep.subr.mxu0 0.0
    %5483 = vmatpush1.xpose.msra.mxu0 0.0
    %5484 = vmatprep.subr.mxu0 0.0
    %5485 = vmatpush1.xpose.msra.mxu0 0.0
    %5486 = vmatprep.subr.mxu0 0.0
    %5487 = vmatpush1.xpose.msra.mxu0 0.0
    %5488 = vmatprep.subr.mxu0 0.0
    %5489 = vmatpush1.xpose.msra.mxu0 0.0
    %5490 = vmatprep.subr.mxu0 0.0
    %5491 = vmatpush1.xpose.msra.mxu0 0.0
    %5492 = vmatprep.subr.mxu0 0.0
    %5493 = vmatpush1.xpose.msra.mxu0 0.0
    %5494 = vmatprep.subr.mxu0 0.0
    %5495 = vmatpush1.xpose.msra.mxu0 0.0
    %5496 = vmatprep.subr.mxu0 0.0
    %5497 = vmatpush1.xpose.msra.mxu0 0.0
    %5498 = vmatprep.subr.mxu0 0.0
    %5499 = vmatpush1.xpose.msra.mxu0 0.0
    %5500 = vmatprep.subr.mxu0 0.0
    %5501 = vmatpush1.xpose.msra.mxu0 0.0
    %5502 = vmatprep.subr.mxu0 0.0
    %5503 = vmatpush1.xpose.msra.mxu0 0.0
    %5504 = vmatprep.subr.mxu0 0.0
    %5505 = vmatpush1.xpose.msra.mxu0 0.0
    %5506 = vmatprep.subr.mxu0 0.0
    %5507 = vmatpush1.xpose.msra.mxu0 0.0
    %5508 = vmatprep.subr.mxu0 0.0
    %5509 = vmatpush1.xpose.msra.mxu0 0.0
    %5510 = vmatprep.subr.mxu0 0.0
    %5511 = vmatpush1.xpose.msra.mxu0 0.0
    %5512 = vmatprep.subr.mxu0 0.0
    %5513 = vmatpush1.xpose.msra.mxu0 0.0
    %5514 = vmatprep.mubr.f32.mxu0 0.0
    %5515 = vmatmul.mubr.f32.gmra.mrb[0].mxu0 %v5442
    %v5516 = vpop.f32.mrb[0].mxu0
    %v5517 = vadd.f32 0.0, %v5516
    %v5518 = vpop.f32.mrb[0].mxu0
    %5519 = vdwg.mxu0
    %vm5520 = vcmask 130048
    %v5521 = vsel %vm5520, %v5517, -inf
    %5522 = vmax.xlane.f32.xlu0 %v5521
    %v5523 = vpop.xlane.xlu0 %5522
    %v5524 = vsub.f32 %v5517, %v5523
    %v5525 = vmul.f32 %v5524, 1.442695
    %v5526 = vpow.pop %v5525
    %v5527 = vsel %vm5520, %v5526, 0.0
    %5528 = vadd.xlane.f32.xlu0 %v5527
    %v5529 = vpop.xlane.xlu0 %5528
    %v5530 = vrcp.pop %v5529
    %v5531 = vmul.f32 %v5526, %v5530
    %v5533 = vsel %vm5520, %v5531, 0
    %5535 = vmatprep.subr.mxu0 0.0
    %5536 = vmatpush1.msra.mxu0 %v5438
    %5537 = vmatprep.subr.mxu0 0.0
    %5538 = vmatpush1.msra.mxu0 %v5439
    %5539 = vmatprep.subr.mxu0 0.0
    %5540 = vmatpush1.msra.mxu0 0.0
    %5541 = vmatprep.subr.mxu0 0.0
    %5542 = vmatpush1.msra.mxu0 0.0
    %5543 = vmatprep.subr.mxu0 0.0
    %5544 = vmatpush1.msra.mxu0 0.0
    %5545 = vmatprep.subr.mxu0 0.0
    %5546 = vmatpush1.msra.mxu0 0.0
    %5547 = vmatprep.subr.mxu0 0.0
    %5548 = vmatpush1.msra.mxu0 0.0
    %5549 = vmatprep.subr.mxu0 0.0
    %5550 = vmatpush1.msra.mxu0 0.0
    %5551 = vmatprep.subr.mxu0 0.0
    %5552 = vmatpush1.msra.mxu0 0.0
    %5553 = vmatprep.subr.mxu0 0.0
    %5554 = vmatpush1.msra.mxu0 0.0
    %5555 = vmatprep.subr.mxu0 0.0
    %5556 = vmatpush1.msra.mxu0 0.0
    %5557 = vmatprep.subr.mxu0 0.0
    %5558 = vmatpush1.msra.mxu0 0.0
    %5559 = vmatprep.subr.mxu0 0.0
    %5560 = vmatpush1.msra.mxu0 0.0
    %5561 = vmatprep.subr.mxu0 0.0
    %5562 = vmatpush1.msra.mxu0 0.0
    %5563 = vmatprep.subr.mxu0 0.0
    %5564 = vmatpush1.msra.mxu0 0.0
    %5565 = vmatprep.subr.mxu0 0.0
    %5566 = vmatpush1.msra.mxu0 0.0
    %5567 = vmatprep.subr.mxu0 0.0
    %5568 = vmatpush1.msra.mxu0 0.0
    %5569 = vmatprep.subr.mxu0 0.0
    %5570 = vmatpush1.msra.mxu0 0.0
    %5571 = vmatprep.subr.mxu0 0.0
    %5572 = vmatpush1.msra.mxu0 0.0
    %5573 = vmatprep.subr.mxu0 0.0
    %5574 = vmatpush1.msra.mxu0 0.0
    %5575 = vmatprep.subr.mxu0 0.0
    %5576 = vmatpush1.msra.mxu0 0.0
    %5577 = vmatprep.subr.mxu0 0.0
    %5578 = vmatpush1.msra.mxu0 0.0
    %5579 = vmatprep.subr.mxu0 0.0
    %5580 = vmatpush1.msra.mxu0 0.0
    %5581 = vmatprep.subr.mxu0 0.0
    %5582 = vmatpush1.msra.mxu0 0.0
    %5583 = vmatprep.subr.mxu0 0.0
    %5584 = vmatpush1.msra.mxu0 0.0
    %5585 = vmatprep.subr.mxu0 0.0
    %5586 = vmatpush1.msra.mxu0 0.0
    %5587 = vmatprep.subr.mxu0 0.0
    %5588 = vmatpush1.msra.mxu0 0.0
    %5589 = vmatprep.subr.mxu0 0.0
    %5590 = vmatpush1.msra.mxu0 0.0
    %5591 = vmatprep.subr.mxu0 0.0
    %5592 = vmatpush1.msra.mxu0 0.0
    %5593 = vmatprep.subr.mxu0 0.0
    %5594 = vmatpush1.msra.mxu0 0.0
    %5595 = vmatprep.subr.mxu0 0.0
    %5596 = vmatpush1.msra.mxu0 0.0
    %5597 = vmatprep.subr.mxu0 0.0
    %5598 = vmatpush1.msra.mxu0 0.0
    %5599 = vmatprep.mubr.f32.mxu0 0.0
    %5600 = vmatmul.mubr.f32.gmra.mrb[0].mxu0 %v5533
    %v5601 = vpop.f32.mrb[0].mxu0
    %v5602 = vadd.f32 0.0, %v5601
    %v5603 = vpop.f32.mrb[0].mxu0
    %5604 = vdwg.mxu0
    %v5606 = vsel %vm56, %v5602, 0
    %5608 = vmatprep.subr.mxu0 0.0
    %5609 = vmatpush1.msra.mxu0 %v5428
    %5610 = vmatprep.subr.mxu0 0.0
    %5611 = vmatpush1.msra.mxu0 %v5429
    %5612 = vmatprep.subr.mxu0 0.0
    %5613 = vmatpush1.msra.mxu0 %v5430
    %5614 = vmatprep.subr.mxu0 0.0
    %5615 = vmatpush1.msra.mxu0 %v5431
    %5616 = vmatprep.subr.mxu0 0.0
    %5617 = vmatpush1.msra.mxu0 0.0
    %5618 = vmatprep.subr.mxu0 0.0
    %5619 = vmatpush1.msra.mxu0 0.0
    %5620 = vmatprep.subr.mxu0 0.0
    %5621 = vmatpush1.msra.mxu0 0.0
    %5622 = vmatprep.subr.mxu0 0.0
    %5623 = vmatpush1.msra.mxu0 0.0
    %5624 = vmatprep.subr.mxu0 0.0
    %5625 = vmatpush1.msra.mxu0 0.0
    %5626 = vmatprep.subr.mxu0 0.0
    %5627 = vmatpush1.msra.mxu0 0.0
    %5628 = vmatprep.subr.mxu0 0.0
    %5629 = vmatpush1.msra.mxu0 0.0
    %5630 = vmatprep.subr.mxu0 0.0
    %5631 = vmatpush1.msra.mxu0 0.0
    %5632 = vmatprep.subr.mxu0 0.0
    %5633 = vmatpush1.msra.mxu0 0.0
    %5634 = vmatprep.subr.mxu0 0.0
    %5635 = vmatpush1.msra.mxu0 0.0
    %5636 = vmatprep.subr.mxu0 0.0
    %5637 = vmatpush1.msra.mxu0 0.0
    %5638 = vmatprep.subr.mxu0 0.0
    %5639 = vmatpush1.msra.mxu0 0.0
    %5640 = vmatprep.subr.mxu0 0.0
    %5641 = vmatpush1.msra.mxu0 0.0
    %5642 = vmatprep.subr.mxu0 0.0
    %5643 = vmatpush1.msra.mxu0 0.0
    %5644 = vmatprep.subr.mxu0 0.0
    %5645 = vmatpush1.msra.mxu0 0.0
    %5646 = vmatprep.subr.mxu0 0.0
    %5647 = vmatpush1.msra.mxu0 0.0
    %5648 = vmatprep.subr.mxu0 0.0
    %5649 = vmatpush1.msra.mxu0 0.0
    %5650 = vmatprep.subr.mxu0 0.0
    %5651 = vmatpush1.msra.mxu0 0.0
    %5652 = vmatprep.subr.mxu0 0.0
    %5653 = vmatpush1.msra.mxu0 0.0
    %5654 = vmatprep.subr.mxu0 0.0
    %5655 = vmatpush1.msra.mxu0 0.0
    %5656 = vmatprep.subr.mxu0 0.0
    %5657 = vmatpush1.msra.mxu0 0.0
    %5658 = vmatprep.subr.mxu0 0.0
    %5659 = vmatpush1.msra.mxu0 0.0
    %5660 = vmatprep.subr.mxu0 0.0
    %5661 = vmatpush1.msra.mxu0 0.0
    %5662 = vmatprep.subr.mxu0 0.0
    %5663 = vmatpush1.msra.mxu0 0.0
    %5664 = vmatprep.subr.mxu0 0.0
    %5665 = vmatpush1.msra.mxu0 0.0
    %5666 = vmatprep.subr.mxu0 0.0
    %5667 = vmatpush1.msra.mxu0 0.0
    %5668 = vmatprep.subr.mxu0 0.0
    %5669 = vmatpush1.msra.mxu0 0.0
    %5670 = vmatprep.subr.mxu0 0.0
    %5671 = vmatpush1.msra.mxu0 0.0
    %5672 = vmatprep.mubr.f32.mxu0 0.0
    %5673 = vmatmul.mubr.f32.gmra.mrb[0].mxu0 %v5606
    %v5674 = vpop.f32.mrb[0].mxu0
    %v5675 = vadd.f32 0.0, %v5674
    %v5676 = vpop.f32.mrb[0].mxu0
    %5677 = vdwg.mxu0
    %5678 = vmatprep.subr.mxu0 0.0
    %5679 = vmatpush1.msra.mxu0 %v5424
    %5680 = vmatprep.subr.mxu0 0.0
    %5681 = vmatpush1.msra.mxu0 %v5425
    %5682 = vmatprep.subr.mxu0 0.0
    %5683 = vmatpush1.msra.mxu0 %v5426
    %5684 = vmatprep.subr.mxu0 0.0
    %5685 = vmatpush1.msra.mxu0 %v5427
    %5686 = vmatprep.subr.mxu0 0.0
    %5687 = vmatpush1.msra.mxu0 0.0
    %5688 = vmatprep.subr.mxu0 0.0
    %5689 = vmatpush1.msra.mxu0 0.0
    %5690 = vmatprep.subr.mxu0 0.0
    %5691 = vmatpush1.msra.mxu0 0.0
    %5692 = vmatprep.subr.mxu0 0.0
    %5693 = vmatpush1.msra.mxu0 0.0
    %5694 = vmatprep.subr.mxu0 0.0
    %5695 = vmatpush1.msra.mxu0 0.0
    %5696 = vmatprep.subr.mxu0 0.0
    %5697 = vmatpush1.msra.mxu0 0.0
    %5698 = vmatprep.subr.mxu0 0.0
    %5699 = vmatpush1.msra.mxu0 0.0
    %5700 = vmatprep.subr.mxu0 0.0
    %5701 = vmatpush1.msra.mxu0 0.0
    %5702 = vmatprep.subr.mxu0 0.0
    %5703 = vmatpush1.msra.mxu0 0.0
    %5704 = vmatprep.subr.mxu0 0.0
    %5705 = vmatpush1.msra.mxu0 0.0
    %5706 = vmatprep.subr.mxu0 0.0
    %5707 = vmatpush1.msra.mxu0 0.0
    %5708 = vmatprep.subr.mxu0 0.0
    %5709 = vmatpush1.msra.mxu0 0.0
    %5710 = vmatprep.subr.mxu0 0.0
    %5711 = vmatpush1.msra.mxu0 0.0
    %5712 = vmatprep.subr.mxu0 0.0
    %5713 = vmatpush1.msra.mxu0 0.0
    %5714 = vmatprep.subr.mxu0 0.0
    %5715 = vmatpush1.msra.mxu0 0.0
    %5716 = vmatprep.subr.mxu0 0.0
    %5717 = vmatpush1.msra.mxu0 0.0
    %5718 = vmatprep.subr.mxu0 0.0
    %5719 = vmatpush1.msra.mxu0 0.0
    %5720 = vmatprep.subr.mxu0 0.0
    %5721 = vmatpush1.msra.mxu0 0.0
    %5722 = vmatprep.subr.mxu0 0.0
    %5723 = vmatpush1.msra.mxu0 0.0
    %5724 = vmatprep.subr.mxu0 0.0
    %5725 = vmatpush1.msra.mxu0 0.0
    %5726 = vmatprep.subr.mxu0 0.0
    %5727 = vmatpush1.msra.mxu0 0.0
    %5728 = vmatprep.subr.mxu0 0.0
    %5729 = vmatpush1.msra.mxu0 0.0
    %5730 = vmatprep.subr.mxu0 0.0
    %5731 = vmatpush1.msra.mxu0 0.0
    %5732 = vmatprep.subr.mxu0 0.0
    %5733 = vmatpush1.msra.mxu0 0.0
    %5734 = vmatprep.subr.mxu0 0.0
    %5735 = vmatpush1.msra.mxu0 0.0
    %5736 = vmatprep.subr.mxu0 0.0
    %5737 = vmatpush1.msra.mxu0 0.0
    %5738 = vmatprep.subr.mxu0 0.0
    %5739 = vmatpush1.msra.mxu0 0.0
    %5740 = vmatprep.subr.mxu0 0.0
    %5741 = vmatpush1.msra.mxu0 0.0
    %5742 = vmatprep.mubr.f32.mxu0 0.0
    %5743 = vmatmul.mubr.f32.gmra.mrb[0].mxu0 %v5442
    %v5744 = vpop.f32.mrb[0].mxu0
    %v5745 = vadd.f32 %v5675, %v5744
    %v5746 = vpop.f32.mrb[0].mxu0
    %5747 = vdwg.mxu0
    %v5749 = vlaneseq
    %v5750 = vshrl.u32 %v5749, 7
    %v5751 = vsub.s32 0, %v5750
    %v5752 = vrot.slane %v5432, %v5751
    %v5754 = vadd.f32 %v5745, %v5752
    %v5756 = vlaneseq
    %v5757 = vshrl.u32 %v5756, 7
    %v5758 = vsub.s32 0, %v5757
    %v5759 = vrot.slane %v5437, %v5758
    %v5762 = vsel %vm56, %v5754, 0
    %5764 = vmatprep.subr.mxu0 0.0
    %5765 = vmatpush1.msra.mxu0 %v5433
    %5766 = vmatprep.subr.mxu0 0.0
    %5767 = vmatpush1.msra.mxu0 %v5434
    %5768 = vmatprep.subr.mxu0 0.0
    %5769 = vmatpush1.msra.mxu0 %v5435
    %5770 = vmatprep.subr.mxu0 0.0
    %5771 = vmatpush1.msra.mxu0 %v5436
    %5772 = vmatprep.subr.mxu0 0.0
    %5773 = vmatpush1.msra.mxu0 0.0
    %5774 = vmatprep.subr.mxu0 0.0
    %5775 = vmatpush1.msra.mxu0 0.0
    %5776 = vmatprep.subr.mxu0 0.0
    %5777 = vmatpush1.msra.mxu0 0.0
    %5778 = vmatprep.subr.mxu0 0.0
    %5779 = vmatpush1.msra.mxu0 0.0
    %5780 = vmatprep.subr.mxu0 0.0
    %5781 = vmatpush1.msra.mxu0 0.0
    %5782 = vmatprep.subr.mxu0 0.0
    %5783 = vmatpush1.msra.mxu0 0.0
    %5784 = vmatprep.subr.mxu0 0.0
    %5785 = vmatpush1.msra.mxu0 0.0
    %5786 = vmatprep.subr.mxu0 0.0
    %5787 = vmatpush1.msra.mxu0 0.0
    %5788 = vmatprep.subr.mxu0 0.0
    %5789 = vmatpush1.msra.mxu0 0.0
    %5790 = vmatprep.subr.mxu0 0.0
    %5791 = vmatpush1.msra.mxu0 0.0
    %5792 = vmatprep.subr.mxu0 0.0
    %5793 = vmatpush1.msra.mxu0 0.0
    %5794 = vmatprep.subr.mxu0 0.0
    %5795 = vmatpush1.msra.mxu0 0.0
    %5796 = vmatprep.subr.mxu0 0.0
    %5797 = vmatpush1.msra.mxu0 0.0
    %5798 = vmatprep.subr.mxu0 0.0
    %5799 = vmatpush1.msra.mxu0 0.0
    %5800 = vmatprep.subr.mxu0 0.0
    %5801 = vmatpush1.msra.mxu0 0.0
    %5802 = vmatprep.subr.mxu0 0.0
    %5803 = vmatpush1.msra.mxu0 0.0
    %5804 = vmatprep.subr.mxu0 0.0
    %5805 = vmatpush1.msra.mxu0 0.0
    %5806 = vmatprep.subr.mxu0 0.0
    %5807 = vmatpush1.msra.mxu0 0.0
    %5808 = vmatprep.subr.mxu0 0.0
    %5809 = vmatpush1.msra.mxu0 0.0
    %5810 = vmatprep.subr.mxu0 0.0
    %5811 = vmatpush1.msra.mxu0 0.0
    %5812 = vmatprep.subr.mxu0 0.0
    %5813 = vmatpush1.msra.mxu0 0.0
    %5814 = vmatprep.subr.mxu0 0.0
    %5815 = vmatpush1.msra.mxu0 0.0
    %5816 = vmatprep.subr.mxu0 0.0
    %5817 = vmatpush1.msra.mxu0 0.0
    %5818 = vmatprep.subr.mxu0 0.0
    %5819 = vmatpush1.msra.mxu0 0.0
    %5820 = vmatprep.subr.mxu0 0.0
    %5821 = vmatpush1.msra.mxu0 0.0
    %5822 = vmatprep.subr.mxu0 0.0
    %5823 = vmatpush1.msra.mxu0 0.0
    %5824 = vmatprep.subr.mxu0 0.0
    %5825 = vmatpush1.msra.mxu0 0.0
    %5826 = vmatprep.subr.mxu0 0.0
    %5827 = vmatpush1.msra.mxu0 0.0
    %5828 = vmatprep.mubr.f32.mxu0 0.0
    %5829 = vmatmul.mubr.f32.gmra.mrb[0].mxu0 %v5762
    %v5830 = vpop.f32.mrb[0].mxu0
    %v5831 = vadd.f32 %v5759, %v5830
    %v5832 = vpop.f32.mrb[0].mxu0
    %5833 = vdwg.mxu0
    %5834 = vst [vmem:[#allocation6] sm:$0xff] %v5831
    %v5835 = vld [vmem:[%s1938] sm:$0xff]
    %v5836 = vld [vmem:[%s1938 + $0x8] sm:$0xff]
    %v5837 = vld [vmem:[%s4647] sm:$0xff]
    %v5839 = vsel %vm56, %v5837, 0
    %v5842 = vsel %vm56, %v5835, 0
    %v5845 = vsel %vm56, %v5836, 0
    %5847 = vmatprep.subr.mxu0 0.0
    %5848 = vmatpush1.xpose.msra.mxu0 %v5842
    %5849 = vmatprep.subr.mxu0 0.0
    %5850 = vmatpush1.xpose.msra.mxu0 %v5845
    %5851 = vmatprep.subr.mxu0 0.0
    %5852 = vmatpush1.xpose.msra.mxu0 0.0
    %5853 = vmatprep.subr.mxu0 0.0
    %5854 = vmatpush1.xpose.msra.mxu0 0.0
    %5855 = vmatprep.subr.mxu0 0.0
    %5856 = vmatpush1.xpose.msra.mxu0 0.0
    %5857 = vmatprep.subr.mxu0 0.0
    %5858 = vmatpush1.xpose.msra.mxu0 0.0
    %5859 = vmatprep.subr.mxu0 0.0
    %5860 = vmatpush1.xpose.msra.mxu0 0.0
    %5861 = vmatprep.subr.mxu0 0.0
    %5862 = vmatpush1.xpose.msra.mxu0 0.0
    %5863 = vmatprep.subr.mxu0 0.0
    %5864 = vmatpush1.xpose.msra.mxu0 0.0
    %5865 = vmatprep.subr.mxu0 0.0
    %5866 = vmatpush1.xpose.msra.mxu0 0.0
    %5867 = vmatprep.subr.mxu0 0.0
    %5868 = vmatpush1.xpose.msra.mxu0 0.0
    %5869 = vmatprep.subr.mxu0 0.0
    %5870 = vmatpush1.xpose.msra.mxu0 0.0
    %5871 = vmatprep.subr.mxu0 0.0
    %5872 = vmatpush1.xpose.msra.mxu0 0.0
    %5873 = vmatprep.subr.mxu0 0.0
    %5874 = vmatpush1.xpose.msra.mxu0 0.0
    %5875 = vmatprep.subr.mxu0 0.0
    %5876 = vmatpush1.xpose.msra.mxu0 0.0
    %5877 = vmatprep.subr.mxu0 0.0
    %5878 = vmatpush1.xpose.msra.mxu0 0.0
    %5879 = vmatprep.subr.mxu0 0.0
    %5880 = vmatpush1.xpose.msra.mxu0 0.0
    %5881 = vmatprep.subr.mxu0 0.0
    %5882 = vmatpush1.xpose.msra.mxu0 0.0
    %5883 = vmatprep.subr.mxu0 0.0
    %5884 = vmatpush1.xpose.msra.mxu0 0.0
    %5885 = vmatprep.subr.mxu0 0.0
    %5886 = vmatpush1.xpose.msra.mxu0 0.0
    %5887 = vmatprep.subr.mxu0 0.0
    %5888 = vmatpush1.xpose.msra.mxu0 0.0
    %5889 = vmatprep.subr.mxu0 0.0
    %5890 = vmatpush1.xpose.msra.mxu0 0.0
    %5891 = vmatprep.subr.mxu0 0.0
    %5892 = vmatpush1.xpose.msra.mxu0 0.0
    %5893 = vmatprep.subr.mxu0 0.0
    %5894 = vmatpush1.xpose.msra.mxu0 0.0
    %5895 = vmatprep.subr.mxu0 0.0
    %5896 = vmatpush1.xpose.msra.mxu0 0.0
    %5897 = vmatprep.subr.mxu0 0.0
    %5898 = vmatpush1.xpose.msra.mxu0 0.0
    %5899 = vmatprep.subr.mxu0 0.0
    %5900 = vmatpush1.xpose.msra.mxu0 0.0
    %5901 = vmatprep.subr.mxu0 0.0
    %5902 = vmatpush1.xpose.msra.mxu0 0.0
    %5903 = vmatprep.subr.mxu0 0.0
    %5904 = vmatpush1.xpose.msra.mxu0 0.0
    %5905 = vmatprep.subr.mxu0 0.0
    %5906 = vmatpush1.xpose.msra.mxu0 0.0
    %5907 = vmatprep.subr.mxu0 0.0
    %5908 = vmatpush1.xpose.msra.mxu0 0.0
    %5909 = vmatprep.subr.mxu0 0.0
    %5910 = vmatpush1.xpose.msra.mxu0 0.0
    %5911 = vmatprep.mubr.f32.mxu0 0.0
    %5912 = vmatmul.mubr.f32.gmra.mrb[0].mxu0 %v5839
    %v5913 = vpop.f32.mrb[0].mxu0
    %v5914 = vadd.f32 0.0, %v5913
    %v5915 = vpop.f32.mrb[0].mxu0
    %5916 = vdwg.mxu0
    %v5917 = vsel %vm5520, %v5914, -inf
    %5918 = vmax.xlane.f32.xlu0 %v5917
    %v5919 = vpop.xlane.xlu0 %5918
    %v5920 = vsub.f32 %v5914, %v5919
    %v5921 = vmul.f32 %v5920, 1.442695
    %v5922 = vpow.pop %v5921
    %v5923 = vsel %vm5520, %v5922, 0.0
    %5924 = vadd.xlane.f32.xlu0 %v5923
    %v5925 = vpop.xlane.xlu0 %5924
    %v5926 = vrcp.pop %v5925
    %v5927 = vmul.f32 %v5922, %v5926
    %v5929 = vsel %vm5520, %v5927, 0
    %5931 = vmatprep.subr.mxu0 0.0
    %5932 = vmatpush1.msra.mxu0 %v5835
    %5933 = vmatprep.subr.mxu0 0.0
    %5934 = vmatpush1.msra.mxu0 %v5836
    %5935 = vmatprep.subr.mxu0 0.0
    %5936 = vmatpush1.msra.mxu0 0.0
    %5937 = vmatprep.subr.mxu0 0.0
    %5938 = vmatpush1.msra.mxu0 0.0
    %5939 = vmatprep.subr.mxu0 0.0
    %5940 = vmatpush1.msra.mxu0 0.0
    %5941 = vmatprep.subr.mxu0 0.0
    %5942 = vmatpush1.msra.mxu0 0.0
    %5943 = vmatprep.subr.mxu0 0.0
    %5944 = vmatpush1.msra.mxu0 0.0
    %5945 = vmatprep.subr.mxu0 0.0
    %5946 = vmatpush1.msra.mxu0 0.0
    %5947 = vmatprep.subr.mxu0 0.0
    %5948 = vmatpush1.msra.mxu0 0.0
    %5949 = vmatprep.subr.mxu0 0.0
    %5950 = vmatpush1.msra.mxu0 0.0
    %5951 = vmatprep.subr.mxu0 0.0
    %5952 = vmatpush1.msra.mxu0 0.0
    %5953 = vmatprep.subr.mxu0 0.0
    %5954 = vmatpush1.msra.mxu0 0.0
    %5955 = vmatprep.subr.mxu0 0.0
    %5956 = vmatpush1.msra.mxu0 0.0
    %5957 = vmatprep.subr.mxu0 0.0
    %5958 = vmatpush1.msra.mxu0 0.0
    %5959 = vmatprep.subr.mxu0 0.0
    %5960 = vmatpush1.msra.mxu0 0.0
    %5961 = vmatprep.subr.mxu0 0.0
    %5962 = vmatpush1.msra.mxu0 0.0
    %5963 = vmatprep.subr.mxu0 0.0
    %5964 = vmatpush1.msra.mxu0 0.0
    %5965 = vmatprep.subr.mxu0 0.0
    %5966 = vmatpush1.msra.mxu0 0.0
    %5967 = vmatprep.subr.mxu0 0.0
    %5968 = vmatpush1.msra.mxu0 0.0
    %5969 = vmatprep.subr.mxu0 0.0
    %5970 = vmatpush1.msra.mxu0 0.0
    %5971 = vmatprep.subr.mxu0 0.0
    %5972 = vmatpush1.msra.mxu0 0.0
    %5973 = vmatprep.subr.mxu0 0.0
    %5974 = vmatpush1.msra.mxu0 0.0
    %5975 = vmatprep.subr.mxu0 0.0
    %5976 = vmatpush1.msra.mxu0 0.0
    %5977 = vmatprep.subr.mxu0 0.0
    %5978 = vmatpush1.msra.mxu0 0.0
    %5979 = vmatprep.subr.mxu0 0.0
    %5980 = vmatpush1.msra.mxu0 0.0
    %5981 = vmatprep.subr.mxu0 0.0
    %5982 = vmatpush1.msra.mxu0 0.0
    %5983 = vmatprep.subr.mxu0 0.0
    %5984 = vmatpush1.msra.mxu0 0.0
    %5985 = vmatprep.subr.mxu0 0.0
    %5986 = vmatpush1.msra.mxu0 0.0
    %5987 = vmatprep.subr.mxu0 0.0
    %5988 = vmatpush1.msra.mxu0 0.0
    %5989 = vmatprep.subr.mxu0 0.0
    %5990 = vmatpush1.msra.mxu0 0.0
    %5991 = vmatprep.subr.mxu0 0.0
    %5992 = vmatpush1.msra.mxu0 0.0
    %5993 = vmatprep.subr.mxu0 0.0
    %5994 = vmatpush1.msra.mxu0 0.0
    %5995 = vmatprep.mubr.f32.mxu0 0.0
    %5996 = vmatmul.mubr.f32.gmra.mrb[0].mxu0 %v5929
    %v5997 = vpop.f32.mrb[0].mxu0
    %v5998 = vadd.f32 0.0, %v5997
    %v5999 = vpop.f32.mrb[0].mxu0
    %6000 = vdwg.mxu0
    %v6002 = vsel %vm56, %v5998, 0
    %6004 = vmatprep.subr.mxu0 0.0
    %6005 = vmatpush1.msra.mxu0 %v5428
    %6006 = vmatprep.subr.mxu0 0.0
    %6007 = vmatpush1.msra.mxu0 %v5429
    %6008 = vmatprep.subr.mxu0 0.0
    %6009 = vmatpush1.msra.mxu0 %v5430
    %6010 = vmatprep.subr.mxu0 0.0
    %6011 = vmatpush1.msra.mxu0 %v5431
    %6012 = vmatprep.subr.mxu0 0.0
    %6013 = vmatpush1.msra.mxu0 0.0
    %6014 = vmatprep.subr.mxu0 0.0
    %6015 = vmatpush1.msra.mxu0 0.0
    %6016 = vmatprep.subr.mxu0 0.0
    %6017 = vmatpush1.msra.mxu0 0.0
    %6018 = vmatprep.subr.mxu0 0.0
    %6019 = vmatpush1.msra.mxu0 0.0
    %6020 = vmatprep.subr.mxu0 0.0
    %6021 = vmatpush1.msra.mxu0 0.0
    %6022 = vmatprep.subr.mxu0 0.0
    %6023 = vmatpush1.msra.mxu0 0.0
    %6024 = vmatprep.subr.mxu0 0.0
    %6025 = vmatpush1.msra.mxu0 0.0
    %6026 = vmatprep.subr.mxu0 0.0
    %6027 = vmatpush1.msra.mxu0 0.0
    %6028 = vmatprep.subr.mxu0 0.0
    %6029 = vmatpush1.msra.mxu0 0.0
    %6030 = vmatprep.subr.mxu0 0.0
    %6031 = vmatpush1.msra.mxu0 0.0
    %6032 = vmatprep.subr.mxu0 0.0
    %6033 = vmatpush1.msra.mxu0 0.0
    %6034 = vmatprep.subr.mxu0 0.0
    %6035 = vmatpush1.msra.mxu0 0.0
    %6036 = vmatprep.subr.mxu0 0.0
    %6037 = vmatpush1.msra.mxu0 0.0
    %6038 = vmatprep.subr.mxu0 0.0
    %6039 = vmatpush1.msra.mxu0 0.0
    %6040 = vmatprep.subr.mxu0 0.0
    %6041 = vmatpush1.msra.mxu0 0.0
    %6042 = vmatprep.subr.mxu0 0.0
    %6043 = vmatpush1.msra.mxu0 0.0
    %6044 = vmatprep.subr.mxu0 0.0
    %6045 = vmatpush1.msra.mxu0 0.0
    %6046 = vmatprep.subr.mxu0 0.0
    %6047 = vmatpush1.msra.mxu0 0.0
    %6048 = vmatprep.subr.mxu0 0.0
    %6049 = vmatpush1.msra.mxu0 0.0
    %6050 = vmatprep.subr.mxu0 0.0
    %6051 = vmatpush1.msra.mxu0 0.0
    %6052 = vmatprep.subr.mxu0 0.0
    %6053 = vmatpush1.msra.mxu0 0.0
    %6054 = vmatprep.subr.mxu0 0.0
    %6055 = vmatpush1.msra.mxu0 0.0
    %6056 = vmatprep.subr.mxu0 0.0
    %6057 = vmatpush1.msra.mxu0 0.0
    %6058 = vmatprep.subr.mxu0 0.0
    %6059 = vmatpush1.msra.mxu0 0.0
    %6060 = vmatprep.subr.mxu0 0.0
    %6061 = vmatpush1.msra.mxu0 0.0
    %6062 = vmatprep.subr.mxu0 0.0
    %6063 = vmatpush1.msra.mxu0 0.0
    %6064 = vmatprep.subr.mxu0 0.0
    %6065 = vmatpush1.msra.mxu0 0.0
    %6066 = vmatprep.subr.mxu0 0.0
    %6067 = vmatpush1.msra.mxu0 0.0
    %6068 = vmatprep.mubr.f32.mxu0 0.0
    %6069 = vmatmul.mubr.f32.gmra.mrb[0].mxu0 %v6002
    %v6070 = vpop.f32.mrb[0].mxu0
    %v6071 = vadd.f32 0.0, %v6070
    %v6072 = vpop.f32.mrb[0].mxu0
    %6073 = vdwg.mxu0
    %6074 = vmatprep.subr.mxu0 0.0
    %6075 = vmatpush1.msra.mxu0 %v5424
    %6076 = vmatprep.subr.mxu0 0.0
    %6077 = vmatpush1.msra.mxu0 %v5425
    %6078 = vmatprep.subr.mxu0 0.0
    %6079 = vmatpush1.msra.mxu0 %v5426
    %6080 = vmatprep.subr.mxu0 0.0
    %6081 = vmatpush1.msra.mxu0 %v5427
    %6082 = vmatprep.subr.mxu0 0.0
    %6083 = vmatpush1.msra.mxu0 0.0
    %6084 = vmatprep.subr.mxu0 0.0
    %6085 = vmatpush1.msra.mxu0 0.0
    %6086 = vmatprep.subr.mxu0 0.0
    %6087 = vmatpush1.msra.mxu0 0.0
    %6088 = vmatprep.subr.mxu0 0.0
    %6089 = vmatpush1.msra.mxu0 0.0
    %6090 = vmatprep.subr.mxu0 0.0
    %6091 = vmatpush1.msra.mxu0 0.0
    %6092 = vmatprep.subr.mxu0 0.0
    %6093 = vmatpush1.msra.mxu0 0.0
    %6094 = vmatprep.subr.mxu0 0.0
    %6095 = vmatpush1.msra.mxu0 0.0
    %6096 = vmatprep.subr.mxu0 0.0
    %6097 = vmatpush1.msra.mxu0 0.0
    %6098 = vmatprep.subr.mxu0 0.0
    %6099 = vmatpush1.msra.mxu0 0.0
    %6100 = vmatprep.subr.mxu0 0.0
    %6101 = vmatpush1.msra.mxu0 0.0
    %6102 = vmatprep.subr.mxu0 0.0
    %6103 = vmatpush1.msra.mxu0 0.0
    %6104 = vmatprep.subr.mxu0 0.0
    %6105 = vmatpush1.msra.mxu0 0.0
    %6106 = vmatprep.subr.mxu0 0.0
    %6107 = vmatpush1.msra.mxu0 0.0
    %6108 = vmatprep.subr.mxu0 0.0
    %6109 = vmatpush1.msra.mxu0 0.0
    %6110 = vmatprep.subr.mxu0 0.0
    %6111 = vmatpush1.msra.mxu0 0.0
    %6112 = vmatprep.subr.mxu0 0.0
    %6113 = vmatpush1.msra.mxu0 0.0
    %6114 = vmatprep.subr.mxu0 0.0
    %6115 = vmatpush1.msra.mxu0 0.0
    %6116 = vmatprep.subr.mxu0 0.0
    %6117 = vmatpush1.msra.mxu0 0.0
    %6118 = vmatprep.subr.mxu0 0.0
    %6119 = vmatpush1.msra.mxu0 0.0
    %6120 = vmatprep.subr.mxu0 0.0
    %6121 = vmatpush1.msra.mxu0 0.0
    %6122 = vmatprep.subr.mxu0 0.0
    %6123 = vmatpush1.msra.mxu0 0.0
    %6124 = vmatprep.subr.mxu0 0.0
    %6125 = vmatpush1.msra.mxu0 0.0
    %6126 = vmatprep.subr.mxu0 0.0
    %6127 = vmatpush1.msra.mxu0 0.0
    %6128 = vmatprep.subr.mxu0 0.0
    %6129 = vmatpush1.msra.mxu0 0.0
    %6130 = vmatprep.subr.mxu0 0.0
    %6131 = vmatpush1.msra.mxu0 0.0
    %6132 = vmatprep.subr.mxu0 0.0
    %6133 = vmatpush1.msra.mxu0 0.0
    %6134 = vmatprep.subr.mxu0 0.0
    %6135 = vmatpush1.msra.mxu0 0.0
    %6136 = vmatprep.subr.mxu0 0.0
    %6137 = vmatpush1.msra.mxu0 0.0
    %6138 = vmatprep.mubr.f32.mxu0 0.0
    %6139 = vmatmul.mubr.f32.gmra.mrb[0].mxu0 %v5839
    %v6140 = vpop.f32.mrb[0].mxu0
    %v6141 = vadd.f32 %v6071, %v6140
    %v6142 = vpop.f32.mrb[0].mxu0
    %6143 = vdwg.mxu0
    %v6144 = vadd.f32 %v6141, %v5752
    %v6146 = vsel %vm56, %v6144, 0
    %6148 = vmatprep.subr.mxu0 0.0
    %6149 = vmatpush1.msra.mxu0 %v5433
    %6150 = vmatprep.subr.mxu0 0.0
    %6151 = vmatpush1.msra.mxu0 %v5434
    %6152 = vmatprep.subr.mxu0 0.0
    %6153 = vmatpush1.msra.mxu0 %v5435
    %6154 = vmatprep.subr.mxu0 0.0
    %6155 = vmatpush1.msra.mxu0 %v5436
    %6156 = vmatprep.subr.mxu0 0.0
    %6157 = vmatpush1.msra.mxu0 0.0
    %6158 = vmatprep.subr.mxu0 0.0
    %6159 = vmatpush1.msra.mxu0 0.0
    %6160 = vmatprep.subr.mxu0 0.0
    %6161 = vmatpush1.msra.mxu0 0.0
    %6162 = vmatprep.subr.mxu0 0.0
    %6163 = vmatpush1.msra.mxu0 0.0
    %6164 = vmatprep.subr.mxu0 0.0
    %6165 = vmatpush1.msra.mxu0 0.0
    %6166 = vmatprep.subr.mxu0 0.0
    %6167 = vmatpush1.msra.mxu0 0.0
    %6168 = vmatprep.subr.mxu0 0.0
    %6169 = vmatpush1.msra.mxu0 0.0
    %6170 = vmatprep.subr.mxu0 0.0
    %6171 = vmatpush1.msra.mxu0 0.0
    %6172 = vmatprep.subr.mxu0 0.0
    %6173 = vmatpush1.msra.mxu0 0.0
    %6174 = vmatprep.subr.mxu0 0.0
    %6175 = vmatpush1.msra.mxu0 0.0
    %6176 = vmatprep.subr.mxu0 0.0
    %6177 = vmatpush1.msra.mxu0 0.0
    %6178 = vmatprep.subr.mxu0 0.0
    %6179 = vmatpush1.msra.mxu0 0.0
    %6180 = vmatprep.subr.mxu0 0.0
    %6181 = vmatpush1.msra.mxu0 0.0
    %6182 = vmatprep.subr.mxu0 0.0
    %6183 = vmatpush1.msra.mxu0 0.0
    %6184 = vmatprep.subr.mxu0 0.0
    %6185 = vmatpush1.msra.mxu0 0.0
    %6186 = vmatprep.subr.mxu0 0.0
    %6187 = vmatpush1.msra.mxu0 0.0
    %6188 = vmatprep.subr.mxu0 0.0
    %6189 = vmatpush1.msra.mxu0 0.0
    %6190 = vmatprep.subr.mxu0 0.0
    %6191 = vmatpush1.msra.mxu0 0.0
    %6192 = vmatprep.subr.mxu0 0.0
    %6193 = vmatpush1.msra.mxu0 0.0
    %6194 = vmatprep.subr.mxu0 0.0
    %6195 = vmatpush1.msra.mxu0 0.0
    %6196 = vmatprep.subr.mxu0 0.0
    %6197 = vmatpush1.msra.mxu0 0.0
    %6198 = vmatprep.subr.mxu0 0.0
    %6199 = vmatpush1.msra.mxu0 0.0
    %6200 = vmatprep.subr.mxu0 0.0
    %6201 = vmatpush1.msra.mxu0 0.0
    %6202 = vmatprep.subr.mxu0 0.0
    %6203 = vmatpush1.msra.mxu0 0.0
    %6204 = vmatprep.subr.mxu0 0.0
    %6205 = vmatpush1.msra.mxu0 0.0
    %6206 = vmatprep.subr.mxu0 0.0
    %6207 = vmatpush1.msra.mxu0 0.0
    %6208 = vmatprep.subr.mxu0 0.0
    %6209 = vmatpush1.msra.mxu0 0.0
    %6210 = vmatprep.subr.mxu0 0.0
    %6211 = vmatpush1.msra.mxu0 0.0
    %6212 = vmatprep.mubr.f32.mxu0 0.0
    %6213 = vmatmul.mubr.f32.gmra.mrb[0].mxu0 %v6146
    %v6214 = vpop.f32.mrb[0].mxu0
    %v6215 = vadd.f32 %v5759, %v6214
    %v6216 = vpop.f32.mrb[0].mxu0
    %6217 = vdwg.mxu0
    %s6218 = scalar_lea.vmem [#allocation6], 8
    %6219 = vst [vmem:[%s6218] sm:$0xff] %v6215
    // Predicated region
    $region62: #{lstm_with_att_forward.1} parent=1 // pred_check
      _
    $region63: #{lstm_with_att_forward.1} parent=1 // pred_check_branch
      %6221 = sbr.rel (0) target = $region65
    $region64: #{lstm_with_att_forward.1} parent=1 // pred_region
      %s6223 = ssub.s32 256, 256
      %6224 = vsyncadd [#allocation7], %s6223
      %s6225 = sshll.u32 [#allocation6], 4
      %s6226 = int_to_ptr.vmem [resolvable:$true] %s6225
      %6231 = dma.vmem_to_hbm [thread:$0]  %s6226, 256, %s15, [#allocation7], 128, 128, 8
    $region65: #{lstm_with_att_forward.1} parent=1 // pred_fallthru
      _
    // Predicated region
    $region66: #{lstm_with_att_forward.1} parent=1 // pred_check
      _
    $region67: #{lstm_with_att_forward.1} parent=1 // pred_check_branch
      %6233 = sbr.rel (0) target = $region69
    $region68: #{lstm_with_att_forward.1} parent=1 // pred_region
      %6234 = dma.done [#allocation7], 256
    $region69: #{lstm_with_att_forward.1} parent=1 // pred_fallthru
      _
    %6235 = vsyncpa [#allocation7], 1

</llo_original>
